<compile_context>
chip_gen: v6e
topology: v6e:2x2x1
jax: 0.10.0
libtpu: 0.0.40
codegen_flags: <defaults>
</compile_context>

<pallas_src>
import functools
import math

import jax
import jax.numpy as jnp
from jax.experimental import pallas as pl
from jax.experimental.pallas import tpu as pltpu

D_MODEL = 128
N_HEADS = 8
HEAD_DIM = D_MODEL // N_HEADS        # 16
D_FF = 2048                          # nn.TransformerEncoderLayer default dim_feedforward
D_FC = 64
LN_EPS = 1e-5                        # nn.LayerNorm default eps


# ----------------------------------------------------------------------------
# Fused whole-model kernel
# ----------------------------------------------------------------------------
def _layernorm(y, g, b):
    mu = jnp.mean(y, axis=-1, keepdims=True)
    yc = y - mu
    var = jnp.mean(yc * yc, axis=-1, keepdims=True)
    return yc * jax.lax.rsqrt(var + LN_EPS) * g + b


def _model_kernel(*refs, num_layers, batch, seq):
    out_ref = refs[-1]
    x_ref, w_emb_ref, b_emb_ref = refs[0:3]
    pos = 3
    layer_refs = []
    for _ in range(num_layers):
        layer_refs.append(refs[pos:pos + 16])
        pos += 16
    w_fc_ref, b_fc_ref, w_o_ref, b_o_ref = refs[pos:pos + 4]

    scale = 1.0 / math.sqrt(HEAD_DIM)

    # --- embedding: (B*S, F) @ (F, 128) on the MXU, f32 accumulation ---
    h = (jnp.dot(x_ref[...], w_emb_ref[...], preferred_element_type=jnp.float32)
         + b_emb_ref[...])                                             # (B*S, 128)

    for layer in range(num_layers):
        (w_q_ref, b_q_ref, w_k_ref, b_k_ref, w_v_ref, b_v_ref,
         w_out_ref, b_out_ref, g1_ref, be1_ref,
         w1_ref, b1_ref, w2_ref, b2_ref, g2_ref, be2_ref) = layer_refs[layer]

        # ---- self-attention block (post-LN), fully VMEM-resident ----
        new_rows = []
        for b in range(batch):                                         # static unroll
            h_b = h[b * seq:(b + 1) * seq, :]                          # (S, 128)

            def head_body(hd, acc):
                # Per-head weights are indexed along the leading axis of the
                # (H, ...) weight slabs -> no lane-offset slicing.
                q = jnp.dot(h_b, w_q_ref[hd],
                            preferred_element_type=jnp.float32) + b_q_ref[hd]   # (S, 16)
                k = jnp.dot(h_b, w_k_ref[hd],
                            preferred_element_type=jnp.float32) + b_k_ref[hd]
                v = jnp.dot(h_b, w_v_ref[hd],
                            preferred_element_type=jnp.float32) + b_v_ref[hd]
                s = jax.lax.dot_general(q, k, (((1,), (1,)), ((), ())),
                                        preferred_element_type=jnp.float32) * scale
                s = s - jnp.max(s, axis=-1, keepdims=True)
                p = jnp.exp(s)
                p = p * pl.reciprocal(jnp.sum(p, axis=-1, keepdims=True), approx=True)
                o = jnp.dot(p, v, preferred_element_type=jnp.float32)            # (S, 16)
                # Out-projection accumulated per head: equivalent to
                # concat_h(o_h) @ W_out, without any concat / lane writes.
                return acc + jnp.dot(o, w_out_ref[hd],
                                     preferred_element_type=jnp.float32)         # (S, 128)

            attn = jax.lax.fori_loop(0, N_HEADS, head_body,
                                     jnp.zeros((seq, D_MODEL), jnp.float32))
            y = h_b + attn + b_out_ref[...]
            new_rows.append(_layernorm(y, g1_ref[...], be1_ref[...]))
        h = jnp.concatenate(new_rows, axis=0)                           # (B*S, 128)

        # ---- feed-forward block (post-LN); (B*S, 2048) stays in VMEM ----
        ff = jnp.dot(h, w1_ref[...], preferred_element_type=jnp.float32) + b1_ref[...]
        ff = jnp.maximum(ff, 0.0)
        ff = jnp.dot(ff, w2_ref[...], preferred_element_type=jnp.float32) + b2_ref[...]
        h = _layernorm(h + ff, g2_ref[...], be2_ref[...])

    # ---- mean pool over the sequence (sublane reduce) + MLP head ----
    pooled = jnp.concatenate(
        [jnp.mean(h[b * seq:(b + 1) * seq, :], axis=0, keepdims=True)
         for b in range(batch)], axis=0)                                # (B, 128)
    z = jnp.dot(pooled, w_fc_ref[...], preferred_element_type=jnp.float32) + b_fc_ref[...]
    z = jnp.maximum(z, 0.0)
    # Linear(64 -> 1): a 1-column RHS wastes the MXU; VPU multiply + lane reduce.
    logit = jnp.sum(z * w_o_ref[...], axis=-1, keepdims=True) + b_o_ref[...]     # (B, 1)
    out_ref[...] = 1.0 / (1.0 + jnp.exp(-logit))


def _full_spec(shape):
    # Whole array as a single VMEM-resident block (grid has one step).
    return pl.BlockSpec(tuple(shape), lambda i: (0,) * len(shape))


# ----------------------------------------------------------------------------
# Parameters & forward
# ----------------------------------------------------------------------------
def init_transformer_params(input_size, num_layers=3, seed=1):
    key = jax.random.PRNGKey(seed)
    keys = iter(jax.random.split(key, 2 * (3 + 4 * num_layers)))

    def dense(fan_in, fan_out):
        w = jax.random.normal(next(keys), (fan_in, fan_out), jnp.float32) * (fan_in ** -0.5)
        b = jax.random.normal(next(keys), (fan_out,), jnp.float32) * 0.05
        return w, b

    w_emb, b_emb = dense(input_size, D_MODEL)
    layers = []
    for _ in range(num_layers):
        w_in, b_in = dense(D_MODEL, 3 * D_MODEL)      # fused QKV projection
        w_out, b_out = dense(D_MODEL, D_MODEL)        # attention output projection
        w1, b1 = dense(D_MODEL, D_FF)                 # FFN in
        w2, b2 = dense(D_FF, D_MODEL)                 # FFN out
        layers.append(dict(
            w_in=w_in, b_in=b_in, w_out=w_out, b_out=b_out,
            w1=w1, b1=b1, w2=w2, b2=b2,
            g1=jnp.ones((D_MODEL,), jnp.float32), be1=jnp.zeros((D_MODEL,), jnp.float32),
            g2=jnp.ones((D_MODEL,), jnp.float32), be2=jnp.zeros((D_MODEL,), jnp.float32)))
    w_fc, b_fc = dense(D_MODEL, D_FC)
    w_o, b_o = dense(D_FC, 1)
    return dict(w_emb=w_emb, b_emb=b_emb, layers=layers,
                w_fc=w_fc, b_fc=b_fc, w_o=w_o, b_o=b_o)


@jax.jit
def transformer_forward(params, x):
    B, S, F = x.shape
    num_layers = len(params["layers"])

    def heads_cols(w):     # (D, D) column blocks -> (H, D, dh)
        return w.reshape(D_MODEL, N_HEADS, HEAD_DIM).transpose(1, 0, 2)

    inputs = [x.reshape(B * S, F), params["w_emb"], params["b_emb"].reshape(1, D_MODEL)]
    for lp in params["layers"]:
        w_in, b_in = lp["w_in"], lp["b_in"]
        inputs += [
            heads_cols(w_in[:, 0 * D_MODEL:1 * D_MODEL]),                 # w_q (H, D, dh)
            b_in[0 * D_MODEL:1 * D_MODEL].reshape(N_HEADS, 1, HEAD_DIM),  # b_q
            heads_cols(w_in[:, 1 * D_MODEL:2 * D_MODEL]),                 # w_k
            b_in[1 * D_MODEL:2 * D_MODEL].reshape(N_HEADS, 1, HEAD_DIM),  # b_k
            heads_cols(w_in[:, 2 * D_MODEL:3 * D_MODEL]),                 # w_v
            b_in[2 * D_MODEL:3 * D_MODEL].reshape(N_HEADS, 1, HEAD_DIM),  # b_v
            lp["w_out"].reshape(N_HEADS, HEAD_DIM, D_MODEL),              # w_out (H, dh, D)
            lp["b_out"].reshape(1, D_MODEL),
            lp["g1"].reshape(1, D_MODEL), lp["be1"].reshape(1, D_MODEL),
            lp["w1"], lp["b1"].reshape(1, D_FF),
            lp["w2"], lp["b2"].reshape(1, D_MODEL),
            lp["g2"].reshape(1, D_MODEL), lp["be2"].reshape(1, D_MODEL),
        ]
    inputs += [params["w_fc"], params["b_fc"].reshape(1, D_FC),
               params["w_o"].reshape(1, D_FC), params["b_o"].reshape(1, 1)]

    y = pl.pallas_call(
        functools.partial(_model_kernel, num_layers=num_layers, batch=B, seq=S),
        out_shape=jax.ShapeDtypeStruct((B, 1), jnp.float32),
        grid_spec=pltpu.PrefetchScalarGridSpec(
            num_scalar_prefetch=0,
            grid=(1,),
            in_specs=[_full_spec(a.shape) for a in inputs],
            out_specs=pl.BlockSpec((B, 1), lambda i: (0, 0)),
        ),
        compiler_params=pltpu.CompilerParams(
            # Single-step grid: "arbitrary" (no megacore split of one step).
            dimension_semantics=("arbitrary",),
            # ~7 MiB of weights (double-buffered ~14 MiB) + activations; 32 MiB
            # is a safe scoped limit on v5e / v6e / v7x.
            vmem_limit_bytes=32 * 1024 * 1024,
        ),
    )(*inputs)
    return y.reshape(B)                                                  # torch squeeze()


class TransformerModelPallas:
    """JAX/Pallas port of the PyTorch TransformerModel (eval-mode forward)."""

    def __init__(self, input_size, num_layers=3, seed=1):
        self.params = init_transformer_params(input_size, num_layers, seed)

    def __call__(self, x):
        return transformer_forward(self.params, x)


# ----------------------------------------------------------------------------
# Pure-JAX reference (HIGHEST precision) for correctness checking
# ----------------------------------------------------------------------------
_HI = jax.lax.Precision.HIGHEST


def _ref_layernorm(x, g, b):
    mu = jnp.mean(x, axis=-1, keepdims=True)
    xc = x - mu
    var = jnp.mean(xc * xc, axis=-1, keepdims=True)
    return xc * jax.lax.rsqrt(var + LN_EPS) * g + b


def reference_forward(params, x):
    B, S, F = x.shape
    scale = 1.0 / math.sqrt(HEAD_DIM)
    h = jnp.dot(x.reshape(B * S, F), params["w_emb"], precision=_HI) + params["b_emb"]

    def split_heads(t):
        return (t.reshape(B, S, N_HEADS, HEAD_DIM)
                 .transpose(0, 2, 1, 3)
                 .reshape(B * N_HEADS, S, HEAD_DIM))

    for lp in params["layers"]:
        qkv = jnp.dot(h, lp["w_in"], precision=_HI) + lp["b_in"]
        q, k, v = map(split_heads, jnp.split(qkv, 3, axis=-1))
        s = jnp.einsum("nqd,nkd->nqk", q, k, precision=_HI) * scale
        s = s - jnp.max(s, axis=-1, keepdims=True)
        p = jnp.exp(s)
        p = p / jnp.sum(p, axis=-1, keepdims=True)
        a = jnp.einsum("nqk,nkd->nqd", p, v, precision=_HI)
        a = (a.reshape(B, N_HEADS, S, HEAD_DIM)
              .transpose(0, 2, 1, 3)
              .reshape(B * S, D_MODEL))
        a = jnp.dot(a, lp["w_out"], precision=_HI) + lp["b_out"]
        h = _ref_layernorm(h + a, lp["g1"], lp["be1"])
        ff = jnp.maximum(jnp.dot(h, lp["w1"], precision=_HI) + lp["b1"], 0.0)
        ff = jnp.dot(ff, lp["w2"], precision=_HI) + lp["b2"]
        h = _ref_layernorm(h + ff, lp["g2"], lp["be2"])

    pooled = h.reshape(B, S, D_MODEL).mean(axis=1)
    z = jnp.maximum(jnp.dot(pooled, params["w_fc"], precision=_HI) + params["b_fc"], 0.0)
    y = jnp.dot(z, params["w_o"], precision=_HI) + params["b_o"]
    return (1.0 / (1.0 + jnp.exp(-y))).reshape(B)


if __name__ == "__main__":
    B, S, F = 2, 8, 32   # small demo shapes: batch=2, seq=8, input_size=32
    x = jax.random.normal(jax.random.PRNGKey(0), (B, S, F), dtype=jnp.float32)

    model = TransformerModelPallas(input_size=F, num_layers=3, seed=1)
    y = jax.block_until_ready(model(x))

    y_ref = jax.block_until_ready(reference_forward(model.params, x))
    assert y.shape == (B,), y.shape
    # Kernel uses the native MXU fast path (bf16-class passes, f32 accumulation)
    # and an approx reciprocal in softmax; reference is HIGHEST precision, and the
    # sigmoid output compresses the accumulated error -> modest tolerance.
    assert jnp.allclose(y, y_ref, atol=2e-2, rtol=2e-2), (y, y_ref)
    assert bool(jnp.all(jnp.isfinite(y)))

    print("KERNEL_OK")
</pallas_src>

<mosaic_0001>
module attributes {stable_mosaic.version = 11 : i64} {
  func.func @_model_kernel(%arg0: i32, %arg1: memref<16x32xf32, #tpu.memory_space<vmem>>, %arg2: memref<32x128xf32, #tpu.memory_space<vmem>>, %arg3: memref<1x128xf32, #tpu.memory_space<vmem>>, %arg4: memref<8x128x16xf32, #tpu.memory_space<vmem>>, %arg5: memref<8x1x16xf32, #tpu.memory_space<vmem>>, %arg6: memref<8x128x16xf32, #tpu.memory_space<vmem>>, %arg7: memref<8x1x16xf32, #tpu.memory_space<vmem>>, %arg8: memref<8x128x16xf32, #tpu.memory_space<vmem>>, %arg9: memref<8x1x16xf32, #tpu.memory_space<vmem>>, %arg10: memref<8x16x128xf32, #tpu.memory_space<vmem>>, %arg11: memref<1x128xf32, #tpu.memory_space<vmem>>, %arg12: memref<1x128xf32, #tpu.memory_space<vmem>>, %arg13: memref<1x128xf32, #tpu.memory_space<vmem>>, %arg14: memref<128x2048xf32, #tpu.memory_space<vmem>>, %arg15: memref<1x2048xf32, #tpu.memory_space<vmem>>, %arg16: memref<2048x128xf32, #tpu.memory_space<vmem>>, %arg17: memref<1x128xf32, #tpu.memory_space<vmem>>, %arg18: memref<1x128xf32, #tpu.memory_space<vmem>>, %arg19: memref<1x128xf32, #tpu.memory_space<vmem>>, %arg20: memref<8x128x16xf32, #tpu.memory_space<vmem>>, %arg21: memref<8x1x16xf32, #tpu.memory_space<vmem>>, %arg22: memref<8x128x16xf32, #tpu.memory_space<vmem>>, %arg23: memref<8x1x16xf32, #tpu.memory_space<vmem>>, %arg24: memref<8x128x16xf32, #tpu.memory_space<vmem>>, %arg25: memref<8x1x16xf32, #tpu.memory_space<vmem>>, %arg26: memref<8x16x128xf32, #tpu.memory_space<vmem>>, %arg27: memref<1x128xf32, #tpu.memory_space<vmem>>, %arg28: memref<1x128xf32, #tpu.memory_space<vmem>>, %arg29: memref<1x128xf32, #tpu.memory_space<vmem>>, %arg30: memref<128x2048xf32, #tpu.memory_space<vmem>>, %arg31: memref<1x2048xf32, #tpu.memory_space<vmem>>, %arg32: memref<2048x128xf32, #tpu.memory_space<vmem>>, %arg33: memref<1x128xf32, #tpu.memory_space<vmem>>, %arg34: memref<1x128xf32, #tpu.memory_space<vmem>>, %arg35: memref<1x128xf32, #tpu.memory_space<vmem>>, %arg36: memref<8x128x16xf32, #tpu.memory_space<vmem>>, %arg37: memref<8x1x16xf32, #tpu.memory_space<vmem>>, %arg38: memref<8x128x16xf32, #tpu.memory_space<vmem>>, %arg39: memref<8x1x16xf32, #tpu.memory_space<vmem>>, %arg40: memref<8x128x16xf32, #tpu.memory_space<vmem>>, %arg41: memref<8x1x16xf32, #tpu.memory_space<vmem>>, %arg42: memref<8x16x128xf32, #tpu.memory_space<vmem>>, %arg43: memref<1x128xf32, #tpu.memory_space<vmem>>, %arg44: memref<1x128xf32, #tpu.memory_space<vmem>>, %arg45: memref<1x128xf32, #tpu.memory_space<vmem>>, %arg46: memref<128x2048xf32, #tpu.memory_space<vmem>>, %arg47: memref<1x2048xf32, #tpu.memory_space<vmem>>, %arg48: memref<2048x128xf32, #tpu.memory_space<vmem>>, %arg49: memref<1x128xf32, #tpu.memory_space<vmem>>, %arg50: memref<1x128xf32, #tpu.memory_space<vmem>>, %arg51: memref<1x128xf32, #tpu.memory_space<vmem>>, %arg52: memref<128x64xf32, #tpu.memory_space<vmem>>, %arg53: memref<1x64xf32, #tpu.memory_space<vmem>>, %arg54: memref<1x64xf32, #tpu.memory_space<vmem>>, %arg55: memref<1x1xf32, #tpu.memory_space<vmem>>, %arg56: memref<2x1xf32, #tpu.memory_space<vmem>>) attributes {dimension_semantics = [#tpu.dimension_semantics<arbitrary>], iteration_bounds = array<i64: 1>, scalar_prefetch = 0 : i64, scratch_operands = 0 : i64, tpu.core_type = #tpu.core_type<tc>, window_params = [{pipeline_mode = #tpu.pipeline_mode<synchronous>, transform_indices = @transform_0, window_bounds = array<i64: 16, 32>}, {pipeline_mode = #tpu.pipeline_mode<synchronous>, transform_indices = @transform_1, window_bounds = array<i64: 32, 128>}, {pipeline_mode = #tpu.pipeline_mode<synchronous>, transform_indices = @transform_2, window_bounds = array<i64: 1, 128>}, {pipeline_mode = #tpu.pipeline_mode<synchronous>, transform_indices = @transform_3, window_bounds = array<i64: 8, 128, 16>}, {pipeline_mode = #tpu.pipeline_mode<synchronous>, transform_indices = @transform_4, window_bounds = array<i64: 8, 1, 16>}, {pipeline_mode = #tpu.pipeline_mode<synchronous>, transform_indices = @transform_5, window_bounds = array<i64: 8, 128, 16>}, {pipeline_mode = #tpu.pipeline_mode<synchronous>, transform_indices = @transform_6, window_bounds = array<i64: 8, 1, 16>}, {pipeline_mode = #tpu.pipeline_mode<synchronous>, transform_indices = @transform_7, window_bounds = array<i64: 8, 128, 16>}, {pipeline_mode = #tpu.pipeline_mode<synchronous>, transform_indices = @transform_8, window_bounds = array<i64: 8, 1, 16>}, {pipeline_mode = #tpu.pipeline_mode<synchronous>, transform_indices = @transform_9, window_bounds = array<i64: 8, 16, 128>}, {pipeline_mode = #tpu.pipeline_mode<synchronous>, transform_indices = @transform_10, window_bounds = array<i64: 1, 128>}, {pipeline_mode = #tpu.pipeline_mode<synchronous>, transform_indices = @transform_11, window_bounds = array<i64: 1, 128>}, {pipeline_mode = #tpu.pipeline_mode<synchronous>, transform_indices = @transform_12, window_bounds = array<i64: 1, 128>}, {pipeline_mode = #tpu.pipeline_mode<synchronous>, transform_indices = @transform_13, window_bounds = array<i64: 128, 2048>}, {pipeline_mode = #tpu.pipeline_mode<synchronous>, transform_indices = @transform_14, window_bounds = array<i64: 1, 2048>}, {pipeline_mode = #tpu.pipeline_mode<synchronous>, transform_indices = @transform_15, window_bounds = array<i64: 2048, 128>}, {pipeline_mode = #tpu.pipeline_mode<synchronous>, transform_indices = @transform_16, window_bounds = array<i64: 1, 128>}, {pipeline_mode = #tpu.pipeline_mode<synchronous>, transform_indices = @transform_17, window_bounds = array<i64: 1, 128>}, {pipeline_mode = #tpu.pipeline_mode<synchronous>, transform_indices = @transform_18, window_bounds = array<i64: 1, 128>}, {pipeline_mode = #tpu.pipeline_mode<synchronous>, transform_indices = @transform_19, window_bounds = array<i64: 8, 128, 16>}, {pipeline_mode = #tpu.pipeline_mode<synchronous>, transform_indices = @transform_20, window_bounds = array<i64: 8, 1, 16>}, {pipeline_mode = #tpu.pipeline_mode<synchronous>, transform_indices = @transform_21, window_bounds = array<i64: 8, 128, 16>}, {pipeline_mode = #tpu.pipeline_mode<synchronous>, transform_indices = @transform_22, window_bounds = array<i64: 8, 1, 16>}, {pipeline_mode = #tpu.pipeline_mode<synchronous>, transform_indices = @transform_23, window_bounds = array<i64: 8, 128, 16>}, {pipeline_mode = #tpu.pipeline_mode<synchronous>, transform_indices = @transform_24, window_bounds = array<i64: 8, 1, 16>}, {pipeline_mode = #tpu.pipeline_mode<synchronous>, transform_indices = @transform_25, window_bounds = array<i64: 8, 16, 128>}, {pipeline_mode = #tpu.pipeline_mode<synchronous>, transform_indices = @transform_26, window_bounds = array<i64: 1, 128>}, {pipeline_mode = #tpu.pipeline_mode<synchronous>, transform_indices = @transform_27, window_bounds = array<i64: 1, 128>}, {pipeline_mode = #tpu.pipeline_mode<synchronous>, transform_indices = @transform_28, window_bounds = array<i64: 1, 128>}, {pipeline_mode = #tpu.pipeline_mode<synchronous>, transform_indices = @transform_29, window_bounds = array<i64: 128, 2048>}, {pipeline_mode = #tpu.pipeline_mode<synchronous>, transform_indices = @transform_30, window_bounds = array<i64: 1, 2048>}, {pipeline_mode = #tpu.pipeline_mode<synchronous>, transform_indices = @transform_31, window_bounds = array<i64: 2048, 128>}, {pipeline_mode = #tpu.pipeline_mode<synchronous>, transform_indices = @transform_32, window_bounds = array<i64: 1, 128>}, {pipeline_mode = #tpu.pipeline_mode<synchronous>, transform_indices = @transform_33, window_bounds = array<i64: 1, 128>}, {pipeline_mode = #tpu.pipeline_mode<synchronous>, transform_indices = @transform_34, window_bounds = array<i64: 1, 128>}, {pipeline_mode = #tpu.pipeline_mode<synchronous>, transform_indices = @transform_35, window_bounds = array<i64: 8, 128, 16>}, {pipeline_mode = #tpu.pipeline_mode<synchronous>, transform_indices = @transform_36, window_bounds = array<i64: 8, 1, 16>}, {pipeline_mode = #tpu.pipeline_mode<synchronous>, transform_indices = @transform_37, window_bounds = array<i64: 8, 128, 16>}, {pipeline_mode = #tpu.pipeline_mode<synchronous>, transform_indices = @transform_38, window_bounds = array<i64: 8, 1, 16>}, {pipeline_mode = #tpu.pipeline_mode<synchronous>, transform_indices = @transform_39, window_bounds = array<i64: 8, 128, 16>}, {pipeline_mode = #tpu.pipeline_mode<synchronous>, transform_indices = @transform_40, window_bounds = array<i64: 8, 1, 16>}, {pipeline_mode = #tpu.pipeline_mode<synchronous>, transform_indices = @transform_41, window_bounds = array<i64: 8, 16, 128>}, {pipeline_mode = #tpu.pipeline_mode<synchronous>, transform_indices = @transform_42, window_bounds = array<i64: 1, 128>}, {pipeline_mode = #tpu.pipeline_mode<synchronous>, transform_indices = @transform_43, window_bounds = array<i64: 1, 128>}, {pipeline_mode = #tpu.pipeline_mode<synchronous>, transform_indices = @transform_44, window_bounds = array<i64: 1, 128>}, {pipeline_mode = #tpu.pipeline_mode<synchronous>, transform_indices = @transform_45, window_bounds = array<i64: 128, 2048>}, {pipeline_mode = #tpu.pipeline_mode<synchronous>, transform_indices = @transform_46, window_bounds = array<i64: 1, 2048>}, {pipeline_mode = #tpu.pipeline_mode<synchronous>, transform_indices = @transform_47, window_bounds = array<i64: 2048, 128>}, {pipeline_mode = #tpu.pipeline_mode<synchronous>, transform_indices = @transform_48, window_bounds = array<i64: 1, 128>}, {pipeline_mode = #tpu.pipeline_mode<synchronous>, transform_indices = @transform_49, window_bounds = array<i64: 1, 128>}, {pipeline_mode = #tpu.pipeline_mode<synchronous>, transform_indices = @transform_50, window_bounds = array<i64: 1, 128>}, {pipeline_mode = #tpu.pipeline_mode<synchronous>, transform_indices = @transform_51, window_bounds = array<i64: 128, 64>}, {pipeline_mode = #tpu.pipeline_mode<synchronous>, transform_indices = @transform_52, window_bounds = array<i64: 1, 64>}, {pipeline_mode = #tpu.pipeline_mode<synchronous>, transform_indices = @transform_53, window_bounds = array<i64: 1, 64>}, {pipeline_mode = #tpu.pipeline_mode<synchronous>, transform_indices = @transform_54, window_bounds = array<i64: 1, 1>}, {pipeline_mode = #tpu.pipeline_mode<synchronous>, transform_indices = @transform_55, window_bounds = array<i64: 2, 1>}]} {
    %c0 = arith.constant 0 : index
    %c0_0 = arith.constant 0 : index
    %0 = vector.load %arg1[%c0, %c0_0] : memref<16x32xf32, #tpu.memory_space<vmem>>, vector<16x32xf32>
    %c0_1 = arith.constant 0 : index
    %c0_2 = arith.constant 0 : index
    %1 = vector.load %arg2[%c0_1, %c0_2] : memref<32x128xf32, #tpu.memory_space<vmem>>, vector<32x128xf32>
    %cst = arith.constant dense<0.000000e+00> : vector<16x128xf32>
    %2 = tpu.matmul %0, %1, %cst {dimension_numbers = #tpu.dot_dimension_numbers<[1], [0], [0], [1], [0, 0, 1, 1], [], []>} : vector<16x32xf32>, vector<32x128xf32>, vector<16x128xf32> -> vector<16x128xf32>
    %c0_3 = arith.constant 0 : index
    %c0_4 = arith.constant 0 : index
    %3 = vector.load %arg3[%c0_3, %c0_4] : memref<1x128xf32, #tpu.memory_space<vmem>>, vector<1x128xf32>
    %4 = vector.broadcast %3 : vector<1x128xf32> to vector<16x128xf32>
    %5 = arith.addf %2, %4 : vector<16x128xf32>
    %6 = vector.extract_strided_slice %5 {offsets = [0, 0], sizes = [8, 128], strides = [1, 1]} : vector<16x128xf32> to vector<8x128xf32>
    %cst_5 = arith.constant 0.000000e+00 : f32
    %7 = vector.broadcast %cst_5 : f32 to vector<8x128xf32>
    %c0_i32 = arith.constant 0 : i32
    %c8_i32 = arith.constant 8 : i32
    %8 = arith.addi %c0_i32, %c8_i32 : i32
    %c1_i32 = arith.constant 1 : i32
    %9 = scf.for %arg57 = %c0_i32 to %8 step %c1_i32 iter_args(%arg58 = %7) -> (vector<8x128xf32>)  : i32 {
      %328 = arith.index_cast %arg57 : i32 to index
      %c0_178 = arith.constant 0 : index
      %c0_179 = arith.constant 0 : index
      %329 = vector.load %arg4[%328, %c0_178, %c0_179] : memref<8x128x16xf32, #tpu.memory_space<vmem>>, vector<1x128x16xf32>
      %330 = vector.shape_cast %329 : vector<1x128x16xf32> to vector<128x16xf32>
      %cst_180 = arith.constant dense<0.000000e+00> : vector<8x16xf32>
      %331 = tpu.matmul %6, %330, %cst_180 {dimension_numbers = #tpu.dot_dimension_numbers<[1], [0], [0], [1], [0, 0, 1, 1], [], []>} : vector<8x128xf32>, vector<128x16xf32>, vector<8x16xf32> -> vector<8x16xf32>
      %332 = arith.index_cast %arg57 : i32 to index
      %c0_181 = arith.constant 0 : index
      %c0_182 = arith.constant 0 : index
      %333 = vector.load %arg5[%332, %c0_181, %c0_182] : memref<8x1x16xf32, #tpu.memory_space<vmem>>, vector<1x1x16xf32>
      %334 = vector.shape_cast %333 : vector<1x1x16xf32> to vector<1x16xf32>
      %335 = vector.broadcast %334 : vector<1x16xf32> to vector<8x16xf32>
      %336 = arith.addf %331, %335 : vector<8x16xf32>
      %337 = arith.index_cast %arg57 : i32 to index
      %c0_183 = arith.constant 0 : index
      %c0_184 = arith.constant 0 : index
      %338 = vector.load %arg6[%337, %c0_183, %c0_184] : memref<8x128x16xf32, #tpu.memory_space<vmem>>, vector<1x128x16xf32>
      %339 = vector.shape_cast %338 : vector<1x128x16xf32> to vector<128x16xf32>
      %cst_185 = arith.constant dense<0.000000e+00> : vector<8x16xf32>
      %340 = tpu.matmul %6, %339, %cst_185 {dimension_numbers = #tpu.dot_dimension_numbers<[1], [0], [0], [1], [0, 0, 1, 1], [], []>} : vector<8x128xf32>, vector<128x16xf32>, vector<8x16xf32> -> vector<8x16xf32>
      %341 = arith.index_cast %arg57 : i32 to index
      %c0_186 = arith.constant 0 : index
      %c0_187 = arith.constant 0 : index
      %342 = vector.load %arg7[%341, %c0_186, %c0_187] : memref<8x1x16xf32, #tpu.memory_space<vmem>>, vector<1x1x16xf32>
      %343 = vector.shape_cast %342 : vector<1x1x16xf32> to vector<1x16xf32>
      %344 = vector.broadcast %343 : vector<1x16xf32> to vector<8x16xf32>
      %345 = arith.addf %340, %344 : vector<8x16xf32>
      %346 = arith.index_cast %arg57 : i32 to index
      %c0_188 = arith.constant 0 : index
      %c0_189 = arith.constant 0 : index
      %347 = vector.load %arg8[%346, %c0_188, %c0_189] : memref<8x128x16xf32, #tpu.memory_space<vmem>>, vector<1x128x16xf32>
      %348 = vector.shape_cast %347 : vector<1x128x16xf32> to vector<128x16xf32>
      %cst_190 = arith.constant dense<0.000000e+00> : vector<8x16xf32>
      %349 = tpu.matmul %6, %348, %cst_190 {dimension_numbers = #tpu.dot_dimension_numbers<[1], [0], [0], [1], [0, 0, 1, 1], [], []>} : vector<8x128xf32>, vector<128x16xf32>, vector<8x16xf32> -> vector<8x16xf32>
      %350 = arith.index_cast %arg57 : i32 to index
      %c0_191 = arith.constant 0 : index
      %c0_192 = arith.constant 0 : index
      %351 = vector.load %arg9[%350, %c0_191, %c0_192] : memref<8x1x16xf32, #tpu.memory_space<vmem>>, vector<1x1x16xf32>
      %352 = vector.shape_cast %351 : vector<1x1x16xf32> to vector<1x16xf32>
      %353 = vector.broadcast %352 : vector<1x16xf32> to vector<8x16xf32>
      %354 = arith.addf %349, %353 : vector<8x16xf32>
      %cst_193 = arith.constant dense<0.000000e+00> : vector<8x8xf32>
      %355 = tpu.matmul %336, %345, %cst_193 {dimension_numbers = #tpu.dot_dimension_numbers<[1], [1], [0], [0], [0, 0, 1, 0], [], []>} : vector<8x16xf32>, vector<8x16xf32>, vector<8x8xf32> -> vector<8x8xf32>
      %cst_194 = arith.constant 2.500000e-01 : f32
      %356 = vector.broadcast %cst_194 : f32 to vector<8x8xf32>
      %357 = arith.mulf %355, %356 : vector<8x8xf32>
      %cst_195 = arith.constant dense<0xFF800000> : vector<8xf32>
      %358 = vector.multi_reduction <maximumf>, %357, %cst_195 [1] : vector<8x8xf32> to vector<8xf32>
      %359 = vector.shape_cast %358 : vector<8xf32> to vector<8x1xf32>
      %360 = vector.broadcast %359 : vector<8x1xf32> to vector<8x8xf32>
      %361 = arith.subf %357, %360 : vector<8x8xf32>
      %362 = math.exp %361 : vector<8x8xf32>
      %cst_196 = arith.constant dense<0.000000e+00> : vector<8xf32>
      %363 = vector.multi_reduction <add>, %362, %cst_196 [1] : vector<8x8xf32> to vector<8xf32>
      %364 = vector.shape_cast %363 : vector<8xf32> to vector<8x1xf32>
      %365 = tpu.reciprocal %364 {approx = true} : vector<8x1xf32> -> vector<8x1xf32>
      %366 = vector.broadcast %365 : vector<8x1xf32> to vector<8x8xf32>
      %367 = arith.mulf %362, %366 : vector<8x8xf32>
      %cst_197 = arith.constant dense<0.000000e+00> : vector<8x16xf32>
      %368 = tpu.matmul %367, %354, %cst_197 {dimension_numbers = #tpu.dot_dimension_numbers<[1], [0], [0], [1], [0, 0, 1, 1], [], []>} : vector<8x8xf32>, vector<8x16xf32>, vector<8x16xf32> -> vector<8x16xf32>
      %369 = arith.index_cast %arg57 : i32 to index
      %c0_198 = arith.constant 0 : index
      %c0_199 = arith.constant 0 : index
      %370 = vector.load %arg10[%369, %c0_198, %c0_199] : memref<8x16x128xf32, #tpu.memory_space<vmem>>, vector<1x16x128xf32>
      %371 = vector.shape_cast %370 : vector<1x16x128xf32> to vector<16x128xf32>
      %cst_200 = arith.constant dense<0.000000e+00> : vector<8x128xf32>
      %372 = tpu.matmul %368, %371, %cst_200 {dimension_numbers = #tpu.dot_dimension_numbers<[1], [0], [0], [1], [0, 0, 1, 1], [], []>} : vector<8x16xf32>, vector<16x128xf32>, vector<8x128xf32> -> vector<8x128xf32>
      %373 = arith.addf %arg58, %372 : vector<8x128xf32>
      scf.yield %373 : vector<8x128xf32>
    }
    %c8_i32_6 = arith.constant 8 : i32
    %10 = arith.addf %6, %9 : vector<8x128xf32>
    %c0_7 = arith.constant 0 : index
    %c0_8 = arith.constant 0 : index
    %11 = vector.load %arg11[%c0_7, %c0_8] : memref<1x128xf32, #tpu.memory_space<vmem>>, vector<1x128xf32>
    %12 = vector.broadcast %11 : vector<1x128xf32> to vector<8x128xf32>
    %13 = arith.addf %10, %12 : vector<8x128xf32>
    %c0_9 = arith.constant 0 : index
    %c0_10 = arith.constant 0 : index
    %14 = vector.load %arg12[%c0_9, %c0_10] : memref<1x128xf32, #tpu.memory_space<vmem>>, vector<1x128xf32>
    %c0_11 = arith.constant 0 : index
    %c0_12 = arith.constant 0 : index
    %15 = vector.load %arg13[%c0_11, %c0_12] : memref<1x128xf32, #tpu.memory_space<vmem>>, vector<1x128xf32>
    %cst_13 = arith.constant dense<0.000000e+00> : vector<8xf32>
    %16 = vector.multi_reduction <add>, %13, %cst_13 [1] : vector<8x128xf32> to vector<8xf32>
    %17 = vector.shape_cast %16 : vector<8xf32> to vector<8x1xf32>
    %cst_14 = arith.constant 1.280000e+02 : f32
    %18 = vector.broadcast %cst_14 : f32 to vector<8x1xf32>
    %19 = arith.divf %17, %18 : vector<8x1xf32>
    %20 = vector.broadcast %19 : vector<8x1xf32> to vector<8x128xf32>
    %21 = arith.subf %13, %20 : vector<8x128xf32>
    %22 = arith.mulf %21, %21 : vector<8x128xf32>
    %cst_15 = arith.constant dense<0.000000e+00> : vector<8xf32>
    %23 = vector.multi_reduction <add>, %22, %cst_15 [1] : vector<8x128xf32> to vector<8xf32>
    %24 = vector.shape_cast %23 : vector<8xf32> to vector<8x1xf32>
    %cst_16 = arith.constant 1.280000e+02 : f32
    %25 = vector.broadcast %cst_16 : f32 to vector<8x1xf32>
    %26 = arith.divf %24, %25 : vector<8x1xf32>
    %cst_17 = arith.constant 9.99999974E-6 : f32
    %27 = vector.broadcast %cst_17 : f32 to vector<8x1xf32>
    %28 = arith.addf %26, %27 : vector<8x1xf32>
    %29 = math.rsqrt %28 : vector<8x1xf32>
    %30 = vector.broadcast %29 : vector<8x1xf32> to vector<8x128xf32>
    %31 = arith.mulf %21, %30 : vector<8x128xf32>
    %32 = vector.broadcast %14 : vector<1x128xf32> to vector<8x128xf32>
    %33 = arith.mulf %31, %32 : vector<8x128xf32>
    %34 = vector.broadcast %15 : vector<1x128xf32> to vector<8x128xf32>
    %35 = arith.addf %33, %34 : vector<8x128xf32>
    %36 = vector.extract_strided_slice %5 {offsets = [8, 0], sizes = [8, 128], strides = [1, 1]} : vector<16x128xf32> to vector<8x128xf32>
    %cst_18 = arith.constant 0.000000e+00 : f32
    %37 = vector.broadcast %cst_18 : f32 to vector<8x128xf32>
    %c0_i32_19 = arith.constant 0 : i32
    %c8_i32_20 = arith.constant 8 : i32
    %38 = arith.addi %c0_i32_19, %c8_i32_20 : i32
    %c1_i32_21 = arith.constant 1 : i32
    %39 = scf.for %arg57 = %c0_i32_19 to %38 step %c1_i32_21 iter_args(%arg58 = %37) -> (vector<8x128xf32>)  : i32 {
      %328 = arith.index_cast %arg57 : i32 to index
      %c0_178 = arith.constant 0 : index
      %c0_179 = arith.constant 0 : index
      %329 = vector.load %arg4[%328, %c0_178, %c0_179] : memref<8x128x16xf32, #tpu.memory_space<vmem>>, vector<1x128x16xf32>
      %330 = vector.shape_cast %329 : vector<1x128x16xf32> to vector<128x16xf32>
      %cst_180 = arith.constant dense<0.000000e+00> : vector<8x16xf32>
      %331 = tpu.matmul %36, %330, %cst_180 {dimension_numbers = #tpu.dot_dimension_numbers<[1], [0], [0], [1], [0, 0, 1, 1], [], []>} : vector<8x128xf32>, vector<128x16xf32>, vector<8x16xf32> -> vector<8x16xf32>
      %332 = arith.index_cast %arg57 : i32 to index
      %c0_181 = arith.constant 0 : index
      %c0_182 = arith.constant 0 : index
      %333 = vector.load %arg5[%332, %c0_181, %c0_182] : memref<8x1x16xf32, #tpu.memory_space<vmem>>, vector<1x1x16xf32>
      %334 = vector.shape_cast %333 : vector<1x1x16xf32> to vector<1x16xf32>
      %335 = vector.broadcast %334 : vector<1x16xf32> to vector<8x16xf32>
      %336 = arith.addf %331, %335 : vector<8x16xf32>
      %337 = arith.index_cast %arg57 : i32 to index
      %c0_183 = arith.constant 0 : index
      %c0_184 = arith.constant 0 : index
      %338 = vector.load %arg6[%337, %c0_183, %c0_184] : memref<8x128x16xf32, #tpu.memory_space<vmem>>, vector<1x128x16xf32>
      %339 = vector.shape_cast %338 : vector<1x128x16xf32> to vector<128x16xf32>
      %cst_185 = arith.constant dense<0.000000e+00> : vector<8x16xf32>
      %340 = tpu.matmul %36, %339, %cst_185 {dimension_numbers = #tpu.dot_dimension_numbers<[1], [0], [0], [1], [0, 0, 1, 1], [], []>} : vector<8x128xf32>, vector<128x16xf32>, vector<8x16xf32> -> vector<8x16xf32>
      %341 = arith.index_cast %arg57 : i32 to index
      %c0_186 = arith.constant 0 : index
      %c0_187 = arith.constant 0 : index
      %342 = vector.load %arg7[%341, %c0_186, %c0_187] : memref<8x1x16xf32, #tpu.memory_space<vmem>>, vector<1x1x16xf32>
      %343 = vector.shape_cast %342 : vector<1x1x16xf32> to vector<1x16xf32>
      %344 = vector.broadcast %343 : vector<1x16xf32> to vector<8x16xf32>
      %345 = arith.addf %340, %344 : vector<8x16xf32>
      %346 = arith.index_cast %arg57 : i32 to index
      %c0_188 = arith.constant 0 : index
      %c0_189 = arith.constant 0 : index
      %347 = vector.load %arg8[%346, %c0_188, %c0_189] : memref<8x128x16xf32, #tpu.memory_space<vmem>>, vector<1x128x16xf32>
      %348 = vector.shape_cast %347 : vector<1x128x16xf32> to vector<128x16xf32>
      %cst_190 = arith.constant dense<0.000000e+00> : vector<8x16xf32>
      %349 = tpu.matmul %36, %348, %cst_190 {dimension_numbers = #tpu.dot_dimension_numbers<[1], [0], [0], [1], [0, 0, 1, 1], [], []>} : vector<8x128xf32>, vector<128x16xf32>, vector<8x16xf32> -> vector<8x16xf32>
      %350 = arith.index_cast %arg57 : i32 to index
      %c0_191 = arith.constant 0 : index
      %c0_192 = arith.constant 0 : index
      %351 = vector.load %arg9[%350, %c0_191, %c0_192] : memref<8x1x16xf32, #tpu.memory_space<vmem>>, vector<1x1x16xf32>
      %352 = vector.shape_cast %351 : vector<1x1x16xf32> to vector<1x16xf32>
      %353 = vector.broadcast %352 : vector<1x16xf32> to vector<8x16xf32>
      %354 = arith.addf %349, %353 : vector<8x16xf32>
      %cst_193 = arith.constant dense<0.000000e+00> : vector<8x8xf32>
      %355 = tpu.matmul %336, %345, %cst_193 {dimension_numbers = #tpu.dot_dimension_numbers<[1], [1], [0], [0], [0, 0, 1, 0], [], []>} : vector<8x16xf32>, vector<8x16xf32>, vector<8x8xf32> -> vector<8x8xf32>
      %cst_194 = arith.constant 2.500000e-01 : f32
      %356 = vector.broadcast %cst_194 : f32 to vector<8x8xf32>
      %357 = arith.mulf %355, %356 : vector<8x8xf32>
      %cst_195 = arith.constant dense<0xFF800000> : vector<8xf32>
      %358 = vector.multi_reduction <maximumf>, %357, %cst_195 [1] : vector<8x8xf32> to vector<8xf32>
      %359 = vector.shape_cast %358 : vector<8xf32> to vector<8x1xf32>
      %360 = vector.broadcast %359 : vector<8x1xf32> to vector<8x8xf32>
      %361 = arith.subf %357, %360 : vector<8x8xf32>
      %362 = math.exp %361 : vector<8x8xf32>
      %cst_196 = arith.constant dense<0.000000e+00> : vector<8xf32>
      %363 = vector.multi_reduction <add>, %362, %cst_196 [1] : vector<8x8xf32> to vector<8xf32>
      %364 = vector.shape_cast %363 : vector<8xf32> to vector<8x1xf32>
      %365 = tpu.reciprocal %364 {approx = true} : vector<8x1xf32> -> vector<8x1xf32>
      %366 = vector.broadcast %365 : vector<8x1xf32> to vector<8x8xf32>
      %367 = arith.mulf %362, %366 : vector<8x8xf32>
      %cst_197 = arith.constant dense<0.000000e+00> : vector<8x16xf32>
      %368 = tpu.matmul %367, %354, %cst_197 {dimension_numbers = #tpu.dot_dimension_numbers<[1], [0], [0], [1], [0, 0, 1, 1], [], []>} : vector<8x8xf32>, vector<8x16xf32>, vector<8x16xf32> -> vector<8x16xf32>
      %369 = arith.index_cast %arg57 : i32 to index
      %c0_198 = arith.constant 0 : index
      %c0_199 = arith.constant 0 : index
      %370 = vector.load %arg10[%369, %c0_198, %c0_199] : memref<8x16x128xf32, #tpu.memory_space<vmem>>, vector<1x16x128xf32>
      %371 = vector.shape_cast %370 : vector<1x16x128xf32> to vector<16x128xf32>
      %cst_200 = arith.constant dense<0.000000e+00> : vector<8x128xf32>
      %372 = tpu.matmul %368, %371, %cst_200 {dimension_numbers = #tpu.dot_dimension_numbers<[1], [0], [0], [1], [0, 0, 1, 1], [], []>} : vector<8x16xf32>, vector<16x128xf32>, vector<8x128xf32> -> vector<8x128xf32>
      %373 = arith.addf %arg58, %372 : vector<8x128xf32>
      scf.yield %373 : vector<8x128xf32>
    }
    %c8_i32_22 = arith.constant 8 : i32
    %40 = arith.addf %36, %39 : vector<8x128xf32>
    %c0_23 = arith.constant 0 : index
    %c0_24 = arith.constant 0 : index
    %41 = vector.load %arg11[%c0_23, %c0_24] : memref<1x128xf32, #tpu.memory_space<vmem>>, vector<1x128xf32>
    %42 = vector.broadcast %41 : vector<1x128xf32> to vector<8x128xf32>
    %43 = arith.addf %40, %42 : vector<8x128xf32>
    %c0_25 = arith.constant 0 : index
    %c0_26 = arith.constant 0 : index
    %44 = vector.load %arg12[%c0_25, %c0_26] : memref<1x128xf32, #tpu.memory_space<vmem>>, vector<1x128xf32>
    %c0_27 = arith.constant 0 : index
    %c0_28 = arith.constant 0 : index
    %45 = vector.load %arg13[%c0_27, %c0_28] : memref<1x128xf32, #tpu.memory_space<vmem>>, vector<1x128xf32>
    %cst_29 = arith.constant dense<0.000000e+00> : vector<8xf32>
    %46 = vector.multi_reduction <add>, %43, %cst_29 [1] : vector<8x128xf32> to vector<8xf32>
    %47 = vector.shape_cast %46 : vector<8xf32> to vector<8x1xf32>
    %cst_30 = arith.constant 1.280000e+02 : f32
    %48 = vector.broadcast %cst_30 : f32 to vector<8x1xf32>
    %49 = arith.divf %47, %48 : vector<8x1xf32>
    %50 = vector.broadcast %49 : vector<8x1xf32> to vector<8x128xf32>
    %51 = arith.subf %43, %50 : vector<8x128xf32>
    %52 = arith.mulf %51, %51 : vector<8x128xf32>
    %cst_31 = arith.constant dense<0.000000e+00> : vector<8xf32>
    %53 = vector.multi_reduction <add>, %52, %cst_31 [1] : vector<8x128xf32> to vector<8xf32>
    %54 = vector.shape_cast %53 : vector<8xf32> to vector<8x1xf32>
    %cst_32 = arith.constant 1.280000e+02 : f32
    %55 = vector.broadcast %cst_32 : f32 to vector<8x1xf32>
    %56 = arith.divf %54, %55 : vector<8x1xf32>
    %cst_33 = arith.constant 9.99999974E-6 : f32
    %57 = vector.broadcast %cst_33 : f32 to vector<8x1xf32>
    %58 = arith.addf %56, %57 : vector<8x1xf32>
    %59 = math.rsqrt %58 : vector<8x1xf32>
    %60 = vector.broadcast %59 : vector<8x1xf32> to vector<8x128xf32>
    %61 = arith.mulf %51, %60 : vector<8x128xf32>
    %62 = vector.broadcast %44 : vector<1x128xf32> to vector<8x128xf32>
    %63 = arith.mulf %61, %62 : vector<8x128xf32>
    %64 = vector.broadcast %45 : vector<1x128xf32> to vector<8x128xf32>
    %65 = arith.addf %63, %64 : vector<8x128xf32>
    %66 = tpu.concatenate %35, %65 in 0 : vector<8x128xf32>, vector<8x128xf32> -> vector<16x128xf32>
    %c0_34 = arith.constant 0 : index
    %c0_35 = arith.constant 0 : index
    %67 = vector.load %arg14[%c0_34, %c0_35] : memref<128x2048xf32, #tpu.memory_space<vmem>>, vector<128x2048xf32>
    %cst_36 = arith.constant dense<0.000000e+00> : vector<16x2048xf32>
    %68 = tpu.matmul %66, %67, %cst_36 {dimension_numbers = #tpu.dot_dimension_numbers<[1], [0], [0], [1], [0, 0, 1, 1], [], []>} : vector<16x128xf32>, vector<128x2048xf32>, vector<16x2048xf32> -> vector<16x2048xf32>
    %c0_37 = arith.constant 0 : index
    %c0_38 = arith.constant 0 : index
    %69 = vector.load %arg15[%c0_37, %c0_38] : memref<1x2048xf32, #tpu.memory_space<vmem>>, vector<1x2048xf32>
    %70 = vector.broadcast %69 : vector<1x2048xf32> to vector<16x2048xf32>
    %71 = arith.addf %68, %70 : vector<16x2048xf32>
    %cst_39 = arith.constant 0.000000e+00 : f32
    %72 = vector.broadcast %cst_39 : f32 to vector<16x2048xf32>
    %73 = arith.maximumf %71, %72 : vector<16x2048xf32>
    %c0_40 = arith.constant 0 : index
    %c0_41 = arith.constant 0 : index
    %74 = vector.load %arg16[%c0_40, %c0_41] : memref<2048x128xf32, #tpu.memory_space<vmem>>, vector<2048x128xf32>
    %cst_42 = arith.constant dense<0.000000e+00> : vector<16x128xf32>
    %75 = tpu.matmul %73, %74, %cst_42 {dimension_numbers = #tpu.dot_dimension_numbers<[1], [0], [0], [1], [0, 0, 1, 1], [], []>} : vector<16x2048xf32>, vector<2048x128xf32>, vector<16x128xf32> -> vector<16x128xf32>
    %c0_43 = arith.constant 0 : index
    %c0_44 = arith.constant 0 : index
    %76 = vector.load %arg17[%c0_43, %c0_44] : memref<1x128xf32, #tpu.memory_space<vmem>>, vector<1x128xf32>
    %77 = vector.broadcast %76 : vector<1x128xf32> to vector<16x128xf32>
    %78 = arith.addf %75, %77 : vector<16x128xf32>
    %79 = arith.addf %66, %78 : vector<16x128xf32>
    %c0_45 = arith.constant 0 : index
    %c0_46 = arith.constant 0 : index
    %80 = vector.load %arg18[%c0_45, %c0_46] : memref<1x128xf32, #tpu.memory_space<vmem>>, vector<1x128xf32>
    %c0_47 = arith.constant 0 : index
    %c0_48 = arith.constant 0 : index
    %81 = vector.load %arg19[%c0_47, %c0_48] : memref<1x128xf32, #tpu.memory_space<vmem>>, vector<1x128xf32>
    %cst_49 = arith.constant dense<0.000000e+00> : vector<16xf32>
    %82 = vector.multi_reduction <add>, %79, %cst_49 [1] : vector<16x128xf32> to vector<16xf32>
    %83 = vector.shape_cast %82 : vector<16xf32> to vector<16x1xf32>
    %cst_50 = arith.constant 1.280000e+02 : f32
    %84 = vector.broadcast %cst_50 : f32 to vector<16x1xf32>
    %85 = arith.divf %83, %84 : vector<16x1xf32>
    %86 = vector.broadcast %85 : vector<16x1xf32> to vector<16x128xf32>
    %87 = arith.subf %79, %86 : vector<16x128xf32>
    %88 = arith.mulf %87, %87 : vector<16x128xf32>
    %cst_51 = arith.constant dense<0.000000e+00> : vector<16xf32>
    %89 = vector.multi_reduction <add>, %88, %cst_51 [1] : vector<16x128xf32> to vector<16xf32>
    %90 = vector.shape_cast %89 : vector<16xf32> to vector<16x1xf32>
    %cst_52 = arith.constant 1.280000e+02 : f32
    %91 = vector.broadcast %cst_52 : f32 to vector<16x1xf32>
    %92 = arith.divf %90, %91 : vector<16x1xf32>
    %cst_53 = arith.constant 9.99999974E-6 : f32
    %93 = vector.broadcast %cst_53 : f32 to vector<16x1xf32>
    %94 = arith.addf %92, %93 : vector<16x1xf32>
    %95 = math.rsqrt %94 : vector<16x1xf32>
    %96 = vector.broadcast %95 : vector<16x1xf32> to vector<16x128xf32>
    %97 = arith.mulf %87, %96 : vector<16x128xf32>
    %98 = vector.broadcast %80 : vector<1x128xf32> to vector<16x128xf32>
    %99 = arith.mulf %97, %98 : vector<16x128xf32>
    %100 = vector.broadcast %81 : vector<1x128xf32> to vector<16x128xf32>
    %101 = arith.addf %99, %100 : vector<16x128xf32>
    %102 = vector.extract_strided_slice %101 {offsets = [0, 0], sizes = [8, 128], strides = [1, 1]} : vector<16x128xf32> to vector<8x128xf32>
    %cst_54 = arith.constant 0.000000e+00 : f32
    %103 = vector.broadcast %cst_54 : f32 to vector<8x128xf32>
    %c0_i32_55 = arith.constant 0 : i32
    %c8_i32_56 = arith.constant 8 : i32
    %104 = arith.addi %c0_i32_55, %c8_i32_56 : i32
    %c1_i32_57 = arith.constant 1 : i32
    %105 = scf.for %arg57 = %c0_i32_55 to %104 step %c1_i32_57 iter_args(%arg58 = %103) -> (vector<8x128xf32>)  : i32 {
      %328 = arith.index_cast %arg57 : i32 to index
      %c0_178 = arith.constant 0 : index
      %c0_179 = arith.constant 0 : index
      %329 = vector.load %arg20[%328, %c0_178, %c0_179] : memref<8x128x16xf32, #tpu.memory_space<vmem>>, vector<1x128x16xf32>
      %330 = vector.shape_cast %329 : vector<1x128x16xf32> to vector<128x16xf32>
      %cst_180 = arith.constant dense<0.000000e+00> : vector<8x16xf32>
      %331 = tpu.matmul %102, %330, %cst_180 {dimension_numbers = #tpu.dot_dimension_numbers<[1], [0], [0], [1], [0, 0, 1, 1], [], []>} : vector<8x128xf32>, vector<128x16xf32>, vector<8x16xf32> -> vector<8x16xf32>
      %332 = arith.index_cast %arg57 : i32 to index
      %c0_181 = arith.constant 0 : index
      %c0_182 = arith.constant 0 : index
      %333 = vector.load %arg21[%332, %c0_181, %c0_182] : memref<8x1x16xf32, #tpu.memory_space<vmem>>, vector<1x1x16xf32>
      %334 = vector.shape_cast %333 : vector<1x1x16xf32> to vector<1x16xf32>
      %335 = vector.broadcast %334 : vector<1x16xf32> to vector<8x16xf32>
      %336 = arith.addf %331, %335 : vector<8x16xf32>
      %337 = arith.index_cast %arg57 : i32 to index
      %c0_183 = arith.constant 0 : index
      %c0_184 = arith.constant 0 : index
      %338 = vector.load %arg22[%337, %c0_183, %c0_184] : memref<8x128x16xf32, #tpu.memory_space<vmem>>, vector<1x128x16xf32>
      %339 = vector.shape_cast %338 : vector<1x128x16xf32> to vector<128x16xf32>
      %cst_185 = arith.constant dense<0.000000e+00> : vector<8x16xf32>
      %340 = tpu.matmul %102, %339, %cst_185 {dimension_numbers = #tpu.dot_dimension_numbers<[1], [0], [0], [1], [0, 0, 1, 1], [], []>} : vector<8x128xf32>, vector<128x16xf32>, vector<8x16xf32> -> vector<8x16xf32>
      %341 = arith.index_cast %arg57 : i32 to index
      %c0_186 = arith.constant 0 : index
      %c0_187 = arith.constant 0 : index
      %342 = vector.load %arg23[%341, %c0_186, %c0_187] : memref<8x1x16xf32, #tpu.memory_space<vmem>>, vector<1x1x16xf32>
      %343 = vector.shape_cast %342 : vector<1x1x16xf32> to vector<1x16xf32>
      %344 = vector.broadcast %343 : vector<1x16xf32> to vector<8x16xf32>
      %345 = arith.addf %340, %344 : vector<8x16xf32>
      %346 = arith.index_cast %arg57 : i32 to index
      %c0_188 = arith.constant 0 : index
      %c0_189 = arith.constant 0 : index
      %347 = vector.load %arg24[%346, %c0_188, %c0_189] : memref<8x128x16xf32, #tpu.memory_space<vmem>>, vector<1x128x16xf32>
      %348 = vector.shape_cast %347 : vector<1x128x16xf32> to vector<128x16xf32>
      %cst_190 = arith.constant dense<0.000000e+00> : vector<8x16xf32>
      %349 = tpu.matmul %102, %348, %cst_190 {dimension_numbers = #tpu.dot_dimension_numbers<[1], [0], [0], [1], [0, 0, 1, 1], [], []>} : vector<8x128xf32>, vector<128x16xf32>, vector<8x16xf32> -> vector<8x16xf32>
      %350 = arith.index_cast %arg57 : i32 to index
      %c0_191 = arith.constant 0 : index
      %c0_192 = arith.constant 0 : index
      %351 = vector.load %arg25[%350, %c0_191, %c0_192] : memref<8x1x16xf32, #tpu.memory_space<vmem>>, vector<1x1x16xf32>
      %352 = vector.shape_cast %351 : vector<1x1x16xf32> to vector<1x16xf32>
      %353 = vector.broadcast %352 : vector<1x16xf32> to vector<8x16xf32>
      %354 = arith.addf %349, %353 : vector<8x16xf32>
      %cst_193 = arith.constant dense<0.000000e+00> : vector<8x8xf32>
      %355 = tpu.matmul %336, %345, %cst_193 {dimension_numbers = #tpu.dot_dimension_numbers<[1], [1], [0], [0], [0, 0, 1, 0], [], []>} : vector<8x16xf32>, vector<8x16xf32>, vector<8x8xf32> -> vector<8x8xf32>
      %cst_194 = arith.constant 2.500000e-01 : f32
      %356 = vector.broadcast %cst_194 : f32 to vector<8x8xf32>
      %357 = arith.mulf %355, %356 : vector<8x8xf32>
      %cst_195 = arith.constant dense<0xFF800000> : vector<8xf32>
      %358 = vector.multi_reduction <maximumf>, %357, %cst_195 [1] : vector<8x8xf32> to vector<8xf32>
      %359 = vector.shape_cast %358 : vector<8xf32> to vector<8x1xf32>
      %360 = vector.broadcast %359 : vector<8x1xf32> to vector<8x8xf32>
      %361 = arith.subf %357, %360 : vector<8x8xf32>
      %362 = math.exp %361 : vector<8x8xf32>
      %cst_196 = arith.constant dense<0.000000e+00> : vector<8xf32>
      %363 = vector.multi_reduction <add>, %362, %cst_196 [1] : vector<8x8xf32> to vector<8xf32>
      %364 = vector.shape_cast %363 : vector<8xf32> to vector<8x1xf32>
      %365 = tpu.reciprocal %364 {approx = true} : vector<8x1xf32> -> vector<8x1xf32>
      %366 = vector.broadcast %365 : vector<8x1xf32> to vector<8x8xf32>
      %367 = arith.mulf %362, %366 : vector<8x8xf32>
      %cst_197 = arith.constant dense<0.000000e+00> : vector<8x16xf32>
      %368 = tpu.matmul %367, %354, %cst_197 {dimension_numbers = #tpu.dot_dimension_numbers<[1], [0], [0], [1], [0, 0, 1, 1], [], []>} : vector<8x8xf32>, vector<8x16xf32>, vector<8x16xf32> -> vector<8x16xf32>
      %369 = arith.index_cast %arg57 : i32 to index
      %c0_198 = arith.constant 0 : index
      %c0_199 = arith.constant 0 : index
      %370 = vector.load %arg26[%369, %c0_198, %c0_199] : memref<8x16x128xf32, #tpu.memory_space<vmem>>, vector<1x16x128xf32>
      %371 = vector.shape_cast %370 : vector<1x16x128xf32> to vector<16x128xf32>
      %cst_200 = arith.constant dense<0.000000e+00> : vector<8x128xf32>
      %372 = tpu.matmul %368, %371, %cst_200 {dimension_numbers = #tpu.dot_dimension_numbers<[1], [0], [0], [1], [0, 0, 1, 1], [], []>} : vector<8x16xf32>, vector<16x128xf32>, vector<8x128xf32> -> vector<8x128xf32>
      %373 = arith.addf %arg58, %372 : vector<8x128xf32>
      scf.yield %373 : vector<8x128xf32>
    }
    %c8_i32_58 = arith.constant 8 : i32
    %106 = arith.addf %102, %105 : vector<8x128xf32>
    %c0_59 = arith.constant 0 : index
    %c0_60 = arith.constant 0 : index
    %107 = vector.load %arg27[%c0_59, %c0_60] : memref<1x128xf32, #tpu.memory_space<vmem>>, vector<1x128xf32>
    %108 = vector.broadcast %107 : vector<1x128xf32> to vector<8x128xf32>
    %109 = arith.addf %106, %108 : vector<8x128xf32>
    %c0_61 = arith.constant 0 : index
    %c0_62 = arith.constant 0 : index
    %110 = vector.load %arg28[%c0_61, %c0_62] : memref<1x128xf32, #tpu.memory_space<vmem>>, vector<1x128xf32>
    %c0_63 = arith.constant 0 : index
    %c0_64 = arith.constant 0 : index
    %111 = vector.load %arg29[%c0_63, %c0_64] : memref<1x128xf32, #tpu.memory_space<vmem>>, vector<1x128xf32>
    %cst_65 = arith.constant dense<0.000000e+00> : vector<8xf32>
    %112 = vector.multi_reduction <add>, %109, %cst_65 [1] : vector<8x128xf32> to vector<8xf32>
    %113 = vector.shape_cast %112 : vector<8xf32> to vector<8x1xf32>
    %cst_66 = arith.constant 1.280000e+02 : f32
    %114 = vector.broadcast %cst_66 : f32 to vector<8x1xf32>
    %115 = arith.divf %113, %114 : vector<8x1xf32>
    %116 = vector.broadcast %115 : vector<8x1xf32> to vector<8x128xf32>
    %117 = arith.subf %109, %116 : vector<8x128xf32>
    %118 = arith.mulf %117, %117 : vector<8x128xf32>
    %cst_67 = arith.constant dense<0.000000e+00> : vector<8xf32>
    %119 = vector.multi_reduction <add>, %118, %cst_67 [1] : vector<8x128xf32> to vector<8xf32>
    %120 = vector.shape_cast %119 : vector<8xf32> to vector<8x1xf32>
    %cst_68 = arith.constant 1.280000e+02 : f32
    %121 = vector.broadcast %cst_68 : f32 to vector<8x1xf32>
    %122 = arith.divf %120, %121 : vector<8x1xf32>
    %cst_69 = arith.constant 9.99999974E-6 : f32
    %123 = vector.broadcast %cst_69 : f32 to vector<8x1xf32>
    %124 = arith.addf %122, %123 : vector<8x1xf32>
    %125 = math.rsqrt %124 : vector<8x1xf32>
    %126 = vector.broadcast %125 : vector<8x1xf32> to vector<8x128xf32>
    %127 = arith.mulf %117, %126 : vector<8x128xf32>
    %128 = vector.broadcast %110 : vector<1x128xf32> to vector<8x128xf32>
    %129 = arith.mulf %127, %128 : vector<8x128xf32>
    %130 = vector.broadcast %111 : vector<1x128xf32> to vector<8x128xf32>
    %131 = arith.addf %129, %130 : vector<8x128xf32>
    %132 = vector.extract_strided_slice %101 {offsets = [8, 0], sizes = [8, 128], strides = [1, 1]} : vector<16x128xf32> to vector<8x128xf32>
    %cst_70 = arith.constant 0.000000e+00 : f32
    %133 = vector.broadcast %cst_70 : f32 to vector<8x128xf32>
    %c0_i32_71 = arith.constant 0 : i32
    %c8_i32_72 = arith.constant 8 : i32
    %134 = arith.addi %c0_i32_71, %c8_i32_72 : i32
    %c1_i32_73 = arith.constant 1 : i32
    %135 = scf.for %arg57 = %c0_i32_71 to %134 step %c1_i32_73 iter_args(%arg58 = %133) -> (vector<8x128xf32>)  : i32 {
      %328 = arith.index_cast %arg57 : i32 to index
      %c0_178 = arith.constant 0 : index
      %c0_179 = arith.constant 0 : index
      %329 = vector.load %arg20[%328, %c0_178, %c0_179] : memref<8x128x16xf32, #tpu.memory_space<vmem>>, vector<1x128x16xf32>
      %330 = vector.shape_cast %329 : vector<1x128x16xf32> to vector<128x16xf32>
      %cst_180 = arith.constant dense<0.000000e+00> : vector<8x16xf32>
      %331 = tpu.matmul %132, %330, %cst_180 {dimension_numbers = #tpu.dot_dimension_numbers<[1], [0], [0], [1], [0, 0, 1, 1], [], []>} : vector<8x128xf32>, vector<128x16xf32>, vector<8x16xf32> -> vector<8x16xf32>
      %332 = arith.index_cast %arg57 : i32 to index
      %c0_181 = arith.constant 0 : index
      %c0_182 = arith.constant 0 : index
      %333 = vector.load %arg21[%332, %c0_181, %c0_182] : memref<8x1x16xf32, #tpu.memory_space<vmem>>, vector<1x1x16xf32>
      %334 = vector.shape_cast %333 : vector<1x1x16xf32> to vector<1x16xf32>
      %335 = vector.broadcast %334 : vector<1x16xf32> to vector<8x16xf32>
      %336 = arith.addf %331, %335 : vector<8x16xf32>
      %337 = arith.index_cast %arg57 : i32 to index
      %c0_183 = arith.constant 0 : index
      %c0_184 = arith.constant 0 : index
      %338 = vector.load %arg22[%337, %c0_183, %c0_184] : memref<8x128x16xf32, #tpu.memory_space<vmem>>, vector<1x128x16xf32>
      %339 = vector.shape_cast %338 : vector<1x128x16xf32> to vector<128x16xf32>
      %cst_185 = arith.constant dense<0.000000e+00> : vector<8x16xf32>
      %340 = tpu.matmul %132, %339, %cst_185 {dimension_numbers = #tpu.dot_dimension_numbers<[1], [0], [0], [1], [0, 0, 1, 1], [], []>} : vector<8x128xf32>, vector<128x16xf32>, vector<8x16xf32> -> vector<8x16xf32>
      %341 = arith.index_cast %arg57 : i32 to index
      %c0_186 = arith.constant 0 : index
      %c0_187 = arith.constant 0 : index
      %342 = vector.load %arg23[%341, %c0_186, %c0_187] : memref<8x1x16xf32, #tpu.memory_space<vmem>>, vector<1x1x16xf32>
      %343 = vector.shape_cast %342 : vector<1x1x16xf32> to vector<1x16xf32>
      %344 = vector.broadcast %343 : vector<1x16xf32> to vector<8x16xf32>
      %345 = arith.addf %340, %344 : vector<8x16xf32>
      %346 = arith.index_cast %arg57 : i32 to index
      %c0_188 = arith.constant 0 : index
      %c0_189 = arith.constant 0 : index
      %347 = vector.load %arg24[%346, %c0_188, %c0_189] : memref<8x128x16xf32, #tpu.memory_space<vmem>>, vector<1x128x16xf32>
      %348 = vector.shape_cast %347 : vector<1x128x16xf32> to vector<128x16xf32>
      %cst_190 = arith.constant dense<0.000000e+00> : vector<8x16xf32>
      %349 = tpu.matmul %132, %348, %cst_190 {dimension_numbers = #tpu.dot_dimension_numbers<[1], [0], [0], [1], [0, 0, 1, 1], [], []>} : vector<8x128xf32>, vector<128x16xf32>, vector<8x16xf32> -> vector<8x16xf32>
      %350 = arith.index_cast %arg57 : i32 to index
      %c0_191 = arith.constant 0 : index
      %c0_192 = arith.constant 0 : index
      %351 = vector.load %arg25[%350, %c0_191, %c0_192] : memref<8x1x16xf32, #tpu.memory_space<vmem>>, vector<1x1x16xf32>
      %352 = vector.shape_cast %351 : vector<1x1x16xf32> to vector<1x16xf32>
      %353 = vector.broadcast %352 : vector<1x16xf32> to vector<8x16xf32>
      %354 = arith.addf %349, %353 : vector<8x16xf32>
      %cst_193 = arith.constant dense<0.000000e+00> : vector<8x8xf32>
      %355 = tpu.matmul %336, %345, %cst_193 {dimension_numbers = #tpu.dot_dimension_numbers<[1], [1], [0], [0], [0, 0, 1, 0], [], []>} : vector<8x16xf32>, vector<8x16xf32>, vector<8x8xf32> -> vector<8x8xf32>
      %cst_194 = arith.constant 2.500000e-01 : f32
      %356 = vector.broadcast %cst_194 : f32 to vector<8x8xf32>
      %357 = arith.mulf %355, %356 : vector<8x8xf32>
      %cst_195 = arith.constant dense<0xFF800000> : vector<8xf32>
      %358 = vector.multi_reduction <maximumf>, %357, %cst_195 [1] : vector<8x8xf32> to vector<8xf32>
      %359 = vector.shape_cast %358 : vector<8xf32> to vector<8x1xf32>
      %360 = vector.broadcast %359 : vector<8x1xf32> to vector<8x8xf32>
      %361 = arith.subf %357, %360 : vector<8x8xf32>
      %362 = math.exp %361 : vector<8x8xf32>
      %cst_196 = arith.constant dense<0.000000e+00> : vector<8xf32>
      %363 = vector.multi_reduction <add>, %362, %cst_196 [1] : vector<8x8xf32> to vector<8xf32>
      %364 = vector.shape_cast %363 : vector<8xf32> to vector<8x1xf32>
      %365 = tpu.reciprocal %364 {approx = true} : vector<8x1xf32> -> vector<8x1xf32>
      %366 = vector.broadcast %365 : vector<8x1xf32> to vector<8x8xf32>
      %367 = arith.mulf %362, %366 : vector<8x8xf32>
      %cst_197 = arith.constant dense<0.000000e+00> : vector<8x16xf32>
      %368 = tpu.matmul %367, %354, %cst_197 {dimension_numbers = #tpu.dot_dimension_numbers<[1], [0], [0], [1], [0, 0, 1, 1], [], []>} : vector<8x8xf32>, vector<8x16xf32>, vector<8x16xf32> -> vector<8x16xf32>
      %369 = arith.index_cast %arg57 : i32 to index
      %c0_198 = arith.constant 0 : index
      %c0_199 = arith.constant 0 : index
      %370 = vector.load %arg26[%369, %c0_198, %c0_199] : memref<8x16x128xf32, #tpu.memory_space<vmem>>, vector<1x16x128xf32>
      %371 = vector.shape_cast %370 : vector<1x16x128xf32> to vector<16x128xf32>
      %cst_200 = arith.constant dense<0.000000e+00> : vector<8x128xf32>
      %372 = tpu.matmul %368, %371, %cst_200 {dimension_numbers = #tpu.dot_dimension_numbers<[1], [0], [0], [1], [0, 0, 1, 1], [], []>} : vector<8x16xf32>, vector<16x128xf32>, vector<8x128xf32> -> vector<8x128xf32>
      %373 = arith.addf %arg58, %372 : vector<8x128xf32>
      scf.yield %373 : vector<8x128xf32>
    }
    %c8_i32_74 = arith.constant 8 : i32
    %136 = arith.addf %132, %135 : vector<8x128xf32>
    %c0_75 = arith.constant 0 : index
    %c0_76 = arith.constant 0 : index
    %137 = vector.load %arg27[%c0_75, %c0_76] : memref<1x128xf32, #tpu.memory_space<vmem>>, vector<1x128xf32>
    %138 = vector.broadcast %137 : vector<1x128xf32> to vector<8x128xf32>
    %139 = arith.addf %136, %138 : vector<8x128xf32>
    %c0_77 = arith.constant 0 : index
    %c0_78 = arith.constant 0 : index
    %140 = vector.load %arg28[%c0_77, %c0_78] : memref<1x128xf32, #tpu.memory_space<vmem>>, vector<1x128xf32>
    %c0_79 = arith.constant 0 : index
    %c0_80 = arith.constant 0 : index
    %141 = vector.load %arg29[%c0_79, %c0_80] : memref<1x128xf32, #tpu.memory_space<vmem>>, vector<1x128xf32>
    %cst_81 = arith.constant dense<0.000000e+00> : vector<8xf32>
    %142 = vector.multi_reduction <add>, %139, %cst_81 [1] : vector<8x128xf32> to vector<8xf32>
    %143 = vector.shape_cast %142 : vector<8xf32> to vector<8x1xf32>
    %cst_82 = arith.constant 1.280000e+02 : f32
    %144 = vector.broadcast %cst_82 : f32 to vector<8x1xf32>
    %145 = arith.divf %143, %144 : vector<8x1xf32>
    %146 = vector.broadcast %145 : vector<8x1xf32> to vector<8x128xf32>
    %147 = arith.subf %139, %146 : vector<8x128xf32>
    %148 = arith.mulf %147, %147 : vector<8x128xf32>
    %cst_83 = arith.constant dense<0.000000e+00> : vector<8xf32>
    %149 = vector.multi_reduction <add>, %148, %cst_83 [1] : vector<8x128xf32> to vector<8xf32>
    %150 = vector.shape_cast %149 : vector<8xf32> to vector<8x1xf32>
    %cst_84 = arith.constant 1.280000e+02 : f32
    %151 = vector.broadcast %cst_84 : f32 to vector<8x1xf32>
    %152 = arith.divf %150, %151 : vector<8x1xf32>
    %cst_85 = arith.constant 9.99999974E-6 : f32
    %153 = vector.broadcast %cst_85 : f32 to vector<8x1xf32>
    %154 = arith.addf %152, %153 : vector<8x1xf32>
    %155 = math.rsqrt %154 : vector<8x1xf32>
    %156 = vector.broadcast %155 : vector<8x1xf32> to vector<8x128xf32>
    %157 = arith.mulf %147, %156 : vector<8x128xf32>
    %158 = vector.broadcast %140 : vector<1x128xf32> to vector<8x128xf32>
    %159 = arith.mulf %157, %158 : vector<8x128xf32>
    %160 = vector.broadcast %141 : vector<1x128xf32> to vector<8x128xf32>
    %161 = arith.addf %159, %160 : vector<8x128xf32>
    %162 = tpu.concatenate %131, %161 in 0 : vector<8x128xf32>, vector<8x128xf32> -> vector<16x128xf32>
    %c0_86 = arith.constant 0 : index
    %c0_87 = arith.constant 0 : index
    %163 = vector.load %arg30[%c0_86, %c0_87] : memref<128x2048xf32, #tpu.memory_space<vmem>>, vector<128x2048xf32>
    %cst_88 = arith.constant dense<0.000000e+00> : vector<16x2048xf32>
    %164 = tpu.matmul %162, %163, %cst_88 {dimension_numbers = #tpu.dot_dimension_numbers<[1], [0], [0], [1], [0, 0, 1, 1], [], []>} : vector<16x128xf32>, vector<128x2048xf32>, vector<16x2048xf32> -> vector<16x2048xf32>
    %c0_89 = arith.constant 0 : index
    %c0_90 = arith.constant 0 : index
    %165 = vector.load %arg31[%c0_89, %c0_90] : memref<1x2048xf32, #tpu.memory_space<vmem>>, vector<1x2048xf32>
    %166 = vector.broadcast %165 : vector<1x2048xf32> to vector<16x2048xf32>
    %167 = arith.addf %164, %166 : vector<16x2048xf32>
    %cst_91 = arith.constant 0.000000e+00 : f32
    %168 = vector.broadcast %cst_91 : f32 to vector<16x2048xf32>
    %169 = arith.maximumf %167, %168 : vector<16x2048xf32>
    %c0_92 = arith.constant 0 : index
    %c0_93 = arith.constant 0 : index
    %170 = vector.load %arg32[%c0_92, %c0_93] : memref<2048x128xf32, #tpu.memory_space<vmem>>, vector<2048x128xf32>
    %cst_94 = arith.constant dense<0.000000e+00> : vector<16x128xf32>
    %171 = tpu.matmul %169, %170, %cst_94 {dimension_numbers = #tpu.dot_dimension_numbers<[1], [0], [0], [1], [0, 0, 1, 1], [], []>} : vector<16x2048xf32>, vector<2048x128xf32>, vector<16x128xf32> -> vector<16x128xf32>
    %c0_95 = arith.constant 0 : index
    %c0_96 = arith.constant 0 : index
    %172 = vector.load %arg33[%c0_95, %c0_96] : memref<1x128xf32, #tpu.memory_space<vmem>>, vector<1x128xf32>
    %173 = vector.broadcast %172 : vector<1x128xf32> to vector<16x128xf32>
    %174 = arith.addf %171, %173 : vector<16x128xf32>
    %175 = arith.addf %162, %174 : vector<16x128xf32>
    %c0_97 = arith.constant 0 : index
    %c0_98 = arith.constant 0 : index
    %176 = vector.load %arg34[%c0_97, %c0_98] : memref<1x128xf32, #tpu.memory_space<vmem>>, vector<1x128xf32>
    %c0_99 = arith.constant 0 : index
    %c0_100 = arith.constant 0 : index
    %177 = vector.load %arg35[%c0_99, %c0_100] : memref<1x128xf32, #tpu.memory_space<vmem>>, vector<1x128xf32>
    %cst_101 = arith.constant dense<0.000000e+00> : vector<16xf32>
    %178 = vector.multi_reduction <add>, %175, %cst_101 [1] : vector<16x128xf32> to vector<16xf32>
    %179 = vector.shape_cast %178 : vector<16xf32> to vector<16x1xf32>
    %cst_102 = arith.constant 1.280000e+02 : f32
    %180 = vector.broadcast %cst_102 : f32 to vector<16x1xf32>
    %181 = arith.divf %179, %180 : vector<16x1xf32>
    %182 = vector.broadcast %181 : vector<16x1xf32> to vector<16x128xf32>
    %183 = arith.subf %175, %182 : vector<16x128xf32>
    %184 = arith.mulf %183, %183 : vector<16x128xf32>
    %cst_103 = arith.constant dense<0.000000e+00> : vector<16xf32>
    %185 = vector.multi_reduction <add>, %184, %cst_103 [1] : vector<16x128xf32> to vector<16xf32>
    %186 = vector.shape_cast %185 : vector<16xf32> to vector<16x1xf32>
    %cst_104 = arith.constant 1.280000e+02 : f32
    %187 = vector.broadcast %cst_104 : f32 to vector<16x1xf32>
    %188 = arith.divf %186, %187 : vector<16x1xf32>
    %cst_105 = arith.constant 9.99999974E-6 : f32
    %189 = vector.broadcast %cst_105 : f32 to vector<16x1xf32>
    %190 = arith.addf %188, %189 : vector<16x1xf32>
    %191 = math.rsqrt %190 : vector<16x1xf32>
    %192 = vector.broadcast %191 : vector<16x1xf32> to vector<16x128xf32>
    %193 = arith.mulf %183, %192 : vector<16x128xf32>
    %194 = vector.broadcast %176 : vector<1x128xf32> to vector<16x128xf32>
    %195 = arith.mulf %193, %194 : vector<16x128xf32>
    %196 = vector.broadcast %177 : vector<1x128xf32> to vector<16x128xf32>
    %197 = arith.addf %195, %196 : vector<16x128xf32>
    %198 = vector.extract_strided_slice %197 {offsets = [0, 0], sizes = [8, 128], strides = [1, 1]} : vector<16x128xf32> to vector<8x128xf32>
    %cst_106 = arith.constant 0.000000e+00 : f32
    %199 = vector.broadcast %cst_106 : f32 to vector<8x128xf32>
    %c0_i32_107 = arith.constant 0 : i32
    %c8_i32_108 = arith.constant 8 : i32
    %200 = arith.addi %c0_i32_107, %c8_i32_108 : i32
    %c1_i32_109 = arith.constant 1 : i32
    %201 = scf.for %arg57 = %c0_i32_107 to %200 step %c1_i32_109 iter_args(%arg58 = %199) -> (vector<8x128xf32>)  : i32 {
      %328 = arith.index_cast %arg57 : i32 to index
      %c0_178 = arith.constant 0 : index
      %c0_179 = arith.constant 0 : index
      %329 = vector.load %arg36[%328, %c0_178, %c0_179] : memref<8x128x16xf32, #tpu.memory_space<vmem>>, vector<1x128x16xf32>
      %330 = vector.shape_cast %329 : vector<1x128x16xf32> to vector<128x16xf32>
      %cst_180 = arith.constant dense<0.000000e+00> : vector<8x16xf32>
      %331 = tpu.matmul %198, %330, %cst_180 {dimension_numbers = #tpu.dot_dimension_numbers<[1], [0], [0], [1], [0, 0, 1, 1], [], []>} : vector<8x128xf32>, vector<128x16xf32>, vector<8x16xf32> -> vector<8x16xf32>
      %332 = arith.index_cast %arg57 : i32 to index
      %c0_181 = arith.constant 0 : index
      %c0_182 = arith.constant 0 : index
      %333 = vector.load %arg37[%332, %c0_181, %c0_182] : memref<8x1x16xf32, #tpu.memory_space<vmem>>, vector<1x1x16xf32>
      %334 = vector.shape_cast %333 : vector<1x1x16xf32> to vector<1x16xf32>
      %335 = vector.broadcast %334 : vector<1x16xf32> to vector<8x16xf32>
      %336 = arith.addf %331, %335 : vector<8x16xf32>
      %337 = arith.index_cast %arg57 : i32 to index
      %c0_183 = arith.constant 0 : index
      %c0_184 = arith.constant 0 : index
      %338 = vector.load %arg38[%337, %c0_183, %c0_184] : memref<8x128x16xf32, #tpu.memory_space<vmem>>, vector<1x128x16xf32>
      %339 = vector.shape_cast %338 : vector<1x128x16xf32> to vector<128x16xf32>
      %cst_185 = arith.constant dense<0.000000e+00> : vector<8x16xf32>
      %340 = tpu.matmul %198, %339, %cst_185 {dimension_numbers = #tpu.dot_dimension_numbers<[1], [0], [0], [1], [0, 0, 1, 1], [], []>} : vector<8x128xf32>, vector<128x16xf32>, vector<8x16xf32> -> vector<8x16xf32>
      %341 = arith.index_cast %arg57 : i32 to index
      %c0_186 = arith.constant 0 : index
      %c0_187 = arith.constant 0 : index
      %342 = vector.load %arg39[%341, %c0_186, %c0_187] : memref<8x1x16xf32, #tpu.memory_space<vmem>>, vector<1x1x16xf32>
      %343 = vector.shape_cast %342 : vector<1x1x16xf32> to vector<1x16xf32>
      %344 = vector.broadcast %343 : vector<1x16xf32> to vector<8x16xf32>
      %345 = arith.addf %340, %344 : vector<8x16xf32>
      %346 = arith.index_cast %arg57 : i32 to index
      %c0_188 = arith.constant 0 : index
      %c0_189 = arith.constant 0 : index
      %347 = vector.load %arg40[%346, %c0_188, %c0_189] : memref<8x128x16xf32, #tpu.memory_space<vmem>>, vector<1x128x16xf32>
      %348 = vector.shape_cast %347 : vector<1x128x16xf32> to vector<128x16xf32>
      %cst_190 = arith.constant dense<0.000000e+00> : vector<8x16xf32>
      %349 = tpu.matmul %198, %348, %cst_190 {dimension_numbers = #tpu.dot_dimension_numbers<[1], [0], [0], [1], [0, 0, 1, 1], [], []>} : vector<8x128xf32>, vector<128x16xf32>, vector<8x16xf32> -> vector<8x16xf32>
      %350 = arith.index_cast %arg57 : i32 to index
      %c0_191 = arith.constant 0 : index
      %c0_192 = arith.constant 0 : index
      %351 = vector.load %arg41[%350, %c0_191, %c0_192] : memref<8x1x16xf32, #tpu.memory_space<vmem>>, vector<1x1x16xf32>
      %352 = vector.shape_cast %351 : vector<1x1x16xf32> to vector<1x16xf32>
      %353 = vector.broadcast %352 : vector<1x16xf32> to vector<8x16xf32>
      %354 = arith.addf %349, %353 : vector<8x16xf32>
      %cst_193 = arith.constant dense<0.000000e+00> : vector<8x8xf32>
      %355 = tpu.matmul %336, %345, %cst_193 {dimension_numbers = #tpu.dot_dimension_numbers<[1], [1], [0], [0], [0, 0, 1, 0], [], []>} : vector<8x16xf32>, vector<8x16xf32>, vector<8x8xf32> -> vector<8x8xf32>
      %cst_194 = arith.constant 2.500000e-01 : f32
      %356 = vector.broadcast %cst_194 : f32 to vector<8x8xf32>
      %357 = arith.mulf %355, %356 : vector<8x8xf32>
      %cst_195 = arith.constant dense<0xFF800000> : vector<8xf32>
      %358 = vector.multi_reduction <maximumf>, %357, %cst_195 [1] : vector<8x8xf32> to vector<8xf32>
      %359 = vector.shape_cast %358 : vector<8xf32> to vector<8x1xf32>
      %360 = vector.broadcast %359 : vector<8x1xf32> to vector<8x8xf32>
      %361 = arith.subf %357, %360 : vector<8x8xf32>
      %362 = math.exp %361 : vector<8x8xf32>
      %cst_196 = arith.constant dense<0.000000e+00> : vector<8xf32>
      %363 = vector.multi_reduction <add>, %362, %cst_196 [1] : vector<8x8xf32> to vector<8xf32>
      %364 = vector.shape_cast %363 : vector<8xf32> to vector<8x1xf32>
      %365 = tpu.reciprocal %364 {approx = true} : vector<8x1xf32> -> vector<8x1xf32>
      %366 = vector.broadcast %365 : vector<8x1xf32> to vector<8x8xf32>
      %367 = arith.mulf %362, %366 : vector<8x8xf32>
      %cst_197 = arith.constant dense<0.000000e+00> : vector<8x16xf32>
      %368 = tpu.matmul %367, %354, %cst_197 {dimension_numbers = #tpu.dot_dimension_numbers<[1], [0], [0], [1], [0, 0, 1, 1], [], []>} : vector<8x8xf32>, vector<8x16xf32>, vector<8x16xf32> -> vector<8x16xf32>
      %369 = arith.index_cast %arg57 : i32 to index
      %c0_198 = arith.constant 0 : index
      %c0_199 = arith.constant 0 : index
      %370 = vector.load %arg42[%369, %c0_198, %c0_199] : memref<8x16x128xf32, #tpu.memory_space<vmem>>, vector<1x16x128xf32>
      %371 = vector.shape_cast %370 : vector<1x16x128xf32> to vector<16x128xf32>
      %cst_200 = arith.constant dense<0.000000e+00> : vector<8x128xf32>
      %372 = tpu.matmul %368, %371, %cst_200 {dimension_numbers = #tpu.dot_dimension_numbers<[1], [0], [0], [1], [0, 0, 1, 1], [], []>} : vector<8x16xf32>, vector<16x128xf32>, vector<8x128xf32> -> vector<8x128xf32>
      %373 = arith.addf %arg58, %372 : vector<8x128xf32>
      scf.yield %373 : vector<8x128xf32>
    }
    %c8_i32_110 = arith.constant 8 : i32
    %202 = arith.addf %198, %201 : vector<8x128xf32>
    %c0_111 = arith.constant 0 : index
    %c0_112 = arith.constant 0 : index
    %203 = vector.load %arg43[%c0_111, %c0_112] : memref<1x128xf32, #tpu.memory_space<vmem>>, vector<1x128xf32>
    %204 = vector.broadcast %203 : vector<1x128xf32> to vector<8x128xf32>
    %205 = arith.addf %202, %204 : vector<8x128xf32>
    %c0_113 = arith.constant 0 : index
    %c0_114 = arith.constant 0 : index
    %206 = vector.load %arg44[%c0_113, %c0_114] : memref<1x128xf32, #tpu.memory_space<vmem>>, vector<1x128xf32>
    %c0_115 = arith.constant 0 : index
    %c0_116 = arith.constant 0 : index
    %207 = vector.load %arg45[%c0_115, %c0_116] : memref<1x128xf32, #tpu.memory_space<vmem>>, vector<1x128xf32>
    %cst_117 = arith.constant dense<0.000000e+00> : vector<8xf32>
    %208 = vector.multi_reduction <add>, %205, %cst_117 [1] : vector<8x128xf32> to vector<8xf32>
    %209 = vector.shape_cast %208 : vector<8xf32> to vector<8x1xf32>
    %cst_118 = arith.constant 1.280000e+02 : f32
    %210 = vector.broadcast %cst_118 : f32 to vector<8x1xf32>
    %211 = arith.divf %209, %210 : vector<8x1xf32>
    %212 = vector.broadcast %211 : vector<8x1xf32> to vector<8x128xf32>
    %213 = arith.subf %205, %212 : vector<8x128xf32>
    %214 = arith.mulf %213, %213 : vector<8x128xf32>
    %cst_119 = arith.constant dense<0.000000e+00> : vector<8xf32>
    %215 = vector.multi_reduction <add>, %214, %cst_119 [1] : vector<8x128xf32> to vector<8xf32>
    %216 = vector.shape_cast %215 : vector<8xf32> to vector<8x1xf32>
    %cst_120 = arith.constant 1.280000e+02 : f32
    %217 = vector.broadcast %cst_120 : f32 to vector<8x1xf32>
    %218 = arith.divf %216, %217 : vector<8x1xf32>
    %cst_121 = arith.constant 9.99999974E-6 : f32
    %219 = vector.broadcast %cst_121 : f32 to vector<8x1xf32>
    %220 = arith.addf %218, %219 : vector<8x1xf32>
    %221 = math.rsqrt %220 : vector<8x1xf32>
    %222 = vector.broadcast %221 : vector<8x1xf32> to vector<8x128xf32>
    %223 = arith.mulf %213, %222 : vector<8x128xf32>
    %224 = vector.broadcast %206 : vector<1x128xf32> to vector<8x128xf32>
    %225 = arith.mulf %223, %224 : vector<8x128xf32>
    %226 = vector.broadcast %207 : vector<1x128xf32> to vector<8x128xf32>
    %227 = arith.addf %225, %226 : vector<8x128xf32>
    %228 = vector.extract_strided_slice %197 {offsets = [8, 0], sizes = [8, 128], strides = [1, 1]} : vector<16x128xf32> to vector<8x128xf32>
    %cst_122 = arith.constant 0.000000e+00 : f32
    %229 = vector.broadcast %cst_122 : f32 to vector<8x128xf32>
    %c0_i32_123 = arith.constant 0 : i32
    %c8_i32_124 = arith.constant 8 : i32
    %230 = arith.addi %c0_i32_123, %c8_i32_124 : i32
    %c1_i32_125 = arith.constant 1 : i32
    %231 = scf.for %arg57 = %c0_i32_123 to %230 step %c1_i32_125 iter_args(%arg58 = %229) -> (vector<8x128xf32>)  : i32 {
      %328 = arith.index_cast %arg57 : i32 to index
      %c0_178 = arith.constant 0 : index
      %c0_179 = arith.constant 0 : index
      %329 = vector.load %arg36[%328, %c0_178, %c0_179] : memref<8x128x16xf32, #tpu.memory_space<vmem>>, vector<1x128x16xf32>
      %330 = vector.shape_cast %329 : vector<1x128x16xf32> to vector<128x16xf32>
      %cst_180 = arith.constant dense<0.000000e+00> : vector<8x16xf32>
      %331 = tpu.matmul %228, %330, %cst_180 {dimension_numbers = #tpu.dot_dimension_numbers<[1], [0], [0], [1], [0, 0, 1, 1], [], []>} : vector<8x128xf32>, vector<128x16xf32>, vector<8x16xf32> -> vector<8x16xf32>
      %332 = arith.index_cast %arg57 : i32 to index
      %c0_181 = arith.constant 0 : index
      %c0_182 = arith.constant 0 : index
      %333 = vector.load %arg37[%332, %c0_181, %c0_182] : memref<8x1x16xf32, #tpu.memory_space<vmem>>, vector<1x1x16xf32>
      %334 = vector.shape_cast %333 : vector<1x1x16xf32> to vector<1x16xf32>
      %335 = vector.broadcast %334 : vector<1x16xf32> to vector<8x16xf32>
      %336 = arith.addf %331, %335 : vector<8x16xf32>
      %337 = arith.index_cast %arg57 : i32 to index
      %c0_183 = arith.constant 0 : index
      %c0_184 = arith.constant 0 : index
      %338 = vector.load %arg38[%337, %c0_183, %c0_184] : memref<8x128x16xf32, #tpu.memory_space<vmem>>, vector<1x128x16xf32>
      %339 = vector.shape_cast %338 : vector<1x128x16xf32> to vector<128x16xf32>
      %cst_185 = arith.constant dense<0.000000e+00> : vector<8x16xf32>
      %340 = tpu.matmul %228, %339, %cst_185 {dimension_numbers = #tpu.dot_dimension_numbers<[1], [0], [0], [1], [0, 0, 1, 1], [], []>} : vector<8x128xf32>, vector<128x16xf32>, vector<8x16xf32> -> vector<8x16xf32>
      %341 = arith.index_cast %arg57 : i32 to index
      %c0_186 = arith.constant 0 : index
      %c0_187 = arith.constant 0 : index
      %342 = vector.load %arg39[%341, %c0_186, %c0_187] : memref<8x1x16xf32, #tpu.memory_space<vmem>>, vector<1x1x16xf32>
      %343 = vector.shape_cast %342 : vector<1x1x16xf32> to vector<1x16xf32>
      %344 = vector.broadcast %343 : vector<1x16xf32> to vector<8x16xf32>
      %345 = arith.addf %340, %344 : vector<8x16xf32>
      %346 = arith.index_cast %arg57 : i32 to index
      %c0_188 = arith.constant 0 : index
      %c0_189 = arith.constant 0 : index
      %347 = vector.load %arg40[%346, %c0_188, %c0_189] : memref<8x128x16xf32, #tpu.memory_space<vmem>>, vector<1x128x16xf32>
      %348 = vector.shape_cast %347 : vector<1x128x16xf32> to vector<128x16xf32>
      %cst_190 = arith.constant dense<0.000000e+00> : vector<8x16xf32>
      %349 = tpu.matmul %228, %348, %cst_190 {dimension_numbers = #tpu.dot_dimension_numbers<[1], [0], [0], [1], [0, 0, 1, 1], [], []>} : vector<8x128xf32>, vector<128x16xf32>, vector<8x16xf32> -> vector<8x16xf32>
      %350 = arith.index_cast %arg57 : i32 to index
      %c0_191 = arith.constant 0 : index
      %c0_192 = arith.constant 0 : index
      %351 = vector.load %arg41[%350, %c0_191, %c0_192] : memref<8x1x16xf32, #tpu.memory_space<vmem>>, vector<1x1x16xf32>
      %352 = vector.shape_cast %351 : vector<1x1x16xf32> to vector<1x16xf32>
      %353 = vector.broadcast %352 : vector<1x16xf32> to vector<8x16xf32>
      %354 = arith.addf %349, %353 : vector<8x16xf32>
      %cst_193 = arith.constant dense<0.000000e+00> : vector<8x8xf32>
      %355 = tpu.matmul %336, %345, %cst_193 {dimension_numbers = #tpu.dot_dimension_numbers<[1], [1], [0], [0], [0, 0, 1, 0], [], []>} : vector<8x16xf32>, vector<8x16xf32>, vector<8x8xf32> -> vector<8x8xf32>
      %cst_194 = arith.constant 2.500000e-01 : f32
      %356 = vector.broadcast %cst_194 : f32 to vector<8x8xf32>
      %357 = arith.mulf %355, %356 : vector<8x8xf32>
      %cst_195 = arith.constant dense<0xFF800000> : vector<8xf32>
      %358 = vector.multi_reduction <maximumf>, %357, %cst_195 [1] : vector<8x8xf32> to vector<8xf32>
      %359 = vector.shape_cast %358 : vector<8xf32> to vector<8x1xf32>
      %360 = vector.broadcast %359 : vector<8x1xf32> to vector<8x8xf32>
      %361 = arith.subf %357, %360 : vector<8x8xf32>
      %362 = math.exp %361 : vector<8x8xf32>
      %cst_196 = arith.constant dense<0.000000e+00> : vector<8xf32>
      %363 = vector.multi_reduction <add>, %362, %cst_196 [1] : vector<8x8xf32> to vector<8xf32>
      %364 = vector.shape_cast %363 : vector<8xf32> to vector<8x1xf32>
      %365 = tpu.reciprocal %364 {approx = true} : vector<8x1xf32> -> vector<8x1xf32>
      %366 = vector.broadcast %365 : vector<8x1xf32> to vector<8x8xf32>
      %367 = arith.mulf %362, %366 : vector<8x8xf32>
      %cst_197 = arith.constant dense<0.000000e+00> : vector<8x16xf32>
      %368 = tpu.matmul %367, %354, %cst_197 {dimension_numbers = #tpu.dot_dimension_numbers<[1], [0], [0], [1], [0, 0, 1, 1], [], []>} : vector<8x8xf32>, vector<8x16xf32>, vector<8x16xf32> -> vector<8x16xf32>
      %369 = arith.index_cast %arg57 : i32 to index
      %c0_198 = arith.constant 0 : index
      %c0_199 = arith.constant 0 : index
      %370 = vector.load %arg42[%369, %c0_198, %c0_199] : memref<8x16x128xf32, #tpu.memory_space<vmem>>, vector<1x16x128xf32>
      %371 = vector.shape_cast %370 : vector<1x16x128xf32> to vector<16x128xf32>
      %cst_200 = arith.constant dense<0.000000e+00> : vector<8x128xf32>
      %372 = tpu.matmul %368, %371, %cst_200 {dimension_numbers = #tpu.dot_dimension_numbers<[1], [0], [0], [1], [0, 0, 1, 1], [], []>} : vector<8x16xf32>, vector<16x128xf32>, vector<8x128xf32> -> vector<8x128xf32>
      %373 = arith.addf %arg58, %372 : vector<8x128xf32>
      scf.yield %373 : vector<8x128xf32>
    }
    %c8_i32_126 = arith.constant 8 : i32
    %232 = arith.addf %228, %231 : vector<8x128xf32>
    %c0_127 = arith.constant 0 : index
    %c0_128 = arith.constant 0 : index
    %233 = vector.load %arg43[%c0_127, %c0_128] : memref<1x128xf32, #tpu.memory_space<vmem>>, vector<1x128xf32>
    %234 = vector.broadcast %233 : vector<1x128xf32> to vector<8x128xf32>
    %235 = arith.addf %232, %234 : vector<8x128xf32>
    %c0_129 = arith.constant 0 : index
    %c0_130 = arith.constant 0 : index
    %236 = vector.load %arg44[%c0_129, %c0_130] : memref<1x128xf32, #tpu.memory_space<vmem>>, vector<1x128xf32>
    %c0_131 = arith.constant 0 : index
    %c0_132 = arith.constant 0 : index
    %237 = vector.load %arg45[%c0_131, %c0_132] : memref<1x128xf32, #tpu.memory_space<vmem>>, vector<1x128xf32>
    %cst_133 = arith.constant dense<0.000000e+00> : vector<8xf32>
    %238 = vector.multi_reduction <add>, %235, %cst_133 [1] : vector<8x128xf32> to vector<8xf32>
    %239 = vector.shape_cast %238 : vector<8xf32> to vector<8x1xf32>
    %cst_134 = arith.constant 1.280000e+02 : f32
    %240 = vector.broadcast %cst_134 : f32 to vector<8x1xf32>
    %241 = arith.divf %239, %240 : vector<8x1xf32>
    %242 = vector.broadcast %241 : vector<8x1xf32> to vector<8x128xf32>
    %243 = arith.subf %235, %242 : vector<8x128xf32>
    %244 = arith.mulf %243, %243 : vector<8x128xf32>
    %cst_135 = arith.constant dense<0.000000e+00> : vector<8xf32>
    %245 = vector.multi_reduction <add>, %244, %cst_135 [1] : vector<8x128xf32> to vector<8xf32>
    %246 = vector.shape_cast %245 : vector<8xf32> to vector<8x1xf32>
    %cst_136 = arith.constant 1.280000e+02 : f32
    %247 = vector.broadcast %cst_136 : f32 to vector<8x1xf32>
    %248 = arith.divf %246, %247 : vector<8x1xf32>
    %cst_137 = arith.constant 9.99999974E-6 : f32
    %249 = vector.broadcast %cst_137 : f32 to vector<8x1xf32>
    %250 = arith.addf %248, %249 : vector<8x1xf32>
    %251 = math.rsqrt %250 : vector<8x1xf32>
    %252 = vector.broadcast %251 : vector<8x1xf32> to vector<8x128xf32>
    %253 = arith.mulf %243, %252 : vector<8x128xf32>
    %254 = vector.broadcast %236 : vector<1x128xf32> to vector<8x128xf32>
    %255 = arith.mulf %253, %254 : vector<8x128xf32>
    %256 = vector.broadcast %237 : vector<1x128xf32> to vector<8x128xf32>
    %257 = arith.addf %255, %256 : vector<8x128xf32>
    %258 = tpu.concatenate %227, %257 in 0 : vector<8x128xf32>, vector<8x128xf32> -> vector<16x128xf32>
    %c0_138 = arith.constant 0 : index
    %c0_139 = arith.constant 0 : index
    %259 = vector.load %arg46[%c0_138, %c0_139] : memref<128x2048xf32, #tpu.memory_space<vmem>>, vector<128x2048xf32>
    %cst_140 = arith.constant dense<0.000000e+00> : vector<16x2048xf32>
    %260 = tpu.matmul %258, %259, %cst_140 {dimension_numbers = #tpu.dot_dimension_numbers<[1], [0], [0], [1], [0, 0, 1, 1], [], []>} : vector<16x128xf32>, vector<128x2048xf32>, vector<16x2048xf32> -> vector<16x2048xf32>
    %c0_141 = arith.constant 0 : index
    %c0_142 = arith.constant 0 : index
    %261 = vector.load %arg47[%c0_141, %c0_142] : memref<1x2048xf32, #tpu.memory_space<vmem>>, vector<1x2048xf32>
    %262 = vector.broadcast %261 : vector<1x2048xf32> to vector<16x2048xf32>
    %263 = arith.addf %260, %262 : vector<16x2048xf32>
    %cst_143 = arith.constant 0.000000e+00 : f32
    %264 = vector.broadcast %cst_143 : f32 to vector<16x2048xf32>
    %265 = arith.maximumf %263, %264 : vector<16x2048xf32>
    %c0_144 = arith.constant 0 : index
    %c0_145 = arith.constant 0 : index
    %266 = vector.load %arg48[%c0_144, %c0_145] : memref<2048x128xf32, #tpu.memory_space<vmem>>, vector<2048x128xf32>
    %cst_146 = arith.constant dense<0.000000e+00> : vector<16x128xf32>
    %267 = tpu.matmul %265, %266, %cst_146 {dimension_numbers = #tpu.dot_dimension_numbers<[1], [0], [0], [1], [0, 0, 1, 1], [], []>} : vector<16x2048xf32>, vector<2048x128xf32>, vector<16x128xf32> -> vector<16x128xf32>
    %c0_147 = arith.constant 0 : index
    %c0_148 = arith.constant 0 : index
    %268 = vector.load %arg49[%c0_147, %c0_148] : memref<1x128xf32, #tpu.memory_space<vmem>>, vector<1x128xf32>
    %269 = vector.broadcast %268 : vector<1x128xf32> to vector<16x128xf32>
    %270 = arith.addf %267, %269 : vector<16x128xf32>
    %271 = arith.addf %258, %270 : vector<16x128xf32>
    %c0_149 = arith.constant 0 : index
    %c0_150 = arith.constant 0 : index
    %272 = vector.load %arg50[%c0_149, %c0_150] : memref<1x128xf32, #tpu.memory_space<vmem>>, vector<1x128xf32>
    %c0_151 = arith.constant 0 : index
    %c0_152 = arith.constant 0 : index
    %273 = vector.load %arg51[%c0_151, %c0_152] : memref<1x128xf32, #tpu.memory_space<vmem>>, vector<1x128xf32>
    %cst_153 = arith.constant dense<0.000000e+00> : vector<16xf32>
    %274 = vector.multi_reduction <add>, %271, %cst_153 [1] : vector<16x128xf32> to vector<16xf32>
    %275 = vector.shape_cast %274 : vector<16xf32> to vector<16x1xf32>
    %cst_154 = arith.constant 1.280000e+02 : f32
    %276 = vector.broadcast %cst_154 : f32 to vector<16x1xf32>
    %277 = arith.divf %275, %276 : vector<16x1xf32>
    %278 = vector.broadcast %277 : vector<16x1xf32> to vector<16x128xf32>
    %279 = arith.subf %271, %278 : vector<16x128xf32>
    %280 = arith.mulf %279, %279 : vector<16x128xf32>
    %cst_155 = arith.constant dense<0.000000e+00> : vector<16xf32>
    %281 = vector.multi_reduction <add>, %280, %cst_155 [1] : vector<16x128xf32> to vector<16xf32>
    %282 = vector.shape_cast %281 : vector<16xf32> to vector<16x1xf32>
    %cst_156 = arith.constant 1.280000e+02 : f32
    %283 = vector.broadcast %cst_156 : f32 to vector<16x1xf32>
    %284 = arith.divf %282, %283 : vector<16x1xf32>
    %cst_157 = arith.constant 9.99999974E-6 : f32
    %285 = vector.broadcast %cst_157 : f32 to vector<16x1xf32>
    %286 = arith.addf %284, %285 : vector<16x1xf32>
    %287 = math.rsqrt %286 : vector<16x1xf32>
    %288 = vector.broadcast %287 : vector<16x1xf32> to vector<16x128xf32>
    %289 = arith.mulf %279, %288 : vector<16x128xf32>
    %290 = vector.broadcast %272 : vector<1x128xf32> to vector<16x128xf32>
    %291 = arith.mulf %289, %290 : vector<16x128xf32>
    %292 = vector.broadcast %273 : vector<1x128xf32> to vector<16x128xf32>
    %293 = arith.addf %291, %292 : vector<16x128xf32>
    %294 = vector.extract_strided_slice %293 {offsets = [0, 0], sizes = [8, 128], strides = [1, 1]} : vector<16x128xf32> to vector<8x128xf32>
    %cst_158 = arith.constant dense<0.000000e+00> : vector<128xf32>
    %295 = vector.multi_reduction <add>, %294, %cst_158 [0] : vector<8x128xf32> to vector<128xf32>
    %296 = vector.shape_cast %295 : vector<128xf32> to vector<1x128xf32>
    %cst_159 = arith.constant 8.000000e+00 : f32
    %297 = vector.broadcast %cst_159 : f32 to vector<1x128xf32>
    %298 = arith.divf %296, %297 : vector<1x128xf32>
    %299 = vector.extract_strided_slice %293 {offsets = [8, 0], sizes = [8, 128], strides = [1, 1]} : vector<16x128xf32> to vector<8x128xf32>
    %cst_160 = arith.constant dense<0.000000e+00> : vector<128xf32>
    %300 = vector.multi_reduction <add>, %299, %cst_160 [0] : vector<8x128xf32> to vector<128xf32>
    %301 = vector.shape_cast %300 : vector<128xf32> to vector<1x128xf32>
    %cst_161 = arith.constant 8.000000e+00 : f32
    %302 = vector.broadcast %cst_161 : f32 to vector<1x128xf32>
    %303 = arith.divf %301, %302 : vector<1x128xf32>
    %304 = tpu.concatenate %298, %303 in 0 : vector<1x128xf32>, vector<1x128xf32> -> vector<2x128xf32>
    %c0_162 = arith.constant 0 : index
    %c0_163 = arith.constant 0 : index
    %305 = vector.load %arg52[%c0_162, %c0_163] : memref<128x64xf32, #tpu.memory_space<vmem>>, vector<128x64xf32>
    %cst_164 = arith.constant dense<0.000000e+00> : vector<2x64xf32>
    %306 = tpu.matmul %304, %305, %cst_164 {dimension_numbers = #tpu.dot_dimension_numbers<[1], [0], [0], [1], [0, 0, 1, 1], [], []>} : vector<2x128xf32>, vector<128x64xf32>, vector<2x64xf32> -> vector<2x64xf32>
    %c0_165 = arith.constant 0 : index
    %c0_166 = arith.constant 0 : index
    %307 = vector.load %arg53[%c0_165, %c0_166] : memref<1x64xf32, #tpu.memory_space<vmem>>, vector<1x64xf32>
    %308 = vector.broadcast %307 : vector<1x64xf32> to vector<2x64xf32>
    %309 = arith.addf %306, %308 : vector<2x64xf32>
    %cst_167 = arith.constant 0.000000e+00 : f32
    %310 = vector.broadcast %cst_167 : f32 to vector<2x64xf32>
    %311 = arith.maximumf %309, %310 : vector<2x64xf32>
    %c0_168 = arith.constant 0 : index
    %c0_169 = arith.constant 0 : index
    %312 = vector.load %arg54[%c0_168, %c0_169] : memref<1x64xf32, #tpu.memory_space<vmem>>, vector<1x64xf32>
    %313 = vector.broadcast %312 : vector<1x64xf32> to vector<2x64xf32>
    %314 = arith.mulf %311, %313 : vector<2x64xf32>
    %cst_170 = arith.constant dense<0.000000e+00> : vector<2xf32>
    %315 = vector.multi_reduction <add>, %314, %cst_170 [1] : vector<2x64xf32> to vector<2xf32>
    %316 = vector.shape_cast %315 : vector<2xf32> to vector<2x1xf32>
    %c0_171 = arith.constant 0 : index
    %c0_172 = arith.constant 0 : index
    %317 = vector.load %arg55[%c0_171, %c0_172] : memref<1x1xf32, #tpu.memory_space<vmem>>, vector<1x1xf32>
    %318 = vector.broadcast %317 : vector<1x1xf32> to vector<2x1xf32>
    %319 = arith.addf %316, %318 : vector<2x1xf32>
    %cst_173 = arith.constant 0.000000e+00 : f32
    %320 = vector.broadcast %cst_173 : f32 to vector<2x1xf32>
    %321 = arith.subf %320, %319 : vector<2x1xf32>
    %322 = math.exp %321 : vector<2x1xf32>
    %cst_174 = arith.constant 1.000000e+00 : f32
    %323 = vector.broadcast %cst_174 : f32 to vector<2x1xf32>
    %324 = arith.addf %323, %322 : vector<2x1xf32>
    %cst_175 = arith.constant 1.000000e+00 : f32
    %325 = vector.broadcast %cst_175 : f32 to vector<2x1xf32>
    %326 = arith.divf %325, %324 : vector<2x1xf32>
    %c0_176 = arith.constant 0 : index
    %c0_177 = arith.constant 0 : index
    %327 = vector.load %arg56[%c0_176, %c0_177] : memref<2x1xf32, #tpu.memory_space<vmem>>, vector<2x1xf32>
    tpu.vector_store %arg56[%c0_176, %c0_177], %326 {strides = array<i32>} : memref<2x1xf32, #tpu.memory_space<vmem>>, vector<2x1xf32>,
    return
  }
  func.func @transform_0(%arg0: i32) -> (i32, i32) {
    %c0_i32 = arith.constant 0 : i32
    %c0_i32_0 = arith.constant 0 : i32
    %c0_i32_1 = arith.constant 0 : i32
    return %c0_i32, %c0_i32_0 : i32, i32
  }
  func.func @transform_1(%arg0: i32) -> (i32, i32) {
    %c0_i32 = arith.constant 0 : i32
    %c0_i32_0 = arith.constant 0 : i32
    %c0_i32_1 = arith.constant 0 : i32
    return %c0_i32, %c0_i32_0 : i32, i32
  }
  func.func @transform_2(%arg0: i32) -> (i32, i32) {
    %c0_i32 = arith.constant 0 : i32
    %c0_i32_0 = arith.constant 0 : i32
    %c0_i32_1 = arith.constant 0 : i32
    return %c0_i32, %c0_i32_0 : i32, i32
  }
  func.func @transform_3(%arg0: i32) -> (i32, i32, i32) {
    %c0_i32 = arith.constant 0 : i32
    %c0_i32_0 = arith.constant 0 : i32
    %c0_i32_1 = arith.constant 0 : i32
    %c0_i32_2 = arith.constant 0 : i32
    return %c0_i32, %c0_i32_0, %c0_i32_1 : i32, i32, i32
  }
  func.func @transform_4(%arg0: i32) -> (i32, i32, i32) {
    %c0_i32 = arith.constant 0 : i32
    %c0_i32_0 = arith.constant 0 : i32
    %c0_i32_1 = arith.constant 0 : i32
    %c0_i32_2 = arith.constant 0 : i32
    return %c0_i32, %c0_i32_0, %c0_i32_1 : i32, i32, i32
  }
  func.func @transform_5(%arg0: i32) -> (i32, i32, i32) {
    %c0_i32 = arith.constant 0 : i32
    %c0_i32_0 = arith.constant 0 : i32
    %c0_i32_1 = arith.constant 0 : i32
    %c0_i32_2 = arith.constant 0 : i32
    return %c0_i32, %c0_i32_0, %c0_i32_1 : i32, i32, i32
  }
  func.func @transform_6(%arg0: i32) -> (i32, i32, i32) {
    %c0_i32 = arith.constant 0 : i32
    %c0_i32_0 = arith.constant 0 : i32
    %c0_i32_1 = arith.constant 0 : i32
    %c0_i32_2 = arith.constant 0 : i32
    return %c0_i32, %c0_i32_0, %c0_i32_1 : i32, i32, i32
  }
  func.func @transform_7(%arg0: i32) -> (i32, i32, i32) {
    %c0_i32 = arith.constant 0 : i32
    %c0_i32_0 = arith.constant 0 : i32
    %c0_i32_1 = arith.constant 0 : i32
    %c0_i32_2 = arith.constant 0 : i32
    return %c0_i32, %c0_i32_0, %c0_i32_1 : i32, i32, i32
  }
  func.func @transform_8(%arg0: i32) -> (i32, i32, i32) {
    %c0_i32 = arith.constant 0 : i32
    %c0_i32_0 = arith.constant 0 : i32
    %c0_i32_1 = arith.constant 0 : i32
    %c0_i32_2 = arith.constant 0 : i32
    return %c0_i32, %c0_i32_0, %c0_i32_1 : i32, i32, i32
  }
  func.func @transform_9(%arg0: i32) -> (i32, i32, i32) {
    %c0_i32 = arith.constant 0 : i32
    %c0_i32_0 = arith.constant 0 : i32
    %c0_i32_1 = arith.constant 0 : i32
    %c0_i32_2 = arith.constant 0 : i32
    return %c0_i32, %c0_i32_0, %c0_i32_1 : i32, i32, i32
  }
  func.func @transform_10(%arg0: i32) -> (i32, i32) {
    %c0_i32 = arith.constant 0 : i32
    %c0_i32_0 = arith.constant 0 : i32
    %c0_i32_1 = arith.constant 0 : i32
    return %c0_i32, %c0_i32_0 : i32, i32
  }
  func.func @transform_11(%arg0: i32) -> (i32, i32) {
    %c0_i32 = arith.constant 0 : i32
    %c0_i32_0 = arith.constant 0 : i32
    %c0_i32_1 = arith.constant 0 : i32
    return %c0_i32, %c0_i32_0 : i32, i32
  }
  func.func @transform_12(%arg0: i32) -> (i32, i32) {
    %c0_i32 = arith.constant 0 : i32
    %c0_i32_0 = arith.constant 0 : i32
    %c0_i32_1 = arith.constant 0 : i32
    return %c0_i32, %c0_i32_0 : i32, i32
  }
  func.func @transform_13(%arg0: i32) -> (i32, i32) {
    %c0_i32 = arith.constant 0 : i32
    %c0_i32_0 = arith.constant 0 : i32
    %c0_i32_1 = arith.constant 0 : i32
    return %c0_i32, %c0_i32_0 : i32, i32
  }
  func.func @transform_14(%arg0: i32) -> (i32, i32) {
    %c0_i32 = arith.constant 0 : i32
    %c0_i32_0 = arith.constant 0 : i32
    %c0_i32_1 = arith.constant 0 : i32
    return %c0_i32, %c0_i32_0 : i32, i32
  }
  func.func @transform_15(%arg0: i32) -> (i32, i32) {
    %c0_i32 = arith.constant 0 : i32
    %c0_i32_0 = arith.constant 0 : i32
    %c0_i32_1 = arith.constant 0 : i32
    return %c0_i32, %c0_i32_0 : i32, i32
  }
  func.func @transform_16(%arg0: i32) -> (i32, i32) {
    %c0_i32 = arith.constant 0 : i32
    %c0_i32_0 = arith.constant 0 : i32
    %c0_i32_1 = arith.constant 0 : i32
    return %c0_i32, %c0_i32_0 : i32, i32
  }
  func.func @transform_17(%arg0: i32) -> (i32, i32) {
    %c0_i32 = arith.constant 0 : i32
    %c0_i32_0 = arith.constant 0 : i32
    %c0_i32_1 = arith.constant 0 : i32
    return %c0_i32, %c0_i32_0 : i32, i32
  }
  func.func @transform_18(%arg0: i32) -> (i32, i32) {
    %c0_i32 = arith.constant 0 : i32
    %c0_i32_0 = arith.constant 0 : i32
    %c0_i32_1 = arith.constant 0 : i32
    return %c0_i32, %c0_i32_0 : i32, i32
  }
  func.func @transform_19(%arg0: i32) -> (i32, i32, i32) {
    %c0_i32 = arith.constant 0 : i32
    %c0_i32_0 = arith.constant 0 : i32
    %c0_i32_1 = arith.constant 0 : i32
    %c0_i32_2 = arith.constant 0 : i32
    return %c0_i32, %c0_i32_0, %c0_i32_1 : i32, i32, i32
  }
  func.func @transform_20(%arg0: i32) -> (i32, i32, i32) {
    %c0_i32 = arith.constant 0 : i32
    %c0_i32_0 = arith.constant 0 : i32
    %c0_i32_1 = arith.constant 0 : i32
    %c0_i32_2 = arith.constant 0 : i32
    return %c0_i32, %c0_i32_0, %c0_i32_1 : i32, i32, i32
  }
  func.func @transform_21(%arg0: i32) -> (i32, i32, i32) {
    %c0_i32 = arith.constant 0 : i32
    %c0_i32_0 = arith.constant 0 : i32
    %c0_i32_1 = arith.constant 0 : i32
    %c0_i32_2 = arith.constant 0 : i32
    return %c0_i32, %c0_i32_0, %c0_i32_1 : i32, i32, i32
  }
  func.func @transform_22(%arg0: i32) -> (i32, i32, i32) {
    %c0_i32 = arith.constant 0 : i32
    %c0_i32_0 = arith.constant 0 : i32
    %c0_i32_1 = arith.constant 0 : i32
    %c0_i32_2 = arith.constant 0 : i32
    return %c0_i32, %c0_i32_0, %c0_i32_1 : i32, i32, i32
  }
  func.func @transform_23(%arg0: i32) -> (i32, i32, i32) {
    %c0_i32 = arith.constant 0 : i32
    %c0_i32_0 = arith.constant 0 : i32
    %c0_i32_1 = arith.constant 0 : i32
    %c0_i32_2 = arith.constant 0 : i32
    return %c0_i32, %c0_i32_0, %c0_i32_1 : i32, i32, i32
  }
  func.func @transform_24(%arg0: i32) -> (i32, i32, i32) {
    %c0_i32 = arith.constant 0 : i32
    %c0_i32_0 = arith.constant 0 : i32
    %c0_i32_1 = arith.constant 0 : i32
    %c0_i32_2 = arith.constant 0 : i32
    return %c0_i32, %c0_i32_0, %c0_i32_1 : i32, i32, i32
  }
  func.func @transform_25(%arg0: i32) -> (i32, i32, i32) {
    %c0_i32 = arith.constant 0 : i32
    %c0_i32_0 = arith.constant 0 : i32
    %c0_i32_1 = arith.constant 0 : i32
    %c0_i32_2 = arith.constant 0 : i32
    return %c0_i32, %c0_i32_0, %c0_i32_1 : i32, i32, i32
  }
  func.func @transform_26(%arg0: i32) -> (i32, i32) {
    %c0_i32 = arith.constant 0 : i32
    %c0_i32_0 = arith.constant 0 : i32
    %c0_i32_1 = arith.constant 0 : i32
    return %c0_i32, %c0_i32_0 : i32, i32
  }
  func.func @transform_27(%arg0: i32) -> (i32, i32) {
    %c0_i32 = arith.constant 0 : i32
    %c0_i32_0 = arith.constant 0 : i32
    %c0_i32_1 = arith.constant 0 : i32
    return %c0_i32, %c0_i32_0 : i32, i32
  }
  func.func @transform_28(%arg0: i32) -> (i32, i32) {
    %c0_i32 = arith.constant 0 : i32
    %c0_i32_0 = arith.constant 0 : i32
    %c0_i32_1 = arith.constant 0 : i32
    return %c0_i32, %c0_i32_0 : i32, i32
  }
  func.func @transform_29(%arg0: i32) -> (i32, i32) {
    %c0_i32 = arith.constant 0 : i32
    %c0_i32_0 = arith.constant 0 : i32
    %c0_i32_1 = arith.constant 0 : i32
    return %c0_i32, %c0_i32_0 : i32, i32
  }
  func.func @transform_30(%arg0: i32) -> (i32, i32) {
    %c0_i32 = arith.constant 0 : i32
    %c0_i32_0 = arith.constant 0 : i32
    %c0_i32_1 = arith.constant 0 : i32
    return %c0_i32, %c0_i32_0 : i32, i32
  }
  func.func @transform_31(%arg0: i32) -> (i32, i32) {
    %c0_i32 = arith.constant 0 : i32
    %c0_i32_0 = arith.constant 0 : i32
    %c0_i32_1 = arith.constant 0 : i32
    return %c0_i32, %c0_i32_0 : i32, i32
  }
  func.func @transform_32(%arg0: i32) -> (i32, i32) {
    %c0_i32 = arith.constant 0 : i32
    %c0_i32_0 = arith.constant 0 : i32
    %c0_i32_1 = arith.constant 0 : i32
    return %c0_i32, %c0_i32_0 : i32, i32
  }
  func.func @transform_33(%arg0: i32) -> (i32, i32) {
    %c0_i32 = arith.constant 0 : i32
    %c0_i32_0 = arith.constant 0 : i32
    %c0_i32_1 = arith.constant 0 : i32
    return %c0_i32, %c0_i32_0 : i32, i32
  }
  func.func @transform_34(%arg0: i32) -> (i32, i32) {
    %c0_i32 = arith.constant 0 : i32
    %c0_i32_0 = arith.constant 0 : i32
    %c0_i32_1 = arith.constant 0 : i32
    return %c0_i32, %c0_i32_0 : i32, i32
  }
  func.func @transform_35(%arg0: i32) -> (i32, i32, i32) {
    %c0_i32 = arith.constant 0 : i32
    %c0_i32_0 = arith.constant 0 : i32
    %c0_i32_1 = arith.constant 0 : i32
    %c0_i32_2 = arith.constant 0 : i32
    return %c0_i32, %c0_i32_0, %c0_i32_1 : i32, i32, i32
  }
  func.func @transform_36(%arg0: i32) -> (i32, i32, i32) {
    %c0_i32 = arith.constant 0 : i32
    %c0_i32_0 = arith.constant 0 : i32
    %c0_i32_1 = arith.constant 0 : i32
    %c0_i32_2 = arith.constant 0 : i32
    return %c0_i32, %c0_i32_0, %c0_i32_1 : i32, i32, i32
  }
  func.func @transform_37(%arg0: i32) -> (i32, i32, i32) {
    %c0_i32 = arith.constant 0 : i32
    %c0_i32_0 = arith.constant 0 : i32
    %c0_i32_1 = arith.constant 0 : i32
    %c0_i32_2 = arith.constant 0 : i32
    return %c0_i32, %c0_i32_0, %c0_i32_1 : i32, i32, i32
  }
  func.func @transform_38(%arg0: i32) -> (i32, i32, i32) {
    %c0_i32 = arith.constant 0 : i32
    %c0_i32_0 = arith.constant 0 : i32
    %c0_i32_1 = arith.constant 0 : i32
    %c0_i32_2 = arith.constant 0 : i32
    return %c0_i32, %c0_i32_0, %c0_i32_1 : i32, i32, i32
  }
  func.func @transform_39(%arg0: i32) -> (i32, i32, i32) {
    %c0_i32 = arith.constant 0 : i32
    %c0_i32_0 = arith.constant 0 : i32
    %c0_i32_1 = arith.constant 0 : i32
    %c0_i32_2 = arith.constant 0 : i32
    return %c0_i32, %c0_i32_0, %c0_i32_1 : i32, i32, i32
  }
  func.func @transform_40(%arg0: i32) -> (i32, i32, i32) {
    %c0_i32 = arith.constant 0 : i32
    %c0_i32_0 = arith.constant 0 : i32
    %c0_i32_1 = arith.constant 0 : i32
    %c0_i32_2 = arith.constant 0 : i32
    return %c0_i32, %c0_i32_0, %c0_i32_1 : i32, i32, i32
  }
  func.func @transform_41(%arg0: i32) -> (i32, i32, i32) {
    %c0_i32 = arith.constant 0 : i32
    %c0_i32_0 = arith.constant 0 : i32
    %c0_i32_1 = arith.constant 0 : i32
    %c0_i32_2 = arith.constant 0 : i32
    return %c0_i32, %c0_i32_0, %c0_i32_1 : i32, i32, i32
  }
  func.func @transform_42(%arg0: i32) -> (i32, i32) {
    %c0_i32 = arith.constant 0 : i32
    %c0_i32_0 = arith.constant 0 : i32
    %c0_i32_1 = arith.constant 0 : i32
    return %c0_i32, %c0_i32_0 : i32, i32
  }
  func.func @transform_43(%arg0: i32) -> (i32, i32) {
    %c0_i32 = arith.constant 0 : i32
    %c0_i32_0 = arith.constant 0 : i32
    %c0_i32_1 = arith.constant 0 : i32
    return %c0_i32, %c0_i32_0 : i32, i32
  }
  func.func @transform_44(%arg0: i32) -> (i32, i32) {
    %c0_i32 = arith.constant 0 : i32
    %c0_i32_0 = arith.constant 0 : i32
    %c0_i32_1 = arith.constant 0 : i32
    return %c0_i32, %c0_i32_0 : i32, i32
  }
  func.func @transform_45(%arg0: i32) -> (i32, i32) {
    %c0_i32 = arith.constant 0 : i32
    %c0_i32_0 = arith.constant 0 : i32
    %c0_i32_1 = arith.constant 0 : i32
    return %c0_i32, %c0_i32_0 : i32, i32
  }
  func.func @transform_46(%arg0: i32) -> (i32, i32) {
    %c0_i32 = arith.constant 0 : i32
    %c0_i32_0 = arith.constant 0 : i32
    %c0_i32_1 = arith.constant 0 : i32
    return %c0_i32, %c0_i32_0 : i32, i32
  }
  func.func @transform_47(%arg0: i32) -> (i32, i32) {
    %c0_i32 = arith.constant 0 : i32
    %c0_i32_0 = arith.constant 0 : i32
    %c0_i32_1 = arith.constant 0 : i32
    return %c0_i32, %c0_i32_0 : i32, i32
  }
  func.func @transform_48(%arg0: i32) -> (i32, i32) {
    %c0_i32 = arith.constant 0 : i32
    %c0_i32_0 = arith.constant 0 : i32
    %c0_i32_1 = arith.constant 0 : i32
    return %c0_i32, %c0_i32_0 : i32, i32
  }
  func.func @transform_49(%arg0: i32) -> (i32, i32) {
    %c0_i32 = arith.constant 0 : i32
    %c0_i32_0 = arith.constant 0 : i32
    %c0_i32_1 = arith.constant 0 : i32
    return %c0_i32, %c0_i32_0 : i32, i32
  }
  func.func @transform_50(%arg0: i32) -> (i32, i32) {
    %c0_i32 = arith.constant 0 : i32
    %c0_i32_0 = arith.constant 0 : i32
    %c0_i32_1 = arith.constant 0 : i32
    return %c0_i32, %c0_i32_0 : i32, i32
  }
  func.func @transform_51(%arg0: i32) -> (i32, i32) {
    %c0_i32 = arith.constant 0 : i32
    %c0_i32_0 = arith.constant 0 : i32
    %c0_i32_1 = arith.constant 0 : i32
    return %c0_i32, %c0_i32_0 : i32, i32
  }
  func.func @transform_52(%arg0: i32) -> (i32, i32) {
    %c0_i32 = arith.constant 0 : i32
    %c0_i32_0 = arith.constant 0 : i32
    %c0_i32_1 = arith.constant 0 : i32
    return %c0_i32, %c0_i32_0 : i32, i32
  }
  func.func @transform_53(%arg0: i32) -> (i32, i32) {
    %c0_i32 = arith.constant 0 : i32
    %c0_i32_0 = arith.constant 0 : i32
    %c0_i32_1 = arith.constant 0 : i32
    return %c0_i32, %c0_i32_0 : i32, i32
  }
  func.func @transform_54(%arg0: i32) -> (i32, i32) {
    %c0_i32 = arith.constant 0 : i32
    %c0_i32_0 = arith.constant 0 : i32
    %c0_i32_1 = arith.constant 0 : i32
    return %c0_i32, %c0_i32_0 : i32, i32
  }
  func.func @transform_55(%arg0: i32) -> (i32, i32) {
    %c0_i32 = arith.constant 0 : i32
    %c0_i32_0 = arith.constant 0 : i32
    %c0_i32_1 = arith.constant 0 : i32
    return %c0_i32, %c0_i32_0 : i32, i32
  }
}

</mosaic_0001>

<llo_original>
// kernel: transformer_forward.1
$region0: #{transformer_forward.1}
  #allocation0 [shape = 'u32[]', space=smem, size = 0x4, offset = 0x4, fixed_abs, tag = 'smem constant byte address 0x4 - core index']
  #allocation1 [shape = 'u32[144,128]{1,0:T(1,128)}', space=vmem, size = 0x12000, scoped, tag = 'internal scratch']
  #allocation2 [shape = 'f32[1,1]{1,0:T(1,128)S(1)}', space=vmem, size = 0x200, scoped, tag = 'scoped memory for transformer_forward.1']
  %s0 = inlined_call_operand.smem [shape: u32[56], index: -1, kind: input, shape index: {}]
  %s1 = sld [smem:[%s0]]
  %s2 = scalar_lea.smem %s0, 1
  %s3 = sld [smem:[%s2]]
  %s4 = scalar_lea.smem %s0, 2
  %s5 = sld [smem:[%s4]]
  %s6 = scalar_lea.smem %s0, 3
  %s7 = sld [smem:[%s6]]
  %s8 = scalar_lea.smem %s0, 4
  %s9 = sld [smem:[%s8]]
  %s10 = scalar_lea.smem %s0, 5
  %s11 = sld [smem:[%s10]]
  %s12 = scalar_lea.smem %s0, 6
  %s13 = sld [smem:[%s12]]
  %s14 = scalar_lea.smem %s0, 7
  %s15 = sld [smem:[%s14]]
  %s16 = scalar_lea.smem %s0, 8
  %s17 = sld [smem:[%s16]]
  %s18 = scalar_lea.smem %s0, 9
  %s19 = sld [smem:[%s18]]
  %s20 = scalar_lea.smem %s0, 10
  %s21 = sld [smem:[%s20]]
  %s22 = scalar_lea.smem %s0, 11
  %s23 = sld [smem:[%s22]]
  %s24 = scalar_lea.smem %s0, 12
  %s25 = sld [smem:[%s24]]
  %s26 = scalar_lea.smem %s0, 13
  %s27 = sld [smem:[%s26]]
  %s28 = scalar_lea.smem %s0, 14
  %s29 = sld [smem:[%s28]]
  %s30 = scalar_lea.smem %s0, 15
  %s31 = sld [smem:[%s30]]
  %s32 = scalar_lea.smem %s0, 16
  %s33 = sld [smem:[%s32]]
  %s34 = scalar_lea.smem %s0, 17
  %s35 = sld [smem:[%s34]]
  %s36 = scalar_lea.smem %s0, 18
  %s37 = sld [smem:[%s36]]
  %s38 = scalar_lea.smem %s0, 19
  %s39 = sld [smem:[%s38]]
  %s40 = scalar_lea.smem %s0, 20
  %s41 = sld [smem:[%s40]]
  %s42 = scalar_lea.smem %s0, 21
  %s43 = sld [smem:[%s42]]
  %s44 = scalar_lea.smem %s0, 22
  %s45 = sld [smem:[%s44]]
  %s46 = scalar_lea.smem %s0, 23
  %s47 = sld [smem:[%s46]]
  %s48 = scalar_lea.smem %s0, 24
  %s49 = sld [smem:[%s48]]
  %s50 = scalar_lea.smem %s0, 25
  %s51 = sld [smem:[%s50]]
  %s52 = scalar_lea.smem %s0, 26
  %s53 = sld [smem:[%s52]]
  %s54 = scalar_lea.smem %s0, 27
  %s55 = sld [smem:[%s54]]
  %s56 = scalar_lea.smem %s0, 28
  %s57 = sld [smem:[%s56]]
  %s58 = scalar_lea.smem %s0, 29
  %s59 = sld [smem:[%s58]]
  %s60 = scalar_lea.smem %s0, 30
  %s61 = sld [smem:[%s60]]
  %s62 = scalar_lea.smem %s0, 31
  %s63 = sld [smem:[%s62]]
  %s64 = scalar_lea.smem %s0, 32
  %s65 = sld [smem:[%s64]]
  %s66 = scalar_lea.smem %s0, 33
  %s67 = sld [smem:[%s66]]
  %s68 = scalar_lea.smem %s0, 34
  %s69 = sld [smem:[%s68]]
  %s70 = scalar_lea.smem %s0, 35
  %s71 = sld [smem:[%s70]]
  %s72 = scalar_lea.smem %s0, 36
  %s73 = sld [smem:[%s72]]
  %s74 = scalar_lea.smem %s0, 37
  %s75 = sld [smem:[%s74]]
  %s76 = scalar_lea.smem %s0, 38
  %s77 = sld [smem:[%s76]]
  %s78 = scalar_lea.smem %s0, 39
  %s79 = sld [smem:[%s78]]
  %s80 = scalar_lea.smem %s0, 40
  %s81 = sld [smem:[%s80]]
  %s82 = scalar_lea.smem %s0, 41
  %s83 = sld [smem:[%s82]]
  %s84 = scalar_lea.smem %s0, 42
  %s85 = sld [smem:[%s84]]
  %s86 = scalar_lea.smem %s0, 43
  %s87 = sld [smem:[%s86]]
  %s88 = scalar_lea.smem %s0, 44
  %s89 = sld [smem:[%s88]]
  %s90 = scalar_lea.smem %s0, 45
  %s91 = sld [smem:[%s90]]
  %s92 = scalar_lea.smem %s0, 46
  %s93 = sld [smem:[%s92]]
  %s94 = scalar_lea.smem %s0, 47
  %s95 = sld [smem:[%s94]]
  %s96 = scalar_lea.smem %s0, 48
  %s97 = sld [smem:[%s96]]
  %s98 = scalar_lea.smem %s0, 49
  %s99 = sld [smem:[%s98]]
  %s100 = scalar_lea.smem %s0, 50
  %s101 = sld [smem:[%s100]]
  %s102 = scalar_lea.smem %s0, 51
  %s103 = sld [smem:[%s102]]
  %s104 = scalar_lea.smem %s0, 52
  %s105 = sld [smem:[%s104]]
  %s106 = scalar_lea.smem %s0, 53
  %s107 = sld [smem:[%s106]]
  %s108 = scalar_lea.smem %s0, 54
  %s109 = sld [smem:[%s108]]
  %s110 = scalar_lea.smem %s0, 55
  %s111 = sld [smem:[%s110]]
  %s112 = sld [smem:[#allocation0]]
  $region280: #{transformer_forward.1} parent=0
    _
  %s114 = ssub.s32 1, %s112
  %s115 = scalar_select 0, %s114, %s112
  %v116 = vstv %s109
  %117 = vst [vmem:[#allocation2] sm:$0x1] %v116
  $region1: #{transformer_forward.1} parent=0
    #allocation3 [shape = 'u8[512]{0}', space=vmem, size = 0x400, scoped, tag = 'input window, operand 52, single buffered']
    #allocation4 [shape = 's32[1]{0}', space=sflag, size = 0x4, scoped, tag = 'scoped memory for transformer_forward.1']
    #allocation5 [shape = 'u8[512]{0}', space=vmem, size = 0x400, scoped, tag = 'input window, operand 53, single buffered']
    #allocation6 [shape = 's32[1]{0}', space=sflag, size = 0x4, scoped, tag = 'scoped memory for transformer_forward.1']
    %118 = vsyncpa [#allocation4], 0
    %119 = vsyncpa [#allocation6], 0
    // Predicated region
    $region2: #{transformer_forward.1} parent=1 // pred_check
      _
    $region3: #{transformer_forward.1} parent=1 // pred_check_branch
      %121 = sbr.rel (0) target = $region5
    $region4: #{transformer_forward.1} parent=1 // pred_region
      _
    $region5: #{transformer_forward.1} parent=1 // pred_fallthru
      _
    // Predicated region
    $region6: #{transformer_forward.1} parent=1 // pred_check
      _
    $region7: #{transformer_forward.1} parent=1 // pred_check_branch
      %123 = sbr.rel (0) target = $region9
    $region8: #{transformer_forward.1} parent=1 // pred_region
      _
    $region9: #{transformer_forward.1} parent=1 // pred_fallthru
      _
    // Predicated region
    $region10: #{transformer_forward.1} parent=1 // pred_check
      _
    $region11: #{transformer_forward.1} parent=1 // pred_check_branch
      %125 = sbr.rel (0) target = $region13
    $region12: #{transformer_forward.1} parent=1 // pred_region
      _
    $region13: #{transformer_forward.1} parent=1 // pred_fallthru
      _
    // Predicated region
    $region14: #{transformer_forward.1} parent=1 // pred_check
      _
    $region15: #{transformer_forward.1} parent=1 // pred_check_branch
      %127 = sbr.rel (0) target = $region17
    $region16: #{transformer_forward.1} parent=1 // pred_region
      _
    $region17: #{transformer_forward.1} parent=1 // pred_fallthru
      _
    // Predicated region
    $region18: #{transformer_forward.1} parent=1 // pred_check
      _
    $region19: #{transformer_forward.1} parent=1 // pred_check_branch
      %129 = sbr.rel (0) target = $region21
    $region20: #{transformer_forward.1} parent=1 // pred_region
      _
    $region21: #{transformer_forward.1} parent=1 // pred_fallthru
      _
    // Predicated region
    $region22: #{transformer_forward.1} parent=1 // pred_check
      _
    $region23: #{transformer_forward.1} parent=1 // pred_check_branch
      %131 = sbr.rel (0) target = $region25
    $region24: #{transformer_forward.1} parent=1 // pred_region
      _
    $region25: #{transformer_forward.1} parent=1 // pred_fallthru
      _
    // Predicated region
    $region26: #{transformer_forward.1} parent=1 // pred_check
      _
    $region27: #{transformer_forward.1} parent=1 // pred_check_branch
      %133 = sbr.rel (0) target = $region29
    $region28: #{transformer_forward.1} parent=1 // pred_region
      _
    $region29: #{transformer_forward.1} parent=1 // pred_fallthru
      _
    // Predicated region
    $region30: #{transformer_forward.1} parent=1 // pred_check
      _
    $region31: #{transformer_forward.1} parent=1 // pred_check_branch
      %135 = sbr.rel (0) target = $region33
    $region32: #{transformer_forward.1} parent=1 // pred_region
      _
    $region33: #{transformer_forward.1} parent=1 // pred_fallthru
      _
    // Predicated region
    $region34: #{transformer_forward.1} parent=1 // pred_check
      _
    $region35: #{transformer_forward.1} parent=1 // pred_check_branch
      %137 = sbr.rel (0) target = $region37
    $region36: #{transformer_forward.1} parent=1 // pred_region
      _
    $region37: #{transformer_forward.1} parent=1 // pred_fallthru
      _
    // Predicated region
    $region38: #{transformer_forward.1} parent=1 // pred_check
      _
    $region39: #{transformer_forward.1} parent=1 // pred_check_branch
      %139 = sbr.rel (0) target = $region41
    $region40: #{transformer_forward.1} parent=1 // pred_region
      _
    $region41: #{transformer_forward.1} parent=1 // pred_fallthru
      _
    // Predicated region
    $region42: #{transformer_forward.1} parent=1 // pred_check
      _
    $region43: #{transformer_forward.1} parent=1 // pred_check_branch
      %141 = sbr.rel (0) target = $region45
    $region44: #{transformer_forward.1} parent=1 // pred_region
      _
    $region45: #{transformer_forward.1} parent=1 // pred_fallthru
      _
    // Predicated region
    $region46: #{transformer_forward.1} parent=1 // pred_check
      _
    $region47: #{transformer_forward.1} parent=1 // pred_check_branch
      %143 = sbr.rel (0) target = $region49
    $region48: #{transformer_forward.1} parent=1 // pred_region
      _
    $region49: #{transformer_forward.1} parent=1 // pred_fallthru
      _
    // Predicated region
    $region50: #{transformer_forward.1} parent=1 // pred_check
      _
    $region51: #{transformer_forward.1} parent=1 // pred_check_branch
      %145 = sbr.rel (0) target = $region53
    $region52: #{transformer_forward.1} parent=1 // pred_region
      _
    $region53: #{transformer_forward.1} parent=1 // pred_fallthru
      _
    // Predicated region
    $region54: #{transformer_forward.1} parent=1 // pred_check
      _
    $region55: #{transformer_forward.1} parent=1 // pred_check_branch
      %147 = sbr.rel (0) target = $region57
    $region56: #{transformer_forward.1} parent=1 // pred_region
      _
    $region57: #{transformer_forward.1} parent=1 // pred_fallthru
      _
    // Predicated region
    $region58: #{transformer_forward.1} parent=1 // pred_check
      _
    $region59: #{transformer_forward.1} parent=1 // pred_check_branch
      %149 = sbr.rel (0) target = $region61
    $region60: #{transformer_forward.1} parent=1 // pred_region
      _
    $region61: #{transformer_forward.1} parent=1 // pred_fallthru
      _
    // Predicated region
    $region62: #{transformer_forward.1} parent=1 // pred_check
      _
    $region63: #{transformer_forward.1} parent=1 // pred_check_branch
      %151 = sbr.rel (0) target = $region65
    $region64: #{transformer_forward.1} parent=1 // pred_region
      _
    $region65: #{transformer_forward.1} parent=1 // pred_fallthru
      _
    // Predicated region
    $region66: #{transformer_forward.1} parent=1 // pred_check
      _
    $region67: #{transformer_forward.1} parent=1 // pred_check_branch
      %153 = sbr.rel (0) target = $region69
    $region68: #{transformer_forward.1} parent=1 // pred_region
      _
    $region69: #{transformer_forward.1} parent=1 // pred_fallthru
      _
    // Predicated region
    $region70: #{transformer_forward.1} parent=1 // pred_check
      _
    $region71: #{transformer_forward.1} parent=1 // pred_check_branch
      %155 = sbr.rel (0) target = $region73
    $region72: #{transformer_forward.1} parent=1 // pred_region
      _
    $region73: #{transformer_forward.1} parent=1 // pred_fallthru
      _
    // Predicated region
    $region74: #{transformer_forward.1} parent=1 // pred_check
      _
    $region75: #{transformer_forward.1} parent=1 // pred_check_branch
      %157 = sbr.rel (0) target = $region77
    $region76: #{transformer_forward.1} parent=1 // pred_region
      _
    $region77: #{transformer_forward.1} parent=1 // pred_fallthru
      _
    // Predicated region
    $region78: #{transformer_forward.1} parent=1 // pred_check
      _
    $region79: #{transformer_forward.1} parent=1 // pred_check_branch
      %159 = sbr.rel (0) target = $region81
    $region80: #{transformer_forward.1} parent=1 // pred_region
      _
    $region81: #{transformer_forward.1} parent=1 // pred_fallthru
      _
    // Predicated region
    $region82: #{transformer_forward.1} parent=1 // pred_check
      _
    $region83: #{transformer_forward.1} parent=1 // pred_check_branch
      %161 = sbr.rel (0) target = $region85
    $region84: #{transformer_forward.1} parent=1 // pred_region
      _
    $region85: #{transformer_forward.1} parent=1 // pred_fallthru
      _
    // Predicated region
    $region86: #{transformer_forward.1} parent=1 // pred_check
      _
    $region87: #{transformer_forward.1} parent=1 // pred_check_branch
      %163 = sbr.rel (0) target = $region89
    $region88: #{transformer_forward.1} parent=1 // pred_region
      _
    $region89: #{transformer_forward.1} parent=1 // pred_fallthru
      _
    // Predicated region
    $region90: #{transformer_forward.1} parent=1 // pred_check
      _
    $region91: #{transformer_forward.1} parent=1 // pred_check_branch
      %165 = sbr.rel (0) target = $region93
    $region92: #{transformer_forward.1} parent=1 // pred_region
      _
    $region93: #{transformer_forward.1} parent=1 // pred_fallthru
      _
    // Predicated region
    $region94: #{transformer_forward.1} parent=1 // pred_check
      _
    $region95: #{transformer_forward.1} parent=1 // pred_check_branch
      %167 = sbr.rel (0) target = $region97
    $region96: #{transformer_forward.1} parent=1 // pred_region
      _
    $region97: #{transformer_forward.1} parent=1 // pred_fallthru
      _
    // Predicated region
    $region98: #{transformer_forward.1} parent=1 // pred_check
      _
    $region99: #{transformer_forward.1} parent=1 // pred_check_branch
      %169 = sbr.rel (0) target = $region101
    $region100: #{transformer_forward.1} parent=1 // pred_region
      _
    $region101: #{transformer_forward.1} parent=1 // pred_fallthru
      _
    // Predicated region
    $region102: #{transformer_forward.1} parent=1 // pred_check
      _
    $region103: #{transformer_forward.1} parent=1 // pred_check_branch
      %171 = sbr.rel (0) target = $region105
    $region104: #{transformer_forward.1} parent=1 // pred_region
      _
    $region105: #{transformer_forward.1} parent=1 // pred_fallthru
      _
    // Predicated region
    $region106: #{transformer_forward.1} parent=1 // pred_check
      _
    $region107: #{transformer_forward.1} parent=1 // pred_check_branch
      %173 = sbr.rel (0) target = $region109
    $region108: #{transformer_forward.1} parent=1 // pred_region
      _
    $region109: #{transformer_forward.1} parent=1 // pred_fallthru
      _
    // Predicated region
    $region110: #{transformer_forward.1} parent=1 // pred_check
      _
    $region111: #{transformer_forward.1} parent=1 // pred_check_branch
      %175 = sbr.rel (0) target = $region113
    $region112: #{transformer_forward.1} parent=1 // pred_region
      _
    $region113: #{transformer_forward.1} parent=1 // pred_fallthru
      _
    // Predicated region
    $region114: #{transformer_forward.1} parent=1 // pred_check
      _
    $region115: #{transformer_forward.1} parent=1 // pred_check_branch
      %177 = sbr.rel (0) target = $region117
    $region116: #{transformer_forward.1} parent=1 // pred_region
      _
    $region117: #{transformer_forward.1} parent=1 // pred_fallthru
      _
    // Predicated region
    $region118: #{transformer_forward.1} parent=1 // pred_check
      _
    $region119: #{transformer_forward.1} parent=1 // pred_check_branch
      %179 = sbr.rel (0) target = $region121
    $region120: #{transformer_forward.1} parent=1 // pred_region
      _
    $region121: #{transformer_forward.1} parent=1 // pred_fallthru
      _
    // Predicated region
    $region122: #{transformer_forward.1} parent=1 // pred_check
      _
    $region123: #{transformer_forward.1} parent=1 // pred_check_branch
      %181 = sbr.rel (0) target = $region125
    $region124: #{transformer_forward.1} parent=1 // pred_region
      _
    $region125: #{transformer_forward.1} parent=1 // pred_fallthru
      _
    // Predicated region
    $region126: #{transformer_forward.1} parent=1 // pred_check
      _
    $region127: #{transformer_forward.1} parent=1 // pred_check_branch
      %183 = sbr.rel (0) target = $region129
    $region128: #{transformer_forward.1} parent=1 // pred_region
      _
    $region129: #{transformer_forward.1} parent=1 // pred_fallthru
      _
    // Predicated region
    $region130: #{transformer_forward.1} parent=1 // pred_check
      _
    $region131: #{transformer_forward.1} parent=1 // pred_check_branch
      %185 = sbr.rel (0) target = $region133
    $region132: #{transformer_forward.1} parent=1 // pred_region
      _
    $region133: #{transformer_forward.1} parent=1 // pred_fallthru
      _
    // Predicated region
    $region134: #{transformer_forward.1} parent=1 // pred_check
      _
    $region135: #{transformer_forward.1} parent=1 // pred_check_branch
      %187 = sbr.rel (0) target = $region137
    $region136: #{transformer_forward.1} parent=1 // pred_region
      _
    $region137: #{transformer_forward.1} parent=1 // pred_fallthru
      _
    // Predicated region
    $region138: #{transformer_forward.1} parent=1 // pred_check
      _
    $region139: #{transformer_forward.1} parent=1 // pred_check_branch
      %189 = sbr.rel (0) target = $region141
    $region140: #{transformer_forward.1} parent=1 // pred_region
      _
    $region141: #{transformer_forward.1} parent=1 // pred_fallthru
      _
    // Predicated region
    $region142: #{transformer_forward.1} parent=1 // pred_check
      _
    $region143: #{transformer_forward.1} parent=1 // pred_check_branch
      %191 = sbr.rel (0) target = $region145
    $region144: #{transformer_forward.1} parent=1 // pred_region
      _
    $region145: #{transformer_forward.1} parent=1 // pred_fallthru
      _
    // Predicated region
    $region146: #{transformer_forward.1} parent=1 // pred_check
      _
    $region147: #{transformer_forward.1} parent=1 // pred_check_branch
      %193 = sbr.rel (0) target = $region149
    $region148: #{transformer_forward.1} parent=1 // pred_region
      _
    $region149: #{transformer_forward.1} parent=1 // pred_fallthru
      _
    // Predicated region
    $region150: #{transformer_forward.1} parent=1 // pred_check
      _
    $region151: #{transformer_forward.1} parent=1 // pred_check_branch
      %195 = sbr.rel (0) target = $region153
    $region152: #{transformer_forward.1} parent=1 // pred_region
      _
    $region153: #{transformer_forward.1} parent=1 // pred_fallthru
      _
    // Predicated region
    $region154: #{transformer_forward.1} parent=1 // pred_check
      _
    $region155: #{transformer_forward.1} parent=1 // pred_check_branch
      %197 = sbr.rel (0) target = $region157
    $region156: #{transformer_forward.1} parent=1 // pred_region
      _
    $region157: #{transformer_forward.1} parent=1 // pred_fallthru
      _
    // Predicated region
    $region158: #{transformer_forward.1} parent=1 // pred_check
      _
    $region159: #{transformer_forward.1} parent=1 // pred_check_branch
      %199 = sbr.rel (0) target = $region161
    $region160: #{transformer_forward.1} parent=1 // pred_region
      _
    $region161: #{transformer_forward.1} parent=1 // pred_fallthru
      _
    // Predicated region
    $region162: #{transformer_forward.1} parent=1 // pred_check
      _
    $region163: #{transformer_forward.1} parent=1 // pred_check_branch
      %201 = sbr.rel (0) target = $region165
    $region164: #{transformer_forward.1} parent=1 // pred_region
      _
    $region165: #{transformer_forward.1} parent=1 // pred_fallthru
      _
    // Predicated region
    $region166: #{transformer_forward.1} parent=1 // pred_check
      _
    $region167: #{transformer_forward.1} parent=1 // pred_check_branch
      %203 = sbr.rel (0) target = $region169
    $region168: #{transformer_forward.1} parent=1 // pred_region
      _
    $region169: #{transformer_forward.1} parent=1 // pred_fallthru
      _
    // Predicated region
    $region170: #{transformer_forward.1} parent=1 // pred_check
      _
    $region171: #{transformer_forward.1} parent=1 // pred_check_branch
      %205 = sbr.rel (0) target = $region173
    $region172: #{transformer_forward.1} parent=1 // pred_region
      _
    $region173: #{transformer_forward.1} parent=1 // pred_fallthru
      _
    // Predicated region
    $region174: #{transformer_forward.1} parent=1 // pred_check
      _
    $region175: #{transformer_forward.1} parent=1 // pred_check_branch
      %207 = sbr.rel (0) target = $region177
    $region176: #{transformer_forward.1} parent=1 // pred_region
      _
    $region177: #{transformer_forward.1} parent=1 // pred_fallthru
      _
    // Predicated region
    $region178: #{transformer_forward.1} parent=1 // pred_check
      _
    $region179: #{transformer_forward.1} parent=1 // pred_check_branch
      %209 = sbr.rel (0) target = $region181
    $region180: #{transformer_forward.1} parent=1 // pred_region
      _
    $region181: #{transformer_forward.1} parent=1 // pred_fallthru
      _
    // Predicated region
    $region182: #{transformer_forward.1} parent=1 // pred_check
      _
    $region183: #{transformer_forward.1} parent=1 // pred_check_branch
      %211 = sbr.rel (0) target = $region185
    $region184: #{transformer_forward.1} parent=1 // pred_region
      _
    $region185: #{transformer_forward.1} parent=1 // pred_fallthru
      _
    // Predicated region
    $region186: #{transformer_forward.1} parent=1 // pred_check
      _
    $region187: #{transformer_forward.1} parent=1 // pred_check_branch
      %213 = sbr.rel (0) target = $region189
    $region188: #{transformer_forward.1} parent=1 // pred_region
      _
    $region189: #{transformer_forward.1} parent=1 // pred_fallthru
      _
    // Predicated region
    $region190: #{transformer_forward.1} parent=1 // pred_check
      _
    $region191: #{transformer_forward.1} parent=1 // pred_check_branch
      %215 = sbr.rel (0) target = $region193
    $region192: #{transformer_forward.1} parent=1 // pred_region
      _
    $region193: #{transformer_forward.1} parent=1 // pred_fallthru
      _
    // Predicated region
    $region194: #{transformer_forward.1} parent=1 // pred_check
      _
    $region195: #{transformer_forward.1} parent=1 // pred_check_branch
      %217 = sbr.rel (0) target = $region197
    $region196: #{transformer_forward.1} parent=1 // pred_region
      _
    $region197: #{transformer_forward.1} parent=1 // pred_fallthru
      _
    // Predicated region
    $region198: #{transformer_forward.1} parent=1 // pred_check
      _
    $region199: #{transformer_forward.1} parent=1 // pred_check_branch
      %219 = sbr.rel (0) target = $region201
    $region200: #{transformer_forward.1} parent=1 // pred_region
      _
    $region201: #{transformer_forward.1} parent=1 // pred_fallthru
      _
    // Predicated region
    $region202: #{transformer_forward.1} parent=1 // pred_check
      _
    $region203: #{transformer_forward.1} parent=1 // pred_check_branch
      %221 = sbr.rel (0) target = $region205
    $region204: #{transformer_forward.1} parent=1 // pred_region
      _
    $region205: #{transformer_forward.1} parent=1 // pred_fallthru
      _
    // Predicated region
    $region206: #{transformer_forward.1} parent=1 // pred_check
      _
    $region207: #{transformer_forward.1} parent=1 // pred_check_branch
      %223 = sbr.rel (0) target = $region209
    $region208: #{transformer_forward.1} parent=1 // pred_region
      _
    $region209: #{transformer_forward.1} parent=1 // pred_fallthru
      _
    // Predicated region
    $region210: #{transformer_forward.1} parent=1 // pred_check
      _
    $region211: #{transformer_forward.1} parent=1 // pred_check_branch
      %225 = sbr.rel (0) target = $region213
    $region212: #{transformer_forward.1} parent=1 // pred_region
      %s227 = ssub.s32 16, 16
      %228 = vsyncadd [#allocation4], %s227
      %s230 = sshll.u32 [#allocation3], 4
      %s231 = int_to_ptr.vmem [resolvable:$true] %s230
      %233 = dma.hbm_to_vmem [thread:$0]  %s105, 16, %s231, [#allocation4]
    $region213: #{transformer_forward.1} parent=1 // pred_fallthru
      _
    // Predicated region
    $region214: #{transformer_forward.1} parent=1 // pred_check
      _
    $region215: #{transformer_forward.1} parent=1 // pred_check_branch
      %235 = sbr.rel (0) target = $region217
    $region216: #{transformer_forward.1} parent=1 // pred_region
      %s237 = ssub.s32 16, 16
      %238 = vsyncadd [#allocation6], %s237
      %s240 = sshll.u32 [#allocation5], 4
      %s241 = int_to_ptr.vmem [resolvable:$true] %s240
      %243 = dma.hbm_to_vmem [thread:$0]  %s107, 16, %s241, [#allocation6]
    $region217: #{transformer_forward.1} parent=1 // pred_fallthru
      _
    // Predicated region
    $region218: #{transformer_forward.1} parent=1 // pred_check
      _
    $region219: #{transformer_forward.1} parent=1 // pred_check_branch
      %245 = sbr.rel (0) target = $region221
    $region220: #{transformer_forward.1} parent=1 // pred_region
      _
    $region221: #{transformer_forward.1} parent=1 // pred_fallthru
      _
    // Predicated region
    $region222: #{transformer_forward.1} parent=1 // pred_check
      _
    $region223: #{transformer_forward.1} parent=1 // pred_check_branch
      %247 = sbr.rel (0) target = $region225
    $region224: #{transformer_forward.1} parent=1 // pred_region
      %248 = dma.done [#allocation4], 16
    $region225: #{transformer_forward.1} parent=1 // pred_fallthru
      _
    // Predicated region
    $region226: #{transformer_forward.1} parent=1 // pred_check
      _
    $region227: #{transformer_forward.1} parent=1 // pred_check_branch
      %250 = sbr.rel (0) target = $region229
    $region228: #{transformer_forward.1} parent=1 // pred_region
      %251 = dma.done [#allocation6], 16
    $region229: #{transformer_forward.1} parent=1 // pred_fallthru
      _
    %v252 = vld [vmem:[%s1] sm:$0xff]
    %v253 = vld [vmem:[%s1 + $0x8] sm:$0xff]
    %v254 = vld [vmem:[%s3] sm:$0xff]
    %v255 = vld [vmem:[%s3 + $0x8] sm:$0xff]
    %v256 = vld [vmem:[%s3 + $0x10] sm:$0xff]
    %v257 = vld [vmem:[%s3 + $0x18] sm:$0xff]
    %v258 = vld [vmem:[%s5] sm:$0x1]
    %v260 = vlaneseq
    %v261 = vshrl.u32 %v260, 7
    %v262 = vsub.s32 0, %v261
    %v263 = vrot.slane %v258, %v262
    %vm265 = vcmask 261120
    %v267 = vsel %vm265, %v252, 0
    %v270 = vsel %vm265, %v253, 0
    %272 = vmatprep.subr.mxu0 0.0
    %273 = vmatpush1.msra.mxu0 0.0
    %274 = vmatprep.subr.mxu0 0.0
    %275 = vmatpush1.msra.mxu0 0.0
    %276 = vmatprep.subr.mxu0 0.0
    %277 = vmatpush1.msra.mxu0 0.0
    %278 = vmatprep.subr.mxu0 0.0
    %279 = vmatpush1.msra.mxu0 0.0
    %280 = vmatprep.subr.mxu0 0.0
    %281 = vmatpush1.msra.mxu0 0.0
    %282 = vmatprep.subr.mxu0 0.0
    %283 = vmatpush1.msra.mxu0 0.0
    %284 = vmatprep.subr.mxu0 0.0
    %285 = vmatpush1.msra.mxu0 0.0
    %286 = vmatprep.subr.mxu0 0.0
    %287 = vmatpush1.msra.mxu0 0.0
    %288 = vmatprep.subr.mxu0 0.0
    %289 = vmatpush1.msra.mxu0 0.0
    %290 = vmatprep.subr.mxu0 0.0
    %291 = vmatpush1.msra.mxu0 0.0
    %292 = vmatprep.subr.mxu0 0.0
    %293 = vmatpush1.msra.mxu0 0.0
    %294 = vmatprep.subr.mxu0 0.0
    %295 = vmatpush1.msra.mxu0 0.0
    %296 = vmatprep.subr.mxu0 0.0
    %297 = vmatpush1.msra.mxu0 %v257
    %298 = vmatprep.subr.mxu0 0.0
    %299 = vmatpush1.msra.mxu0 %v256
    %300 = vmatprep.subr.mxu0 0.0
    %301 = vmatpush1.msra.mxu0 %v255
    %302 = vmatprep.subr.mxu0 0.0
    %303 = vmatpush1.msra.mxu0 %v254
    %304 = vmatprep.subr.mxu0 0.0
    %305 = vmatpush2.msra.mxu0 0.0
    %306 = vmatprep.subr.mxu0 0.0
    %307 = vmatpush2.msra.mxu0 0.0
    %308 = vmatprep.subr.mxu0 0.0
    %309 = vmatpush2.msra.mxu0 0.0
    %310 = vmatprep.subr.mxu0 0.0
    %311 = vmatpush2.msra.mxu0 0.0
    %312 = vmatprep.subr.mxu0 0.0
    %313 = vmatpush2.msra.mxu0 0.0
    %314 = vmatprep.subr.mxu0 0.0
    %315 = vmatpush2.msra.mxu0 0.0
    %316 = vmatprep.subr.mxu0 0.0
    %317 = vmatpush2.msra.mxu0 0.0
    %318 = vmatprep.subr.mxu0 0.0
    %319 = vmatpush2.msra.mxu0 0.0
    %320 = vmatprep.subr.mxu0 0.0
    %321 = vmatpush2.msra.mxu0 0.0
    %322 = vmatprep.subr.mxu0 0.0
    %323 = vmatpush2.msra.mxu0 0.0
    %324 = vmatprep.subr.mxu0 0.0
    %325 = vmatpush2.msra.mxu0 0.0
    %326 = vmatprep.subr.mxu0 0.0
    %327 = vmatpush2.msra.mxu0 0.0
    %328 = vmatprep.subr.mxu0 0.0
    %329 = vmatpush2.msra.mxu0 0.0
    %330 = vmatprep.subr.mxu0 0.0
    %331 = vmatpush2.msra.mxu0 0.0
    %332 = vmatprep.subr.mxu0 0.0
    %333 = vmatpush2.msra.mxu0 0.0
    %334 = vmatprep.subr.mxu0 0.0
    %335 = vmatpush2.msra.mxu0 0.0
    %336 = vmatprep.mubr.f32.mxu0 0.0
    %337 = vmatmul.mubr.f32.gmra.mxu0 %v267
    %v338 = vpop.f32.mrf.mxu0
    %v339 = vadd.f32 %v263, %v338
    %v340 = vpop.f32.mrf.mxu0
    %341 = vmatprep.mubr.f32.mxu0 0.0
    %342 = vmatmul.mubr.f32.gmra.mxu0 %v270
    %v343 = vpop.f32.mrf.mxu0
    %v344 = vadd.f32 %v263, %v343
    %v345 = vpop.f32.mrf.mxu0
    %346 = vdwg.mxu0
    loop: start=0, step=1, limit=8
    $region230: #{transformer_forward.1} parent=1 // loop_pre_header
      _
    $region231: #{transformer_forward.1} parent=1 // loop_header
      %s348 = sphi 0, %s352
      %p349 = scmp.ge.s32.totalorder %s348, 8
      %v353 = vphi 0.0, %v880
    $region232: #{transformer_forward.1} parent=1 // loop_header_branch
      %351 = sbr.rel (%p349) target = $region236
    $region233: #{transformer_forward.1} parent=1 // loop_body
      %s354 = smul.u32 %s348, 128
      %s355 = scalar_lea.vmem %s7, %s354
      %v356 = vld [vmem:[%s355] sm:$0xff]
      %v357 = vld [vmem:[%s355 + $0x8] sm:$0xff]
      %v358 = vld [vmem:[%s355 + $0x10] sm:$0xff]
      %v359 = vld [vmem:[%s355 + $0x18] sm:$0xff]
      %v360 = vld [vmem:[%s355 + $0x20] sm:$0xff]
      %v361 = vld [vmem:[%s355 + $0x28] sm:$0xff]
      %v362 = vld [vmem:[%s355 + $0x30] sm:$0xff]
      %v363 = vld [vmem:[%s355 + $0x38] sm:$0xff]
      %v364 = vld [vmem:[%s355 + $0x40] sm:$0xff]
      %v365 = vld [vmem:[%s355 + $0x48] sm:$0xff]
      %v366 = vld [vmem:[%s355 + $0x50] sm:$0xff]
      %v367 = vld [vmem:[%s355 + $0x58] sm:$0xff]
      %v368 = vld [vmem:[%s355 + $0x60] sm:$0xff]
      %v369 = vld [vmem:[%s355 + $0x68] sm:$0xff]
      %v370 = vld [vmem:[%s355 + $0x70] sm:$0xff]
      %v371 = vld [vmem:[%s355 + $0x78] sm:$0xff]
      %s372 = scalar_lea.vmem %s9, %s348
      %v373 = vld [vmem:[%s372] sm:$0x1]
      %v375 = vlaneseq
      %v376 = vshrl.u32 %v375, 7
      %v377 = vsub.s32 0, %v376
      %v378 = vrot.slane %v373, %v377
      %380 = vmatprep.subr.mxu0 0.0
      %381 = vmatpush1.msra.mxu0 %v371
      %382 = vmatprep.subr.mxu0 0.0
      %383 = vmatpush1.msra.mxu0 %v370
      %384 = vmatprep.subr.mxu0 0.0
      %385 = vmatpush1.msra.mxu0 %v369
      %386 = vmatprep.subr.mxu0 0.0
      %387 = vmatpush1.msra.mxu0 %v368
      %388 = vmatprep.subr.mxu0 0.0
      %389 = vmatpush1.msra.mxu0 %v367
      %390 = vmatprep.subr.mxu0 0.0
      %391 = vmatpush1.msra.mxu0 %v366
      %392 = vmatprep.subr.mxu0 0.0
      %393 = vmatpush1.msra.mxu0 %v365
      %394 = vmatprep.subr.mxu0 0.0
      %395 = vmatpush1.msra.mxu0 %v364
      %396 = vmatprep.subr.mxu0 0.0
      %397 = vmatpush1.msra.mxu0 %v363
      %398 = vmatprep.subr.mxu0 0.0
      %399 = vmatpush1.msra.mxu0 %v362
      %400 = vmatprep.subr.mxu0 0.0
      %401 = vmatpush1.msra.mxu0 %v361
      %402 = vmatprep.subr.mxu0 0.0
      %403 = vmatpush1.msra.mxu0 %v360
      %404 = vmatprep.subr.mxu0 0.0
      %405 = vmatpush1.msra.mxu0 %v359
      %406 = vmatprep.subr.mxu0 0.0
      %407 = vmatpush1.msra.mxu0 %v358
      %408 = vmatprep.subr.mxu0 0.0
      %409 = vmatpush1.msra.mxu0 %v357
      %410 = vmatprep.subr.mxu0 0.0
      %411 = vmatpush1.msra.mxu0 %v356
      %412 = vmatprep.subr.mxu0 0.0
      %413 = vmatpush2.msra.mxu0 0.0
      %414 = vmatprep.subr.mxu0 0.0
      %415 = vmatpush2.msra.mxu0 0.0
      %416 = vmatprep.subr.mxu0 0.0
      %417 = vmatpush2.msra.mxu0 0.0
      %418 = vmatprep.subr.mxu0 0.0
      %419 = vmatpush2.msra.mxu0 0.0
      %420 = vmatprep.subr.mxu0 0.0
      %421 = vmatpush2.msra.mxu0 0.0
      %422 = vmatprep.subr.mxu0 0.0
      %423 = vmatpush2.msra.mxu0 0.0
      %424 = vmatprep.subr.mxu0 0.0
      %425 = vmatpush2.msra.mxu0 0.0
      %426 = vmatprep.subr.mxu0 0.0
      %427 = vmatpush2.msra.mxu0 0.0
      %428 = vmatprep.subr.mxu0 0.0
      %429 = vmatpush2.msra.mxu0 0.0
      %430 = vmatprep.subr.mxu0 0.0
      %431 = vmatpush2.msra.mxu0 0.0
      %432 = vmatprep.subr.mxu0 0.0
      %433 = vmatpush2.msra.mxu0 0.0
      %434 = vmatprep.subr.mxu0 0.0
      %435 = vmatpush2.msra.mxu0 0.0
      %436 = vmatprep.subr.mxu0 0.0
      %437 = vmatpush2.msra.mxu0 0.0
      %438 = vmatprep.subr.mxu0 0.0
      %439 = vmatpush2.msra.mxu0 0.0
      %440 = vmatprep.subr.mxu0 0.0
      %441 = vmatpush2.msra.mxu0 0.0
      %442 = vmatprep.subr.mxu0 0.0
      %443 = vmatpush2.msra.mxu0 0.0
      %444 = vmatprep.mubr.f32.mxu0 0.0
      %445 = vmatmul.mubr.f32.gmra.mxu0 %v339
      %v446 = vpop.f32.mrf.mxu0
      %v447 = vadd.f32 %v378, %v446
      %v448 = vpop.f32.mrf.mxu0
      %449 = vdwg.mxu0
      %s450 = scalar_lea.vmem %s11, %s354
      %v451 = vld [vmem:[%s450] sm:$0xff]
      %v452 = vld [vmem:[%s450 + $0x8] sm:$0xff]
      %v453 = vld [vmem:[%s450 + $0x10] sm:$0xff]
      %v454 = vld [vmem:[%s450 + $0x18] sm:$0xff]
      %v455 = vld [vmem:[%s450 + $0x20] sm:$0xff]
      %v456 = vld [vmem:[%s450 + $0x28] sm:$0xff]
      %v457 = vld [vmem:[%s450 + $0x30] sm:$0xff]
      %v458 = vld [vmem:[%s450 + $0x38] sm:$0xff]
      %v459 = vld [vmem:[%s450 + $0x40] sm:$0xff]
      %v460 = vld [vmem:[%s450 + $0x48] sm:$0xff]
      %v461 = vld [vmem:[%s450 + $0x50] sm:$0xff]
      %v462 = vld [vmem:[%s450 + $0x58] sm:$0xff]
      %v463 = vld [vmem:[%s450 + $0x60] sm:$0xff]
      %v464 = vld [vmem:[%s450 + $0x68] sm:$0xff]
      %v465 = vld [vmem:[%s450 + $0x70] sm:$0xff]
      %v466 = vld [vmem:[%s450 + $0x78] sm:$0xff]
      %s467 = scalar_lea.vmem %s13, %s348
      %v468 = vld [vmem:[%s467] sm:$0x1]
      %v470 = vlaneseq
      %v471 = vshrl.u32 %v470, 7
      %v472 = vsub.s32 0, %v471
      %v473 = vrot.slane %v468, %v472
      %475 = vmatprep.subr.mxu0 0.0
      %476 = vmatpush1.msra.mxu0 %v466
      %477 = vmatprep.subr.mxu0 0.0
      %478 = vmatpush1.msra.mxu0 %v465
      %479 = vmatprep.subr.mxu0 0.0
      %480 = vmatpush1.msra.mxu0 %v464
      %481 = vmatprep.subr.mxu0 0.0
      %482 = vmatpush1.msra.mxu0 %v463
      %483 = vmatprep.subr.mxu0 0.0
      %484 = vmatpush1.msra.mxu0 %v462
      %485 = vmatprep.subr.mxu0 0.0
      %486 = vmatpush1.msra.mxu0 %v461
      %487 = vmatprep.subr.mxu0 0.0
      %488 = vmatpush1.msra.mxu0 %v460
      %489 = vmatprep.subr.mxu0 0.0
      %490 = vmatpush1.msra.mxu0 %v459
      %491 = vmatprep.subr.mxu0 0.0
      %492 = vmatpush1.msra.mxu0 %v458
      %493 = vmatprep.subr.mxu0 0.0
      %494 = vmatpush1.msra.mxu0 %v457
      %495 = vmatprep.subr.mxu0 0.0
      %496 = vmatpush1.msra.mxu0 %v456
      %497 = vmatprep.subr.mxu0 0.0
      %498 = vmatpush1.msra.mxu0 %v455
      %499 = vmatprep.subr.mxu0 0.0
      %500 = vmatpush1.msra.mxu0 %v454
      %501 = vmatprep.subr.mxu0 0.0
      %502 = vmatpush1.msra.mxu0 %v453
      %503 = vmatprep.subr.mxu0 0.0
      %504 = vmatpush1.msra.mxu0 %v452
      %505 = vmatprep.subr.mxu0 0.0
      %506 = vmatpush1.msra.mxu0 %v451
      %507 = vmatprep.subr.mxu0 0.0
      %508 = vmatpush2.msra.mxu0 0.0
      %509 = vmatprep.subr.mxu0 0.0
      %510 = vmatpush2.msra.mxu0 0.0
      %511 = vmatprep.subr.mxu0 0.0
      %512 = vmatpush2.msra.mxu0 0.0
      %513 = vmatprep.subr.mxu0 0.0
      %514 = vmatpush2.msra.mxu0 0.0
      %515 = vmatprep.subr.mxu0 0.0
      %516 = vmatpush2.msra.mxu0 0.0
      %517 = vmatprep.subr.mxu0 0.0
      %518 = vmatpush2.msra.mxu0 0.0
      %519 = vmatprep.subr.mxu0 0.0
      %520 = vmatpush2.msra.mxu0 0.0
      %521 = vmatprep.subr.mxu0 0.0
      %522 = vmatpush2.msra.mxu0 0.0
      %523 = vmatprep.subr.mxu0 0.0
      %524 = vmatpush2.msra.mxu0 0.0
      %525 = vmatprep.subr.mxu0 0.0
      %526 = vmatpush2.msra.mxu0 0.0
      %527 = vmatprep.subr.mxu0 0.0
      %528 = vmatpush2.msra.mxu0 0.0
      %529 = vmatprep.subr.mxu0 0.0
      %530 = vmatpush2.msra.mxu0 0.0
      %531 = vmatprep.subr.mxu0 0.0
      %532 = vmatpush2.msra.mxu0 0.0
      %533 = vmatprep.subr.mxu0 0.0
      %534 = vmatpush2.msra.mxu0 0.0
      %535 = vmatprep.subr.mxu0 0.0
      %536 = vmatpush2.msra.mxu0 0.0
      %537 = vmatprep.subr.mxu0 0.0
      %538 = vmatpush2.msra.mxu0 0.0
      %539 = vmatprep.mubr.f32.mxu0 0.0
      %540 = vmatmul.mubr.f32.gmra.mxu0 %v339
      %v541 = vpop.f32.mrf.mxu0
      %v542 = vadd.f32 %v473, %v541
      %v543 = vpop.f32.mrf.mxu0
      %544 = vdwg.mxu0
      %s545 = scalar_lea.vmem %s15, %s354
      %v546 = vld [vmem:[%s545] sm:$0xff]
      %v547 = vld [vmem:[%s545 + $0x8] sm:$0xff]
      %v548 = vld [vmem:[%s545 + $0x10] sm:$0xff]
      %v549 = vld [vmem:[%s545 + $0x18] sm:$0xff]
      %v550 = vld [vmem:[%s545 + $0x20] sm:$0xff]
      %v551 = vld [vmem:[%s545 + $0x28] sm:$0xff]
      %v552 = vld [vmem:[%s545 + $0x30] sm:$0xff]
      %v553 = vld [vmem:[%s545 + $0x38] sm:$0xff]
      %v554 = vld [vmem:[%s545 + $0x40] sm:$0xff]
      %v555 = vld [vmem:[%s545 + $0x48] sm:$0xff]
      %v556 = vld [vmem:[%s545 + $0x50] sm:$0xff]
      %v557 = vld [vmem:[%s545 + $0x58] sm:$0xff]
      %v558 = vld [vmem:[%s545 + $0x60] sm:$0xff]
      %v559 = vld [vmem:[%s545 + $0x68] sm:$0xff]
      %v560 = vld [vmem:[%s545 + $0x70] sm:$0xff]
      %v561 = vld [vmem:[%s545 + $0x78] sm:$0xff]
      %s562 = scalar_lea.vmem %s17, %s348
      %v563 = vld [vmem:[%s562] sm:$0x1]
      %v565 = vlaneseq
      %v566 = vshrl.u32 %v565, 7
      %v567 = vsub.s32 0, %v566
      %v568 = vrot.slane %v563, %v567
      %570 = vmatprep.subr.mxu0 0.0
      %571 = vmatpush1.msra.mxu0 %v561
      %572 = vmatprep.subr.mxu0 0.0
      %573 = vmatpush1.msra.mxu0 %v560
      %574 = vmatprep.subr.mxu0 0.0
      %575 = vmatpush1.msra.mxu0 %v559
      %576 = vmatprep.subr.mxu0 0.0
      %577 = vmatpush1.msra.mxu0 %v558
      %578 = vmatprep.subr.mxu0 0.0
      %579 = vmatpush1.msra.mxu0 %v557
      %580 = vmatprep.subr.mxu0 0.0
      %581 = vmatpush1.msra.mxu0 %v556
      %582 = vmatprep.subr.mxu0 0.0
      %583 = vmatpush1.msra.mxu0 %v555
      %584 = vmatprep.subr.mxu0 0.0
      %585 = vmatpush1.msra.mxu0 %v554
      %586 = vmatprep.subr.mxu0 0.0
      %587 = vmatpush1.msra.mxu0 %v553
      %588 = vmatprep.subr.mxu0 0.0
      %589 = vmatpush1.msra.mxu0 %v552
      %590 = vmatprep.subr.mxu0 0.0
      %591 = vmatpush1.msra.mxu0 %v551
      %592 = vmatprep.subr.mxu0 0.0
      %593 = vmatpush1.msra.mxu0 %v550
      %594 = vmatprep.subr.mxu0 0.0
      %595 = vmatpush1.msra.mxu0 %v549
      %596 = vmatprep.subr.mxu0 0.0
      %597 = vmatpush1.msra.mxu0 %v548
      %598 = vmatprep.subr.mxu0 0.0
      %599 = vmatpush1.msra.mxu0 %v547
      %600 = vmatprep.subr.mxu0 0.0
      %601 = vmatpush1.msra.mxu0 %v546
      %602 = vmatprep.subr.mxu0 0.0
      %603 = vmatpush2.msra.mxu0 0.0
      %604 = vmatprep.subr.mxu0 0.0
      %605 = vmatpush2.msra.mxu0 0.0
      %606 = vmatprep.subr.mxu0 0.0
      %607 = vmatpush2.msra.mxu0 0.0
      %608 = vmatprep.subr.mxu0 0.0
      %609 = vmatpush2.msra.mxu0 0.0
      %610 = vmatprep.subr.mxu0 0.0
      %611 = vmatpush2.msra.mxu0 0.0
      %612 = vmatprep.subr.mxu0 0.0
      %613 = vmatpush2.msra.mxu0 0.0
      %614 = vmatprep.subr.mxu0 0.0
      %615 = vmatpush2.msra.mxu0 0.0
      %616 = vmatprep.subr.mxu0 0.0
      %617 = vmatpush2.msra.mxu0 0.0
      %618 = vmatprep.subr.mxu0 0.0
      %619 = vmatpush2.msra.mxu0 0.0
      %620 = vmatprep.subr.mxu0 0.0
      %621 = vmatpush2.msra.mxu0 0.0
      %622 = vmatprep.subr.mxu0 0.0
      %623 = vmatpush2.msra.mxu0 0.0
      %624 = vmatprep.subr.mxu0 0.0
      %625 = vmatpush2.msra.mxu0 0.0
      %626 = vmatprep.subr.mxu0 0.0
      %627 = vmatpush2.msra.mxu0 0.0
      %628 = vmatprep.subr.mxu0 0.0
      %629 = vmatpush2.msra.mxu0 0.0
      %630 = vmatprep.subr.mxu0 0.0
      %631 = vmatpush2.msra.mxu0 0.0
      %632 = vmatprep.subr.mxu0 0.0
      %633 = vmatpush2.msra.mxu0 0.0
      %634 = vmatprep.mubr.f32.mxu0 0.0
      %635 = vmatmul.mubr.f32.gmra.mxu0 %v339
      %v636 = vpop.f32.mrf.mxu0
      %v637 = vadd.f32 %v568, %v636
      %v638 = vpop.f32.mrf.mxu0
      %639 = vdwg.mxu0
      %vm640 = vcmask 130048
      %v642 = vsel %vm640, %v447, 0
      %v645 = vsel %vm640, %v542, 0
      %647 = vmatprep.subr.mxu0 0.0
      %648 = vmatpush1.xpose.msra.mxu0 0.0
      %649 = vmatprep.subr.mxu0 0.0
      %650 = vmatpush1.xpose.msra.mxu0 0.0
      %651 = vmatprep.subr.mxu0 0.0
      %652 = vmatpush1.xpose.msra.mxu0 0.0
      %653 = vmatprep.subr.mxu0 0.0
      %654 = vmatpush1.xpose.msra.mxu0 0.0
      %655 = vmatprep.subr.mxu0 0.0
      %656 = vmatpush1.xpose.msra.mxu0 0.0
      %657 = vmatprep.subr.mxu0 0.0
      %658 = vmatpush1.xpose.msra.mxu0 0.0
      %659 = vmatprep.subr.mxu0 0.0
      %660 = vmatpush1.xpose.msra.mxu0 0.0
      %661 = vmatprep.subr.mxu0 0.0
      %662 = vmatpush1.xpose.msra.mxu0 0.0
      %663 = vmatprep.subr.mxu0 0.0
      %664 = vmatpush1.xpose.msra.mxu0 0.0
      %665 = vmatprep.subr.mxu0 0.0
      %666 = vmatpush1.xpose.msra.mxu0 0.0
      %667 = vmatprep.subr.mxu0 0.0
      %668 = vmatpush1.xpose.msra.mxu0 0.0
      %669 = vmatprep.subr.mxu0 0.0
      %670 = vmatpush1.xpose.msra.mxu0 0.0
      %671 = vmatprep.subr.mxu0 0.0
      %672 = vmatpush1.xpose.msra.mxu0 0.0
      %673 = vmatprep.subr.mxu0 0.0
      %674 = vmatpush1.xpose.msra.mxu0 0.0
      %675 = vmatprep.subr.mxu0 0.0
      %676 = vmatpush1.xpose.msra.mxu0 0.0
      %677 = vmatprep.subr.mxu0 0.0
      %678 = vmatpush1.xpose.msra.mxu0 %v645
      %679 = vmatprep.subr.mxu0 0.0
      %680 = vmatpush2.xpose.msra.mxu0 0.0
      %681 = vmatprep.subr.mxu0 0.0
      %682 = vmatpush2.xpose.msra.mxu0 0.0
      %683 = vmatprep.subr.mxu0 0.0
      %684 = vmatpush2.xpose.msra.mxu0 0.0
      %685 = vmatprep.subr.mxu0 0.0
      %686 = vmatpush2.xpose.msra.mxu0 0.0
      %687 = vmatprep.subr.mxu0 0.0
      %688 = vmatpush2.xpose.msra.mxu0 0.0
      %689 = vmatprep.subr.mxu0 0.0
      %690 = vmatpush2.xpose.msra.mxu0 0.0
      %691 = vmatprep.subr.mxu0 0.0
      %692 = vmatpush2.xpose.msra.mxu0 0.0
      %693 = vmatprep.subr.mxu0 0.0
      %694 = vmatpush2.xpose.msra.mxu0 0.0
      %695 = vmatprep.subr.mxu0 0.0
      %696 = vmatpush2.xpose.msra.mxu0 0.0
      %697 = vmatprep.subr.mxu0 0.0
      %698 = vmatpush2.xpose.msra.mxu0 0.0
      %699 = vmatprep.subr.mxu0 0.0
      %700 = vmatpush2.xpose.msra.mxu0 0.0
      %701 = vmatprep.subr.mxu0 0.0
      %702 = vmatpush2.xpose.msra.mxu0 0.0
      %703 = vmatprep.subr.mxu0 0.0
      %704 = vmatpush2.xpose.msra.mxu0 0.0
      %705 = vmatprep.subr.mxu0 0.0
      %706 = vmatpush2.xpose.msra.mxu0 0.0
      %707 = vmatprep.subr.mxu0 0.0
      %708 = vmatpush2.xpose.msra.mxu0 0.0
      %709 = vmatprep.subr.mxu0 0.0
      %710 = vmatpush2.xpose.msra.mxu0 0.0
      %711 = vmatprep.mubr.f32.mxu0 0.0
      %712 = vmatmul.mubr.f32.gmra.mxu0 %v642
      %v713 = vpop.f32.mrf.mxu0
      %v714 = vadd.f32 0.0, %v713
      %v715 = vpop.f32.mrf.mxu0
      %716 = vdwg.mxu0
      %v717 = vmul.f32 %v714, 0.25
      %vm718 = vcmask 64512
      %v719 = vsel %vm718, %v717, -inf
      %720 = vmax.xlane.f32.xlu0 %v719
      %v721 = vpop.xlane.xlu0 %720
      %v722 = vsub.f32 %v717, %v721
      %v723 = vmul.f32 %v722, 1.442695
      %v724 = vpow.pop %v723
      %v725 = vsel %vm718, %v724, 0.0
      %726 = vadd.xlane.f32.xlu0 %v725
      %v727 = vpop.xlane.xlu0 %726
      %v728 = vrcp.pop %v727
      %v729 = vmul.f32 %v724, %v728
      %v731 = vsel %vm718, %v729, 0
      %733 = vmatprep.subr.mxu0 0.0
      %734 = vmatpush1.msra.mxu0 0.0
      %735 = vmatprep.subr.mxu0 0.0
      %736 = vmatpush1.msra.mxu0 0.0
      %737 = vmatprep.subr.mxu0 0.0
      %738 = vmatpush1.msra.mxu0 0.0
      %739 = vmatprep.subr.mxu0 0.0
      %740 = vmatpush1.msra.mxu0 0.0
      %741 = vmatprep.subr.mxu0 0.0
      %742 = vmatpush1.msra.mxu0 0.0
      %743 = vmatprep.subr.mxu0 0.0
      %744 = vmatpush1.msra.mxu0 0.0
      %745 = vmatprep.subr.mxu0 0.0
      %746 = vmatpush1.msra.mxu0 0.0
      %747 = vmatprep.subr.mxu0 0.0
      %748 = vmatpush1.msra.mxu0 0.0
      %749 = vmatprep.subr.mxu0 0.0
      %750 = vmatpush1.msra.mxu0 0.0
      %751 = vmatprep.subr.mxu0 0.0
      %752 = vmatpush1.msra.mxu0 0.0
      %753 = vmatprep.subr.mxu0 0.0
      %754 = vmatpush1.msra.mxu0 0.0
      %755 = vmatprep.subr.mxu0 0.0
      %756 = vmatpush1.msra.mxu0 0.0
      %757 = vmatprep.subr.mxu0 0.0
      %758 = vmatpush1.msra.mxu0 0.0
      %759 = vmatprep.subr.mxu0 0.0
      %760 = vmatpush1.msra.mxu0 0.0
      %761 = vmatprep.subr.mxu0 0.0
      %762 = vmatpush1.msra.mxu0 0.0
      %763 = vmatprep.subr.mxu0 0.0
      %764 = vmatpush1.msra.mxu0 %v637
      %765 = vmatprep.subr.mxu0 0.0
      %766 = vmatpush2.msra.mxu0 0.0
      %767 = vmatprep.subr.mxu0 0.0
      %768 = vmatpush2.msra.mxu0 0.0
      %769 = vmatprep.subr.mxu0 0.0
      %770 = vmatpush2.msra.mxu0 0.0
      %771 = vmatprep.subr.mxu0 0.0
      %772 = vmatpush2.msra.mxu0 0.0
      %773 = vmatprep.subr.mxu0 0.0
      %774 = vmatpush2.msra.mxu0 0.0
      %775 = vmatprep.subr.mxu0 0.0
      %776 = vmatpush2.msra.mxu0 0.0
      %777 = vmatprep.subr.mxu0 0.0
      %778 = vmatpush2.msra.mxu0 0.0
      %779 = vmatprep.subr.mxu0 0.0
      %780 = vmatpush2.msra.mxu0 0.0
      %781 = vmatprep.subr.mxu0 0.0
      %782 = vmatpush2.msra.mxu0 0.0
      %783 = vmatprep.subr.mxu0 0.0
      %784 = vmatpush2.msra.mxu0 0.0
      %785 = vmatprep.subr.mxu0 0.0
      %786 = vmatpush2.msra.mxu0 0.0
      %787 = vmatprep.subr.mxu0 0.0
      %788 = vmatpush2.msra.mxu0 0.0
      %789 = vmatprep.subr.mxu0 0.0
      %790 = vmatpush2.msra.mxu0 0.0
      %791 = vmatprep.subr.mxu0 0.0
      %792 = vmatpush2.msra.mxu0 0.0
      %793 = vmatprep.subr.mxu0 0.0
      %794 = vmatpush2.msra.mxu0 0.0
      %795 = vmatprep.subr.mxu0 0.0
      %796 = vmatpush2.msra.mxu0 0.0
      %797 = vmatprep.mubr.f32.mxu0 0.0
      %798 = vmatmul.mubr.f32.gmra.mxu0 %v731
      %v799 = vpop.f32.mrf.mxu0
      %v800 = vadd.f32 0.0, %v799
      %v801 = vpop.f32.mrf.mxu0
      %802 = vdwg.mxu0
      %s803 = smul.u32 %s348, 16
      %s804 = scalar_lea.vmem %s19, %s803
      %v805 = vld [vmem:[%s804] sm:$0xff]
      %v806 = vld [vmem:[%s804 + $0x8] sm:$0xff]
      %v808 = vsel %vm640, %v800, 0
      %810 = vmatprep.subr.mxu0 0.0
      %811 = vmatpush1.msra.mxu0 0.0
      %812 = vmatprep.subr.mxu0 0.0
      %813 = vmatpush1.msra.mxu0 0.0
      %814 = vmatprep.subr.mxu0 0.0
      %815 = vmatpush1.msra.mxu0 0.0
      %816 = vmatprep.subr.mxu0 0.0
      %817 = vmatpush1.msra.mxu0 0.0
      %818 = vmatprep.subr.mxu0 0.0
      %819 = vmatpush1.msra.mxu0 0.0
      %820 = vmatprep.subr.mxu0 0.0
      %821 = vmatpush1.msra.mxu0 0.0
      %822 = vmatprep.subr.mxu0 0.0
      %823 = vmatpush1.msra.mxu0 0.0
      %824 = vmatprep.subr.mxu0 0.0
      %825 = vmatpush1.msra.mxu0 0.0
      %826 = vmatprep.subr.mxu0 0.0
      %827 = vmatpush1.msra.mxu0 0.0
      %828 = vmatprep.subr.mxu0 0.0
      %829 = vmatpush1.msra.mxu0 0.0
      %830 = vmatprep.subr.mxu0 0.0
      %831 = vmatpush1.msra.mxu0 0.0
      %832 = vmatprep.subr.mxu0 0.0
      %833 = vmatpush1.msra.mxu0 0.0
      %834 = vmatprep.subr.mxu0 0.0
      %835 = vmatpush1.msra.mxu0 0.0
      %836 = vmatprep.subr.mxu0 0.0
      %837 = vmatpush1.msra.mxu0 0.0
      %838 = vmatprep.subr.mxu0 0.0
      %839 = vmatpush1.msra.mxu0 %v806
      %840 = vmatprep.subr.mxu0 0.0
      %841 = vmatpush1.msra.mxu0 %v805
      %842 = vmatprep.subr.mxu0 0.0
      %843 = vmatpush2.msra.mxu0 0.0
      %844 = vmatprep.subr.mxu0 0.0
      %845 = vmatpush2.msra.mxu0 0.0
      %846 = vmatprep.subr.mxu0 0.0
      %847 = vmatpush2.msra.mxu0 0.0
      %848 = vmatprep.subr.mxu0 0.0
      %849 = vmatpush2.msra.mxu0 0.0
      %850 = vmatprep.subr.mxu0 0.0
      %851 = vmatpush2.msra.mxu0 0.0
      %852 = vmatprep.subr.mxu0 0.0
      %853 = vmatpush2.msra.mxu0 0.0
      %854 = vmatprep.subr.mxu0 0.0
      %855 = vmatpush2.msra.mxu0 0.0
      %856 = vmatprep.subr.mxu0 0.0
      %857 = vmatpush2.msra.mxu0 0.0
      %858 = vmatprep.subr.mxu0 0.0
      %859 = vmatpush2.msra.mxu0 0.0
      %860 = vmatprep.subr.mxu0 0.0
      %861 = vmatpush2.msra.mxu0 0.0
      %862 = vmatprep.subr.mxu0 0.0
      %863 = vmatpush2.msra.mxu0 0.0
      %864 = vmatprep.subr.mxu0 0.0
      %865 = vmatpush2.msra.mxu0 0.0
      %866 = vmatprep.subr.mxu0 0.0
      %867 = vmatpush2.msra.mxu0 0.0
      %868 = vmatprep.subr.mxu0 0.0
      %869 = vmatpush2.msra.mxu0 0.0
      %870 = vmatprep.subr.mxu0 0.0
      %871 = vmatpush2.msra.mxu0 0.0
      %872 = vmatprep.subr.mxu0 0.0
      %873 = vmatpush2.msra.mxu0 0.0
      %874 = vmatprep.mubr.f32.mxu0 0.0
      %875 = vmatmul.mubr.f32.gmra.mxu0 %v808
      %v876 = vpop.f32.mrf.mxu0
      %v877 = vadd.f32 0.0, %v876
      %v878 = vpop.f32.mrf.mxu0
      %879 = vdwg.mxu0
      %v880 = vadd.f32 %v353, %v877
    $region234: #{transformer_forward.1} parent=1 // loop_footer
      %s352 = sadd.s32 1, %s348
    $region235: #{transformer_forward.1} parent=1 // loop_footer_branch
      %347 = sbr.rel target = $region231
    $region236: #{transformer_forward.1} parent=1 // loop_exit
      _
    %v881 = vadd.f32 %v339, %v353
    %v882 = vld [vmem:[%s21] sm:$0x1]
    %v884 = vlaneseq
    %v885 = vshrl.u32 %v884, 7
    %v886 = vsub.s32 0, %v885
    %v887 = vrot.slane %v882, %v886
    %v889 = vadd.f32 %v881, %v887
    %v890 = vld [vmem:[%s23] sm:$0x1]
    %v891 = vld [vmem:[%s25] sm:$0x1]
    %892 = vadd.xlane.f32.xlu0 %v889
    %v893 = vpop.xlane.xlu0 %892
    %v894 = vrcp.pop 128.0
    %v895 = vmul.f32 %v893, %v894
    %v896 = vsub.f32 %v889, %v895
    %v897 = vmul.f32 %v896, %v896
    %898 = vadd.xlane.f32.xlu0 %v897
    %v899 = vpop.xlane.xlu0 %898
    %v900 = vmul.f32 %v899, %v894
    %v901 = vadd.f32 %v900, 1e-05
    %v902 = vrsqrt.pop %v901
    %v903 = vmul.f32 %v896, %v902
    %v905 = vlaneseq
    %v906 = vshrl.u32 %v905, 7
    %v907 = vsub.s32 0, %v906
    %v908 = vrot.slane %v890, %v907
    %v910 = vmul.f32 %v903, %v908
    %v912 = vlaneseq
    %v913 = vshrl.u32 %v912, 7
    %v914 = vsub.s32 0, %v913
    %v915 = vrot.slane %v891, %v914
    %v917 = vadd.f32 %v910, %v915
    loop: start=0, step=1, limit=8
    $region237: #{transformer_forward.1} parent=1 // loop_pre_header
      _
    $region238: #{transformer_forward.1} parent=1 // loop_header
      %s919 = sphi 0, %s923
      %p920 = scmp.ge.s32.totalorder %s919, 8
      %v924 = vphi 0.0, %v1451
    $region239: #{transformer_forward.1} parent=1 // loop_header_branch
      %922 = sbr.rel (%p920) target = $region243
    $region240: #{transformer_forward.1} parent=1 // loop_body
      %s925 = smul.u32 %s919, 128
      %s926 = scalar_lea.vmem %s7, %s925
      %v927 = vld [vmem:[%s926] sm:$0xff]
      %v928 = vld [vmem:[%s926 + $0x8] sm:$0xff]
      %v929 = vld [vmem:[%s926 + $0x10] sm:$0xff]
      %v930 = vld [vmem:[%s926 + $0x18] sm:$0xff]
      %v931 = vld [vmem:[%s926 + $0x20] sm:$0xff]
      %v932 = vld [vmem:[%s926 + $0x28] sm:$0xff]
      %v933 = vld [vmem:[%s926 + $0x30] sm:$0xff]
      %v934 = vld [vmem:[%s926 + $0x38] sm:$0xff]
      %v935 = vld [vmem:[%s926 + $0x40] sm:$0xff]
      %v936 = vld [vmem:[%s926 + $0x48] sm:$0xff]
      %v937 = vld [vmem:[%s926 + $0x50] sm:$0xff]
      %v938 = vld [vmem:[%s926 + $0x58] sm:$0xff]
      %v939 = vld [vmem:[%s926 + $0x60] sm:$0xff]
      %v940 = vld [vmem:[%s926 + $0x68] sm:$0xff]
      %v941 = vld [vmem:[%s926 + $0x70] sm:$0xff]
      %v942 = vld [vmem:[%s926 + $0x78] sm:$0xff]
      %s943 = scalar_lea.vmem %s9, %s919
      %v944 = vld [vmem:[%s943] sm:$0x1]
      %v946 = vlaneseq
      %v947 = vshrl.u32 %v946, 7
      %v948 = vsub.s32 0, %v947
      %v949 = vrot.slane %v944, %v948
      %951 = vmatprep.subr.mxu0 0.0
      %952 = vmatpush1.msra.mxu0 %v942
      %953 = vmatprep.subr.mxu0 0.0
      %954 = vmatpush1.msra.mxu0 %v941
      %955 = vmatprep.subr.mxu0 0.0
      %956 = vmatpush1.msra.mxu0 %v940
      %957 = vmatprep.subr.mxu0 0.0
      %958 = vmatpush1.msra.mxu0 %v939
      %959 = vmatprep.subr.mxu0 0.0
      %960 = vmatpush1.msra.mxu0 %v938
      %961 = vmatprep.subr.mxu0 0.0
      %962 = vmatpush1.msra.mxu0 %v937
      %963 = vmatprep.subr.mxu0 0.0
      %964 = vmatpush1.msra.mxu0 %v936
      %965 = vmatprep.subr.mxu0 0.0
      %966 = vmatpush1.msra.mxu0 %v935
      %967 = vmatprep.subr.mxu0 0.0
      %968 = vmatpush1.msra.mxu0 %v934
      %969 = vmatprep.subr.mxu0 0.0
      %970 = vmatpush1.msra.mxu0 %v933
      %971 = vmatprep.subr.mxu0 0.0
      %972 = vmatpush1.msra.mxu0 %v932
      %973 = vmatprep.subr.mxu0 0.0
      %974 = vmatpush1.msra.mxu0 %v931
      %975 = vmatprep.subr.mxu0 0.0
      %976 = vmatpush1.msra.mxu0 %v930
      %977 = vmatprep.subr.mxu0 0.0
      %978 = vmatpush1.msra.mxu0 %v929
      %979 = vmatprep.subr.mxu0 0.0
      %980 = vmatpush1.msra.mxu0 %v928
      %981 = vmatprep.subr.mxu0 0.0
      %982 = vmatpush1.msra.mxu0 %v927
      %983 = vmatprep.subr.mxu0 0.0
      %984 = vmatpush2.msra.mxu0 0.0
      %985 = vmatprep.subr.mxu0 0.0
      %986 = vmatpush2.msra.mxu0 0.0
      %987 = vmatprep.subr.mxu0 0.0
      %988 = vmatpush2.msra.mxu0 0.0
      %989 = vmatprep.subr.mxu0 0.0
      %990 = vmatpush2.msra.mxu0 0.0
      %991 = vmatprep.subr.mxu0 0.0
      %992 = vmatpush2.msra.mxu0 0.0
      %993 = vmatprep.subr.mxu0 0.0
      %994 = vmatpush2.msra.mxu0 0.0
      %995 = vmatprep.subr.mxu0 0.0
      %996 = vmatpush2.msra.mxu0 0.0
      %997 = vmatprep.subr.mxu0 0.0
      %998 = vmatpush2.msra.mxu0 0.0
      %999 = vmatprep.subr.mxu0 0.0
      %1000 = vmatpush2.msra.mxu0 0.0
      %1001 = vmatprep.subr.mxu0 0.0
      %1002 = vmatpush2.msra.mxu0 0.0
      %1003 = vmatprep.subr.mxu0 0.0
      %1004 = vmatpush2.msra.mxu0 0.0
      %1005 = vmatprep.subr.mxu0 0.0
      %1006 = vmatpush2.msra.mxu0 0.0
      %1007 = vmatprep.subr.mxu0 0.0
      %1008 = vmatpush2.msra.mxu0 0.0
      %1009 = vmatprep.subr.mxu0 0.0
      %1010 = vmatpush2.msra.mxu0 0.0
      %1011 = vmatprep.subr.mxu0 0.0
      %1012 = vmatpush2.msra.mxu0 0.0
      %1013 = vmatprep.subr.mxu0 0.0
      %1014 = vmatpush2.msra.mxu0 0.0
      %1015 = vmatprep.mubr.f32.mxu0 0.0
      %1016 = vmatmul.mubr.f32.gmra.mxu0 %v344
      %v1017 = vpop.f32.mrf.mxu0
      %v1018 = vadd.f32 %v949, %v1017
      %v1019 = vpop.f32.mrf.mxu0
      %1020 = vdwg.mxu0
      %s1021 = scalar_lea.vmem %s11, %s925
      %v1022 = vld [vmem:[%s1021] sm:$0xff]
      %v1023 = vld [vmem:[%s1021 + $0x8] sm:$0xff]
      %v1024 = vld [vmem:[%s1021 + $0x10] sm:$0xff]
      %v1025 = vld [vmem:[%s1021 + $0x18] sm:$0xff]
      %v1026 = vld [vmem:[%s1021 + $0x20] sm:$0xff]
      %v1027 = vld [vmem:[%s1021 + $0x28] sm:$0xff]
      %v1028 = vld [vmem:[%s1021 + $0x30] sm:$0xff]
      %v1029 = vld [vmem:[%s1021 + $0x38] sm:$0xff]
      %v1030 = vld [vmem:[%s1021 + $0x40] sm:$0xff]
      %v1031 = vld [vmem:[%s1021 + $0x48] sm:$0xff]
      %v1032 = vld [vmem:[%s1021 + $0x50] sm:$0xff]
      %v1033 = vld [vmem:[%s1021 + $0x58] sm:$0xff]
      %v1034 = vld [vmem:[%s1021 + $0x60] sm:$0xff]
      %v1035 = vld [vmem:[%s1021 + $0x68] sm:$0xff]
      %v1036 = vld [vmem:[%s1021 + $0x70] sm:$0xff]
      %v1037 = vld [vmem:[%s1021 + $0x78] sm:$0xff]
      %s1038 = scalar_lea.vmem %s13, %s919
      %v1039 = vld [vmem:[%s1038] sm:$0x1]
      %v1041 = vlaneseq
      %v1042 = vshrl.u32 %v1041, 7
      %v1043 = vsub.s32 0, %v1042
      %v1044 = vrot.slane %v1039, %v1043
      %1046 = vmatprep.subr.mxu0 0.0
      %1047 = vmatpush1.msra.mxu0 %v1037
      %1048 = vmatprep.subr.mxu0 0.0
      %1049 = vmatpush1.msra.mxu0 %v1036
      %1050 = vmatprep.subr.mxu0 0.0
      %1051 = vmatpush1.msra.mxu0 %v1035
      %1052 = vmatprep.subr.mxu0 0.0
      %1053 = vmatpush1.msra.mxu0 %v1034
      %1054 = vmatprep.subr.mxu0 0.0
      %1055 = vmatpush1.msra.mxu0 %v1033
      %1056 = vmatprep.subr.mxu0 0.0
      %1057 = vmatpush1.msra.mxu0 %v1032
      %1058 = vmatprep.subr.mxu0 0.0
      %1059 = vmatpush1.msra.mxu0 %v1031
      %1060 = vmatprep.subr.mxu0 0.0
      %1061 = vmatpush1.msra.mxu0 %v1030
      %1062 = vmatprep.subr.mxu0 0.0
      %1063 = vmatpush1.msra.mxu0 %v1029
      %1064 = vmatprep.subr.mxu0 0.0
      %1065 = vmatpush1.msra.mxu0 %v1028
      %1066 = vmatprep.subr.mxu0 0.0
      %1067 = vmatpush1.msra.mxu0 %v1027
      %1068 = vmatprep.subr.mxu0 0.0
      %1069 = vmatpush1.msra.mxu0 %v1026
      %1070 = vmatprep.subr.mxu0 0.0
      %1071 = vmatpush1.msra.mxu0 %v1025
      %1072 = vmatprep.subr.mxu0 0.0
      %1073 = vmatpush1.msra.mxu0 %v1024
      %1074 = vmatprep.subr.mxu0 0.0
      %1075 = vmatpush1.msra.mxu0 %v1023
      %1076 = vmatprep.subr.mxu0 0.0
      %1077 = vmatpush1.msra.mxu0 %v1022
      %1078 = vmatprep.subr.mxu0 0.0
      %1079 = vmatpush2.msra.mxu0 0.0
      %1080 = vmatprep.subr.mxu0 0.0
      %1081 = vmatpush2.msra.mxu0 0.0
      %1082 = vmatprep.subr.mxu0 0.0
      %1083 = vmatpush2.msra.mxu0 0.0
      %1084 = vmatprep.subr.mxu0 0.0
      %1085 = vmatpush2.msra.mxu0 0.0
      %1086 = vmatprep.subr.mxu0 0.0
      %1087 = vmatpush2.msra.mxu0 0.0
      %1088 = vmatprep.subr.mxu0 0.0
      %1089 = vmatpush2.msra.mxu0 0.0
      %1090 = vmatprep.subr.mxu0 0.0
      %1091 = vmatpush2.msra.mxu0 0.0
      %1092 = vmatprep.subr.mxu0 0.0
      %1093 = vmatpush2.msra.mxu0 0.0
      %1094 = vmatprep.subr.mxu0 0.0
      %1095 = vmatpush2.msra.mxu0 0.0
      %1096 = vmatprep.subr.mxu0 0.0
      %1097 = vmatpush2.msra.mxu0 0.0
      %1098 = vmatprep.subr.mxu0 0.0
      %1099 = vmatpush2.msra.mxu0 0.0
      %1100 = vmatprep.subr.mxu0 0.0
      %1101 = vmatpush2.msra.mxu0 0.0
      %1102 = vmatprep.subr.mxu0 0.0
      %1103 = vmatpush2.msra.mxu0 0.0
      %1104 = vmatprep.subr.mxu0 0.0
      %1105 = vmatpush2.msra.mxu0 0.0
      %1106 = vmatprep.subr.mxu0 0.0
      %1107 = vmatpush2.msra.mxu0 0.0
      %1108 = vmatprep.subr.mxu0 0.0
      %1109 = vmatpush2.msra.mxu0 0.0
      %1110 = vmatprep.mubr.f32.mxu0 0.0
      %1111 = vmatmul.mubr.f32.gmra.mxu0 %v344
      %v1112 = vpop.f32.mrf.mxu0
      %v1113 = vadd.f32 %v1044, %v1112
      %v1114 = vpop.f32.mrf.mxu0
      %1115 = vdwg.mxu0
      %s1116 = scalar_lea.vmem %s15, %s925
      %v1117 = vld [vmem:[%s1116] sm:$0xff]
      %v1118 = vld [vmem:[%s1116 + $0x8] sm:$0xff]
      %v1119 = vld [vmem:[%s1116 + $0x10] sm:$0xff]
      %v1120 = vld [vmem:[%s1116 + $0x18] sm:$0xff]
      %v1121 = vld [vmem:[%s1116 + $0x20] sm:$0xff]
      %v1122 = vld [vmem:[%s1116 + $0x28] sm:$0xff]
      %v1123 = vld [vmem:[%s1116 + $0x30] sm:$0xff]
      %v1124 = vld [vmem:[%s1116 + $0x38] sm:$0xff]
      %v1125 = vld [vmem:[%s1116 + $0x40] sm:$0xff]
      %v1126 = vld [vmem:[%s1116 + $0x48] sm:$0xff]
      %v1127 = vld [vmem:[%s1116 + $0x50] sm:$0xff]
      %v1128 = vld [vmem:[%s1116 + $0x58] sm:$0xff]
      %v1129 = vld [vmem:[%s1116 + $0x60] sm:$0xff]
      %v1130 = vld [vmem:[%s1116 + $0x68] sm:$0xff]
      %v1131 = vld [vmem:[%s1116 + $0x70] sm:$0xff]
      %v1132 = vld [vmem:[%s1116 + $0x78] sm:$0xff]
      %s1133 = scalar_lea.vmem %s17, %s919
      %v1134 = vld [vmem:[%s1133] sm:$0x1]
      %v1136 = vlaneseq
      %v1137 = vshrl.u32 %v1136, 7
      %v1138 = vsub.s32 0, %v1137
      %v1139 = vrot.slane %v1134, %v1138
      %1141 = vmatprep.subr.mxu0 0.0
      %1142 = vmatpush1.msra.mxu0 %v1132
      %1143 = vmatprep.subr.mxu0 0.0
      %1144 = vmatpush1.msra.mxu0 %v1131
      %1145 = vmatprep.subr.mxu0 0.0
      %1146 = vmatpush1.msra.mxu0 %v1130
      %1147 = vmatprep.subr.mxu0 0.0
      %1148 = vmatpush1.msra.mxu0 %v1129
      %1149 = vmatprep.subr.mxu0 0.0
      %1150 = vmatpush1.msra.mxu0 %v1128
      %1151 = vmatprep.subr.mxu0 0.0
      %1152 = vmatpush1.msra.mxu0 %v1127
      %1153 = vmatprep.subr.mxu0 0.0
      %1154 = vmatpush1.msra.mxu0 %v1126
      %1155 = vmatprep.subr.mxu0 0.0
      %1156 = vmatpush1.msra.mxu0 %v1125
      %1157 = vmatprep.subr.mxu0 0.0
      %1158 = vmatpush1.msra.mxu0 %v1124
      %1159 = vmatprep.subr.mxu0 0.0
      %1160 = vmatpush1.msra.mxu0 %v1123
      %1161 = vmatprep.subr.mxu0 0.0
      %1162 = vmatpush1.msra.mxu0 %v1122
      %1163 = vmatprep.subr.mxu0 0.0
      %1164 = vmatpush1.msra.mxu0 %v1121
      %1165 = vmatprep.subr.mxu0 0.0
      %1166 = vmatpush1.msra.mxu0 %v1120
      %1167 = vmatprep.subr.mxu0 0.0
      %1168 = vmatpush1.msra.mxu0 %v1119
      %1169 = vmatprep.subr.mxu0 0.0
      %1170 = vmatpush1.msra.mxu0 %v1118
      %1171 = vmatprep.subr.mxu0 0.0
      %1172 = vmatpush1.msra.mxu0 %v1117
      %1173 = vmatprep.subr.mxu0 0.0
      %1174 = vmatpush2.msra.mxu0 0.0
      %1175 = vmatprep.subr.mxu0 0.0
      %1176 = vmatpush2.msra.mxu0 0.0
      %1177 = vmatprep.subr.mxu0 0.0
      %1178 = vmatpush2.msra.mxu0 0.0
      %1179 = vmatprep.subr.mxu0 0.0
      %1180 = vmatpush2.msra.mxu0 0.0
      %1181 = vmatprep.subr.mxu0 0.0
      %1182 = vmatpush2.msra.mxu0 0.0
      %1183 = vmatprep.subr.mxu0 0.0
      %1184 = vmatpush2.msra.mxu0 0.0
      %1185 = vmatprep.subr.mxu0 0.0
      %1186 = vmatpush2.msra.mxu0 0.0
      %1187 = vmatprep.subr.mxu0 0.0
      %1188 = vmatpush2.msra.mxu0 0.0
      %1189 = vmatprep.subr.mxu0 0.0
      %1190 = vmatpush2.msra.mxu0 0.0
      %1191 = vmatprep.subr.mxu0 0.0
      %1192 = vmatpush2.msra.mxu0 0.0
      %1193 = vmatprep.subr.mxu0 0.0
      %1194 = vmatpush2.msra.mxu0 0.0
      %1195 = vmatprep.subr.mxu0 0.0
      %1196 = vmatpush2.msra.mxu0 0.0
      %1197 = vmatprep.subr.mxu0 0.0
      %1198 = vmatpush2.msra.mxu0 0.0
      %1199 = vmatprep.subr.mxu0 0.0
      %1200 = vmatpush2.msra.mxu0 0.0
      %1201 = vmatprep.subr.mxu0 0.0
      %1202 = vmatpush2.msra.mxu0 0.0
      %1203 = vmatprep.subr.mxu0 0.0
      %1204 = vmatpush2.msra.mxu0 0.0
      %1205 = vmatprep.mubr.f32.mxu0 0.0
      %1206 = vmatmul.mubr.f32.gmra.mxu0 %v344
      %v1207 = vpop.f32.mrf.mxu0
      %v1208 = vadd.f32 %v1139, %v1207
      %v1209 = vpop.f32.mrf.mxu0
      %1210 = vdwg.mxu0
      %vm1211 = vcmask 130048
      %v1213 = vsel %vm1211, %v1018, 0
      %v1216 = vsel %vm1211, %v1113, 0
      %1218 = vmatprep.subr.mxu0 0.0
      %1219 = vmatpush1.xpose.msra.mxu0 0.0
      %1220 = vmatprep.subr.mxu0 0.0
      %1221 = vmatpush1.xpose.msra.mxu0 0.0
      %1222 = vmatprep.subr.mxu0 0.0
      %1223 = vmatpush1.xpose.msra.mxu0 0.0
      %1224 = vmatprep.subr.mxu0 0.0
      %1225 = vmatpush1.xpose.msra.mxu0 0.0
      %1226 = vmatprep.subr.mxu0 0.0
      %1227 = vmatpush1.xpose.msra.mxu0 0.0
      %1228 = vmatprep.subr.mxu0 0.0
      %1229 = vmatpush1.xpose.msra.mxu0 0.0
      %1230 = vmatprep.subr.mxu0 0.0
      %1231 = vmatpush1.xpose.msra.mxu0 0.0
      %1232 = vmatprep.subr.mxu0 0.0
      %1233 = vmatpush1.xpose.msra.mxu0 0.0
      %1234 = vmatprep.subr.mxu0 0.0
      %1235 = vmatpush1.xpose.msra.mxu0 0.0
      %1236 = vmatprep.subr.mxu0 0.0
      %1237 = vmatpush1.xpose.msra.mxu0 0.0
      %1238 = vmatprep.subr.mxu0 0.0
      %1239 = vmatpush1.xpose.msra.mxu0 0.0
      %1240 = vmatprep.subr.mxu0 0.0
      %1241 = vmatpush1.xpose.msra.mxu0 0.0
      %1242 = vmatprep.subr.mxu0 0.0
      %1243 = vmatpush1.xpose.msra.mxu0 0.0
      %1244 = vmatprep.subr.mxu0 0.0
      %1245 = vmatpush1.xpose.msra.mxu0 0.0
      %1246 = vmatprep.subr.mxu0 0.0
      %1247 = vmatpush1.xpose.msra.mxu0 0.0
      %1248 = vmatprep.subr.mxu0 0.0
      %1249 = vmatpush1.xpose.msra.mxu0 %v1216
      %1250 = vmatprep.subr.mxu0 0.0
      %1251 = vmatpush2.xpose.msra.mxu0 0.0
      %1252 = vmatprep.subr.mxu0 0.0
      %1253 = vmatpush2.xpose.msra.mxu0 0.0
      %1254 = vmatprep.subr.mxu0 0.0
      %1255 = vmatpush2.xpose.msra.mxu0 0.0
      %1256 = vmatprep.subr.mxu0 0.0
      %1257 = vmatpush2.xpose.msra.mxu0 0.0
      %1258 = vmatprep.subr.mxu0 0.0
      %1259 = vmatpush2.xpose.msra.mxu0 0.0
      %1260 = vmatprep.subr.mxu0 0.0
      %1261 = vmatpush2.xpose.msra.mxu0 0.0
      %1262 = vmatprep.subr.mxu0 0.0
      %1263 = vmatpush2.xpose.msra.mxu0 0.0
      %1264 = vmatprep.subr.mxu0 0.0
      %1265 = vmatpush2.xpose.msra.mxu0 0.0
      %1266 = vmatprep.subr.mxu0 0.0
      %1267 = vmatpush2.xpose.msra.mxu0 0.0
      %1268 = vmatprep.subr.mxu0 0.0
      %1269 = vmatpush2.xpose.msra.mxu0 0.0
      %1270 = vmatprep.subr.mxu0 0.0
      %1271 = vmatpush2.xpose.msra.mxu0 0.0
      %1272 = vmatprep.subr.mxu0 0.0
      %1273 = vmatpush2.xpose.msra.mxu0 0.0
      %1274 = vmatprep.subr.mxu0 0.0
      %1275 = vmatpush2.xpose.msra.mxu0 0.0
      %1276 = vmatprep.subr.mxu0 0.0
      %1277 = vmatpush2.xpose.msra.mxu0 0.0
      %1278 = vmatprep.subr.mxu0 0.0
      %1279 = vmatpush2.xpose.msra.mxu0 0.0
      %1280 = vmatprep.subr.mxu0 0.0
      %1281 = vmatpush2.xpose.msra.mxu0 0.0
      %1282 = vmatprep.mubr.f32.mxu0 0.0
      %1283 = vmatmul.mubr.f32.gmra.mxu0 %v1213
      %v1284 = vpop.f32.mrf.mxu0
      %v1285 = vadd.f32 0.0, %v1284
      %v1286 = vpop.f32.mrf.mxu0
      %1287 = vdwg.mxu0
      %v1288 = vmul.f32 %v1285, 0.25
      %vm1289 = vcmask 64512
      %v1290 = vsel %vm1289, %v1288, -inf
      %1291 = vmax.xlane.f32.xlu0 %v1290
      %v1292 = vpop.xlane.xlu0 %1291
      %v1293 = vsub.f32 %v1288, %v1292
      %v1294 = vmul.f32 %v1293, 1.442695
      %v1295 = vpow.pop %v1294
      %v1296 = vsel %vm1289, %v1295, 0.0
      %1297 = vadd.xlane.f32.xlu0 %v1296
      %v1298 = vpop.xlane.xlu0 %1297
      %v1299 = vrcp.pop %v1298
      %v1300 = vmul.f32 %v1295, %v1299
      %v1302 = vsel %vm1289, %v1300, 0
      %1304 = vmatprep.subr.mxu0 0.0
      %1305 = vmatpush1.msra.mxu0 0.0
      %1306 = vmatprep.subr.mxu0 0.0
      %1307 = vmatpush1.msra.mxu0 0.0
      %1308 = vmatprep.subr.mxu0 0.0
      %1309 = vmatpush1.msra.mxu0 0.0
      %1310 = vmatprep.subr.mxu0 0.0
      %1311 = vmatpush1.msra.mxu0 0.0
      %1312 = vmatprep.subr.mxu0 0.0
      %1313 = vmatpush1.msra.mxu0 0.0
      %1314 = vmatprep.subr.mxu0 0.0
      %1315 = vmatpush1.msra.mxu0 0.0
      %1316 = vmatprep.subr.mxu0 0.0
      %1317 = vmatpush1.msra.mxu0 0.0
      %1318 = vmatprep.subr.mxu0 0.0
      %1319 = vmatpush1.msra.mxu0 0.0
      %1320 = vmatprep.subr.mxu0 0.0
      %1321 = vmatpush1.msra.mxu0 0.0
      %1322 = vmatprep.subr.mxu0 0.0
      %1323 = vmatpush1.msra.mxu0 0.0
      %1324 = vmatprep.subr.mxu0 0.0
      %1325 = vmatpush1.msra.mxu0 0.0
      %1326 = vmatprep.subr.mxu0 0.0
      %1327 = vmatpush1.msra.mxu0 0.0
      %1328 = vmatprep.subr.mxu0 0.0
      %1329 = vmatpush1.msra.mxu0 0.0
      %1330 = vmatprep.subr.mxu0 0.0
      %1331 = vmatpush1.msra.mxu0 0.0
      %1332 = vmatprep.subr.mxu0 0.0
      %1333 = vmatpush1.msra.mxu0 0.0
      %1334 = vmatprep.subr.mxu0 0.0
      %1335 = vmatpush1.msra.mxu0 %v1208
      %1336 = vmatprep.subr.mxu0 0.0
      %1337 = vmatpush2.msra.mxu0 0.0
      %1338 = vmatprep.subr.mxu0 0.0
      %1339 = vmatpush2.msra.mxu0 0.0
      %1340 = vmatprep.subr.mxu0 0.0
      %1341 = vmatpush2.msra.mxu0 0.0
      %1342 = vmatprep.subr.mxu0 0.0
      %1343 = vmatpush2.msra.mxu0 0.0
      %1344 = vmatprep.subr.mxu0 0.0
      %1345 = vmatpush2.msra.mxu0 0.0
      %1346 = vmatprep.subr.mxu0 0.0
      %1347 = vmatpush2.msra.mxu0 0.0
      %1348 = vmatprep.subr.mxu0 0.0
      %1349 = vmatpush2.msra.mxu0 0.0
      %1350 = vmatprep.subr.mxu0 0.0
      %1351 = vmatpush2.msra.mxu0 0.0
      %1352 = vmatprep.subr.mxu0 0.0
      %1353 = vmatpush2.msra.mxu0 0.0
      %1354 = vmatprep.subr.mxu0 0.0
      %1355 = vmatpush2.msra.mxu0 0.0
      %1356 = vmatprep.subr.mxu0 0.0
      %1357 = vmatpush2.msra.mxu0 0.0
      %1358 = vmatprep.subr.mxu0 0.0
      %1359 = vmatpush2.msra.mxu0 0.0
      %1360 = vmatprep.subr.mxu0 0.0
      %1361 = vmatpush2.msra.mxu0 0.0
      %1362 = vmatprep.subr.mxu0 0.0
      %1363 = vmatpush2.msra.mxu0 0.0
      %1364 = vmatprep.subr.mxu0 0.0
      %1365 = vmatpush2.msra.mxu0 0.0
      %1366 = vmatprep.subr.mxu0 0.0
      %1367 = vmatpush2.msra.mxu0 0.0
      %1368 = vmatprep.mubr.f32.mxu0 0.0
      %1369 = vmatmul.mubr.f32.gmra.mxu0 %v1302
      %v1370 = vpop.f32.mrf.mxu0
      %v1371 = vadd.f32 0.0, %v1370
      %v1372 = vpop.f32.mrf.mxu0
      %1373 = vdwg.mxu0
      %s1374 = smul.u32 %s919, 16
      %s1375 = scalar_lea.vmem %s19, %s1374
      %v1376 = vld [vmem:[%s1375] sm:$0xff]
      %v1377 = vld [vmem:[%s1375 + $0x8] sm:$0xff]
      %v1379 = vsel %vm1211, %v1371, 0
      %1381 = vmatprep.subr.mxu0 0.0
      %1382 = vmatpush1.msra.mxu0 0.0
      %1383 = vmatprep.subr.mxu0 0.0
      %1384 = vmatpush1.msra.mxu0 0.0
      %1385 = vmatprep.subr.mxu0 0.0
      %1386 = vmatpush1.msra.mxu0 0.0
      %1387 = vmatprep.subr.mxu0 0.0
      %1388 = vmatpush1.msra.mxu0 0.0
      %1389 = vmatprep.subr.mxu0 0.0
      %1390 = vmatpush1.msra.mxu0 0.0
      %1391 = vmatprep.subr.mxu0 0.0
      %1392 = vmatpush1.msra.mxu0 0.0
      %1393 = vmatprep.subr.mxu0 0.0
      %1394 = vmatpush1.msra.mxu0 0.0
      %1395 = vmatprep.subr.mxu0 0.0
      %1396 = vmatpush1.msra.mxu0 0.0
      %1397 = vmatprep.subr.mxu0 0.0
      %1398 = vmatpush1.msra.mxu0 0.0
      %1399 = vmatprep.subr.mxu0 0.0
      %1400 = vmatpush1.msra.mxu0 0.0
      %1401 = vmatprep.subr.mxu0 0.0
      %1402 = vmatpush1.msra.mxu0 0.0
      %1403 = vmatprep.subr.mxu0 0.0
      %1404 = vmatpush1.msra.mxu0 0.0
      %1405 = vmatprep.subr.mxu0 0.0
      %1406 = vmatpush1.msra.mxu0 0.0
      %1407 = vmatprep.subr.mxu0 0.0
      %1408 = vmatpush1.msra.mxu0 0.0
      %1409 = vmatprep.subr.mxu0 0.0
      %1410 = vmatpush1.msra.mxu0 %v1377
      %1411 = vmatprep.subr.mxu0 0.0
      %1412 = vmatpush1.msra.mxu0 %v1376
      %1413 = vmatprep.subr.mxu0 0.0
      %1414 = vmatpush2.msra.mxu0 0.0
      %1415 = vmatprep.subr.mxu0 0.0
      %1416 = vmatpush2.msra.mxu0 0.0
      %1417 = vmatprep.subr.mxu0 0.0
      %1418 = vmatpush2.msra.mxu0 0.0
      %1419 = vmatprep.subr.mxu0 0.0
      %1420 = vmatpush2.msra.mxu0 0.0
      %1421 = vmatprep.subr.mxu0 0.0
      %1422 = vmatpush2.msra.mxu0 0.0
      %1423 = vmatprep.subr.mxu0 0.0
      %1424 = vmatpush2.msra.mxu0 0.0
      %1425 = vmatprep.subr.mxu0 0.0
      %1426 = vmatpush2.msra.mxu0 0.0
      %1427 = vmatprep.subr.mxu0 0.0
      %1428 = vmatpush2.msra.mxu0 0.0
      %1429 = vmatprep.subr.mxu0 0.0
      %1430 = vmatpush2.msra.mxu0 0.0
      %1431 = vmatprep.subr.mxu0 0.0
      %1432 = vmatpush2.msra.mxu0 0.0
      %1433 = vmatprep.subr.mxu0 0.0
      %1434 = vmatpush2.msra.mxu0 0.0
      %1435 = vmatprep.subr.mxu0 0.0
      %1436 = vmatpush2.msra.mxu0 0.0
      %1437 = vmatprep.subr.mxu0 0.0
      %1438 = vmatpush2.msra.mxu0 0.0
      %1439 = vmatprep.subr.mxu0 0.0
      %1440 = vmatpush2.msra.mxu0 0.0
      %1441 = vmatprep.subr.mxu0 0.0
      %1442 = vmatpush2.msra.mxu0 0.0
      %1443 = vmatprep.subr.mxu0 0.0
      %1444 = vmatpush2.msra.mxu0 0.0
      %1445 = vmatprep.mubr.f32.mxu0 0.0
      %1446 = vmatmul.mubr.f32.gmra.mxu0 %v1379
      %v1447 = vpop.f32.mrf.mxu0
      %v1448 = vadd.f32 0.0, %v1447
      %v1449 = vpop.f32.mrf.mxu0
      %1450 = vdwg.mxu0
      %v1451 = vadd.f32 %v924, %v1448
    $region241: #{transformer_forward.1} parent=1 // loop_footer
      %s923 = sadd.s32 1, %s919
    $region242: #{transformer_forward.1} parent=1 // loop_footer_branch
      %918 = sbr.rel target = $region238
    $region243: #{transformer_forward.1} parent=1 // loop_exit
      _
    %v1452 = vadd.f32 %v344, %v924
    %v1453 = vadd.f32 %v1452, %v887
    %1454 = vadd.xlane.f32.xlu0 %v1453
    %v1455 = vpop.xlane.xlu0 %1454
    %v1456 = vmul.f32 %v1455, %v894
    %v1457 = vsub.f32 %v1453, %v1456
    %v1458 = vmul.f32 %v1457, %v1457
    %1459 = vadd.xlane.f32.xlu0 %v1458
    %v1460 = vpop.xlane.xlu0 %1459
    %v1461 = vmul.f32 %v1460, %v894
    %v1462 = vadd.f32 %v1461, 1e-05
    %v1463 = vrsqrt.pop %v1462
    %v1464 = vmul.f32 %v1457, %v1463
    %v1465 = vmul.f32 %v1464, %v908
    %v1466 = vadd.f32 %v1465, %v915
    %v1467 = vld [vmem:[%s27] sm:$0xff]
    %v1468 = vld [vmem:[%s27 + $0x8] sm:$0xff]
    %v1469 = vld [vmem:[%s27 + $0x10] sm:$0xff]
    %v1470 = vld [vmem:[%s27 + $0x18] sm:$0xff]
    %v1471 = vld [vmem:[%s27 + $0x20] sm:$0xff]
    %v1472 = vld [vmem:[%s27 + $0x28] sm:$0xff]
    %v1473 = vld [vmem:[%s27 + $0x30] sm:$0xff]
    %v1474 = vld [vmem:[%s27 + $0x38] sm:$0xff]
    %v1475 = vld [vmem:[%s27 + $0x40] sm:$0xff]
    %v1476 = vld [vmem:[%s27 + $0x48] sm:$0xff]
    %v1477 = vld [vmem:[%s27 + $0x50] sm:$0xff]
    %v1478 = vld [vmem:[%s27 + $0x58] sm:$0xff]
    %v1479 = vld [vmem:[%s27 + $0x60] sm:$0xff]
    %v1480 = vld [vmem:[%s27 + $0x68] sm:$0xff]
    %v1481 = vld [vmem:[%s27 + $0x70] sm:$0xff]
    %v1482 = vld [vmem:[%s27 + $0x78] sm:$0xff]
    %v1483 = vld [vmem:[%s27 + $0x80] sm:$0xff]
    %v1484 = vld [vmem:[%s27 + $0x88] sm:$0xff]
    %v1485 = vld [vmem:[%s27 + $0x90] sm:$0xff]
    %v1486 = vld [vmem:[%s27 + $0x98] sm:$0xff]
    %v1487 = vld [vmem:[%s27 + $0xa0] sm:$0xff]
    %v1488 = vld [vmem:[%s27 + $0xa8] sm:$0xff]
    %v1489 = vld [vmem:[%s27 + $0xb0] sm:$0xff]
    %v1490 = vld [vmem:[%s27 + $0xb8] sm:$0xff]
    %v1491 = vld [vmem:[%s27 + $0xc0] sm:$0xff]
    %v1492 = vld [vmem:[%s27 + $0xc8] sm:$0xff]
    %v1493 = vld [vmem:[%s27 + $0xd0] sm:$0xff]
    %v1494 = vld [vmem:[%s27 + $0xd8] sm:$0xff]
    %v1495 = vld [vmem:[%s27 + $0xe0] sm:$0xff]
    %v1496 = vld [vmem:[%s27 + $0xe8] sm:$0xff]
    %v1497 = vld [vmem:[%s27 + $0xf0] sm:$0xff]
    %v1498 = vld [vmem:[%s27 + $0xf8] sm:$0xff]
    %v1499 = vld [vmem:[%s27 + $0x100] sm:$0xff]
    %v1500 = vld [vmem:[%s27 + $0x108] sm:$0xff]
    %v1501 = vld [vmem:[%s27 + $0x110] sm:$0xff]
    %v1502 = vld [vmem:[%s27 + $0x118] sm:$0xff]
    %v1503 = vld [vmem:[%s27 + $0x120] sm:$0xff]
    %v1504 = vld [vmem:[%s27 + $0x128] sm:$0xff]
    %v1505 = vld [vmem:[%s27 + $0x130] sm:$0xff]
    %v1506 = vld [vmem:[%s27 + $0x138] sm:$0xff]
    %v1507 = vld [vmem:[%s27 + $0x140] sm:$0xff]
    %v1508 = vld [vmem:[%s27 + $0x148] sm:$0xff]
    %v1509 = vld [vmem:[%s27 + $0x150] sm:$0xff]
    %v1510 = vld [vmem:[%s27 + $0x158] sm:$0xff]
    %v1511 = vld [vmem:[%s27 + $0x160] sm:$0xff]
    %v1512 = vld [vmem:[%s27 + $0x168] sm:$0xff]
    %v1513 = vld [vmem:[%s27 + $0x170] sm:$0xff]
    %v1514 = vld [vmem:[%s27 + $0x178] sm:$0xff]
    %v1515 = vld [vmem:[%s27 + $0x180] sm:$0xff]
    %v1516 = vld [vmem:[%s27 + $0x188] sm:$0xff]
    %v1517 = vld [vmem:[%s27 + $0x190] sm:$0xff]
    %v1518 = vld [vmem:[%s27 + $0x198] sm:$0xff]
    %v1519 = vld [vmem:[%s27 + $0x1a0] sm:$0xff]
    %v1520 = vld [vmem:[%s27 + $0x1a8] sm:$0xff]
    %v1521 = vld [vmem:[%s27 + $0x1b0] sm:$0xff]
    %v1522 = vld [vmem:[%s27 + $0x1b8] sm:$0xff]
    %v1523 = vld [vmem:[%s27 + $0x1c0] sm:$0xff]
    %v1524 = vld [vmem:[%s27 + $0x1c8] sm:$0xff]
    %v1525 = vld [vmem:[%s27 + $0x1d0] sm:$0xff]
    %v1526 = vld [vmem:[%s27 + $0x1d8] sm:$0xff]
    %v1527 = vld [vmem:[%s27 + $0x1e0] sm:$0xff]
    %v1528 = vld [vmem:[%s27 + $0x1e8] sm:$0xff]
    %v1529 = vld [vmem:[%s27 + $0x1f0] sm:$0xff]
    %v1530 = vld [vmem:[%s27 + $0x1f8] sm:$0xff]
    %v1531 = vld [vmem:[%s27 + $0x200] sm:$0xff]
    %v1532 = vld [vmem:[%s27 + $0x208] sm:$0xff]
    %v1533 = vld [vmem:[%s27 + $0x210] sm:$0xff]
    %v1534 = vld [vmem:[%s27 + $0x218] sm:$0xff]
    %v1535 = vld [vmem:[%s27 + $0x220] sm:$0xff]
    %v1536 = vld [vmem:[%s27 + $0x228] sm:$0xff]
    %v1537 = vld [vmem:[%s27 + $0x230] sm:$0xff]
    %v1538 = vld [vmem:[%s27 + $0x238] sm:$0xff]
    %v1539 = vld [vmem:[%s27 + $0x240] sm:$0xff]
    %v1540 = vld [vmem:[%s27 + $0x248] sm:$0xff]
    %v1541 = vld [vmem:[%s27 + $0x250] sm:$0xff]
    %v1542 = vld [vmem:[%s27 + $0x258] sm:$0xff]
    %v1543 = vld [vmem:[%s27 + $0x260] sm:$0xff]
    %v1544 = vld [vmem:[%s27 + $0x268] sm:$0xff]
    %v1545 = vld [vmem:[%s27 + $0x270] sm:$0xff]
    %v1546 = vld [vmem:[%s27 + $0x278] sm:$0xff]
    %v1547 = vld [vmem:[%s27 + $0x280] sm:$0xff]
    %v1548 = vld [vmem:[%s27 + $0x288] sm:$0xff]
    %v1549 = vld [vmem:[%s27 + $0x290] sm:$0xff]
    %v1550 = vld [vmem:[%s27 + $0x298] sm:$0xff]
    %v1551 = vld [vmem:[%s27 + $0x2a0] sm:$0xff]
    %v1552 = vld [vmem:[%s27 + $0x2a8] sm:$0xff]
    %v1553 = vld [vmem:[%s27 + $0x2b0] sm:$0xff]
    %v1554 = vld [vmem:[%s27 + $0x2b8] sm:$0xff]
    %v1555 = vld [vmem:[%s27 + $0x2c0] sm:$0xff]
    %v1556 = vld [vmem:[%s27 + $0x2c8] sm:$0xff]
    %v1557 = vld [vmem:[%s27 + $0x2d0] sm:$0xff]
    %v1558 = vld [vmem:[%s27 + $0x2d8] sm:$0xff]
    %v1559 = vld [vmem:[%s27 + $0x2e0] sm:$0xff]
    %v1560 = vld [vmem:[%s27 + $0x2e8] sm:$0xff]
    %v1561 = vld [vmem:[%s27 + $0x2f0] sm:$0xff]
    %v1562 = vld [vmem:[%s27 + $0x2f8] sm:$0xff]
    %v1563 = vld [vmem:[%s27 + $0x300] sm:$0xff]
    %v1564 = vld [vmem:[%s27 + $0x308] sm:$0xff]
    %v1565 = vld [vmem:[%s27 + $0x310] sm:$0xff]
    %v1566 = vld [vmem:[%s27 + $0x318] sm:$0xff]
    %v1567 = vld [vmem:[%s27 + $0x320] sm:$0xff]
    %v1568 = vld [vmem:[%s27 + $0x328] sm:$0xff]
    %v1569 = vld [vmem:[%s27 + $0x330] sm:$0xff]
    %v1570 = vld [vmem:[%s27 + $0x338] sm:$0xff]
    %v1571 = vld [vmem:[%s27 + $0x340] sm:$0xff]
    %v1572 = vld [vmem:[%s27 + $0x348] sm:$0xff]
    %v1573 = vld [vmem:[%s27 + $0x350] sm:$0xff]
    %v1574 = vld [vmem:[%s27 + $0x358] sm:$0xff]
    %v1575 = vld [vmem:[%s27 + $0x360] sm:$0xff]
    %v1576 = vld [vmem:[%s27 + $0x368] sm:$0xff]
    %v1577 = vld [vmem:[%s27 + $0x370] sm:$0xff]
    %v1578 = vld [vmem:[%s27 + $0x378] sm:$0xff]
    %v1579 = vld [vmem:[%s27 + $0x380] sm:$0xff]
    %v1580 = vld [vmem:[%s27 + $0x388] sm:$0xff]
    %v1581 = vld [vmem:[%s27 + $0x390] sm:$0xff]
    %v1582 = vld [vmem:[%s27 + $0x398] sm:$0xff]
    %v1583 = vld [vmem:[%s27 + $0x3a0] sm:$0xff]
    %v1584 = vld [vmem:[%s27 + $0x3a8] sm:$0xff]
    %v1585 = vld [vmem:[%s27 + $0x3b0] sm:$0xff]
    %v1586 = vld [vmem:[%s27 + $0x3b8] sm:$0xff]
    %v1587 = vld [vmem:[%s27 + $0x3c0] sm:$0xff]
    %v1588 = vld [vmem:[%s27 + $0x3c8] sm:$0xff]
    %v1589 = vld [vmem:[%s27 + $0x3d0] sm:$0xff]
    %v1590 = vld [vmem:[%s27 + $0x3d8] sm:$0xff]
    %v1591 = vld [vmem:[%s27 + $0x3e0] sm:$0xff]
    %v1592 = vld [vmem:[%s27 + $0x3e8] sm:$0xff]
    %v1593 = vld [vmem:[%s27 + $0x3f0] sm:$0xff]
    %v1594 = vld [vmem:[%s27 + $0x3f8] sm:$0xff]
    %v1595 = vld [vmem:[%s27 + $0x400] sm:$0xff]
    %v1596 = vld [vmem:[%s27 + $0x408] sm:$0xff]
    %v1597 = vld [vmem:[%s27 + $0x410] sm:$0xff]
    %v1598 = vld [vmem:[%s27 + $0x418] sm:$0xff]
    %v1599 = vld [vmem:[%s27 + $0x420] sm:$0xff]
    %v1600 = vld [vmem:[%s27 + $0x428] sm:$0xff]
    %v1601 = vld [vmem:[%s27 + $0x430] sm:$0xff]
    %v1602 = vld [vmem:[%s27 + $0x438] sm:$0xff]
    %v1603 = vld [vmem:[%s27 + $0x440] sm:$0xff]
    %v1604 = vld [vmem:[%s27 + $0x448] sm:$0xff]
    %v1605 = vld [vmem:[%s27 + $0x450] sm:$0xff]
    %v1606 = vld [vmem:[%s27 + $0x458] sm:$0xff]
    %v1607 = vld [vmem:[%s27 + $0x460] sm:$0xff]
    %v1608 = vld [vmem:[%s27 + $0x468] sm:$0xff]
    %v1609 = vld [vmem:[%s27 + $0x470] sm:$0xff]
    %v1610 = vld [vmem:[%s27 + $0x478] sm:$0xff]
    %v1611 = vld [vmem:[%s27 + $0x480] sm:$0xff]
    %v1612 = vld [vmem:[%s27 + $0x488] sm:$0xff]
    %v1613 = vld [vmem:[%s27 + $0x490] sm:$0xff]
    %v1614 = vld [vmem:[%s27 + $0x498] sm:$0xff]
    %v1615 = vld [vmem:[%s27 + $0x4a0] sm:$0xff]
    %v1616 = vld [vmem:[%s27 + $0x4a8] sm:$0xff]
    %v1617 = vld [vmem:[%s27 + $0x4b0] sm:$0xff]
    %v1618 = vld [vmem:[%s27 + $0x4b8] sm:$0xff]
    %v1619 = vld [vmem:[%s27 + $0x4c0] sm:$0xff]
    %v1620 = vld [vmem:[%s27 + $0x4c8] sm:$0xff]
    %v1621 = vld [vmem:[%s27 + $0x4d0] sm:$0xff]
    %v1622 = vld [vmem:[%s27 + $0x4d8] sm:$0xff]
    %v1623 = vld [vmem:[%s27 + $0x4e0] sm:$0xff]
    %v1624 = vld [vmem:[%s27 + $0x4e8] sm:$0xff]
    %v1625 = vld [vmem:[%s27 + $0x4f0] sm:$0xff]
    %v1626 = vld [vmem:[%s27 + $0x4f8] sm:$0xff]
    %v1627 = vld [vmem:[%s27 + $0x500] sm:$0xff]
    %v1628 = vld [vmem:[%s27 + $0x508] sm:$0xff]
    %v1629 = vld [vmem:[%s27 + $0x510] sm:$0xff]
    %v1630 = vld [vmem:[%s27 + $0x518] sm:$0xff]
    %v1631 = vld [vmem:[%s27 + $0x520] sm:$0xff]
    %v1632 = vld [vmem:[%s27 + $0x528] sm:$0xff]
    %v1633 = vld [vmem:[%s27 + $0x530] sm:$0xff]
    %v1634 = vld [vmem:[%s27 + $0x538] sm:$0xff]
    %v1635 = vld [vmem:[%s27 + $0x540] sm:$0xff]
    %v1636 = vld [vmem:[%s27 + $0x548] sm:$0xff]
    %v1637 = vld [vmem:[%s27 + $0x550] sm:$0xff]
    %v1638 = vld [vmem:[%s27 + $0x558] sm:$0xff]
    %v1639 = vld [vmem:[%s27 + $0x560] sm:$0xff]
    %v1640 = vld [vmem:[%s27 + $0x568] sm:$0xff]
    %v1641 = vld [vmem:[%s27 + $0x570] sm:$0xff]
    %v1642 = vld [vmem:[%s27 + $0x578] sm:$0xff]
    %v1643 = vld [vmem:[%s27 + $0x580] sm:$0xff]
    %v1644 = vld [vmem:[%s27 + $0x588] sm:$0xff]
    %v1645 = vld [vmem:[%s27 + $0x590] sm:$0xff]
    %v1646 = vld [vmem:[%s27 + $0x598] sm:$0xff]
    %v1647 = vld [vmem:[%s27 + $0x5a0] sm:$0xff]
    %v1648 = vld [vmem:[%s27 + $0x5a8] sm:$0xff]
    %v1649 = vld [vmem:[%s27 + $0x5b0] sm:$0xff]
    %v1650 = vld [vmem:[%s27 + $0x5b8] sm:$0xff]
    %v1651 = vld [vmem:[%s27 + $0x5c0] sm:$0xff]
    %v1652 = vld [vmem:[%s27 + $0x5c8] sm:$0xff]
    %v1653 = vld [vmem:[%s27 + $0x5d0] sm:$0xff]
    %v1654 = vld [vmem:[%s27 + $0x5d8] sm:$0xff]
    %v1655 = vld [vmem:[%s27 + $0x5e0] sm:$0xff]
    %v1656 = vld [vmem:[%s27 + $0x5e8] sm:$0xff]
    %v1657 = vld [vmem:[%s27 + $0x5f0] sm:$0xff]
    %v1658 = vld [vmem:[%s27 + $0x5f8] sm:$0xff]
    %v1659 = vld [vmem:[%s27 + $0x600] sm:$0xff]
    %v1660 = vld [vmem:[%s27 + $0x608] sm:$0xff]
    %v1661 = vld [vmem:[%s27 + $0x610] sm:$0xff]
    %v1662 = vld [vmem:[%s27 + $0x618] sm:$0xff]
    %v1663 = vld [vmem:[%s27 + $0x620] sm:$0xff]
    %v1664 = vld [vmem:[%s27 + $0x628] sm:$0xff]
    %v1665 = vld [vmem:[%s27 + $0x630] sm:$0xff]
    %v1666 = vld [vmem:[%s27 + $0x638] sm:$0xff]
    %v1667 = vld [vmem:[%s27 + $0x640] sm:$0xff]
    %v1668 = vld [vmem:[%s27 + $0x648] sm:$0xff]
    %v1669 = vld [vmem:[%s27 + $0x650] sm:$0xff]
    %v1670 = vld [vmem:[%s27 + $0x658] sm:$0xff]
    %v1671 = vld [vmem:[%s27 + $0x660] sm:$0xff]
    %v1672 = vld [vmem:[%s27 + $0x668] sm:$0xff]
    %v1673 = vld [vmem:[%s27 + $0x670] sm:$0xff]
    %v1674 = vld [vmem:[%s27 + $0x678] sm:$0xff]
    %v1675 = vld [vmem:[%s27 + $0x680] sm:$0xff]
    %v1676 = vld [vmem:[%s27 + $0x688] sm:$0xff]
    %v1677 = vld [vmem:[%s27 + $0x690] sm:$0xff]
    %v1678 = vld [vmem:[%s27 + $0x698] sm:$0xff]
    %v1679 = vld [vmem:[%s27 + $0x6a0] sm:$0xff]
    %v1680 = vld [vmem:[%s27 + $0x6a8] sm:$0xff]
    %v1681 = vld [vmem:[%s27 + $0x6b0] sm:$0xff]
    %v1682 = vld [vmem:[%s27 + $0x6b8] sm:$0xff]
    %v1683 = vld [vmem:[%s27 + $0x6c0] sm:$0xff]
    %v1684 = vld [vmem:[%s27 + $0x6c8] sm:$0xff]
    %v1685 = vld [vmem:[%s27 + $0x6d0] sm:$0xff]
    %v1686 = vld [vmem:[%s27 + $0x6d8] sm:$0xff]
    %v1687 = vld [vmem:[%s27 + $0x6e0] sm:$0xff]
    %v1688 = vld [vmem:[%s27 + $0x6e8] sm:$0xff]
    %v1689 = vld [vmem:[%s27 + $0x6f0] sm:$0xff]
    %v1690 = vld [vmem:[%s27 + $0x6f8] sm:$0xff]
    %v1691 = vld [vmem:[%s27 + $0x700] sm:$0xff]
    %v1692 = vld [vmem:[%s27 + $0x708] sm:$0xff]
    %v1693 = vld [vmem:[%s27 + $0x710] sm:$0xff]
    %v1694 = vld [vmem:[%s27 + $0x718] sm:$0xff]
    %v1695 = vld [vmem:[%s27 + $0x720] sm:$0xff]
    %v1696 = vld [vmem:[%s27 + $0x728] sm:$0xff]
    %v1697 = vld [vmem:[%s27 + $0x730] sm:$0xff]
    %v1698 = vld [vmem:[%s27 + $0x738] sm:$0xff]
    %v1699 = vld [vmem:[%s27 + $0x740] sm:$0xff]
    %v1700 = vld [vmem:[%s27 + $0x748] sm:$0xff]
    %v1701 = vld [vmem:[%s27 + $0x750] sm:$0xff]
    %v1702 = vld [vmem:[%s27 + $0x758] sm:$0xff]
    %v1703 = vld [vmem:[%s27 + $0x760] sm:$0xff]
    %v1704 = vld [vmem:[%s27 + $0x768] sm:$0xff]
    %v1705 = vld [vmem:[%s27 + $0x770] sm:$0xff]
    %v1706 = vld [vmem:[%s27 + $0x778] sm:$0xff]
    %v1707 = vld [vmem:[%s27 + $0x780] sm:$0xff]
    %v1708 = vld [vmem:[%s27 + $0x788] sm:$0xff]
    %v1709 = vld [vmem:[%s27 + $0x790] sm:$0xff]
    %v1710 = vld [vmem:[%s27 + $0x798] sm:$0xff]
    %v1711 = vld [vmem:[%s27 + $0x7a0] sm:$0xff]
    %v1712 = vld [vmem:[%s27 + $0x7a8] sm:$0xff]
    %v1713 = vld [vmem:[%s27 + $0x7b0] sm:$0xff]
    %v1714 = vld [vmem:[%s27 + $0x7b8] sm:$0xff]
    %v1715 = vld [vmem:[%s27 + $0x7c0] sm:$0xff]
    %v1716 = vld [vmem:[%s27 + $0x7c8] sm:$0xff]
    %v1717 = vld [vmem:[%s27 + $0x7d0] sm:$0xff]
    %v1718 = vld [vmem:[%s27 + $0x7d8] sm:$0xff]
    %v1719 = vld [vmem:[%s27 + $0x7e0] sm:$0xff]
    %v1720 = vld [vmem:[%s27 + $0x7e8] sm:$0xff]
    %v1721 = vld [vmem:[%s27 + $0x7f0] sm:$0xff]
    %v1722 = vld [vmem:[%s27 + $0x7f8] sm:$0xff]
    %v1723 = vld [vmem:[%s29] sm:$0xff]
    %v1724 = vld [vmem:[%s29 + $0x8] sm:$0xff]
    %v1727 = vlaneseq
    %v1728 = vshrl.u32 %v1727, 7
    %v1729 = vsub.s32 0, %v1728
    %v1730 = vrot.slane %v1723, %v1729
    %v1731 = vlaneseq
    %v1732 = vshrl.u32 %v1731, 7
    %v1733 = vsub.s32 1, %v1732
    %v1734 = vrot.slane %v1723, %v1733
    %v1735 = vlaneseq
    %v1736 = vshrl.u32 %v1735, 7
    %v1737 = vsub.s32 2, %v1736
    %v1738 = vrot.slane %v1723, %v1737
    %v1739 = vlaneseq
    %v1740 = vshrl.u32 %v1739, 7
    %v1741 = vsub.s32 3, %v1740
    %v1742 = vrot.slane %v1723, %v1741
    %v1743 = vlaneseq
    %v1744 = vshrl.u32 %v1743, 7
    %v1745 = vsub.s32 4, %v1744
    %v1746 = vrot.slane %v1723, %v1745
    %v1747 = vlaneseq
    %v1748 = vshrl.u32 %v1747, 7
    %v1749 = vsub.s32 5, %v1748
    %v1750 = vrot.slane %v1723, %v1749
    %v1751 = vlaneseq
    %v1752 = vshrl.u32 %v1751, 7
    %v1753 = vsub.s32 6, %v1752
    %v1754 = vrot.slane %v1723, %v1753
    %v1755 = vlaneseq
    %v1756 = vshrl.u32 %v1755, 7
    %v1757 = vsub.s32 7, %v1756
    %v1758 = vrot.slane %v1723, %v1757
    %v1759 = vlaneseq
    %v1760 = vshrl.u32 %v1759, 7
    %v1761 = vsub.s32 0, %v1760
    %v1762 = vrot.slane %v1724, %v1761
    %v1763 = vlaneseq
    %v1764 = vshrl.u32 %v1763, 7
    %v1765 = vsub.s32 1, %v1764
    %v1766 = vrot.slane %v1724, %v1765
    %v1767 = vlaneseq
    %v1768 = vshrl.u32 %v1767, 7
    %v1769 = vsub.s32 2, %v1768
    %v1770 = vrot.slane %v1724, %v1769
    %v1771 = vlaneseq
    %v1772 = vshrl.u32 %v1771, 7
    %v1773 = vsub.s32 3, %v1772
    %v1774 = vrot.slane %v1724, %v1773
    %v1775 = vlaneseq
    %v1776 = vshrl.u32 %v1775, 7
    %v1777 = vsub.s32 4, %v1776
    %v1778 = vrot.slane %v1724, %v1777
    %v1779 = vlaneseq
    %v1780 = vshrl.u32 %v1779, 7
    %v1781 = vsub.s32 5, %v1780
    %v1782 = vrot.slane %v1724, %v1781
    %v1783 = vlaneseq
    %v1784 = vshrl.u32 %v1783, 7
    %v1785 = vsub.s32 6, %v1784
    %v1786 = vrot.slane %v1724, %v1785
    %v1787 = vlaneseq
    %v1788 = vshrl.u32 %v1787, 7
    %v1789 = vsub.s32 7, %v1788
    %v1790 = vrot.slane %v1724, %v1789
    %1807 = vmatprep.subr.mxu0 %v1708
    %1808 = vmatpush1.msra.mxu0 %v1707
    %1809 = vmatprep.subr.mxu0 %v1692
    %1810 = vmatpush1.msra.mxu0 %v1691
    %1811 = vmatprep.subr.mxu0 %v1676
    %1812 = vmatpush1.msra.mxu0 %v1675
    %1813 = vmatprep.subr.mxu0 %v1660
    %1814 = vmatpush1.msra.mxu0 %v1659
    %1815 = vmatprep.subr.mxu0 %v1644
    %1816 = vmatpush1.msra.mxu0 %v1643
    %1817 = vmatprep.subr.mxu0 %v1628
    %1818 = vmatpush1.msra.mxu0 %v1627
    %1819 = vmatprep.subr.mxu0 %v1612
    %1820 = vmatpush1.msra.mxu0 %v1611
    %1821 = vmatprep.subr.mxu0 %v1596
    %1822 = vmatpush1.msra.mxu0 %v1595
    %1823 = vmatprep.subr.mxu0 %v1580
    %1824 = vmatpush1.msra.mxu0 %v1579
    %1825 = vmatprep.subr.mxu0 %v1564
    %1826 = vmatpush1.msra.mxu0 %v1563
    %1827 = vmatprep.subr.mxu0 %v1548
    %1828 = vmatpush1.msra.mxu0 %v1547
    %1829 = vmatprep.subr.mxu0 %v1532
    %1830 = vmatpush1.msra.mxu0 %v1531
    %1831 = vmatprep.subr.mxu0 %v1516
    %1832 = vmatpush1.msra.mxu0 %v1515
    %1833 = vmatprep.subr.mxu0 %v1500
    %1834 = vmatpush1.msra.mxu0 %v1499
    %1835 = vmatprep.subr.mxu0 %v1484
    %1836 = vmatpush1.msra.mxu0 %v1483
    %1837 = vmatprep.subr.mxu0 %v1468
    %1838 = vmatpush1.msra.mxu0 %v1467
    %1839 = vmatprep.subr.mxu0 0.0
    %1840 = vmatpush2.msra.mxu0 0.0
    %1841 = vmatprep.subr.mxu0 0.0
    %1842 = vmatpush2.msra.mxu0 0.0
    %1843 = vmatprep.subr.mxu0 0.0
    %1844 = vmatpush2.msra.mxu0 0.0
    %1845 = vmatprep.subr.mxu0 0.0
    %1846 = vmatpush2.msra.mxu0 0.0
    %1847 = vmatprep.subr.mxu0 0.0
    %1848 = vmatpush2.msra.mxu0 0.0
    %1849 = vmatprep.subr.mxu0 0.0
    %1850 = vmatpush2.msra.mxu0 0.0
    %1851 = vmatprep.subr.mxu0 0.0
    %1852 = vmatpush2.msra.mxu0 0.0
    %1853 = vmatprep.subr.mxu0 0.0
    %1854 = vmatpush2.msra.mxu0 0.0
    %1855 = vmatprep.subr.mxu0 0.0
    %1856 = vmatpush2.msra.mxu0 0.0
    %1857 = vmatprep.subr.mxu0 0.0
    %1858 = vmatpush2.msra.mxu0 0.0
    %1859 = vmatprep.subr.mxu0 0.0
    %1860 = vmatpush2.msra.mxu0 0.0
    %1861 = vmatprep.subr.mxu0 0.0
    %1862 = vmatpush2.msra.mxu0 0.0
    %1863 = vmatprep.subr.mxu0 0.0
    %1864 = vmatpush2.msra.mxu0 0.0
    %1865 = vmatprep.subr.mxu0 0.0
    %1866 = vmatpush2.msra.mxu0 0.0
    %1867 = vmatprep.subr.mxu0 0.0
    %1868 = vmatpush2.msra.mxu0 0.0
    %1869 = vmatprep.subr.mxu0 0.0
    %1870 = vmatpush2.msra.mxu0 0.0
    %1871 = vmatprep.mubr.f32.mxu0 0.0
    %1872 = vmatmul.mubr.f32.gmra.mxu0 %v917
    %v1873 = vpop.f32.mrf.mxu0
    %v1874 = vadd.f32 %v1730, %v1873
    %v1875 = vpop.f32.mrf.mxu0
    %v1876 = vadd.f32 %v1734, %v1875
    %1877 = vmatprep.mubr.f32.mxu0 0.0
    %1878 = vmatmul.mubr.f32.gmra.mxu0 %v1466
    %v1879 = vpop.f32.mrf.mxu0
    %v1880 = vadd.f32 %v1730, %v1879
    %v1881 = vpop.f32.mrf.mxu0
    %v1882 = vadd.f32 %v1734, %v1881
    %1883 = vdwg.mxu0
    %1884 = vmatprep.subr.mxu0 %v1710
    %1885 = vmatpush1.msra.mxu0 %v1709
    %1886 = vmatprep.subr.mxu0 %v1694
    %1887 = vmatpush1.msra.mxu0 %v1693
    %1888 = vmatprep.subr.mxu0 %v1678
    %1889 = vmatpush1.msra.mxu0 %v1677
    %1890 = vmatprep.subr.mxu0 %v1662
    %1891 = vmatpush1.msra.mxu0 %v1661
    %1892 = vmatprep.subr.mxu0 %v1646
    %1893 = vmatpush1.msra.mxu0 %v1645
    %1894 = vmatprep.subr.mxu0 %v1630
    %1895 = vmatpush1.msra.mxu0 %v1629
    %1896 = vmatprep.subr.mxu0 %v1614
    %1897 = vmatpush1.msra.mxu0 %v1613
    %1898 = vmatprep.subr.mxu0 %v1598
    %1899 = vmatpush1.msra.mxu0 %v1597
    %1900 = vmatprep.subr.mxu0 %v1582
    %1901 = vmatpush1.msra.mxu0 %v1581
    %1902 = vmatprep.subr.mxu0 %v1566
    %1903 = vmatpush1.msra.mxu0 %v1565
    %1904 = vmatprep.subr.mxu0 %v1550
    %1905 = vmatpush1.msra.mxu0 %v1549
    %1906 = vmatprep.subr.mxu0 %v1534
    %1907 = vmatpush1.msra.mxu0 %v1533
    %1908 = vmatprep.subr.mxu0 %v1518
    %1909 = vmatpush1.msra.mxu0 %v1517
    %1910 = vmatprep.subr.mxu0 %v1502
    %1911 = vmatpush1.msra.mxu0 %v1501
    %1912 = vmatprep.subr.mxu0 %v1486
    %1913 = vmatpush1.msra.mxu0 %v1485
    %1914 = vmatprep.subr.mxu0 %v1470
    %1915 = vmatpush1.msra.mxu0 %v1469
    %1916 = vmatprep.subr.mxu0 0.0
    %1917 = vmatpush2.msra.mxu0 0.0
    %1918 = vmatprep.subr.mxu0 0.0
    %1919 = vmatpush2.msra.mxu0 0.0
    %1920 = vmatprep.subr.mxu0 0.0
    %1921 = vmatpush2.msra.mxu0 0.0
    %1922 = vmatprep.subr.mxu0 0.0
    %1923 = vmatpush2.msra.mxu0 0.0
    %1924 = vmatprep.subr.mxu0 0.0
    %1925 = vmatpush2.msra.mxu0 0.0
    %1926 = vmatprep.subr.mxu0 0.0
    %1927 = vmatpush2.msra.mxu0 0.0
    %1928 = vmatprep.subr.mxu0 0.0
    %1929 = vmatpush2.msra.mxu0 0.0
    %1930 = vmatprep.subr.mxu0 0.0
    %1931 = vmatpush2.msra.mxu0 0.0
    %1932 = vmatprep.subr.mxu0 0.0
    %1933 = vmatpush2.msra.mxu0 0.0
    %1934 = vmatprep.subr.mxu0 0.0
    %1935 = vmatpush2.msra.mxu0 0.0
    %1936 = vmatprep.subr.mxu0 0.0
    %1937 = vmatpush2.msra.mxu0 0.0
    %1938 = vmatprep.subr.mxu0 0.0
    %1939 = vmatpush2.msra.mxu0 0.0
    %1940 = vmatprep.subr.mxu0 0.0
    %1941 = vmatpush2.msra.mxu0 0.0
    %1942 = vmatprep.subr.mxu0 0.0
    %1943 = vmatpush2.msra.mxu0 0.0
    %1944 = vmatprep.subr.mxu0 0.0
    %1945 = vmatpush2.msra.mxu0 0.0
    %1946 = vmatprep.subr.mxu0 0.0
    %1947 = vmatpush2.msra.mxu0 0.0
    %1948 = vmatprep.mubr.f32.mxu0 0.0
    %1949 = vmatmul.mubr.f32.gmra.mxu0 %v917
    %v1950 = vpop.f32.mrf.mxu0
    %v1951 = vadd.f32 %v1738, %v1950
    %v1952 = vpop.f32.mrf.mxu0
    %v1953 = vadd.f32 %v1742, %v1952
    %1954 = vmatprep.mubr.f32.mxu0 0.0
    %1955 = vmatmul.mubr.f32.gmra.mxu0 %v1466
    %v1956 = vpop.f32.mrf.mxu0
    %v1957 = vadd.f32 %v1738, %v1956
    %v1958 = vpop.f32.mrf.mxu0
    %v1959 = vadd.f32 %v1742, %v1958
    %1960 = vdwg.mxu0
    %1961 = vmatprep.subr.mxu0 %v1712
    %1962 = vmatpush1.msra.mxu0 %v1711
    %1963 = vmatprep.subr.mxu0 %v1696
    %1964 = vmatpush1.msra.mxu0 %v1695
    %1965 = vmatprep.subr.mxu0 %v1680
    %1966 = vmatpush1.msra.mxu0 %v1679
    %1967 = vmatprep.subr.mxu0 %v1664
    %1968 = vmatpush1.msra.mxu0 %v1663
    %1969 = vmatprep.subr.mxu0 %v1648
    %1970 = vmatpush1.msra.mxu0 %v1647
    %1971 = vmatprep.subr.mxu0 %v1632
    %1972 = vmatpush1.msra.mxu0 %v1631
    %1973 = vmatprep.subr.mxu0 %v1616
    %1974 = vmatpush1.msra.mxu0 %v1615
    %1975 = vmatprep.subr.mxu0 %v1600
    %1976 = vmatpush1.msra.mxu0 %v1599
    %1977 = vmatprep.subr.mxu0 %v1584
    %1978 = vmatpush1.msra.mxu0 %v1583
    %1979 = vmatprep.subr.mxu0 %v1568
    %1980 = vmatpush1.msra.mxu0 %v1567
    %1981 = vmatprep.subr.mxu0 %v1552
    %1982 = vmatpush1.msra.mxu0 %v1551
    %1983 = vmatprep.subr.mxu0 %v1536
    %1984 = vmatpush1.msra.mxu0 %v1535
    %1985 = vmatprep.subr.mxu0 %v1520
    %1986 = vmatpush1.msra.mxu0 %v1519
    %1987 = vmatprep.subr.mxu0 %v1504
    %1988 = vmatpush1.msra.mxu0 %v1503
    %1989 = vmatprep.subr.mxu0 %v1488
    %1990 = vmatpush1.msra.mxu0 %v1487
    %1991 = vmatprep.subr.mxu0 %v1472
    %1992 = vmatpush1.msra.mxu0 %v1471
    %1993 = vmatprep.subr.mxu0 0.0
    %1994 = vmatpush2.msra.mxu0 0.0
    %1995 = vmatprep.subr.mxu0 0.0
    %1996 = vmatpush2.msra.mxu0 0.0
    %1997 = vmatprep.subr.mxu0 0.0
    %1998 = vmatpush2.msra.mxu0 0.0
    %1999 = vmatprep.subr.mxu0 0.0
    %2000 = vmatpush2.msra.mxu0 0.0
    %2001 = vmatprep.subr.mxu0 0.0
    %2002 = vmatpush2.msra.mxu0 0.0
    %2003 = vmatprep.subr.mxu0 0.0
    %2004 = vmatpush2.msra.mxu0 0.0
    %2005 = vmatprep.subr.mxu0 0.0
    %2006 = vmatpush2.msra.mxu0 0.0
    %2007 = vmatprep.subr.mxu0 0.0
    %2008 = vmatpush2.msra.mxu0 0.0
    %2009 = vmatprep.subr.mxu0 0.0
    %2010 = vmatpush2.msra.mxu0 0.0
    %2011 = vmatprep.subr.mxu0 0.0
    %2012 = vmatpush2.msra.mxu0 0.0
    %2013 = vmatprep.subr.mxu0 0.0
    %2014 = vmatpush2.msra.mxu0 0.0
    %2015 = vmatprep.subr.mxu0 0.0
    %2016 = vmatpush2.msra.mxu0 0.0
    %2017 = vmatprep.subr.mxu0 0.0
    %2018 = vmatpush2.msra.mxu0 0.0
    %2019 = vmatprep.subr.mxu0 0.0
    %2020 = vmatpush2.msra.mxu0 0.0
    %2021 = vmatprep.subr.mxu0 0.0
    %2022 = vmatpush2.msra.mxu0 0.0
    %2023 = vmatprep.subr.mxu0 0.0
    %2024 = vmatpush2.msra.mxu0 0.0
    %2025 = vmatprep.mubr.f32.mxu0 0.0
    %2026 = vmatmul.mubr.f32.gmra.mxu0 %v917
    %v2027 = vpop.f32.mrf.mxu0
    %v2028 = vadd.f32 %v1746, %v2027
    %v2029 = vpop.f32.mrf.mxu0
    %v2030 = vadd.f32 %v1750, %v2029
    %2031 = vmatprep.mubr.f32.mxu0 0.0
    %2032 = vmatmul.mubr.f32.gmra.mxu0 %v1466
    %v2033 = vpop.f32.mrf.mxu0
    %v2034 = vadd.f32 %v1746, %v2033
    %v2035 = vpop.f32.mrf.mxu0
    %v2036 = vadd.f32 %v1750, %v2035
    %2037 = vdwg.mxu0
    %2038 = vmatprep.subr.mxu0 %v1714
    %2039 = vmatpush1.msra.mxu0 %v1713
    %2040 = vmatprep.subr.mxu0 %v1698
    %2041 = vmatpush1.msra.mxu0 %v1697
    %2042 = vmatprep.subr.mxu0 %v1682
    %2043 = vmatpush1.msra.mxu0 %v1681
    %2044 = vmatprep.subr.mxu0 %v1666
    %2045 = vmatpush1.msra.mxu0 %v1665
    %2046 = vmatprep.subr.mxu0 %v1650
    %2047 = vmatpush1.msra.mxu0 %v1649
    %2048 = vmatprep.subr.mxu0 %v1634
    %2049 = vmatpush1.msra.mxu0 %v1633
    %2050 = vmatprep.subr.mxu0 %v1618
    %2051 = vmatpush1.msra.mxu0 %v1617
    %2052 = vmatprep.subr.mxu0 %v1602
    %2053 = vmatpush1.msra.mxu0 %v1601
    %2054 = vmatprep.subr.mxu0 %v1586
    %2055 = vmatpush1.msra.mxu0 %v1585
    %2056 = vmatprep.subr.mxu0 %v1570
    %2057 = vmatpush1.msra.mxu0 %v1569
    %2058 = vmatprep.subr.mxu0 %v1554
    %2059 = vmatpush1.msra.mxu0 %v1553
    %2060 = vmatprep.subr.mxu0 %v1538
    %2061 = vmatpush1.msra.mxu0 %v1537
    %2062 = vmatprep.subr.mxu0 %v1522
    %2063 = vmatpush1.msra.mxu0 %v1521
    %2064 = vmatprep.subr.mxu0 %v1506
    %2065 = vmatpush1.msra.mxu0 %v1505
    %2066 = vmatprep.subr.mxu0 %v1490
    %2067 = vmatpush1.msra.mxu0 %v1489
    %2068 = vmatprep.subr.mxu0 %v1474
    %2069 = vmatpush1.msra.mxu0 %v1473
    %2070 = vmatprep.subr.mxu0 0.0
    %2071 = vmatpush2.msra.mxu0 0.0
    %2072 = vmatprep.subr.mxu0 0.0
    %2073 = vmatpush2.msra.mxu0 0.0
    %2074 = vmatprep.subr.mxu0 0.0
    %2075 = vmatpush2.msra.mxu0 0.0
    %2076 = vmatprep.subr.mxu0 0.0
    %2077 = vmatpush2.msra.mxu0 0.0
    %2078 = vmatprep.subr.mxu0 0.0
    %2079 = vmatpush2.msra.mxu0 0.0
    %2080 = vmatprep.subr.mxu0 0.0
    %2081 = vmatpush2.msra.mxu0 0.0
    %2082 = vmatprep.subr.mxu0 0.0
    %2083 = vmatpush2.msra.mxu0 0.0
    %2084 = vmatprep.subr.mxu0 0.0
    %2085 = vmatpush2.msra.mxu0 0.0
    %2086 = vmatprep.subr.mxu0 0.0
    %2087 = vmatpush2.msra.mxu0 0.0
    %2088 = vmatprep.subr.mxu0 0.0
    %2089 = vmatpush2.msra.mxu0 0.0
    %2090 = vmatprep.subr.mxu0 0.0
    %2091 = vmatpush2.msra.mxu0 0.0
    %2092 = vmatprep.subr.mxu0 0.0
    %2093 = vmatpush2.msra.mxu0 0.0
    %2094 = vmatprep.subr.mxu0 0.0
    %2095 = vmatpush2.msra.mxu0 0.0
    %2096 = vmatprep.subr.mxu0 0.0
    %2097 = vmatpush2.msra.mxu0 0.0
    %2098 = vmatprep.subr.mxu0 0.0
    %2099 = vmatpush2.msra.mxu0 0.0
    %2100 = vmatprep.subr.mxu0 0.0
    %2101 = vmatpush2.msra.mxu0 0.0
    %2102 = vmatprep.mubr.f32.mxu0 0.0
    %2103 = vmatmul.mubr.f32.gmra.mxu0 %v917
    %v2104 = vpop.f32.mrf.mxu0
    %v2105 = vadd.f32 %v1754, %v2104
    %v2106 = vpop.f32.mrf.mxu0
    %v2107 = vadd.f32 %v1758, %v2106
    %2108 = vmatprep.mubr.f32.mxu0 0.0
    %2109 = vmatmul.mubr.f32.gmra.mxu0 %v1466
    %v2110 = vpop.f32.mrf.mxu0
    %v2111 = vadd.f32 %v1754, %v2110
    %v2112 = vpop.f32.mrf.mxu0
    %v2113 = vadd.f32 %v1758, %v2112
    %2114 = vdwg.mxu0
    %2115 = vmatprep.subr.mxu0 %v1716
    %2116 = vmatpush1.msra.mxu0 %v1715
    %2117 = vmatprep.subr.mxu0 %v1700
    %2118 = vmatpush1.msra.mxu0 %v1699
    %2119 = vmatprep.subr.mxu0 %v1684
    %2120 = vmatpush1.msra.mxu0 %v1683
    %2121 = vmatprep.subr.mxu0 %v1668
    %2122 = vmatpush1.msra.mxu0 %v1667
    %2123 = vmatprep.subr.mxu0 %v1652
    %2124 = vmatpush1.msra.mxu0 %v1651
    %2125 = vmatprep.subr.mxu0 %v1636
    %2126 = vmatpush1.msra.mxu0 %v1635
    %2127 = vmatprep.subr.mxu0 %v1620
    %2128 = vmatpush1.msra.mxu0 %v1619
    %2129 = vmatprep.subr.mxu0 %v1604
    %2130 = vmatpush1.msra.mxu0 %v1603
    %2131 = vmatprep.subr.mxu0 %v1588
    %2132 = vmatpush1.msra.mxu0 %v1587
    %2133 = vmatprep.subr.mxu0 %v1572
    %2134 = vmatpush1.msra.mxu0 %v1571
    %2135 = vmatprep.subr.mxu0 %v1556
    %2136 = vmatpush1.msra.mxu0 %v1555
    %2137 = vmatprep.subr.mxu0 %v1540
    %2138 = vmatpush1.msra.mxu0 %v1539
    %2139 = vmatprep.subr.mxu0 %v1524
    %2140 = vmatpush1.msra.mxu0 %v1523
    %2141 = vmatprep.subr.mxu0 %v1508
    %2142 = vmatpush1.msra.mxu0 %v1507
    %2143 = vmatprep.subr.mxu0 %v1492
    %2144 = vmatpush1.msra.mxu0 %v1491
    %2145 = vmatprep.subr.mxu0 %v1476
    %2146 = vmatpush1.msra.mxu0 %v1475
    %2147 = vmatprep.subr.mxu0 0.0
    %2148 = vmatpush2.msra.mxu0 0.0
    %2149 = vmatprep.subr.mxu0 0.0
    %2150 = vmatpush2.msra.mxu0 0.0
    %2151 = vmatprep.subr.mxu0 0.0
    %2152 = vmatpush2.msra.mxu0 0.0
    %2153 = vmatprep.subr.mxu0 0.0
    %2154 = vmatpush2.msra.mxu0 0.0
    %2155 = vmatprep.subr.mxu0 0.0
    %2156 = vmatpush2.msra.mxu0 0.0
    %2157 = vmatprep.subr.mxu0 0.0
    %2158 = vmatpush2.msra.mxu0 0.0
    %2159 = vmatprep.subr.mxu0 0.0
    %2160 = vmatpush2.msra.mxu0 0.0
    %2161 = vmatprep.subr.mxu0 0.0
    %2162 = vmatpush2.msra.mxu0 0.0
    %2163 = vmatprep.subr.mxu0 0.0
    %2164 = vmatpush2.msra.mxu0 0.0
    %2165 = vmatprep.subr.mxu0 0.0
    %2166 = vmatpush2.msra.mxu0 0.0
    %2167 = vmatprep.subr.mxu0 0.0
    %2168 = vmatpush2.msra.mxu0 0.0
    %2169 = vmatprep.subr.mxu0 0.0
    %2170 = vmatpush2.msra.mxu0 0.0
    %2171 = vmatprep.subr.mxu0 0.0
    %2172 = vmatpush2.msra.mxu0 0.0
    %2173 = vmatprep.subr.mxu0 0.0
    %2174 = vmatpush2.msra.mxu0 0.0
    %2175 = vmatprep.subr.mxu0 0.0
    %2176 = vmatpush2.msra.mxu0 0.0
    %2177 = vmatprep.subr.mxu0 0.0
    %2178 = vmatpush2.msra.mxu0 0.0
    %2179 = vmatprep.mubr.f32.mxu0 0.0
    %2180 = vmatmul.mubr.f32.gmra.mxu0 %v917
    %v2181 = vpop.f32.mrf.mxu0
    %v2182 = vadd.f32 %v1762, %v2181
    %v2183 = vpop.f32.mrf.mxu0
    %v2184 = vadd.f32 %v1766, %v2183
    %2185 = vmatprep.mubr.f32.mxu0 0.0
    %2186 = vmatmul.mubr.f32.gmra.mxu0 %v1466
    %v2187 = vpop.f32.mrf.mxu0
    %v2188 = vadd.f32 %v1762, %v2187
    %v2189 = vpop.f32.mrf.mxu0
    %v2190 = vadd.f32 %v1766, %v2189
    %2191 = vdwg.mxu0
    %2192 = vmatprep.subr.mxu0 %v1718
    %2193 = vmatpush1.msra.mxu0 %v1717
    %2194 = vmatprep.subr.mxu0 %v1702
    %2195 = vmatpush1.msra.mxu0 %v1701
    %2196 = vmatprep.subr.mxu0 %v1686
    %2197 = vmatpush1.msra.mxu0 %v1685
    %2198 = vmatprep.subr.mxu0 %v1670
    %2199 = vmatpush1.msra.mxu0 %v1669
    %2200 = vmatprep.subr.mxu0 %v1654
    %2201 = vmatpush1.msra.mxu0 %v1653
    %2202 = vmatprep.subr.mxu0 %v1638
    %2203 = vmatpush1.msra.mxu0 %v1637
    %2204 = vmatprep.subr.mxu0 %v1622
    %2205 = vmatpush1.msra.mxu0 %v1621
    %2206 = vmatprep.subr.mxu0 %v1606
    %2207 = vmatpush1.msra.mxu0 %v1605
    %2208 = vmatprep.subr.mxu0 %v1590
    %2209 = vmatpush1.msra.mxu0 %v1589
    %2210 = vmatprep.subr.mxu0 %v1574
    %2211 = vmatpush1.msra.mxu0 %v1573
    %2212 = vmatprep.subr.mxu0 %v1558
    %2213 = vmatpush1.msra.mxu0 %v1557
    %2214 = vmatprep.subr.mxu0 %v1542
    %2215 = vmatpush1.msra.mxu0 %v1541
    %2216 = vmatprep.subr.mxu0 %v1526
    %2217 = vmatpush1.msra.mxu0 %v1525
    %2218 = vmatprep.subr.mxu0 %v1510
    %2219 = vmatpush1.msra.mxu0 %v1509
    %2220 = vmatprep.subr.mxu0 %v1494
    %2221 = vmatpush1.msra.mxu0 %v1493
    %2222 = vmatprep.subr.mxu0 %v1478
    %2223 = vmatpush1.msra.mxu0 %v1477
    %2224 = vmatprep.subr.mxu0 0.0
    %2225 = vmatpush2.msra.mxu0 0.0
    %2226 = vmatprep.subr.mxu0 0.0
    %2227 = vmatpush2.msra.mxu0 0.0
    %2228 = vmatprep.subr.mxu0 0.0
    %2229 = vmatpush2.msra.mxu0 0.0
    %2230 = vmatprep.subr.mxu0 0.0
    %2231 = vmatpush2.msra.mxu0 0.0
    %2232 = vmatprep.subr.mxu0 0.0
    %2233 = vmatpush2.msra.mxu0 0.0
    %2234 = vmatprep.subr.mxu0 0.0
    %2235 = vmatpush2.msra.mxu0 0.0
    %2236 = vmatprep.subr.mxu0 0.0
    %2237 = vmatpush2.msra.mxu0 0.0
    %2238 = vmatprep.subr.mxu0 0.0
    %2239 = vmatpush2.msra.mxu0 0.0
    %2240 = vmatprep.subr.mxu0 0.0
    %2241 = vmatpush2.msra.mxu0 0.0
    %2242 = vmatprep.subr.mxu0 0.0
    %2243 = vmatpush2.msra.mxu0 0.0
    %2244 = vmatprep.subr.mxu0 0.0
    %2245 = vmatpush2.msra.mxu0 0.0
    %2246 = vmatprep.subr.mxu0 0.0
    %2247 = vmatpush2.msra.mxu0 0.0
    %2248 = vmatprep.subr.mxu0 0.0
    %2249 = vmatpush2.msra.mxu0 0.0
    %2250 = vmatprep.subr.mxu0 0.0
    %2251 = vmatpush2.msra.mxu0 0.0
    %2252 = vmatprep.subr.mxu0 0.0
    %2253 = vmatpush2.msra.mxu0 0.0
    %2254 = vmatprep.subr.mxu0 0.0
    %2255 = vmatpush2.msra.mxu0 0.0
    %2256 = vmatprep.mubr.f32.mxu0 0.0
    %2257 = vmatmul.mubr.f32.gmra.mxu0 %v917
    %v2258 = vpop.f32.mrf.mxu0
    %v2259 = vadd.f32 %v1770, %v2258
    %v2260 = vpop.f32.mrf.mxu0
    %v2261 = vadd.f32 %v1774, %v2260
    %2262 = vmatprep.mubr.f32.mxu0 0.0
    %2263 = vmatmul.mubr.f32.gmra.mxu0 %v1466
    %v2264 = vpop.f32.mrf.mxu0
    %v2265 = vadd.f32 %v1770, %v2264
    %v2266 = vpop.f32.mrf.mxu0
    %v2267 = vadd.f32 %v1774, %v2266
    %2268 = vdwg.mxu0
    %2269 = vmatprep.subr.mxu0 %v1720
    %2270 = vmatpush1.msra.mxu0 %v1719
    %2271 = vmatprep.subr.mxu0 %v1704
    %2272 = vmatpush1.msra.mxu0 %v1703
    %2273 = vmatprep.subr.mxu0 %v1688
    %2274 = vmatpush1.msra.mxu0 %v1687
    %2275 = vmatprep.subr.mxu0 %v1672
    %2276 = vmatpush1.msra.mxu0 %v1671
    %2277 = vmatprep.subr.mxu0 %v1656
    %2278 = vmatpush1.msra.mxu0 %v1655
    %2279 = vmatprep.subr.mxu0 %v1640
    %2280 = vmatpush1.msra.mxu0 %v1639
    %2281 = vmatprep.subr.mxu0 %v1624
    %2282 = vmatpush1.msra.mxu0 %v1623
    %2283 = vmatprep.subr.mxu0 %v1608
    %2284 = vmatpush1.msra.mxu0 %v1607
    %2285 = vmatprep.subr.mxu0 %v1592
    %2286 = vmatpush1.msra.mxu0 %v1591
    %2287 = vmatprep.subr.mxu0 %v1576
    %2288 = vmatpush1.msra.mxu0 %v1575
    %2289 = vmatprep.subr.mxu0 %v1560
    %2290 = vmatpush1.msra.mxu0 %v1559
    %2291 = vmatprep.subr.mxu0 %v1544
    %2292 = vmatpush1.msra.mxu0 %v1543
    %2293 = vmatprep.subr.mxu0 %v1528
    %2294 = vmatpush1.msra.mxu0 %v1527
    %2295 = vmatprep.subr.mxu0 %v1512
    %2296 = vmatpush1.msra.mxu0 %v1511
    %2297 = vmatprep.subr.mxu0 %v1496
    %2298 = vmatpush1.msra.mxu0 %v1495
    %2299 = vmatprep.subr.mxu0 %v1480
    %2300 = vmatpush1.msra.mxu0 %v1479
    %2301 = vmatprep.subr.mxu0 0.0
    %2302 = vmatpush2.msra.mxu0 0.0
    %2303 = vmatprep.subr.mxu0 0.0
    %2304 = vmatpush2.msra.mxu0 0.0
    %2305 = vmatprep.subr.mxu0 0.0
    %2306 = vmatpush2.msra.mxu0 0.0
    %2307 = vmatprep.subr.mxu0 0.0
    %2308 = vmatpush2.msra.mxu0 0.0
    %2309 = vmatprep.subr.mxu0 0.0
    %2310 = vmatpush2.msra.mxu0 0.0
    %2311 = vmatprep.subr.mxu0 0.0
    %2312 = vmatpush2.msra.mxu0 0.0
    %2313 = vmatprep.subr.mxu0 0.0
    %2314 = vmatpush2.msra.mxu0 0.0
    %2315 = vmatprep.subr.mxu0 0.0
    %2316 = vmatpush2.msra.mxu0 0.0
    %2317 = vmatprep.subr.mxu0 0.0
    %2318 = vmatpush2.msra.mxu0 0.0
    %2319 = vmatprep.subr.mxu0 0.0
    %2320 = vmatpush2.msra.mxu0 0.0
    %2321 = vmatprep.subr.mxu0 0.0
    %2322 = vmatpush2.msra.mxu0 0.0
    %2323 = vmatprep.subr.mxu0 0.0
    %2324 = vmatpush2.msra.mxu0 0.0
    %2325 = vmatprep.subr.mxu0 0.0
    %2326 = vmatpush2.msra.mxu0 0.0
    %2327 = vmatprep.subr.mxu0 0.0
    %2328 = vmatpush2.msra.mxu0 0.0
    %2329 = vmatprep.subr.mxu0 0.0
    %2330 = vmatpush2.msra.mxu0 0.0
    %2331 = vmatprep.subr.mxu0 0.0
    %2332 = vmatpush2.msra.mxu0 0.0
    %2333 = vmatprep.mubr.f32.mxu0 0.0
    %2334 = vmatmul.mubr.f32.gmra.mxu0 %v917
    %v2335 = vpop.f32.mrf.mxu0
    %v2336 = vadd.f32 %v1778, %v2335
    %v2337 = vpop.f32.mrf.mxu0
    %v2338 = vadd.f32 %v1782, %v2337
    %2339 = vmatprep.mubr.f32.mxu0 0.0
    %2340 = vmatmul.mubr.f32.gmra.mxu0 %v1466
    %v2341 = vpop.f32.mrf.mxu0
    %v2342 = vadd.f32 %v1778, %v2341
    %v2343 = vpop.f32.mrf.mxu0
    %v2344 = vadd.f32 %v1782, %v2343
    %2345 = vdwg.mxu0
    %2346 = vmatprep.subr.mxu0 %v1722
    %2347 = vmatpush1.msra.mxu0 %v1721
    %2348 = vmatprep.subr.mxu0 %v1706
    %2349 = vmatpush1.msra.mxu0 %v1705
    %2350 = vmatprep.subr.mxu0 %v1690
    %2351 = vmatpush1.msra.mxu0 %v1689
    %2352 = vmatprep.subr.mxu0 %v1674
    %2353 = vmatpush1.msra.mxu0 %v1673
    %2354 = vmatprep.subr.mxu0 %v1658
    %2355 = vmatpush1.msra.mxu0 %v1657
    %2356 = vmatprep.subr.mxu0 %v1642
    %2357 = vmatpush1.msra.mxu0 %v1641
    %2358 = vmatprep.subr.mxu0 %v1626
    %2359 = vmatpush1.msra.mxu0 %v1625
    %2360 = vmatprep.subr.mxu0 %v1610
    %2361 = vmatpush1.msra.mxu0 %v1609
    %2362 = vmatprep.subr.mxu0 %v1594
    %2363 = vmatpush1.msra.mxu0 %v1593
    %2364 = vmatprep.subr.mxu0 %v1578
    %2365 = vmatpush1.msra.mxu0 %v1577
    %2366 = vmatprep.subr.mxu0 %v1562
    %2367 = vmatpush1.msra.mxu0 %v1561
    %2368 = vmatprep.subr.mxu0 %v1546
    %2369 = vmatpush1.msra.mxu0 %v1545
    %2370 = vmatprep.subr.mxu0 %v1530
    %2371 = vmatpush1.msra.mxu0 %v1529
    %2372 = vmatprep.subr.mxu0 %v1514
    %2373 = vmatpush1.msra.mxu0 %v1513
    %2374 = vmatprep.subr.mxu0 %v1498
    %2375 = vmatpush1.msra.mxu0 %v1497
    %2376 = vmatprep.subr.mxu0 %v1482
    %2377 = vmatpush1.msra.mxu0 %v1481
    %2378 = vmatprep.subr.mxu0 0.0
    %2379 = vmatpush2.msra.mxu0 0.0
    %2380 = vmatprep.subr.mxu0 0.0
    %2381 = vmatpush2.msra.mxu0 0.0
    %2382 = vmatprep.subr.mxu0 0.0
    %2383 = vmatpush2.msra.mxu0 0.0
    %2384 = vmatprep.subr.mxu0 0.0
    %2385 = vmatpush2.msra.mxu0 0.0
    %2386 = vmatprep.subr.mxu0 0.0
    %2387 = vmatpush2.msra.mxu0 0.0
    %2388 = vmatprep.subr.mxu0 0.0
    %2389 = vmatpush2.msra.mxu0 0.0
    %2390 = vmatprep.subr.mxu0 0.0
    %2391 = vmatpush2.msra.mxu0 0.0
    %2392 = vmatprep.subr.mxu0 0.0
    %2393 = vmatpush2.msra.mxu0 0.0
    %2394 = vmatprep.subr.mxu0 0.0
    %2395 = vmatpush2.msra.mxu0 0.0
    %2396 = vmatprep.subr.mxu0 0.0
    %2397 = vmatpush2.msra.mxu0 0.0
    %2398 = vmatprep.subr.mxu0 0.0
    %2399 = vmatpush2.msra.mxu0 0.0
    %2400 = vmatprep.subr.mxu0 0.0
    %2401 = vmatpush2.msra.mxu0 0.0
    %2402 = vmatprep.subr.mxu0 0.0
    %2403 = vmatpush2.msra.mxu0 0.0
    %2404 = vmatprep.subr.mxu0 0.0
    %2405 = vmatpush2.msra.mxu0 0.0
    %2406 = vmatprep.subr.mxu0 0.0
    %2407 = vmatpush2.msra.mxu0 0.0
    %2408 = vmatprep.subr.mxu0 0.0
    %2409 = vmatpush2.msra.mxu0 0.0
    %2410 = vmatprep.mubr.f32.mxu0 0.0
    %2411 = vmatmul.mubr.f32.gmra.mxu0 %v917
    %v2412 = vpop.f32.mrf.mxu0
    %v2413 = vadd.f32 %v1786, %v2412
    %v2414 = vpop.f32.mrf.mxu0
    %v2415 = vadd.f32 %v1790, %v2414
    %2416 = vmatprep.mubr.f32.mxu0 0.0
    %2417 = vmatmul.mubr.f32.gmra.mxu0 %v1466
    %v2418 = vpop.f32.mrf.mxu0
    %v2419 = vadd.f32 %v1786, %v2418
    %v2420 = vpop.f32.mrf.mxu0
    %v2421 = vadd.f32 %v1790, %v2420
    %2422 = vdwg.mxu0
    %v2423 = vmax.f32 %v1874, 0.0
    %v2424 = vmax.f32 %v1876, 0.0
    %v2425 = vmax.f32 %v1951, 0.0
    %v2426 = vmax.f32 %v1953, 0.0
    %v2427 = vmax.f32 %v2028, 0.0
    %v2428 = vmax.f32 %v2030, 0.0
    %v2429 = vmax.f32 %v2105, 0.0
    %v2430 = vmax.f32 %v2107, 0.0
    %v2431 = vmax.f32 %v2182, 0.0
    %v2432 = vmax.f32 %v2184, 0.0
    %v2433 = vmax.f32 %v2259, 0.0
    %v2434 = vmax.f32 %v2261, 0.0
    %v2435 = vmax.f32 %v2336, 0.0
    %v2436 = vmax.f32 %v2338, 0.0
    %v2437 = vmax.f32 %v2413, 0.0
    %v2438 = vmax.f32 %v2415, 0.0
    %v2439 = vmax.f32 %v1880, 0.0
    %v2440 = vmax.f32 %v1882, 0.0
    %v2441 = vmax.f32 %v1957, 0.0
    %v2442 = vmax.f32 %v1959, 0.0
    %v2443 = vmax.f32 %v2034, 0.0
    %v2444 = vmax.f32 %v2036, 0.0
    %v2445 = vmax.f32 %v2111, 0.0
    %v2446 = vmax.f32 %v2113, 0.0
    %v2447 = vmax.f32 %v2188, 0.0
    %v2448 = vmax.f32 %v2190, 0.0
    %v2449 = vmax.f32 %v2265, 0.0
    %v2450 = vmax.f32 %v2267, 0.0
    %v2451 = vmax.f32 %v2342, 0.0
    %v2452 = vmax.f32 %v2344, 0.0
    %v2453 = vmax.f32 %v2419, 0.0
    %v2454 = vmax.f32 %v2421, 0.0
    %v2455 = vld [vmem:[%s31] sm:$0xff]
    %v2456 = vld [vmem:[%s31 + $0x8] sm:$0xff]
    %v2457 = vld [vmem:[%s31 + $0x10] sm:$0xff]
    %v2458 = vld [vmem:[%s31 + $0x18] sm:$0xff]
    %v2459 = vld [vmem:[%s31 + $0x20] sm:$0xff]
    %v2460 = vld [vmem:[%s31 + $0x28] sm:$0xff]
    %v2461 = vld [vmem:[%s31 + $0x30] sm:$0xff]
    %v2462 = vld [vmem:[%s31 + $0x38] sm:$0xff]
    %v2463 = vld [vmem:[%s31 + $0x40] sm:$0xff]
    %v2464 = vld [vmem:[%s31 + $0x48] sm:$0xff]
    %v2465 = vld [vmem:[%s31 + $0x50] sm:$0xff]
    %v2466 = vld [vmem:[%s31 + $0x58] sm:$0xff]
    %v2467 = vld [vmem:[%s31 + $0x60] sm:$0xff]
    %v2468 = vld [vmem:[%s31 + $0x68] sm:$0xff]
    %v2469 = vld [vmem:[%s31 + $0x70] sm:$0xff]
    %v2470 = vld [vmem:[%s31 + $0x78] sm:$0xff]
    %v2471 = vld [vmem:[%s31 + $0x80] sm:$0xff]
    %v2472 = vld [vmem:[%s31 + $0x88] sm:$0xff]
    %v2473 = vld [vmem:[%s31 + $0x90] sm:$0xff]
    %v2474 = vld [vmem:[%s31 + $0x98] sm:$0xff]
    %v2475 = vld [vmem:[%s31 + $0xa0] sm:$0xff]
    %v2476 = vld [vmem:[%s31 + $0xa8] sm:$0xff]
    %v2477 = vld [vmem:[%s31 + $0xb0] sm:$0xff]
    %v2478 = vld [vmem:[%s31 + $0xb8] sm:$0xff]
    %v2479 = vld [vmem:[%s31 + $0xc0] sm:$0xff]
    %v2480 = vld [vmem:[%s31 + $0xc8] sm:$0xff]
    %v2481 = vld [vmem:[%s31 + $0xd0] sm:$0xff]
    %v2482 = vld [vmem:[%s31 + $0xd8] sm:$0xff]
    %v2483 = vld [vmem:[%s31 + $0xe0] sm:$0xff]
    %v2484 = vld [vmem:[%s31 + $0xe8] sm:$0xff]
    %v2485 = vld [vmem:[%s31 + $0xf0] sm:$0xff]
    %v2486 = vld [vmem:[%s31 + $0xf8] sm:$0xff]
    %v2487 = vld [vmem:[%s31 + $0x100] sm:$0xff]
    %v2488 = vld [vmem:[%s31 + $0x108] sm:$0xff]
    %v2489 = vld [vmem:[%s31 + $0x110] sm:$0xff]
    %v2490 = vld [vmem:[%s31 + $0x118] sm:$0xff]
    %v2491 = vld [vmem:[%s31 + $0x120] sm:$0xff]
    %v2492 = vld [vmem:[%s31 + $0x128] sm:$0xff]
    %v2493 = vld [vmem:[%s31 + $0x130] sm:$0xff]
    %v2494 = vld [vmem:[%s31 + $0x138] sm:$0xff]
    %v2495 = vld [vmem:[%s31 + $0x140] sm:$0xff]
    %v2496 = vld [vmem:[%s31 + $0x148] sm:$0xff]
    %v2497 = vld [vmem:[%s31 + $0x150] sm:$0xff]
    %v2498 = vld [vmem:[%s31 + $0x158] sm:$0xff]
    %v2499 = vld [vmem:[%s31 + $0x160] sm:$0xff]
    %v2500 = vld [vmem:[%s31 + $0x168] sm:$0xff]
    %v2501 = vld [vmem:[%s31 + $0x170] sm:$0xff]
    %v2502 = vld [vmem:[%s31 + $0x178] sm:$0xff]
    %v2503 = vld [vmem:[%s31 + $0x180] sm:$0xff]
    %v2504 = vld [vmem:[%s31 + $0x188] sm:$0xff]
    %v2505 = vld [vmem:[%s31 + $0x190] sm:$0xff]
    %v2506 = vld [vmem:[%s31 + $0x198] sm:$0xff]
    %v2507 = vld [vmem:[%s31 + $0x1a0] sm:$0xff]
    %v2508 = vld [vmem:[%s31 + $0x1a8] sm:$0xff]
    %v2509 = vld [vmem:[%s31 + $0x1b0] sm:$0xff]
    %v2510 = vld [vmem:[%s31 + $0x1b8] sm:$0xff]
    %v2511 = vld [vmem:[%s31 + $0x1c0] sm:$0xff]
    %v2512 = vld [vmem:[%s31 + $0x1c8] sm:$0xff]
    %v2513 = vld [vmem:[%s31 + $0x1d0] sm:$0xff]
    %v2514 = vld [vmem:[%s31 + $0x1d8] sm:$0xff]
    %v2515 = vld [vmem:[%s31 + $0x1e0] sm:$0xff]
    %v2516 = vld [vmem:[%s31 + $0x1e8] sm:$0xff]
    %v2517 = vld [vmem:[%s31 + $0x1f0] sm:$0xff]
    %v2518 = vld [vmem:[%s31 + $0x1f8] sm:$0xff]
    %v2519 = vld [vmem:[%s31 + $0x200] sm:$0xff]
    %v2520 = vld [vmem:[%s31 + $0x208] sm:$0xff]
    %v2521 = vld [vmem:[%s31 + $0x210] sm:$0xff]
    %v2522 = vld [vmem:[%s31 + $0x218] sm:$0xff]
    %v2523 = vld [vmem:[%s31 + $0x220] sm:$0xff]
    %v2524 = vld [vmem:[%s31 + $0x228] sm:$0xff]
    %v2525 = vld [vmem:[%s31 + $0x230] sm:$0xff]
    %v2526 = vld [vmem:[%s31 + $0x238] sm:$0xff]
    %v2527 = vld [vmem:[%s31 + $0x240] sm:$0xff]
    %v2528 = vld [vmem:[%s31 + $0x248] sm:$0xff]
    %v2529 = vld [vmem:[%s31 + $0x250] sm:$0xff]
    %v2530 = vld [vmem:[%s31 + $0x258] sm:$0xff]
    %v2531 = vld [vmem:[%s31 + $0x260] sm:$0xff]
    %v2532 = vld [vmem:[%s31 + $0x268] sm:$0xff]
    %v2533 = vld [vmem:[%s31 + $0x270] sm:$0xff]
    %v2534 = vld [vmem:[%s31 + $0x278] sm:$0xff]
    %v2535 = vld [vmem:[%s31 + $0x280] sm:$0xff]
    %v2536 = vld [vmem:[%s31 + $0x288] sm:$0xff]
    %v2537 = vld [vmem:[%s31 + $0x290] sm:$0xff]
    %v2538 = vld [vmem:[%s31 + $0x298] sm:$0xff]
    %v2539 = vld [vmem:[%s31 + $0x2a0] sm:$0xff]
    %v2540 = vld [vmem:[%s31 + $0x2a8] sm:$0xff]
    %v2541 = vld [vmem:[%s31 + $0x2b0] sm:$0xff]
    %v2542 = vld [vmem:[%s31 + $0x2b8] sm:$0xff]
    %v2543 = vld [vmem:[%s31 + $0x2c0] sm:$0xff]
    %v2544 = vld [vmem:[%s31 + $0x2c8] sm:$0xff]
    %v2545 = vld [vmem:[%s31 + $0x2d0] sm:$0xff]
    %v2546 = vld [vmem:[%s31 + $0x2d8] sm:$0xff]
    %v2547 = vld [vmem:[%s31 + $0x2e0] sm:$0xff]
    %v2548 = vld [vmem:[%s31 + $0x2e8] sm:$0xff]
    %v2549 = vld [vmem:[%s31 + $0x2f0] sm:$0xff]
    %v2550 = vld [vmem:[%s31 + $0x2f8] sm:$0xff]
    %v2551 = vld [vmem:[%s31 + $0x300] sm:$0xff]
    %v2552 = vld [vmem:[%s31 + $0x308] sm:$0xff]
    %v2553 = vld [vmem:[%s31 + $0x310] sm:$0xff]
    %v2554 = vld [vmem:[%s31 + $0x318] sm:$0xff]
    %v2555 = vld [vmem:[%s31 + $0x320] sm:$0xff]
    %v2556 = vld [vmem:[%s31 + $0x328] sm:$0xff]
    %v2557 = vld [vmem:[%s31 + $0x330] sm:$0xff]
    %v2558 = vld [vmem:[%s31 + $0x338] sm:$0xff]
    %v2559 = vld [vmem:[%s31 + $0x340] sm:$0xff]
    %v2560 = vld [vmem:[%s31 + $0x348] sm:$0xff]
    %v2561 = vld [vmem:[%s31 + $0x350] sm:$0xff]
    %v2562 = vld [vmem:[%s31 + $0x358] sm:$0xff]
    %v2563 = vld [vmem:[%s31 + $0x360] sm:$0xff]
    %v2564 = vld [vmem:[%s31 + $0x368] sm:$0xff]
    %v2565 = vld [vmem:[%s31 + $0x370] sm:$0xff]
    %v2566 = vld [vmem:[%s31 + $0x378] sm:$0xff]
    %v2567 = vld [vmem:[%s31 + $0x380] sm:$0xff]
    %v2568 = vld [vmem:[%s31 + $0x388] sm:$0xff]
    %v2569 = vld [vmem:[%s31 + $0x390] sm:$0xff]
    %v2570 = vld [vmem:[%s31 + $0x398] sm:$0xff]
    %v2571 = vld [vmem:[%s31 + $0x3a0] sm:$0xff]
    %v2572 = vld [vmem:[%s31 + $0x3a8] sm:$0xff]
    %v2573 = vld [vmem:[%s31 + $0x3b0] sm:$0xff]
    %v2574 = vld [vmem:[%s31 + $0x3b8] sm:$0xff]
    %v2575 = vld [vmem:[%s31 + $0x3c0] sm:$0xff]
    %v2576 = vld [vmem:[%s31 + $0x3c8] sm:$0xff]
    %v2577 = vld [vmem:[%s31 + $0x3d0] sm:$0xff]
    %v2578 = vld [vmem:[%s31 + $0x3d8] sm:$0xff]
    %v2579 = vld [vmem:[%s31 + $0x3e0] sm:$0xff]
    %v2580 = vld [vmem:[%s31 + $0x3e8] sm:$0xff]
    %v2581 = vld [vmem:[%s31 + $0x3f0] sm:$0xff]
    %v2582 = vld [vmem:[%s31 + $0x3f8] sm:$0xff]
    %v2583 = vld [vmem:[%s31 + $0x400] sm:$0xff]
    %v2584 = vld [vmem:[%s31 + $0x408] sm:$0xff]
    %v2585 = vld [vmem:[%s31 + $0x410] sm:$0xff]
    %v2586 = vld [vmem:[%s31 + $0x418] sm:$0xff]
    %v2587 = vld [vmem:[%s31 + $0x420] sm:$0xff]
    %v2588 = vld [vmem:[%s31 + $0x428] sm:$0xff]
    %v2589 = vld [vmem:[%s31 + $0x430] sm:$0xff]
    %v2590 = vld [vmem:[%s31 + $0x438] sm:$0xff]
    %v2591 = vld [vmem:[%s31 + $0x440] sm:$0xff]
    %v2592 = vld [vmem:[%s31 + $0x448] sm:$0xff]
    %v2593 = vld [vmem:[%s31 + $0x450] sm:$0xff]
    %v2594 = vld [vmem:[%s31 + $0x458] sm:$0xff]
    %v2595 = vld [vmem:[%s31 + $0x460] sm:$0xff]
    %v2596 = vld [vmem:[%s31 + $0x468] sm:$0xff]
    %v2597 = vld [vmem:[%s31 + $0x470] sm:$0xff]
    %v2598 = vld [vmem:[%s31 + $0x478] sm:$0xff]
    %v2599 = vld [vmem:[%s31 + $0x480] sm:$0xff]
    %v2600 = vld [vmem:[%s31 + $0x488] sm:$0xff]
    %v2601 = vld [vmem:[%s31 + $0x490] sm:$0xff]
    %v2602 = vld [vmem:[%s31 + $0x498] sm:$0xff]
    %v2603 = vld [vmem:[%s31 + $0x4a0] sm:$0xff]
    %v2604 = vld [vmem:[%s31 + $0x4a8] sm:$0xff]
    %v2605 = vld [vmem:[%s31 + $0x4b0] sm:$0xff]
    %v2606 = vld [vmem:[%s31 + $0x4b8] sm:$0xff]
    %v2607 = vld [vmem:[%s31 + $0x4c0] sm:$0xff]
    %v2608 = vld [vmem:[%s31 + $0x4c8] sm:$0xff]
    %v2609 = vld [vmem:[%s31 + $0x4d0] sm:$0xff]
    %v2610 = vld [vmem:[%s31 + $0x4d8] sm:$0xff]
    %v2611 = vld [vmem:[%s31 + $0x4e0] sm:$0xff]
    %v2612 = vld [vmem:[%s31 + $0x4e8] sm:$0xff]
    %v2613 = vld [vmem:[%s31 + $0x4f0] sm:$0xff]
    %v2614 = vld [vmem:[%s31 + $0x4f8] sm:$0xff]
    %v2615 = vld [vmem:[%s31 + $0x500] sm:$0xff]
    %v2616 = vld [vmem:[%s31 + $0x508] sm:$0xff]
    %v2617 = vld [vmem:[%s31 + $0x510] sm:$0xff]
    %v2618 = vld [vmem:[%s31 + $0x518] sm:$0xff]
    %v2619 = vld [vmem:[%s31 + $0x520] sm:$0xff]
    %v2620 = vld [vmem:[%s31 + $0x528] sm:$0xff]
    %v2621 = vld [vmem:[%s31 + $0x530] sm:$0xff]
    %v2622 = vld [vmem:[%s31 + $0x538] sm:$0xff]
    %v2623 = vld [vmem:[%s31 + $0x540] sm:$0xff]
    %v2624 = vld [vmem:[%s31 + $0x548] sm:$0xff]
    %v2625 = vld [vmem:[%s31 + $0x550] sm:$0xff]
    %v2626 = vld [vmem:[%s31 + $0x558] sm:$0xff]
    %v2627 = vld [vmem:[%s31 + $0x560] sm:$0xff]
    %v2628 = vld [vmem:[%s31 + $0x568] sm:$0xff]
    %v2629 = vld [vmem:[%s31 + $0x570] sm:$0xff]
    %v2630 = vld [vmem:[%s31 + $0x578] sm:$0xff]
    %v2631 = vld [vmem:[%s31 + $0x580] sm:$0xff]
    %v2632 = vld [vmem:[%s31 + $0x588] sm:$0xff]
    %v2633 = vld [vmem:[%s31 + $0x590] sm:$0xff]
    %v2634 = vld [vmem:[%s31 + $0x598] sm:$0xff]
    %v2635 = vld [vmem:[%s31 + $0x5a0] sm:$0xff]
    %v2636 = vld [vmem:[%s31 + $0x5a8] sm:$0xff]
    %v2637 = vld [vmem:[%s31 + $0x5b0] sm:$0xff]
    %v2638 = vld [vmem:[%s31 + $0x5b8] sm:$0xff]
    %v2639 = vld [vmem:[%s31 + $0x5c0] sm:$0xff]
    %v2640 = vld [vmem:[%s31 + $0x5c8] sm:$0xff]
    %v2641 = vld [vmem:[%s31 + $0x5d0] sm:$0xff]
    %v2642 = vld [vmem:[%s31 + $0x5d8] sm:$0xff]
    %v2643 = vld [vmem:[%s31 + $0x5e0] sm:$0xff]
    %v2644 = vld [vmem:[%s31 + $0x5e8] sm:$0xff]
    %v2645 = vld [vmem:[%s31 + $0x5f0] sm:$0xff]
    %v2646 = vld [vmem:[%s31 + $0x5f8] sm:$0xff]
    %v2647 = vld [vmem:[%s31 + $0x600] sm:$0xff]
    %v2648 = vld [vmem:[%s31 + $0x608] sm:$0xff]
    %v2649 = vld [vmem:[%s31 + $0x610] sm:$0xff]
    %v2650 = vld [vmem:[%s31 + $0x618] sm:$0xff]
    %v2651 = vld [vmem:[%s31 + $0x620] sm:$0xff]
    %v2652 = vld [vmem:[%s31 + $0x628] sm:$0xff]
    %v2653 = vld [vmem:[%s31 + $0x630] sm:$0xff]
    %v2654 = vld [vmem:[%s31 + $0x638] sm:$0xff]
    %v2655 = vld [vmem:[%s31 + $0x640] sm:$0xff]
    %v2656 = vld [vmem:[%s31 + $0x648] sm:$0xff]
    %v2657 = vld [vmem:[%s31 + $0x650] sm:$0xff]
    %v2658 = vld [vmem:[%s31 + $0x658] sm:$0xff]
    %v2659 = vld [vmem:[%s31 + $0x660] sm:$0xff]
    %v2660 = vld [vmem:[%s31 + $0x668] sm:$0xff]
    %v2661 = vld [vmem:[%s31 + $0x670] sm:$0xff]
    %v2662 = vld [vmem:[%s31 + $0x678] sm:$0xff]
    %v2663 = vld [vmem:[%s31 + $0x680] sm:$0xff]
    %v2664 = vld [vmem:[%s31 + $0x688] sm:$0xff]
    %v2665 = vld [vmem:[%s31 + $0x690] sm:$0xff]
    %v2666 = vld [vmem:[%s31 + $0x698] sm:$0xff]
    %v2667 = vld [vmem:[%s31 + $0x6a0] sm:$0xff]
    %v2668 = vld [vmem:[%s31 + $0x6a8] sm:$0xff]
    %v2669 = vld [vmem:[%s31 + $0x6b0] sm:$0xff]
    %v2670 = vld [vmem:[%s31 + $0x6b8] sm:$0xff]
    %v2671 = vld [vmem:[%s31 + $0x6c0] sm:$0xff]
    %v2672 = vld [vmem:[%s31 + $0x6c8] sm:$0xff]
    %v2673 = vld [vmem:[%s31 + $0x6d0] sm:$0xff]
    %v2674 = vld [vmem:[%s31 + $0x6d8] sm:$0xff]
    %v2675 = vld [vmem:[%s31 + $0x6e0] sm:$0xff]
    %v2676 = vld [vmem:[%s31 + $0x6e8] sm:$0xff]
    %v2677 = vld [vmem:[%s31 + $0x6f0] sm:$0xff]
    %v2678 = vld [vmem:[%s31 + $0x6f8] sm:$0xff]
    %v2679 = vld [vmem:[%s31 + $0x700] sm:$0xff]
    %v2680 = vld [vmem:[%s31 + $0x708] sm:$0xff]
    %v2681 = vld [vmem:[%s31 + $0x710] sm:$0xff]
    %v2682 = vld [vmem:[%s31 + $0x718] sm:$0xff]
    %v2683 = vld [vmem:[%s31 + $0x720] sm:$0xff]
    %v2684 = vld [vmem:[%s31 + $0x728] sm:$0xff]
    %v2685 = vld [vmem:[%s31 + $0x730] sm:$0xff]
    %v2686 = vld [vmem:[%s31 + $0x738] sm:$0xff]
    %v2687 = vld [vmem:[%s31 + $0x740] sm:$0xff]
    %v2688 = vld [vmem:[%s31 + $0x748] sm:$0xff]
    %v2689 = vld [vmem:[%s31 + $0x750] sm:$0xff]
    %v2690 = vld [vmem:[%s31 + $0x758] sm:$0xff]
    %v2691 = vld [vmem:[%s31 + $0x760] sm:$0xff]
    %v2692 = vld [vmem:[%s31 + $0x768] sm:$0xff]
    %v2693 = vld [vmem:[%s31 + $0x770] sm:$0xff]
    %v2694 = vld [vmem:[%s31 + $0x778] sm:$0xff]
    %v2695 = vld [vmem:[%s31 + $0x780] sm:$0xff]
    %v2696 = vld [vmem:[%s31 + $0x788] sm:$0xff]
    %v2697 = vld [vmem:[%s31 + $0x790] sm:$0xff]
    %v2698 = vld [vmem:[%s31 + $0x798] sm:$0xff]
    %v2699 = vld [vmem:[%s31 + $0x7a0] sm:$0xff]
    %v2700 = vld [vmem:[%s31 + $0x7a8] sm:$0xff]
    %v2701 = vld [vmem:[%s31 + $0x7b0] sm:$0xff]
    %v2702 = vld [vmem:[%s31 + $0x7b8] sm:$0xff]
    %v2703 = vld [vmem:[%s31 + $0x7c0] sm:$0xff]
    %v2704 = vld [vmem:[%s31 + $0x7c8] sm:$0xff]
    %v2705 = vld [vmem:[%s31 + $0x7d0] sm:$0xff]
    %v2706 = vld [vmem:[%s31 + $0x7d8] sm:$0xff]
    %v2707 = vld [vmem:[%s31 + $0x7e0] sm:$0xff]
    %v2708 = vld [vmem:[%s31 + $0x7e8] sm:$0xff]
    %v2709 = vld [vmem:[%s31 + $0x7f0] sm:$0xff]
    %v2710 = vld [vmem:[%s31 + $0x7f8] sm:$0xff]
    %v2711 = vld [vmem:[%s33] sm:$0x1]
    %v2713 = vlaneseq
    %v2714 = vshrl.u32 %v2713, 7
    %v2715 = vsub.s32 0, %v2714
    %v2716 = vrot.slane %v2711, %v2715
    %2718 = vmatprep.subr.mxu0 0.0
    %2719 = vmatpush1.msra.mxu0 %v2470
    %2720 = vmatprep.subr.mxu0 0.0
    %2721 = vmatpush1.msra.mxu0 %v2469
    %2722 = vmatprep.subr.mxu0 0.0
    %2723 = vmatpush1.msra.mxu0 %v2468
    %2724 = vmatprep.subr.mxu0 0.0
    %2725 = vmatpush1.msra.mxu0 %v2467
    %2726 = vmatprep.subr.mxu0 0.0
    %2727 = vmatpush1.msra.mxu0 %v2466
    %2728 = vmatprep.subr.mxu0 0.0
    %2729 = vmatpush1.msra.mxu0 %v2465
    %2730 = vmatprep.subr.mxu0 0.0
    %2731 = vmatpush1.msra.mxu0 %v2464
    %2732 = vmatprep.subr.mxu0 0.0
    %2733 = vmatpush1.msra.mxu0 %v2463
    %2734 = vmatprep.subr.mxu0 0.0
    %2735 = vmatpush1.msra.mxu0 %v2462
    %2736 = vmatprep.subr.mxu0 0.0
    %2737 = vmatpush1.msra.mxu0 %v2461
    %2738 = vmatprep.subr.mxu0 0.0
    %2739 = vmatpush1.msra.mxu0 %v2460
    %2740 = vmatprep.subr.mxu0 0.0
    %2741 = vmatpush1.msra.mxu0 %v2459
    %2742 = vmatprep.subr.mxu0 0.0
    %2743 = vmatpush1.msra.mxu0 %v2458
    %2744 = vmatprep.subr.mxu0 0.0
    %2745 = vmatpush1.msra.mxu0 %v2457
    %2746 = vmatprep.subr.mxu0 0.0
    %2747 = vmatpush1.msra.mxu0 %v2456
    %2748 = vmatprep.subr.mxu0 0.0
    %2749 = vmatpush1.msra.mxu0 %v2455
    %2750 = vmatprep.subr.mxu0 0.0
    %2751 = vmatpush2.msra.mxu0 %v2486
    %2752 = vmatprep.subr.mxu0 0.0
    %2753 = vmatpush2.msra.mxu0 %v2485
    %2754 = vmatprep.subr.mxu0 0.0
    %2755 = vmatpush2.msra.mxu0 %v2484
    %2756 = vmatprep.subr.mxu0 0.0
    %2757 = vmatpush2.msra.mxu0 %v2483
    %2758 = vmatprep.subr.mxu0 0.0
    %2759 = vmatpush2.msra.mxu0 %v2482
    %2760 = vmatprep.subr.mxu0 0.0
    %2761 = vmatpush2.msra.mxu0 %v2481
    %2762 = vmatprep.subr.mxu0 0.0
    %2763 = vmatpush2.msra.mxu0 %v2480
    %2764 = vmatprep.subr.mxu0 0.0
    %2765 = vmatpush2.msra.mxu0 %v2479
    %2766 = vmatprep.subr.mxu0 0.0
    %2767 = vmatpush2.msra.mxu0 %v2478
    %2768 = vmatprep.subr.mxu0 0.0
    %2769 = vmatpush2.msra.mxu0 %v2477
    %2770 = vmatprep.subr.mxu0 0.0
    %2771 = vmatpush2.msra.mxu0 %v2476
    %2772 = vmatprep.subr.mxu0 0.0
    %2773 = vmatpush2.msra.mxu0 %v2475
    %2774 = vmatprep.subr.mxu0 0.0
    %2775 = vmatpush2.msra.mxu0 %v2474
    %2776 = vmatprep.subr.mxu0 0.0
    %2777 = vmatpush2.msra.mxu0 %v2473
    %2778 = vmatprep.subr.mxu0 0.0
    %2779 = vmatpush2.msra.mxu0 %v2472
    %2780 = vmatprep.subr.mxu0 0.0
    %2781 = vmatpush2.msra.mxu0 %v2471
    %2782 = vmatprep.mubr.f32.mxu0 %v2424
    %2783 = vmatmul.mubr.f32.gmra.mxu0 %v2423
    %v2784 = vpop.f32.mrf.mxu0
    %v2785 = vadd.f32 %v2716, %v2784
    %v2786 = vpop.f32.mrf.mxu0
    %2787 = vmatprep.mubr.f32.mxu0 %v2440
    %2788 = vmatmul.mubr.f32.gmra.mxu0 %v2439
    %v2789 = vpop.f32.mrf.mxu0
    %v2790 = vadd.f32 %v2716, %v2789
    %v2791 = vpop.f32.mrf.mxu0
    %2792 = vdwg.mxu0
    %2793 = vmatprep.subr.mxu0 0.0
    %2794 = vmatpush1.msra.mxu0 %v2502
    %2795 = vmatprep.subr.mxu0 0.0
    %2796 = vmatpush1.msra.mxu0 %v2501
    %2797 = vmatprep.subr.mxu0 0.0
    %2798 = vmatpush1.msra.mxu0 %v2500
    %2799 = vmatprep.subr.mxu0 0.0
    %2800 = vmatpush1.msra.mxu0 %v2499
    %2801 = vmatprep.subr.mxu0 0.0
    %2802 = vmatpush1.msra.mxu0 %v2498
    %2803 = vmatprep.subr.mxu0 0.0
    %2804 = vmatpush1.msra.mxu0 %v2497
    %2805 = vmatprep.subr.mxu0 0.0
    %2806 = vmatpush1.msra.mxu0 %v2496
    %2807 = vmatprep.subr.mxu0 0.0
    %2808 = vmatpush1.msra.mxu0 %v2495
    %2809 = vmatprep.subr.mxu0 0.0
    %2810 = vmatpush1.msra.mxu0 %v2494
    %2811 = vmatprep.subr.mxu0 0.0
    %2812 = vmatpush1.msra.mxu0 %v2493
    %2813 = vmatprep.subr.mxu0 0.0
    %2814 = vmatpush1.msra.mxu0 %v2492
    %2815 = vmatprep.subr.mxu0 0.0
    %2816 = vmatpush1.msra.mxu0 %v2491
    %2817 = vmatprep.subr.mxu0 0.0
    %2818 = vmatpush1.msra.mxu0 %v2490
    %2819 = vmatprep.subr.mxu0 0.0
    %2820 = vmatpush1.msra.mxu0 %v2489
    %2821 = vmatprep.subr.mxu0 0.0
    %2822 = vmatpush1.msra.mxu0 %v2488
    %2823 = vmatprep.subr.mxu0 0.0
    %2824 = vmatpush1.msra.mxu0 %v2487
    %2825 = vmatprep.subr.mxu0 0.0
    %2826 = vmatpush2.msra.mxu0 %v2518
    %2827 = vmatprep.subr.mxu0 0.0
    %2828 = vmatpush2.msra.mxu0 %v2517
    %2829 = vmatprep.subr.mxu0 0.0
    %2830 = vmatpush2.msra.mxu0 %v2516
    %2831 = vmatprep.subr.mxu0 0.0
    %2832 = vmatpush2.msra.mxu0 %v2515
    %2833 = vmatprep.subr.mxu0 0.0
    %2834 = vmatpush2.msra.mxu0 %v2514
    %2835 = vmatprep.subr.mxu0 0.0
    %2836 = vmatpush2.msra.mxu0 %v2513
    %2837 = vmatprep.subr.mxu0 0.0
    %2838 = vmatpush2.msra.mxu0 %v2512
    %2839 = vmatprep.subr.mxu0 0.0
    %2840 = vmatpush2.msra.mxu0 %v2511
    %2841 = vmatprep.subr.mxu0 0.0
    %2842 = vmatpush2.msra.mxu0 %v2510
    %2843 = vmatprep.subr.mxu0 0.0
    %2844 = vmatpush2.msra.mxu0 %v2509
    %2845 = vmatprep.subr.mxu0 0.0
    %2846 = vmatpush2.msra.mxu0 %v2508
    %2847 = vmatprep.subr.mxu0 0.0
    %2848 = vmatpush2.msra.mxu0 %v2507
    %2849 = vmatprep.subr.mxu0 0.0
    %2850 = vmatpush2.msra.mxu0 %v2506
    %2851 = vmatprep.subr.mxu0 0.0
    %2852 = vmatpush2.msra.mxu0 %v2505
    %2853 = vmatprep.subr.mxu0 0.0
    %2854 = vmatpush2.msra.mxu0 %v2504
    %2855 = vmatprep.subr.mxu0 0.0
    %2856 = vmatpush2.msra.mxu0 %v2503
    %2857 = vmatprep.mubr.f32.mxu0 %v2426
    %2858 = vmatmul.mubr.f32.gmra.mxu0 %v2425
    %v2859 = vpop.f32.mrf.mxu0
    %v2860 = vadd.f32 %v2785, %v2859
    %v2861 = vpop.f32.mrf.mxu0
    %2862 = vmatprep.mubr.f32.mxu0 %v2442
    %2863 = vmatmul.mubr.f32.gmra.mxu0 %v2441
    %v2864 = vpop.f32.mrf.mxu0
    %v2865 = vadd.f32 %v2790, %v2864
    %v2866 = vpop.f32.mrf.mxu0
    %2867 = vdwg.mxu0
    %2868 = vmatprep.subr.mxu0 0.0
    %2869 = vmatpush1.msra.mxu0 %v2534
    %2870 = vmatprep.subr.mxu0 0.0
    %2871 = vmatpush1.msra.mxu0 %v2533
    %2872 = vmatprep.subr.mxu0 0.0
    %2873 = vmatpush1.msra.mxu0 %v2532
    %2874 = vmatprep.subr.mxu0 0.0
    %2875 = vmatpush1.msra.mxu0 %v2531
    %2876 = vmatprep.subr.mxu0 0.0
    %2877 = vmatpush1.msra.mxu0 %v2530
    %2878 = vmatprep.subr.mxu0 0.0
    %2879 = vmatpush1.msra.mxu0 %v2529
    %2880 = vmatprep.subr.mxu0 0.0
    %2881 = vmatpush1.msra.mxu0 %v2528
    %2882 = vmatprep.subr.mxu0 0.0
    %2883 = vmatpush1.msra.mxu0 %v2527
    %2884 = vmatprep.subr.mxu0 0.0
    %2885 = vmatpush1.msra.mxu0 %v2526
    %2886 = vmatprep.subr.mxu0 0.0
    %2887 = vmatpush1.msra.mxu0 %v2525
    %2888 = vmatprep.subr.mxu0 0.0
    %2889 = vmatpush1.msra.mxu0 %v2524
    %2890 = vmatprep.subr.mxu0 0.0
    %2891 = vmatpush1.msra.mxu0 %v2523
    %2892 = vmatprep.subr.mxu0 0.0
    %2893 = vmatpush1.msra.mxu0 %v2522
    %2894 = vmatprep.subr.mxu0 0.0
    %2895 = vmatpush1.msra.mxu0 %v2521
    %2896 = vmatprep.subr.mxu0 0.0
    %2897 = vmatpush1.msra.mxu0 %v2520
    %2898 = vmatprep.subr.mxu0 0.0
    %2899 = vmatpush1.msra.mxu0 %v2519
    %2900 = vmatprep.subr.mxu0 0.0
    %2901 = vmatpush2.msra.mxu0 %v2550
    %2902 = vmatprep.subr.mxu0 0.0
    %2903 = vmatpush2.msra.mxu0 %v2549
    %2904 = vmatprep.subr.mxu0 0.0
    %2905 = vmatpush2.msra.mxu0 %v2548
    %2906 = vmatprep.subr.mxu0 0.0
    %2907 = vmatpush2.msra.mxu0 %v2547
    %2908 = vmatprep.subr.mxu0 0.0
    %2909 = vmatpush2.msra.mxu0 %v2546
    %2910 = vmatprep.subr.mxu0 0.0
    %2911 = vmatpush2.msra.mxu0 %v2545
    %2912 = vmatprep.subr.mxu0 0.0
    %2913 = vmatpush2.msra.mxu0 %v2544
    %2914 = vmatprep.subr.mxu0 0.0
    %2915 = vmatpush2.msra.mxu0 %v2543
    %2916 = vmatprep.subr.mxu0 0.0
    %2917 = vmatpush2.msra.mxu0 %v2542
    %2918 = vmatprep.subr.mxu0 0.0
    %2919 = vmatpush2.msra.mxu0 %v2541
    %2920 = vmatprep.subr.mxu0 0.0
    %2921 = vmatpush2.msra.mxu0 %v2540
    %2922 = vmatprep.subr.mxu0 0.0
    %2923 = vmatpush2.msra.mxu0 %v2539
    %2924 = vmatprep.subr.mxu0 0.0
    %2925 = vmatpush2.msra.mxu0 %v2538
    %2926 = vmatprep.subr.mxu0 0.0
    %2927 = vmatpush2.msra.mxu0 %v2537
    %2928 = vmatprep.subr.mxu0 0.0
    %2929 = vmatpush2.msra.mxu0 %v2536
    %2930 = vmatprep.subr.mxu0 0.0
    %2931 = vmatpush2.msra.mxu0 %v2535
    %2932 = vmatprep.mubr.f32.mxu0 %v2428
    %2933 = vmatmul.mubr.f32.gmra.mxu0 %v2427
    %v2934 = vpop.f32.mrf.mxu0
    %v2935 = vadd.f32 %v2860, %v2934
    %v2936 = vpop.f32.mrf.mxu0
    %2937 = vmatprep.mubr.f32.mxu0 %v2444
    %2938 = vmatmul.mubr.f32.gmra.mxu0 %v2443
    %v2939 = vpop.f32.mrf.mxu0
    %v2940 = vadd.f32 %v2865, %v2939
    %v2941 = vpop.f32.mrf.mxu0
    %2942 = vdwg.mxu0
    %2943 = vmatprep.subr.mxu0 0.0
    %2944 = vmatpush1.msra.mxu0 %v2566
    %2945 = vmatprep.subr.mxu0 0.0
    %2946 = vmatpush1.msra.mxu0 %v2565
    %2947 = vmatprep.subr.mxu0 0.0
    %2948 = vmatpush1.msra.mxu0 %v2564
    %2949 = vmatprep.subr.mxu0 0.0
    %2950 = vmatpush1.msra.mxu0 %v2563
    %2951 = vmatprep.subr.mxu0 0.0
    %2952 = vmatpush1.msra.mxu0 %v2562
    %2953 = vmatprep.subr.mxu0 0.0
    %2954 = vmatpush1.msra.mxu0 %v2561
    %2955 = vmatprep.subr.mxu0 0.0
    %2956 = vmatpush1.msra.mxu0 %v2560
    %2957 = vmatprep.subr.mxu0 0.0
    %2958 = vmatpush1.msra.mxu0 %v2559
    %2959 = vmatprep.subr.mxu0 0.0
    %2960 = vmatpush1.msra.mxu0 %v2558
    %2961 = vmatprep.subr.mxu0 0.0
    %2962 = vmatpush1.msra.mxu0 %v2557
    %2963 = vmatprep.subr.mxu0 0.0
    %2964 = vmatpush1.msra.mxu0 %v2556
    %2965 = vmatprep.subr.mxu0 0.0
    %2966 = vmatpush1.msra.mxu0 %v2555
    %2967 = vmatprep.subr.mxu0 0.0
    %2968 = vmatpush1.msra.mxu0 %v2554
    %2969 = vmatprep.subr.mxu0 0.0
    %2970 = vmatpush1.msra.mxu0 %v2553
    %2971 = vmatprep.subr.mxu0 0.0
    %2972 = vmatpush1.msra.mxu0 %v2552
    %2973 = vmatprep.subr.mxu0 0.0
    %2974 = vmatpush1.msra.mxu0 %v2551
    %2975 = vmatprep.subr.mxu0 0.0
    %2976 = vmatpush2.msra.mxu0 %v2582
    %2977 = vmatprep.subr.mxu0 0.0
    %2978 = vmatpush2.msra.mxu0 %v2581
    %2979 = vmatprep.subr.mxu0 0.0
    %2980 = vmatpush2.msra.mxu0 %v2580
    %2981 = vmatprep.subr.mxu0 0.0
    %2982 = vmatpush2.msra.mxu0 %v2579
    %2983 = vmatprep.subr.mxu0 0.0
    %2984 = vmatpush2.msra.mxu0 %v2578
    %2985 = vmatprep.subr.mxu0 0.0
    %2986 = vmatpush2.msra.mxu0 %v2577
    %2987 = vmatprep.subr.mxu0 0.0
    %2988 = vmatpush2.msra.mxu0 %v2576
    %2989 = vmatprep.subr.mxu0 0.0
    %2990 = vmatpush2.msra.mxu0 %v2575
    %2991 = vmatprep.subr.mxu0 0.0
    %2992 = vmatpush2.msra.mxu0 %v2574
    %2993 = vmatprep.subr.mxu0 0.0
    %2994 = vmatpush2.msra.mxu0 %v2573
    %2995 = vmatprep.subr.mxu0 0.0
    %2996 = vmatpush2.msra.mxu0 %v2572
    %2997 = vmatprep.subr.mxu0 0.0
    %2998 = vmatpush2.msra.mxu0 %v2571
    %2999 = vmatprep.subr.mxu0 0.0
    %3000 = vmatpush2.msra.mxu0 %v2570
    %3001 = vmatprep.subr.mxu0 0.0
    %3002 = vmatpush2.msra.mxu0 %v2569
    %3003 = vmatprep.subr.mxu0 0.0
    %3004 = vmatpush2.msra.mxu0 %v2568
    %3005 = vmatprep.subr.mxu0 0.0
    %3006 = vmatpush2.msra.mxu0 %v2567
    %3007 = vmatprep.mubr.f32.mxu0 %v2430
    %3008 = vmatmul.mubr.f32.gmra.mxu0 %v2429
    %v3009 = vpop.f32.mrf.mxu0
    %v3010 = vadd.f32 %v2935, %v3009
    %v3011 = vpop.f32.mrf.mxu0
    %3012 = vmatprep.mubr.f32.mxu0 %v2446
    %3013 = vmatmul.mubr.f32.gmra.mxu0 %v2445
    %v3014 = vpop.f32.mrf.mxu0
    %v3015 = vadd.f32 %v2940, %v3014
    %v3016 = vpop.f32.mrf.mxu0
    %3017 = vdwg.mxu0
    %3018 = vmatprep.subr.mxu0 0.0
    %3019 = vmatpush1.msra.mxu0 %v2598
    %3020 = vmatprep.subr.mxu0 0.0
    %3021 = vmatpush1.msra.mxu0 %v2597
    %3022 = vmatprep.subr.mxu0 0.0
    %3023 = vmatpush1.msra.mxu0 %v2596
    %3024 = vmatprep.subr.mxu0 0.0
    %3025 = vmatpush1.msra.mxu0 %v2595
    %3026 = vmatprep.subr.mxu0 0.0
    %3027 = vmatpush1.msra.mxu0 %v2594
    %3028 = vmatprep.subr.mxu0 0.0
    %3029 = vmatpush1.msra.mxu0 %v2593
    %3030 = vmatprep.subr.mxu0 0.0
    %3031 = vmatpush1.msra.mxu0 %v2592
    %3032 = vmatprep.subr.mxu0 0.0
    %3033 = vmatpush1.msra.mxu0 %v2591
    %3034 = vmatprep.subr.mxu0 0.0
    %3035 = vmatpush1.msra.mxu0 %v2590
    %3036 = vmatprep.subr.mxu0 0.0
    %3037 = vmatpush1.msra.mxu0 %v2589
    %3038 = vmatprep.subr.mxu0 0.0
    %3039 = vmatpush1.msra.mxu0 %v2588
    %3040 = vmatprep.subr.mxu0 0.0
    %3041 = vmatpush1.msra.mxu0 %v2587
    %3042 = vmatprep.subr.mxu0 0.0
    %3043 = vmatpush1.msra.mxu0 %v2586
    %3044 = vmatprep.subr.mxu0 0.0
    %3045 = vmatpush1.msra.mxu0 %v2585
    %3046 = vmatprep.subr.mxu0 0.0
    %3047 = vmatpush1.msra.mxu0 %v2584
    %3048 = vmatprep.subr.mxu0 0.0
    %3049 = vmatpush1.msra.mxu0 %v2583
    %3050 = vmatprep.subr.mxu0 0.0
    %3051 = vmatpush2.msra.mxu0 %v2614
    %3052 = vmatprep.subr.mxu0 0.0
    %3053 = vmatpush2.msra.mxu0 %v2613
    %3054 = vmatprep.subr.mxu0 0.0
    %3055 = vmatpush2.msra.mxu0 %v2612
    %3056 = vmatprep.subr.mxu0 0.0
    %3057 = vmatpush2.msra.mxu0 %v2611
    %3058 = vmatprep.subr.mxu0 0.0
    %3059 = vmatpush2.msra.mxu0 %v2610
    %3060 = vmatprep.subr.mxu0 0.0
    %3061 = vmatpush2.msra.mxu0 %v2609
    %3062 = vmatprep.subr.mxu0 0.0
    %3063 = vmatpush2.msra.mxu0 %v2608
    %3064 = vmatprep.subr.mxu0 0.0
    %3065 = vmatpush2.msra.mxu0 %v2607
    %3066 = vmatprep.subr.mxu0 0.0
    %3067 = vmatpush2.msra.mxu0 %v2606
    %3068 = vmatprep.subr.mxu0 0.0
    %3069 = vmatpush2.msra.mxu0 %v2605
    %3070 = vmatprep.subr.mxu0 0.0
    %3071 = vmatpush2.msra.mxu0 %v2604
    %3072 = vmatprep.subr.mxu0 0.0
    %3073 = vmatpush2.msra.mxu0 %v2603
    %3074 = vmatprep.subr.mxu0 0.0
    %3075 = vmatpush2.msra.mxu0 %v2602
    %3076 = vmatprep.subr.mxu0 0.0
    %3077 = vmatpush2.msra.mxu0 %v2601
    %3078 = vmatprep.subr.mxu0 0.0
    %3079 = vmatpush2.msra.mxu0 %v2600
    %3080 = vmatprep.subr.mxu0 0.0
    %3081 = vmatpush2.msra.mxu0 %v2599
    %3082 = vmatprep.mubr.f32.mxu0 %v2432
    %3083 = vmatmul.mubr.f32.gmra.mxu0 %v2431
    %v3084 = vpop.f32.mrf.mxu0
    %v3085 = vadd.f32 %v3010, %v3084
    %v3086 = vpop.f32.mrf.mxu0
    %3087 = vmatprep.mubr.f32.mxu0 %v2448
    %3088 = vmatmul.mubr.f32.gmra.mxu0 %v2447
    %v3089 = vpop.f32.mrf.mxu0
    %v3090 = vadd.f32 %v3015, %v3089
    %v3091 = vpop.f32.mrf.mxu0
    %3092 = vdwg.mxu0
    %3093 = vmatprep.subr.mxu0 0.0
    %3094 = vmatpush1.msra.mxu0 %v2630
    %3095 = vmatprep.subr.mxu0 0.0
    %3096 = vmatpush1.msra.mxu0 %v2629
    %3097 = vmatprep.subr.mxu0 0.0
    %3098 = vmatpush1.msra.mxu0 %v2628
    %3099 = vmatprep.subr.mxu0 0.0
    %3100 = vmatpush1.msra.mxu0 %v2627
    %3101 = vmatprep.subr.mxu0 0.0
    %3102 = vmatpush1.msra.mxu0 %v2626
    %3103 = vmatprep.subr.mxu0 0.0
    %3104 = vmatpush1.msra.mxu0 %v2625
    %3105 = vmatprep.subr.mxu0 0.0
    %3106 = vmatpush1.msra.mxu0 %v2624
    %3107 = vmatprep.subr.mxu0 0.0
    %3108 = vmatpush1.msra.mxu0 %v2623
    %3109 = vmatprep.subr.mxu0 0.0
    %3110 = vmatpush1.msra.mxu0 %v2622
    %3111 = vmatprep.subr.mxu0 0.0
    %3112 = vmatpush1.msra.mxu0 %v2621
    %3113 = vmatprep.subr.mxu0 0.0
    %3114 = vmatpush1.msra.mxu0 %v2620
    %3115 = vmatprep.subr.mxu0 0.0
    %3116 = vmatpush1.msra.mxu0 %v2619
    %3117 = vmatprep.subr.mxu0 0.0
    %3118 = vmatpush1.msra.mxu0 %v2618
    %3119 = vmatprep.subr.mxu0 0.0
    %3120 = vmatpush1.msra.mxu0 %v2617
    %3121 = vmatprep.subr.mxu0 0.0
    %3122 = vmatpush1.msra.mxu0 %v2616
    %3123 = vmatprep.subr.mxu0 0.0
    %3124 = vmatpush1.msra.mxu0 %v2615
    %3125 = vmatprep.subr.mxu0 0.0
    %3126 = vmatpush2.msra.mxu0 %v2646
    %3127 = vmatprep.subr.mxu0 0.0
    %3128 = vmatpush2.msra.mxu0 %v2645
    %3129 = vmatprep.subr.mxu0 0.0
    %3130 = vmatpush2.msra.mxu0 %v2644
    %3131 = vmatprep.subr.mxu0 0.0
    %3132 = vmatpush2.msra.mxu0 %v2643
    %3133 = vmatprep.subr.mxu0 0.0
    %3134 = vmatpush2.msra.mxu0 %v2642
    %3135 = vmatprep.subr.mxu0 0.0
    %3136 = vmatpush2.msra.mxu0 %v2641
    %3137 = vmatprep.subr.mxu0 0.0
    %3138 = vmatpush2.msra.mxu0 %v2640
    %3139 = vmatprep.subr.mxu0 0.0
    %3140 = vmatpush2.msra.mxu0 %v2639
    %3141 = vmatprep.subr.mxu0 0.0
    %3142 = vmatpush2.msra.mxu0 %v2638
    %3143 = vmatprep.subr.mxu0 0.0
    %3144 = vmatpush2.msra.mxu0 %v2637
    %3145 = vmatprep.subr.mxu0 0.0
    %3146 = vmatpush2.msra.mxu0 %v2636
    %3147 = vmatprep.subr.mxu0 0.0
    %3148 = vmatpush2.msra.mxu0 %v2635
    %3149 = vmatprep.subr.mxu0 0.0
    %3150 = vmatpush2.msra.mxu0 %v2634
    %3151 = vmatprep.subr.mxu0 0.0
    %3152 = vmatpush2.msra.mxu0 %v2633
    %3153 = vmatprep.subr.mxu0 0.0
    %3154 = vmatpush2.msra.mxu0 %v2632
    %3155 = vmatprep.subr.mxu0 0.0
    %3156 = vmatpush2.msra.mxu0 %v2631
    %3157 = vmatprep.mubr.f32.mxu0 %v2434
    %3158 = vmatmul.mubr.f32.gmra.mxu0 %v2433
    %v3159 = vpop.f32.mrf.mxu0
    %v3160 = vadd.f32 %v3085, %v3159
    %v3161 = vpop.f32.mrf.mxu0
    %3162 = vmatprep.mubr.f32.mxu0 %v2450
    %3163 = vmatmul.mubr.f32.gmra.mxu0 %v2449
    %v3164 = vpop.f32.mrf.mxu0
    %v3165 = vadd.f32 %v3090, %v3164
    %v3166 = vpop.f32.mrf.mxu0
    %3167 = vdwg.mxu0
    %3168 = vmatprep.subr.mxu0 0.0
    %3169 = vmatpush1.msra.mxu0 %v2662
    %3170 = vmatprep.subr.mxu0 0.0
    %3171 = vmatpush1.msra.mxu0 %v2661
    %3172 = vmatprep.subr.mxu0 0.0
    %3173 = vmatpush1.msra.mxu0 %v2660
    %3174 = vmatprep.subr.mxu0 0.0
    %3175 = vmatpush1.msra.mxu0 %v2659
    %3176 = vmatprep.subr.mxu0 0.0
    %3177 = vmatpush1.msra.mxu0 %v2658
    %3178 = vmatprep.subr.mxu0 0.0
    %3179 = vmatpush1.msra.mxu0 %v2657
    %3180 = vmatprep.subr.mxu0 0.0
    %3181 = vmatpush1.msra.mxu0 %v2656
    %3182 = vmatprep.subr.mxu0 0.0
    %3183 = vmatpush1.msra.mxu0 %v2655
    %3184 = vmatprep.subr.mxu0 0.0
    %3185 = vmatpush1.msra.mxu0 %v2654
    %3186 = vmatprep.subr.mxu0 0.0
    %3187 = vmatpush1.msra.mxu0 %v2653
    %3188 = vmatprep.subr.mxu0 0.0
    %3189 = vmatpush1.msra.mxu0 %v2652
    %3190 = vmatprep.subr.mxu0 0.0
    %3191 = vmatpush1.msra.mxu0 %v2651
    %3192 = vmatprep.subr.mxu0 0.0
    %3193 = vmatpush1.msra.mxu0 %v2650
    %3194 = vmatprep.subr.mxu0 0.0
    %3195 = vmatpush1.msra.mxu0 %v2649
    %3196 = vmatprep.subr.mxu0 0.0
    %3197 = vmatpush1.msra.mxu0 %v2648
    %3198 = vmatprep.subr.mxu0 0.0
    %3199 = vmatpush1.msra.mxu0 %v2647
    %3200 = vmatprep.subr.mxu0 0.0
    %3201 = vmatpush2.msra.mxu0 %v2678
    %3202 = vmatprep.subr.mxu0 0.0
    %3203 = vmatpush2.msra.mxu0 %v2677
    %3204 = vmatprep.subr.mxu0 0.0
    %3205 = vmatpush2.msra.mxu0 %v2676
    %3206 = vmatprep.subr.mxu0 0.0
    %3207 = vmatpush2.msra.mxu0 %v2675
    %3208 = vmatprep.subr.mxu0 0.0
    %3209 = vmatpush2.msra.mxu0 %v2674
    %3210 = vmatprep.subr.mxu0 0.0
    %3211 = vmatpush2.msra.mxu0 %v2673
    %3212 = vmatprep.subr.mxu0 0.0
    %3213 = vmatpush2.msra.mxu0 %v2672
    %3214 = vmatprep.subr.mxu0 0.0
    %3215 = vmatpush2.msra.mxu0 %v2671
    %3216 = vmatprep.subr.mxu0 0.0
    %3217 = vmatpush2.msra.mxu0 %v2670
    %3218 = vmatprep.subr.mxu0 0.0
    %3219 = vmatpush2.msra.mxu0 %v2669
    %3220 = vmatprep.subr.mxu0 0.0
    %3221 = vmatpush2.msra.mxu0 %v2668
    %3222 = vmatprep.subr.mxu0 0.0
    %3223 = vmatpush2.msra.mxu0 %v2667
    %3224 = vmatprep.subr.mxu0 0.0
    %3225 = vmatpush2.msra.mxu0 %v2666
    %3226 = vmatprep.subr.mxu0 0.0
    %3227 = vmatpush2.msra.mxu0 %v2665
    %3228 = vmatprep.subr.mxu0 0.0
    %3229 = vmatpush2.msra.mxu0 %v2664
    %3230 = vmatprep.subr.mxu0 0.0
    %3231 = vmatpush2.msra.mxu0 %v2663
    %3232 = vmatprep.mubr.f32.mxu0 %v2436
    %3233 = vmatmul.mubr.f32.gmra.mxu0 %v2435
    %v3234 = vpop.f32.mrf.mxu0
    %v3235 = vadd.f32 %v3160, %v3234
    %v3236 = vpop.f32.mrf.mxu0
    %3237 = vmatprep.mubr.f32.mxu0 %v2452
    %3238 = vmatmul.mubr.f32.gmra.mxu0 %v2451
    %v3239 = vpop.f32.mrf.mxu0
    %v3240 = vadd.f32 %v3165, %v3239
    %v3241 = vpop.f32.mrf.mxu0
    %3242 = vdwg.mxu0
    %3243 = vmatprep.subr.mxu0 0.0
    %3244 = vmatpush1.msra.mxu0 %v2694
    %3245 = vmatprep.subr.mxu0 0.0
    %3246 = vmatpush1.msra.mxu0 %v2693
    %3247 = vmatprep.subr.mxu0 0.0
    %3248 = vmatpush1.msra.mxu0 %v2692
    %3249 = vmatprep.subr.mxu0 0.0
    %3250 = vmatpush1.msra.mxu0 %v2691
    %3251 = vmatprep.subr.mxu0 0.0
    %3252 = vmatpush1.msra.mxu0 %v2690
    %3253 = vmatprep.subr.mxu0 0.0
    %3254 = vmatpush1.msra.mxu0 %v2689
    %3255 = vmatprep.subr.mxu0 0.0
    %3256 = vmatpush1.msra.mxu0 %v2688
    %3257 = vmatprep.subr.mxu0 0.0
    %3258 = vmatpush1.msra.mxu0 %v2687
    %3259 = vmatprep.subr.mxu0 0.0
    %3260 = vmatpush1.msra.mxu0 %v2686
    %3261 = vmatprep.subr.mxu0 0.0
    %3262 = vmatpush1.msra.mxu0 %v2685
    %3263 = vmatprep.subr.mxu0 0.0
    %3264 = vmatpush1.msra.mxu0 %v2684
    %3265 = vmatprep.subr.mxu0 0.0
    %3266 = vmatpush1.msra.mxu0 %v2683
    %3267 = vmatprep.subr.mxu0 0.0
    %3268 = vmatpush1.msra.mxu0 %v2682
    %3269 = vmatprep.subr.mxu0 0.0
    %3270 = vmatpush1.msra.mxu0 %v2681
    %3271 = vmatprep.subr.mxu0 0.0
    %3272 = vmatpush1.msra.mxu0 %v2680
    %3273 = vmatprep.subr.mxu0 0.0
    %3274 = vmatpush1.msra.mxu0 %v2679
    %3275 = vmatprep.subr.mxu0 0.0
    %3276 = vmatpush2.msra.mxu0 %v2710
    %3277 = vmatprep.subr.mxu0 0.0
    %3278 = vmatpush2.msra.mxu0 %v2709
    %3279 = vmatprep.subr.mxu0 0.0
    %3280 = vmatpush2.msra.mxu0 %v2708
    %3281 = vmatprep.subr.mxu0 0.0
    %3282 = vmatpush2.msra.mxu0 %v2707
    %3283 = vmatprep.subr.mxu0 0.0
    %3284 = vmatpush2.msra.mxu0 %v2706
    %3285 = vmatprep.subr.mxu0 0.0
    %3286 = vmatpush2.msra.mxu0 %v2705
    %3287 = vmatprep.subr.mxu0 0.0
    %3288 = vmatpush2.msra.mxu0 %v2704
    %3289 = vmatprep.subr.mxu0 0.0
    %3290 = vmatpush2.msra.mxu0 %v2703
    %3291 = vmatprep.subr.mxu0 0.0
    %3292 = vmatpush2.msra.mxu0 %v2702
    %3293 = vmatprep.subr.mxu0 0.0
    %3294 = vmatpush2.msra.mxu0 %v2701
    %3295 = vmatprep.subr.mxu0 0.0
    %3296 = vmatpush2.msra.mxu0 %v2700
    %3297 = vmatprep.subr.mxu0 0.0
    %3298 = vmatpush2.msra.mxu0 %v2699
    %3299 = vmatprep.subr.mxu0 0.0
    %3300 = vmatpush2.msra.mxu0 %v2698
    %3301 = vmatprep.subr.mxu0 0.0
    %3302 = vmatpush2.msra.mxu0 %v2697
    %3303 = vmatprep.subr.mxu0 0.0
    %3304 = vmatpush2.msra.mxu0 %v2696
    %3305 = vmatprep.subr.mxu0 0.0
    %3306 = vmatpush2.msra.mxu0 %v2695
    %3307 = vmatprep.mubr.f32.mxu0 %v2438
    %3308 = vmatmul.mubr.f32.gmra.mxu0 %v2437
    %v3309 = vpop.f32.mrf.mxu0
    %v3310 = vadd.f32 %v3235, %v3309
    %v3311 = vpop.f32.mrf.mxu0
    %3312 = vmatprep.mubr.f32.mxu0 %v2454
    %3313 = vmatmul.mubr.f32.gmra.mxu0 %v2453
    %v3314 = vpop.f32.mrf.mxu0
    %v3315 = vadd.f32 %v3240, %v3314
    %v3316 = vpop.f32.mrf.mxu0
    %3317 = vdwg.mxu0
    %v3318 = vadd.f32 %v917, %v3310
    %v3319 = vadd.f32 %v1466, %v3315
    %v3320 = vld [vmem:[%s35] sm:$0x1]
    %v3321 = vld [vmem:[%s37] sm:$0x1]
    %3322 = vadd.xlane.f32.xlu0 %v3318
    %v3323 = vpop.xlane.xlu0 %3322
    %3324 = vadd.xlane.f32.xlu0 %v3319
    %v3325 = vpop.xlane.xlu0 %3324
    %v3326 = vmul.f32 %v3323, %v894
    %v3327 = vmul.f32 %v3325, %v894
    %v3328 = vsub.f32 %v3318, %v3326
    %v3329 = vsub.f32 %v3319, %v3327
    %v3330 = vmul.f32 %v3328, %v3328
    %v3331 = vmul.f32 %v3329, %v3329
    %3332 = vadd.xlane.f32.xlu0 %v3330
    %v3333 = vpop.xlane.xlu0 %3332
    %3334 = vadd.xlane.f32.xlu0 %v3331
    %v3335 = vpop.xlane.xlu0 %3334
    %v3336 = vmul.f32 %v3333, %v894
    %v3337 = vmul.f32 %v3335, %v894
    %v3338 = vadd.f32 %v3336, 1e-05
    %v3339 = vadd.f32 %v3337, 1e-05
    %v3340 = vrsqrt.pop %v3338
    %v3341 = vrsqrt.pop %v3339
    %v3342 = vmul.f32 %v3328, %v3340
    %v3343 = vmul.f32 %v3329, %v3341
    %v3345 = vlaneseq
    %v3346 = vshrl.u32 %v3345, 7
    %v3347 = vsub.s32 0, %v3346
    %v3348 = vrot.slane %v3320, %v3347
    %v3350 = vmul.f32 %v3342, %v3348
    %v3351 = vmul.f32 %v3343, %v3348
    %v3353 = vlaneseq
    %v3354 = vshrl.u32 %v3353, 7
    %v3355 = vsub.s32 0, %v3354
    %v3356 = vrot.slane %v3321, %v3355
    %v3358 = vadd.f32 %v3350, %v3356
    %v3359 = vadd.f32 %v3351, %v3356
    loop: start=0, step=1, limit=8
    $region244: #{transformer_forward.1} parent=1 // loop_pre_header
      _
    $region245: #{transformer_forward.1} parent=1 // loop_header
      %s3361 = sphi 0, %s3365
      %p3362 = scmp.ge.s32.totalorder %s3361, 8
      %v3366 = vphi 0.0, %v3893
    $region246: #{transformer_forward.1} parent=1 // loop_header_branch
      %3364 = sbr.rel (%p3362) target = $region250
    $region247: #{transformer_forward.1} parent=1 // loop_body
      %s3367 = smul.u32 %s3361, 128
      %s3368 = scalar_lea.vmem %s39, %s3367
      %v3369 = vld [vmem:[%s3368] sm:$0xff]
      %v3370 = vld [vmem:[%s3368 + $0x8] sm:$0xff]
      %v3371 = vld [vmem:[%s3368 + $0x10] sm:$0xff]
      %v3372 = vld [vmem:[%s3368 + $0x18] sm:$0xff]
      %v3373 = vld [vmem:[%s3368 + $0x20] sm:$0xff]
      %v3374 = vld [vmem:[%s3368 + $0x28] sm:$0xff]
      %v3375 = vld [vmem:[%s3368 + $0x30] sm:$0xff]
      %v3376 = vld [vmem:[%s3368 + $0x38] sm:$0xff]
      %v3377 = vld [vmem:[%s3368 + $0x40] sm:$0xff]
      %v3378 = vld [vmem:[%s3368 + $0x48] sm:$0xff]
      %v3379 = vld [vmem:[%s3368 + $0x50] sm:$0xff]
      %v3380 = vld [vmem:[%s3368 + $0x58] sm:$0xff]
      %v3381 = vld [vmem:[%s3368 + $0x60] sm:$0xff]
      %v3382 = vld [vmem:[%s3368 + $0x68] sm:$0xff]
      %v3383 = vld [vmem:[%s3368 + $0x70] sm:$0xff]
      %v3384 = vld [vmem:[%s3368 + $0x78] sm:$0xff]
      %s3385 = scalar_lea.vmem %s41, %s3361
      %v3386 = vld [vmem:[%s3385] sm:$0x1]
      %v3388 = vlaneseq
      %v3389 = vshrl.u32 %v3388, 7
      %v3390 = vsub.s32 0, %v3389
      %v3391 = vrot.slane %v3386, %v3390
      %3393 = vmatprep.subr.mxu0 0.0
      %3394 = vmatpush1.msra.mxu0 %v3384
      %3395 = vmatprep.subr.mxu0 0.0
      %3396 = vmatpush1.msra.mxu0 %v3383
      %3397 = vmatprep.subr.mxu0 0.0
      %3398 = vmatpush1.msra.mxu0 %v3382
      %3399 = vmatprep.subr.mxu0 0.0
      %3400 = vmatpush1.msra.mxu0 %v3381
      %3401 = vmatprep.subr.mxu0 0.0
      %3402 = vmatpush1.msra.mxu0 %v3380
      %3403 = vmatprep.subr.mxu0 0.0
      %3404 = vmatpush1.msra.mxu0 %v3379
      %3405 = vmatprep.subr.mxu0 0.0
      %3406 = vmatpush1.msra.mxu0 %v3378
      %3407 = vmatprep.subr.mxu0 0.0
      %3408 = vmatpush1.msra.mxu0 %v3377
      %3409 = vmatprep.subr.mxu0 0.0
      %3410 = vmatpush1.msra.mxu0 %v3376
      %3411 = vmatprep.subr.mxu0 0.0
      %3412 = vmatpush1.msra.mxu0 %v3375
      %3413 = vmatprep.subr.mxu0 0.0
      %3414 = vmatpush1.msra.mxu0 %v3374
      %3415 = vmatprep.subr.mxu0 0.0
      %3416 = vmatpush1.msra.mxu0 %v3373
      %3417 = vmatprep.subr.mxu0 0.0
      %3418 = vmatpush1.msra.mxu0 %v3372
      %3419 = vmatprep.subr.mxu0 0.0
      %3420 = vmatpush1.msra.mxu0 %v3371
      %3421 = vmatprep.subr.mxu0 0.0
      %3422 = vmatpush1.msra.mxu0 %v3370
      %3423 = vmatprep.subr.mxu0 0.0
      %3424 = vmatpush1.msra.mxu0 %v3369
      %3425 = vmatprep.subr.mxu0 0.0
      %3426 = vmatpush2.msra.mxu0 0.0
      %3427 = vmatprep.subr.mxu0 0.0
      %3428 = vmatpush2.msra.mxu0 0.0
      %3429 = vmatprep.subr.mxu0 0.0
      %3430 = vmatpush2.msra.mxu0 0.0
      %3431 = vmatprep.subr.mxu0 0.0
      %3432 = vmatpush2.msra.mxu0 0.0
      %3433 = vmatprep.subr.mxu0 0.0
      %3434 = vmatpush2.msra.mxu0 0.0
      %3435 = vmatprep.subr.mxu0 0.0
      %3436 = vmatpush2.msra.mxu0 0.0
      %3437 = vmatprep.subr.mxu0 0.0
      %3438 = vmatpush2.msra.mxu0 0.0
      %3439 = vmatprep.subr.mxu0 0.0
      %3440 = vmatpush2.msra.mxu0 0.0
      %3441 = vmatprep.subr.mxu0 0.0
      %3442 = vmatpush2.msra.mxu0 0.0
      %3443 = vmatprep.subr.mxu0 0.0
      %3444 = vmatpush2.msra.mxu0 0.0
      %3445 = vmatprep.subr.mxu0 0.0
      %3446 = vmatpush2.msra.mxu0 0.0
      %3447 = vmatprep.subr.mxu0 0.0
      %3448 = vmatpush2.msra.mxu0 0.0
      %3449 = vmatprep.subr.mxu0 0.0
      %3450 = vmatpush2.msra.mxu0 0.0
      %3451 = vmatprep.subr.mxu0 0.0
      %3452 = vmatpush2.msra.mxu0 0.0
      %3453 = vmatprep.subr.mxu0 0.0
      %3454 = vmatpush2.msra.mxu0 0.0
      %3455 = vmatprep.subr.mxu0 0.0
      %3456 = vmatpush2.msra.mxu0 0.0
      %3457 = vmatprep.mubr.f32.mxu0 0.0
      %3458 = vmatmul.mubr.f32.gmra.mxu0 %v3358
      %v3459 = vpop.f32.mrf.mxu0
      %v3460 = vadd.f32 %v3391, %v3459
      %v3461 = vpop.f32.mrf.mxu0
      %3462 = vdwg.mxu0
      %s3463 = scalar_lea.vmem %s43, %s3367
      %v3464 = vld [vmem:[%s3463] sm:$0xff]
      %v3465 = vld [vmem:[%s3463 + $0x8] sm:$0xff]
      %v3466 = vld [vmem:[%s3463 + $0x10] sm:$0xff]
      %v3467 = vld [vmem:[%s3463 + $0x18] sm:$0xff]
      %v3468 = vld [vmem:[%s3463 + $0x20] sm:$0xff]
      %v3469 = vld [vmem:[%s3463 + $0x28] sm:$0xff]
      %v3470 = vld [vmem:[%s3463 + $0x30] sm:$0xff]
      %v3471 = vld [vmem:[%s3463 + $0x38] sm:$0xff]
      %v3472 = vld [vmem:[%s3463 + $0x40] sm:$0xff]
      %v3473 = vld [vmem:[%s3463 + $0x48] sm:$0xff]
      %v3474 = vld [vmem:[%s3463 + $0x50] sm:$0xff]
      %v3475 = vld [vmem:[%s3463 + $0x58] sm:$0xff]
      %v3476 = vld [vmem:[%s3463 + $0x60] sm:$0xff]
      %v3477 = vld [vmem:[%s3463 + $0x68] sm:$0xff]
      %v3478 = vld [vmem:[%s3463 + $0x70] sm:$0xff]
      %v3479 = vld [vmem:[%s3463 + $0x78] sm:$0xff]
      %s3480 = scalar_lea.vmem %s45, %s3361
      %v3481 = vld [vmem:[%s3480] sm:$0x1]
      %v3483 = vlaneseq
      %v3484 = vshrl.u32 %v3483, 7
      %v3485 = vsub.s32 0, %v3484
      %v3486 = vrot.slane %v3481, %v3485
      %3488 = vmatprep.subr.mxu0 0.0
      %3489 = vmatpush1.msra.mxu0 %v3479
      %3490 = vmatprep.subr.mxu0 0.0
      %3491 = vmatpush1.msra.mxu0 %v3478
      %3492 = vmatprep.subr.mxu0 0.0
      %3493 = vmatpush1.msra.mxu0 %v3477
      %3494 = vmatprep.subr.mxu0 0.0
      %3495 = vmatpush1.msra.mxu0 %v3476
      %3496 = vmatprep.subr.mxu0 0.0
      %3497 = vmatpush1.msra.mxu0 %v3475
      %3498 = vmatprep.subr.mxu0 0.0
      %3499 = vmatpush1.msra.mxu0 %v3474
      %3500 = vmatprep.subr.mxu0 0.0
      %3501 = vmatpush1.msra.mxu0 %v3473
      %3502 = vmatprep.subr.mxu0 0.0
      %3503 = vmatpush1.msra.mxu0 %v3472
      %3504 = vmatprep.subr.mxu0 0.0
      %3505 = vmatpush1.msra.mxu0 %v3471
      %3506 = vmatprep.subr.mxu0 0.0
      %3507 = vmatpush1.msra.mxu0 %v3470
      %3508 = vmatprep.subr.mxu0 0.0
      %3509 = vmatpush1.msra.mxu0 %v3469
      %3510 = vmatprep.subr.mxu0 0.0
      %3511 = vmatpush1.msra.mxu0 %v3468
      %3512 = vmatprep.subr.mxu0 0.0
      %3513 = vmatpush1.msra.mxu0 %v3467
      %3514 = vmatprep.subr.mxu0 0.0
      %3515 = vmatpush1.msra.mxu0 %v3466
      %3516 = vmatprep.subr.mxu0 0.0
      %3517 = vmatpush1.msra.mxu0 %v3465
      %3518 = vmatprep.subr.mxu0 0.0
      %3519 = vmatpush1.msra.mxu0 %v3464
      %3520 = vmatprep.subr.mxu0 0.0
      %3521 = vmatpush2.msra.mxu0 0.0
      %3522 = vmatprep.subr.mxu0 0.0
      %3523 = vmatpush2.msra.mxu0 0.0
      %3524 = vmatprep.subr.mxu0 0.0
      %3525 = vmatpush2.msra.mxu0 0.0
      %3526 = vmatprep.subr.mxu0 0.0
      %3527 = vmatpush2.msra.mxu0 0.0
      %3528 = vmatprep.subr.mxu0 0.0
      %3529 = vmatpush2.msra.mxu0 0.0
      %3530 = vmatprep.subr.mxu0 0.0
      %3531 = vmatpush2.msra.mxu0 0.0
      %3532 = vmatprep.subr.mxu0 0.0
      %3533 = vmatpush2.msra.mxu0 0.0
      %3534 = vmatprep.subr.mxu0 0.0
      %3535 = vmatpush2.msra.mxu0 0.0
      %3536 = vmatprep.subr.mxu0 0.0
      %3537 = vmatpush2.msra.mxu0 0.0
      %3538 = vmatprep.subr.mxu0 0.0
      %3539 = vmatpush2.msra.mxu0 0.0
      %3540 = vmatprep.subr.mxu0 0.0
      %3541 = vmatpush2.msra.mxu0 0.0
      %3542 = vmatprep.subr.mxu0 0.0
      %3543 = vmatpush2.msra.mxu0 0.0
      %3544 = vmatprep.subr.mxu0 0.0
      %3545 = vmatpush2.msra.mxu0 0.0
      %3546 = vmatprep.subr.mxu0 0.0
      %3547 = vmatpush2.msra.mxu0 0.0
      %3548 = vmatprep.subr.mxu0 0.0
      %3549 = vmatpush2.msra.mxu0 0.0
      %3550 = vmatprep.subr.mxu0 0.0
      %3551 = vmatpush2.msra.mxu0 0.0
      %3552 = vmatprep.mubr.f32.mxu0 0.0
      %3553 = vmatmul.mubr.f32.gmra.mxu0 %v3358
      %v3554 = vpop.f32.mrf.mxu0
      %v3555 = vadd.f32 %v3486, %v3554
      %v3556 = vpop.f32.mrf.mxu0
      %3557 = vdwg.mxu0
      %s3558 = scalar_lea.vmem %s47, %s3367
      %v3559 = vld [vmem:[%s3558] sm:$0xff]
      %v3560 = vld [vmem:[%s3558 + $0x8] sm:$0xff]
      %v3561 = vld [vmem:[%s3558 + $0x10] sm:$0xff]
      %v3562 = vld [vmem:[%s3558 + $0x18] sm:$0xff]
      %v3563 = vld [vmem:[%s3558 + $0x20] sm:$0xff]
      %v3564 = vld [vmem:[%s3558 + $0x28] sm:$0xff]
      %v3565 = vld [vmem:[%s3558 + $0x30] sm:$0xff]
      %v3566 = vld [vmem:[%s3558 + $0x38] sm:$0xff]
      %v3567 = vld [vmem:[%s3558 + $0x40] sm:$0xff]
      %v3568 = vld [vmem:[%s3558 + $0x48] sm:$0xff]
      %v3569 = vld [vmem:[%s3558 + $0x50] sm:$0xff]
      %v3570 = vld [vmem:[%s3558 + $0x58] sm:$0xff]
      %v3571 = vld [vmem:[%s3558 + $0x60] sm:$0xff]
      %v3572 = vld [vmem:[%s3558 + $0x68] sm:$0xff]
      %v3573 = vld [vmem:[%s3558 + $0x70] sm:$0xff]
      %v3574 = vld [vmem:[%s3558 + $0x78] sm:$0xff]
      %s3575 = scalar_lea.vmem %s49, %s3361
      %v3576 = vld [vmem:[%s3575] sm:$0x1]
      %v3578 = vlaneseq
      %v3579 = vshrl.u32 %v3578, 7
      %v3580 = vsub.s32 0, %v3579
      %v3581 = vrot.slane %v3576, %v3580
      %3583 = vmatprep.subr.mxu0 0.0
      %3584 = vmatpush1.msra.mxu0 %v3574
      %3585 = vmatprep.subr.mxu0 0.0
      %3586 = vmatpush1.msra.mxu0 %v3573
      %3587 = vmatprep.subr.mxu0 0.0
      %3588 = vmatpush1.msra.mxu0 %v3572
      %3589 = vmatprep.subr.mxu0 0.0
      %3590 = vmatpush1.msra.mxu0 %v3571
      %3591 = vmatprep.subr.mxu0 0.0
      %3592 = vmatpush1.msra.mxu0 %v3570
      %3593 = vmatprep.subr.mxu0 0.0
      %3594 = vmatpush1.msra.mxu0 %v3569
      %3595 = vmatprep.subr.mxu0 0.0
      %3596 = vmatpush1.msra.mxu0 %v3568
      %3597 = vmatprep.subr.mxu0 0.0
      %3598 = vmatpush1.msra.mxu0 %v3567
      %3599 = vmatprep.subr.mxu0 0.0
      %3600 = vmatpush1.msra.mxu0 %v3566
      %3601 = vmatprep.subr.mxu0 0.0
      %3602 = vmatpush1.msra.mxu0 %v3565
      %3603 = vmatprep.subr.mxu0 0.0
      %3604 = vmatpush1.msra.mxu0 %v3564
      %3605 = vmatprep.subr.mxu0 0.0
      %3606 = vmatpush1.msra.mxu0 %v3563
      %3607 = vmatprep.subr.mxu0 0.0
      %3608 = vmatpush1.msra.mxu0 %v3562
      %3609 = vmatprep.subr.mxu0 0.0
      %3610 = vmatpush1.msra.mxu0 %v3561
      %3611 = vmatprep.subr.mxu0 0.0
      %3612 = vmatpush1.msra.mxu0 %v3560
      %3613 = vmatprep.subr.mxu0 0.0
      %3614 = vmatpush1.msra.mxu0 %v3559
      %3615 = vmatprep.subr.mxu0 0.0
      %3616 = vmatpush2.msra.mxu0 0.0
      %3617 = vmatprep.subr.mxu0 0.0
      %3618 = vmatpush2.msra.mxu0 0.0
      %3619 = vmatprep.subr.mxu0 0.0
      %3620 = vmatpush2.msra.mxu0 0.0
      %3621 = vmatprep.subr.mxu0 0.0
      %3622 = vmatpush2.msra.mxu0 0.0
      %3623 = vmatprep.subr.mxu0 0.0
      %3624 = vmatpush2.msra.mxu0 0.0
      %3625 = vmatprep.subr.mxu0 0.0
      %3626 = vmatpush2.msra.mxu0 0.0
      %3627 = vmatprep.subr.mxu0 0.0
      %3628 = vmatpush2.msra.mxu0 0.0
      %3629 = vmatprep.subr.mxu0 0.0
      %3630 = vmatpush2.msra.mxu0 0.0
      %3631 = vmatprep.subr.mxu0 0.0
      %3632 = vmatpush2.msra.mxu0 0.0
      %3633 = vmatprep.subr.mxu0 0.0
      %3634 = vmatpush2.msra.mxu0 0.0
      %3635 = vmatprep.subr.mxu0 0.0
      %3636 = vmatpush2.msra.mxu0 0.0
      %3637 = vmatprep.subr.mxu0 0.0
      %3638 = vmatpush2.msra.mxu0 0.0
      %3639 = vmatprep.subr.mxu0 0.0
      %3640 = vmatpush2.msra.mxu0 0.0
      %3641 = vmatprep.subr.mxu0 0.0
      %3642 = vmatpush2.msra.mxu0 0.0
      %3643 = vmatprep.subr.mxu0 0.0
      %3644 = vmatpush2.msra.mxu0 0.0
      %3645 = vmatprep.subr.mxu0 0.0
      %3646 = vmatpush2.msra.mxu0 0.0
      %3647 = vmatprep.mubr.f32.mxu0 0.0
      %3648 = vmatmul.mubr.f32.gmra.mxu0 %v3358
      %v3649 = vpop.f32.mrf.mxu0
      %v3650 = vadd.f32 %v3581, %v3649
      %v3651 = vpop.f32.mrf.mxu0
      %3652 = vdwg.mxu0
      %vm3653 = vcmask 130048
      %v3655 = vsel %vm3653, %v3460, 0
      %v3658 = vsel %vm3653, %v3555, 0
      %3660 = vmatprep.subr.mxu0 0.0
      %3661 = vmatpush1.xpose.msra.mxu0 0.0
      %3662 = vmatprep.subr.mxu0 0.0
      %3663 = vmatpush1.xpose.msra.mxu0 0.0
      %3664 = vmatprep.subr.mxu0 0.0
      %3665 = vmatpush1.xpose.msra.mxu0 0.0
      %3666 = vmatprep.subr.mxu0 0.0
      %3667 = vmatpush1.xpose.msra.mxu0 0.0
      %3668 = vmatprep.subr.mxu0 0.0
      %3669 = vmatpush1.xpose.msra.mxu0 0.0
      %3670 = vmatprep.subr.mxu0 0.0
      %3671 = vmatpush1.xpose.msra.mxu0 0.0
      %3672 = vmatprep.subr.mxu0 0.0
      %3673 = vmatpush1.xpose.msra.mxu0 0.0
      %3674 = vmatprep.subr.mxu0 0.0
      %3675 = vmatpush1.xpose.msra.mxu0 0.0
      %3676 = vmatprep.subr.mxu0 0.0
      %3677 = vmatpush1.xpose.msra.mxu0 0.0
      %3678 = vmatprep.subr.mxu0 0.0
      %3679 = vmatpush1.xpose.msra.mxu0 0.0
      %3680 = vmatprep.subr.mxu0 0.0
      %3681 = vmatpush1.xpose.msra.mxu0 0.0
      %3682 = vmatprep.subr.mxu0 0.0
      %3683 = vmatpush1.xpose.msra.mxu0 0.0
      %3684 = vmatprep.subr.mxu0 0.0
      %3685 = vmatpush1.xpose.msra.mxu0 0.0
      %3686 = vmatprep.subr.mxu0 0.0
      %3687 = vmatpush1.xpose.msra.mxu0 0.0
      %3688 = vmatprep.subr.mxu0 0.0
      %3689 = vmatpush1.xpose.msra.mxu0 0.0
      %3690 = vmatprep.subr.mxu0 0.0
      %3691 = vmatpush1.xpose.msra.mxu0 %v3658
      %3692 = vmatprep.subr.mxu0 0.0
      %3693 = vmatpush2.xpose.msra.mxu0 0.0
      %3694 = vmatprep.subr.mxu0 0.0
      %3695 = vmatpush2.xpose.msra.mxu0 0.0
      %3696 = vmatprep.subr.mxu0 0.0
      %3697 = vmatpush2.xpose.msra.mxu0 0.0
      %3698 = vmatprep.subr.mxu0 0.0
      %3699 = vmatpush2.xpose.msra.mxu0 0.0
      %3700 = vmatprep.subr.mxu0 0.0
      %3701 = vmatpush2.xpose.msra.mxu0 0.0
      %3702 = vmatprep.subr.mxu0 0.0
      %3703 = vmatpush2.xpose.msra.mxu0 0.0
      %3704 = vmatprep.subr.mxu0 0.0
      %3705 = vmatpush2.xpose.msra.mxu0 0.0
      %3706 = vmatprep.subr.mxu0 0.0
      %3707 = vmatpush2.xpose.msra.mxu0 0.0
      %3708 = vmatprep.subr.mxu0 0.0
      %3709 = vmatpush2.xpose.msra.mxu0 0.0
      %3710 = vmatprep.subr.mxu0 0.0
      %3711 = vmatpush2.xpose.msra.mxu0 0.0
      %3712 = vmatprep.subr.mxu0 0.0
      %3713 = vmatpush2.xpose.msra.mxu0 0.0
      %3714 = vmatprep.subr.mxu0 0.0
      %3715 = vmatpush2.xpose.msra.mxu0 0.0
      %3716 = vmatprep.subr.mxu0 0.0
      %3717 = vmatpush2.xpose.msra.mxu0 0.0
      %3718 = vmatprep.subr.mxu0 0.0
      %3719 = vmatpush2.xpose.msra.mxu0 0.0
      %3720 = vmatprep.subr.mxu0 0.0
      %3721 = vmatpush2.xpose.msra.mxu0 0.0
      %3722 = vmatprep.subr.mxu0 0.0
      %3723 = vmatpush2.xpose.msra.mxu0 0.0
      %3724 = vmatprep.mubr.f32.mxu0 0.0
      %3725 = vmatmul.mubr.f32.gmra.mxu0 %v3655
      %v3726 = vpop.f32.mrf.mxu0
      %v3727 = vadd.f32 0.0, %v3726
      %v3728 = vpop.f32.mrf.mxu0
      %3729 = vdwg.mxu0
      %v3730 = vmul.f32 %v3727, 0.25
      %vm3731 = vcmask 64512
      %v3732 = vsel %vm3731, %v3730, -inf
      %3733 = vmax.xlane.f32.xlu0 %v3732
      %v3734 = vpop.xlane.xlu0 %3733
      %v3735 = vsub.f32 %v3730, %v3734
      %v3736 = vmul.f32 %v3735, 1.442695
      %v3737 = vpow.pop %v3736
      %v3738 = vsel %vm3731, %v3737, 0.0
      %3739 = vadd.xlane.f32.xlu0 %v3738
      %v3740 = vpop.xlane.xlu0 %3739
      %v3741 = vrcp.pop %v3740
      %v3742 = vmul.f32 %v3737, %v3741
      %v3744 = vsel %vm3731, %v3742, 0
      %3746 = vmatprep.subr.mxu0 0.0
      %3747 = vmatpush1.msra.mxu0 0.0
      %3748 = vmatprep.subr.mxu0 0.0
      %3749 = vmatpush1.msra.mxu0 0.0
      %3750 = vmatprep.subr.mxu0 0.0
      %3751 = vmatpush1.msra.mxu0 0.0
      %3752 = vmatprep.subr.mxu0 0.0
      %3753 = vmatpush1.msra.mxu0 0.0
      %3754 = vmatprep.subr.mxu0 0.0
      %3755 = vmatpush1.msra.mxu0 0.0
      %3756 = vmatprep.subr.mxu0 0.0
      %3757 = vmatpush1.msra.mxu0 0.0
      %3758 = vmatprep.subr.mxu0 0.0
      %3759 = vmatpush1.msra.mxu0 0.0
      %3760 = vmatprep.subr.mxu0 0.0
      %3761 = vmatpush1.msra.mxu0 0.0
      %3762 = vmatprep.subr.mxu0 0.0
      %3763 = vmatpush1.msra.mxu0 0.0
      %3764 = vmatprep.subr.mxu0 0.0
      %3765 = vmatpush1.msra.mxu0 0.0
      %3766 = vmatprep.subr.mxu0 0.0
      %3767 = vmatpush1.msra.mxu0 0.0
      %3768 = vmatprep.subr.mxu0 0.0
      %3769 = vmatpush1.msra.mxu0 0.0
      %3770 = vmatprep.subr.mxu0 0.0
      %3771 = vmatpush1.msra.mxu0 0.0
      %3772 = vmatprep.subr.mxu0 0.0
      %3773 = vmatpush1.msra.mxu0 0.0
      %3774 = vmatprep.subr.mxu0 0.0
      %3775 = vmatpush1.msra.mxu0 0.0
      %3776 = vmatprep.subr.mxu0 0.0
      %3777 = vmatpush1.msra.mxu0 %v3650
      %3778 = vmatprep.subr.mxu0 0.0
      %3779 = vmatpush2.msra.mxu0 0.0
      %3780 = vmatprep.subr.mxu0 0.0
      %3781 = vmatpush2.msra.mxu0 0.0
      %3782 = vmatprep.subr.mxu0 0.0
      %3783 = vmatpush2.msra.mxu0 0.0
      %3784 = vmatprep.subr.mxu0 0.0
      %3785 = vmatpush2.msra.mxu0 0.0
      %3786 = vmatprep.subr.mxu0 0.0
      %3787 = vmatpush2.msra.mxu0 0.0
      %3788 = vmatprep.subr.mxu0 0.0
      %3789 = vmatpush2.msra.mxu0 0.0
      %3790 = vmatprep.subr.mxu0 0.0
      %3791 = vmatpush2.msra.mxu0 0.0
      %3792 = vmatprep.subr.mxu0 0.0
      %3793 = vmatpush2.msra.mxu0 0.0
      %3794 = vmatprep.subr.mxu0 0.0
      %3795 = vmatpush2.msra.mxu0 0.0
      %3796 = vmatprep.subr.mxu0 0.0
      %3797 = vmatpush2.msra.mxu0 0.0
      %3798 = vmatprep.subr.mxu0 0.0
      %3799 = vmatpush2.msra.mxu0 0.0
      %3800 = vmatprep.subr.mxu0 0.0
      %3801 = vmatpush2.msra.mxu0 0.0
      %3802 = vmatprep.subr.mxu0 0.0
      %3803 = vmatpush2.msra.mxu0 0.0
      %3804 = vmatprep.subr.mxu0 0.0
      %3805 = vmatpush2.msra.mxu0 0.0
      %3806 = vmatprep.subr.mxu0 0.0
      %3807 = vmatpush2.msra.mxu0 0.0
      %3808 = vmatprep.subr.mxu0 0.0
      %3809 = vmatpush2.msra.mxu0 0.0
      %3810 = vmatprep.mubr.f32.mxu0 0.0
      %3811 = vmatmul.mubr.f32.gmra.mxu0 %v3744
      %v3812 = vpop.f32.mrf.mxu0
      %v3813 = vadd.f32 0.0, %v3812
      %v3814 = vpop.f32.mrf.mxu0
      %3815 = vdwg.mxu0
      %s3816 = smul.u32 %s3361, 16
      %s3817 = scalar_lea.vmem %s51, %s3816
      %v3818 = vld [vmem:[%s3817] sm:$0xff]
      %v3819 = vld [vmem:[%s3817 + $0x8] sm:$0xff]
      %v3821 = vsel %vm3653, %v3813, 0
      %3823 = vmatprep.subr.mxu0 0.0
      %3824 = vmatpush1.msra.mxu0 0.0
      %3825 = vmatprep.subr.mxu0 0.0
      %3826 = vmatpush1.msra.mxu0 0.0
      %3827 = vmatprep.subr.mxu0 0.0
      %3828 = vmatpush1.msra.mxu0 0.0
      %3829 = vmatprep.subr.mxu0 0.0
      %3830 = vmatpush1.msra.mxu0 0.0
      %3831 = vmatprep.subr.mxu0 0.0
      %3832 = vmatpush1.msra.mxu0 0.0
      %3833 = vmatprep.subr.mxu0 0.0
      %3834 = vmatpush1.msra.mxu0 0.0
      %3835 = vmatprep.subr.mxu0 0.0
      %3836 = vmatpush1.msra.mxu0 0.0
      %3837 = vmatprep.subr.mxu0 0.0
      %3838 = vmatpush1.msra.mxu0 0.0
      %3839 = vmatprep.subr.mxu0 0.0
      %3840 = vmatpush1.msra.mxu0 0.0
      %3841 = vmatprep.subr.mxu0 0.0
      %3842 = vmatpush1.msra.mxu0 0.0
      %3843 = vmatprep.subr.mxu0 0.0
      %3844 = vmatpush1.msra.mxu0 0.0
      %3845 = vmatprep.subr.mxu0 0.0
      %3846 = vmatpush1.msra.mxu0 0.0
      %3847 = vmatprep.subr.mxu0 0.0
      %3848 = vmatpush1.msra.mxu0 0.0
      %3849 = vmatprep.subr.mxu0 0.0
      %3850 = vmatpush1.msra.mxu0 0.0
      %3851 = vmatprep.subr.mxu0 0.0
      %3852 = vmatpush1.msra.mxu0 %v3819
      %3853 = vmatprep.subr.mxu0 0.0
      %3854 = vmatpush1.msra.mxu0 %v3818
      %3855 = vmatprep.subr.mxu0 0.0
      %3856 = vmatpush2.msra.mxu0 0.0
      %3857 = vmatprep.subr.mxu0 0.0
      %3858 = vmatpush2.msra.mxu0 0.0
      %3859 = vmatprep.subr.mxu0 0.0
      %3860 = vmatpush2.msra.mxu0 0.0
      %3861 = vmatprep.subr.mxu0 0.0
      %3862 = vmatpush2.msra.mxu0 0.0
      %3863 = vmatprep.subr.mxu0 0.0
      %3864 = vmatpush2.msra.mxu0 0.0
      %3865 = vmatprep.subr.mxu0 0.0
      %3866 = vmatpush2.msra.mxu0 0.0
      %3867 = vmatprep.subr.mxu0 0.0
      %3868 = vmatpush2.msra.mxu0 0.0
      %3869 = vmatprep.subr.mxu0 0.0
      %3870 = vmatpush2.msra.mxu0 0.0
      %3871 = vmatprep.subr.mxu0 0.0
      %3872 = vmatpush2.msra.mxu0 0.0
      %3873 = vmatprep.subr.mxu0 0.0
      %3874 = vmatpush2.msra.mxu0 0.0
      %3875 = vmatprep.subr.mxu0 0.0
      %3876 = vmatpush2.msra.mxu0 0.0
      %3877 = vmatprep.subr.mxu0 0.0
      %3878 = vmatpush2.msra.mxu0 0.0
      %3879 = vmatprep.subr.mxu0 0.0
      %3880 = vmatpush2.msra.mxu0 0.0
      %3881 = vmatprep.subr.mxu0 0.0
      %3882 = vmatpush2.msra.mxu0 0.0
      %3883 = vmatprep.subr.mxu0 0.0
      %3884 = vmatpush2.msra.mxu0 0.0
      %3885 = vmatprep.subr.mxu0 0.0
      %3886 = vmatpush2.msra.mxu0 0.0
      %3887 = vmatprep.mubr.f32.mxu0 0.0
      %3888 = vmatmul.mubr.f32.gmra.mxu0 %v3821
      %v3889 = vpop.f32.mrf.mxu0
      %v3890 = vadd.f32 0.0, %v3889
      %v3891 = vpop.f32.mrf.mxu0
      %3892 = vdwg.mxu0
      %v3893 = vadd.f32 %v3366, %v3890
    $region248: #{transformer_forward.1} parent=1 // loop_footer
      %s3365 = sadd.s32 1, %s3361
    $region249: #{transformer_forward.1} parent=1 // loop_footer_branch
      %3360 = sbr.rel target = $region245
    $region250: #{transformer_forward.1} parent=1 // loop_exit
      _
    %v3894 = vadd.f32 %v3358, %v3366
    %v3895 = vld [vmem:[%s53] sm:$0x1]
    %v3897 = vlaneseq
    %v3898 = vshrl.u32 %v3897, 7
    %v3899 = vsub.s32 0, %v3898
    %v3900 = vrot.slane %v3895, %v3899
    %v3902 = vadd.f32 %v3894, %v3900
    %v3903 = vld [vmem:[%s55] sm:$0x1]
    %v3904 = vld [vmem:[%s57] sm:$0x1]
    %3905 = vadd.xlane.f32.xlu0 %v3902
    %v3906 = vpop.xlane.xlu0 %3905
    %v3907 = vmul.f32 %v3906, %v894
    %v3908 = vsub.f32 %v3902, %v3907
    %v3909 = vmul.f32 %v3908, %v3908
    %3910 = vadd.xlane.f32.xlu0 %v3909
    %v3911 = vpop.xlane.xlu0 %3910
    %v3912 = vmul.f32 %v3911, %v894
    %v3913 = vadd.f32 %v3912, 1e-05
    %v3914 = vrsqrt.pop %v3913
    %v3915 = vmul.f32 %v3908, %v3914
    %v3917 = vlaneseq
    %v3918 = vshrl.u32 %v3917, 7
    %v3919 = vsub.s32 0, %v3918
    %v3920 = vrot.slane %v3903, %v3919
    %v3922 = vmul.f32 %v3915, %v3920
    %v3924 = vlaneseq
    %v3925 = vshrl.u32 %v3924, 7
    %v3926 = vsub.s32 0, %v3925
    %v3927 = vrot.slane %v3904, %v3926
    %v3929 = vadd.f32 %v3922, %v3927
    loop: start=0, step=1, limit=8
    $region251: #{transformer_forward.1} parent=1 // loop_pre_header
      _
    $region252: #{transformer_forward.1} parent=1 // loop_header
      %s3931 = sphi 0, %s3935
      %p3932 = scmp.ge.s32.totalorder %s3931, 8
      %v3936 = vphi 0.0, %v4463
    $region253: #{transformer_forward.1} parent=1 // loop_header_branch
      %3934 = sbr.rel (%p3932) target = $region257
    $region254: #{transformer_forward.1} parent=1 // loop_body
      %s3937 = smul.u32 %s3931, 128
      %s3938 = scalar_lea.vmem %s39, %s3937
      %v3939 = vld [vmem:[%s3938] sm:$0xff]
      %v3940 = vld [vmem:[%s3938 + $0x8] sm:$0xff]
      %v3941 = vld [vmem:[%s3938 + $0x10] sm:$0xff]
      %v3942 = vld [vmem:[%s3938 + $0x18] sm:$0xff]
      %v3943 = vld [vmem:[%s3938 + $0x20] sm:$0xff]
      %v3944 = vld [vmem:[%s3938 + $0x28] sm:$0xff]
      %v3945 = vld [vmem:[%s3938 + $0x30] sm:$0xff]
      %v3946 = vld [vmem:[%s3938 + $0x38] sm:$0xff]
      %v3947 = vld [vmem:[%s3938 + $0x40] sm:$0xff]
      %v3948 = vld [vmem:[%s3938 + $0x48] sm:$0xff]
      %v3949 = vld [vmem:[%s3938 + $0x50] sm:$0xff]
      %v3950 = vld [vmem:[%s3938 + $0x58] sm:$0xff]
      %v3951 = vld [vmem:[%s3938 + $0x60] sm:$0xff]
      %v3952 = vld [vmem:[%s3938 + $0x68] sm:$0xff]
      %v3953 = vld [vmem:[%s3938 + $0x70] sm:$0xff]
      %v3954 = vld [vmem:[%s3938 + $0x78] sm:$0xff]
      %s3955 = scalar_lea.vmem %s41, %s3931
      %v3956 = vld [vmem:[%s3955] sm:$0x1]
      %v3958 = vlaneseq
      %v3959 = vshrl.u32 %v3958, 7
      %v3960 = vsub.s32 0, %v3959
      %v3961 = vrot.slane %v3956, %v3960
      %3963 = vmatprep.subr.mxu0 0.0
      %3964 = vmatpush1.msra.mxu0 %v3954
      %3965 = vmatprep.subr.mxu0 0.0
      %3966 = vmatpush1.msra.mxu0 %v3953
      %3967 = vmatprep.subr.mxu0 0.0
      %3968 = vmatpush1.msra.mxu0 %v3952
      %3969 = vmatprep.subr.mxu0 0.0
      %3970 = vmatpush1.msra.mxu0 %v3951
      %3971 = vmatprep.subr.mxu0 0.0
      %3972 = vmatpush1.msra.mxu0 %v3950
      %3973 = vmatprep.subr.mxu0 0.0
      %3974 = vmatpush1.msra.mxu0 %v3949
      %3975 = vmatprep.subr.mxu0 0.0
      %3976 = vmatpush1.msra.mxu0 %v3948
      %3977 = vmatprep.subr.mxu0 0.0
      %3978 = vmatpush1.msra.mxu0 %v3947
      %3979 = vmatprep.subr.mxu0 0.0
      %3980 = vmatpush1.msra.mxu0 %v3946
      %3981 = vmatprep.subr.mxu0 0.0
      %3982 = vmatpush1.msra.mxu0 %v3945
      %3983 = vmatprep.subr.mxu0 0.0
      %3984 = vmatpush1.msra.mxu0 %v3944
      %3985 = vmatprep.subr.mxu0 0.0
      %3986 = vmatpush1.msra.mxu0 %v3943
      %3987 = vmatprep.subr.mxu0 0.0
      %3988 = vmatpush1.msra.mxu0 %v3942
      %3989 = vmatprep.subr.mxu0 0.0
      %3990 = vmatpush1.msra.mxu0 %v3941
      %3991 = vmatprep.subr.mxu0 0.0
      %3992 = vmatpush1.msra.mxu0 %v3940
      %3993 = vmatprep.subr.mxu0 0.0
      %3994 = vmatpush1.msra.mxu0 %v3939
      %3995 = vmatprep.subr.mxu0 0.0
      %3996 = vmatpush2.msra.mxu0 0.0
      %3997 = vmatprep.subr.mxu0 0.0
      %3998 = vmatpush2.msra.mxu0 0.0
      %3999 = vmatprep.subr.mxu0 0.0
      %4000 = vmatpush2.msra.mxu0 0.0
      %4001 = vmatprep.subr.mxu0 0.0
      %4002 = vmatpush2.msra.mxu0 0.0
      %4003 = vmatprep.subr.mxu0 0.0
      %4004 = vmatpush2.msra.mxu0 0.0
      %4005 = vmatprep.subr.mxu0 0.0
      %4006 = vmatpush2.msra.mxu0 0.0
      %4007 = vmatprep.subr.mxu0 0.0
      %4008 = vmatpush2.msra.mxu0 0.0
      %4009 = vmatprep.subr.mxu0 0.0
      %4010 = vmatpush2.msra.mxu0 0.0
      %4011 = vmatprep.subr.mxu0 0.0
      %4012 = vmatpush2.msra.mxu0 0.0
      %4013 = vmatprep.subr.mxu0 0.0
      %4014 = vmatpush2.msra.mxu0 0.0
      %4015 = vmatprep.subr.mxu0 0.0
      %4016 = vmatpush2.msra.mxu0 0.0
      %4017 = vmatprep.subr.mxu0 0.0
      %4018 = vmatpush2.msra.mxu0 0.0
      %4019 = vmatprep.subr.mxu0 0.0
      %4020 = vmatpush2.msra.mxu0 0.0
      %4021 = vmatprep.subr.mxu0 0.0
      %4022 = vmatpush2.msra.mxu0 0.0
      %4023 = vmatprep.subr.mxu0 0.0
      %4024 = vmatpush2.msra.mxu0 0.0
      %4025 = vmatprep.subr.mxu0 0.0
      %4026 = vmatpush2.msra.mxu0 0.0
      %4027 = vmatprep.mubr.f32.mxu0 0.0
      %4028 = vmatmul.mubr.f32.gmra.mxu0 %v3359
      %v4029 = vpop.f32.mrf.mxu0
      %v4030 = vadd.f32 %v3961, %v4029
      %v4031 = vpop.f32.mrf.mxu0
      %4032 = vdwg.mxu0
      %s4033 = scalar_lea.vmem %s43, %s3937
      %v4034 = vld [vmem:[%s4033] sm:$0xff]
      %v4035 = vld [vmem:[%s4033 + $0x8] sm:$0xff]
      %v4036 = vld [vmem:[%s4033 + $0x10] sm:$0xff]
      %v4037 = vld [vmem:[%s4033 + $0x18] sm:$0xff]
      %v4038 = vld [vmem:[%s4033 + $0x20] sm:$0xff]
      %v4039 = vld [vmem:[%s4033 + $0x28] sm:$0xff]
      %v4040 = vld [vmem:[%s4033 + $0x30] sm:$0xff]
      %v4041 = vld [vmem:[%s4033 + $0x38] sm:$0xff]
      %v4042 = vld [vmem:[%s4033 + $0x40] sm:$0xff]
      %v4043 = vld [vmem:[%s4033 + $0x48] sm:$0xff]
      %v4044 = vld [vmem:[%s4033 + $0x50] sm:$0xff]
      %v4045 = vld [vmem:[%s4033 + $0x58] sm:$0xff]
      %v4046 = vld [vmem:[%s4033 + $0x60] sm:$0xff]
      %v4047 = vld [vmem:[%s4033 + $0x68] sm:$0xff]
      %v4048 = vld [vmem:[%s4033 + $0x70] sm:$0xff]
      %v4049 = vld [vmem:[%s4033 + $0x78] sm:$0xff]
      %s4050 = scalar_lea.vmem %s45, %s3931
      %v4051 = vld [vmem:[%s4050] sm:$0x1]
      %v4053 = vlaneseq
      %v4054 = vshrl.u32 %v4053, 7
      %v4055 = vsub.s32 0, %v4054
      %v4056 = vrot.slane %v4051, %v4055
      %4058 = vmatprep.subr.mxu0 0.0
      %4059 = vmatpush1.msra.mxu0 %v4049
      %4060 = vmatprep.subr.mxu0 0.0
      %4061 = vmatpush1.msra.mxu0 %v4048
      %4062 = vmatprep.subr.mxu0 0.0
      %4063 = vmatpush1.msra.mxu0 %v4047
      %4064 = vmatprep.subr.mxu0 0.0
      %4065 = vmatpush1.msra.mxu0 %v4046
      %4066 = vmatprep.subr.mxu0 0.0
      %4067 = vmatpush1.msra.mxu0 %v4045
      %4068 = vmatprep.subr.mxu0 0.0
      %4069 = vmatpush1.msra.mxu0 %v4044
      %4070 = vmatprep.subr.mxu0 0.0
      %4071 = vmatpush1.msra.mxu0 %v4043
      %4072 = vmatprep.subr.mxu0 0.0
      %4073 = vmatpush1.msra.mxu0 %v4042
      %4074 = vmatprep.subr.mxu0 0.0
      %4075 = vmatpush1.msra.mxu0 %v4041
      %4076 = vmatprep.subr.mxu0 0.0
      %4077 = vmatpush1.msra.mxu0 %v4040
      %4078 = vmatprep.subr.mxu0 0.0
      %4079 = vmatpush1.msra.mxu0 %v4039
      %4080 = vmatprep.subr.mxu0 0.0
      %4081 = vmatpush1.msra.mxu0 %v4038
      %4082 = vmatprep.subr.mxu0 0.0
      %4083 = vmatpush1.msra.mxu0 %v4037
      %4084 = vmatprep.subr.mxu0 0.0
      %4085 = vmatpush1.msra.mxu0 %v4036
      %4086 = vmatprep.subr.mxu0 0.0
      %4087 = vmatpush1.msra.mxu0 %v4035
      %4088 = vmatprep.subr.mxu0 0.0
      %4089 = vmatpush1.msra.mxu0 %v4034
      %4090 = vmatprep.subr.mxu0 0.0
      %4091 = vmatpush2.msra.mxu0 0.0
      %4092 = vmatprep.subr.mxu0 0.0
      %4093 = vmatpush2.msra.mxu0 0.0
      %4094 = vmatprep.subr.mxu0 0.0
      %4095 = vmatpush2.msra.mxu0 0.0
      %4096 = vmatprep.subr.mxu0 0.0
      %4097 = vmatpush2.msra.mxu0 0.0
      %4098 = vmatprep.subr.mxu0 0.0
      %4099 = vmatpush2.msra.mxu0 0.0
      %4100 = vmatprep.subr.mxu0 0.0
      %4101 = vmatpush2.msra.mxu0 0.0
      %4102 = vmatprep.subr.mxu0 0.0
      %4103 = vmatpush2.msra.mxu0 0.0
      %4104 = vmatprep.subr.mxu0 0.0
      %4105 = vmatpush2.msra.mxu0 0.0
      %4106 = vmatprep.subr.mxu0 0.0
      %4107 = vmatpush2.msra.mxu0 0.0
      %4108 = vmatprep.subr.mxu0 0.0
      %4109 = vmatpush2.msra.mxu0 0.0
      %4110 = vmatprep.subr.mxu0 0.0
      %4111 = vmatpush2.msra.mxu0 0.0
      %4112 = vmatprep.subr.mxu0 0.0
      %4113 = vmatpush2.msra.mxu0 0.0
      %4114 = vmatprep.subr.mxu0 0.0
      %4115 = vmatpush2.msra.mxu0 0.0
      %4116 = vmatprep.subr.mxu0 0.0
      %4117 = vmatpush2.msra.mxu0 0.0
      %4118 = vmatprep.subr.mxu0 0.0
      %4119 = vmatpush2.msra.mxu0 0.0
      %4120 = vmatprep.subr.mxu0 0.0
      %4121 = vmatpush2.msra.mxu0 0.0
      %4122 = vmatprep.mubr.f32.mxu0 0.0
      %4123 = vmatmul.mubr.f32.gmra.mxu0 %v3359
      %v4124 = vpop.f32.mrf.mxu0
      %v4125 = vadd.f32 %v4056, %v4124
      %v4126 = vpop.f32.mrf.mxu0
      %4127 = vdwg.mxu0
      %s4128 = scalar_lea.vmem %s47, %s3937
      %v4129 = vld [vmem:[%s4128] sm:$0xff]
      %v4130 = vld [vmem:[%s4128 + $0x8] sm:$0xff]
      %v4131 = vld [vmem:[%s4128 + $0x10] sm:$0xff]
      %v4132 = vld [vmem:[%s4128 + $0x18] sm:$0xff]
      %v4133 = vld [vmem:[%s4128 + $0x20] sm:$0xff]
      %v4134 = vld [vmem:[%s4128 + $0x28] sm:$0xff]
      %v4135 = vld [vmem:[%s4128 + $0x30] sm:$0xff]
      %v4136 = vld [vmem:[%s4128 + $0x38] sm:$0xff]
      %v4137 = vld [vmem:[%s4128 + $0x40] sm:$0xff]
      %v4138 = vld [vmem:[%s4128 + $0x48] sm:$0xff]
      %v4139 = vld [vmem:[%s4128 + $0x50] sm:$0xff]
      %v4140 = vld [vmem:[%s4128 + $0x58] sm:$0xff]
      %v4141 = vld [vmem:[%s4128 + $0x60] sm:$0xff]
      %v4142 = vld [vmem:[%s4128 + $0x68] sm:$0xff]
      %v4143 = vld [vmem:[%s4128 + $0x70] sm:$0xff]
      %v4144 = vld [vmem:[%s4128 + $0x78] sm:$0xff]
      %s4145 = scalar_lea.vmem %s49, %s3931
      %v4146 = vld [vmem:[%s4145] sm:$0x1]
      %v4148 = vlaneseq
      %v4149 = vshrl.u32 %v4148, 7
      %v4150 = vsub.s32 0, %v4149
      %v4151 = vrot.slane %v4146, %v4150
      %4153 = vmatprep.subr.mxu0 0.0
      %4154 = vmatpush1.msra.mxu0 %v4144
      %4155 = vmatprep.subr.mxu0 0.0
      %4156 = vmatpush1.msra.mxu0 %v4143
      %4157 = vmatprep.subr.mxu0 0.0
      %4158 = vmatpush1.msra.mxu0 %v4142
      %4159 = vmatprep.subr.mxu0 0.0
      %4160 = vmatpush1.msra.mxu0 %v4141
      %4161 = vmatprep.subr.mxu0 0.0
      %4162 = vmatpush1.msra.mxu0 %v4140
      %4163 = vmatprep.subr.mxu0 0.0
      %4164 = vmatpush1.msra.mxu0 %v4139
      %4165 = vmatprep.subr.mxu0 0.0
      %4166 = vmatpush1.msra.mxu0 %v4138
      %4167 = vmatprep.subr.mxu0 0.0
      %4168 = vmatpush1.msra.mxu0 %v4137
      %4169 = vmatprep.subr.mxu0 0.0
      %4170 = vmatpush1.msra.mxu0 %v4136
      %4171 = vmatprep.subr.mxu0 0.0
      %4172 = vmatpush1.msra.mxu0 %v4135
      %4173 = vmatprep.subr.mxu0 0.0
      %4174 = vmatpush1.msra.mxu0 %v4134
      %4175 = vmatprep.subr.mxu0 0.0
      %4176 = vmatpush1.msra.mxu0 %v4133
      %4177 = vmatprep.subr.mxu0 0.0
      %4178 = vmatpush1.msra.mxu0 %v4132
      %4179 = vmatprep.subr.mxu0 0.0
      %4180 = vmatpush1.msra.mxu0 %v4131
      %4181 = vmatprep.subr.mxu0 0.0
      %4182 = vmatpush1.msra.mxu0 %v4130
      %4183 = vmatprep.subr.mxu0 0.0
      %4184 = vmatpush1.msra.mxu0 %v4129
      %4185 = vmatprep.subr.mxu0 0.0
      %4186 = vmatpush2.msra.mxu0 0.0
      %4187 = vmatprep.subr.mxu0 0.0
      %4188 = vmatpush2.msra.mxu0 0.0
      %4189 = vmatprep.subr.mxu0 0.0
      %4190 = vmatpush2.msra.mxu0 0.0
      %4191 = vmatprep.subr.mxu0 0.0
      %4192 = vmatpush2.msra.mxu0 0.0
      %4193 = vmatprep.subr.mxu0 0.0
      %4194 = vmatpush2.msra.mxu0 0.0
      %4195 = vmatprep.subr.mxu0 0.0
      %4196 = vmatpush2.msra.mxu0 0.0
      %4197 = vmatprep.subr.mxu0 0.0
      %4198 = vmatpush2.msra.mxu0 0.0
      %4199 = vmatprep.subr.mxu0 0.0
      %4200 = vmatpush2.msra.mxu0 0.0
      %4201 = vmatprep.subr.mxu0 0.0
      %4202 = vmatpush2.msra.mxu0 0.0
      %4203 = vmatprep.subr.mxu0 0.0
      %4204 = vmatpush2.msra.mxu0 0.0
      %4205 = vmatprep.subr.mxu0 0.0
      %4206 = vmatpush2.msra.mxu0 0.0
      %4207 = vmatprep.subr.mxu0 0.0
      %4208 = vmatpush2.msra.mxu0 0.0
      %4209 = vmatprep.subr.mxu0 0.0
      %4210 = vmatpush2.msra.mxu0 0.0
      %4211 = vmatprep.subr.mxu0 0.0
      %4212 = vmatpush2.msra.mxu0 0.0
      %4213 = vmatprep.subr.mxu0 0.0
      %4214 = vmatpush2.msra.mxu0 0.0
      %4215 = vmatprep.subr.mxu0 0.0
      %4216 = vmatpush2.msra.mxu0 0.0
      %4217 = vmatprep.mubr.f32.mxu0 0.0
      %4218 = vmatmul.mubr.f32.gmra.mxu0 %v3359
      %v4219 = vpop.f32.mrf.mxu0
      %v4220 = vadd.f32 %v4151, %v4219
      %v4221 = vpop.f32.mrf.mxu0
      %4222 = vdwg.mxu0
      %vm4223 = vcmask 130048
      %v4225 = vsel %vm4223, %v4030, 0
      %v4228 = vsel %vm4223, %v4125, 0
      %4230 = vmatprep.subr.mxu0 0.0
      %4231 = vmatpush1.xpose.msra.mxu0 0.0
      %4232 = vmatprep.subr.mxu0 0.0
      %4233 = vmatpush1.xpose.msra.mxu0 0.0
      %4234 = vmatprep.subr.mxu0 0.0
      %4235 = vmatpush1.xpose.msra.mxu0 0.0
      %4236 = vmatprep.subr.mxu0 0.0
      %4237 = vmatpush1.xpose.msra.mxu0 0.0
      %4238 = vmatprep.subr.mxu0 0.0
      %4239 = vmatpush1.xpose.msra.mxu0 0.0
      %4240 = vmatprep.subr.mxu0 0.0
      %4241 = vmatpush1.xpose.msra.mxu0 0.0
      %4242 = vmatprep.subr.mxu0 0.0
      %4243 = vmatpush1.xpose.msra.mxu0 0.0
      %4244 = vmatprep.subr.mxu0 0.0
      %4245 = vmatpush1.xpose.msra.mxu0 0.0
      %4246 = vmatprep.subr.mxu0 0.0
      %4247 = vmatpush1.xpose.msra.mxu0 0.0
      %4248 = vmatprep.subr.mxu0 0.0
      %4249 = vmatpush1.xpose.msra.mxu0 0.0
      %4250 = vmatprep.subr.mxu0 0.0
      %4251 = vmatpush1.xpose.msra.mxu0 0.0
      %4252 = vmatprep.subr.mxu0 0.0
      %4253 = vmatpush1.xpose.msra.mxu0 0.0
      %4254 = vmatprep.subr.mxu0 0.0
      %4255 = vmatpush1.xpose.msra.mxu0 0.0
      %4256 = vmatprep.subr.mxu0 0.0
      %4257 = vmatpush1.xpose.msra.mxu0 0.0
      %4258 = vmatprep.subr.mxu0 0.0
      %4259 = vmatpush1.xpose.msra.mxu0 0.0
      %4260 = vmatprep.subr.mxu0 0.0
      %4261 = vmatpush1.xpose.msra.mxu0 %v4228
      %4262 = vmatprep.subr.mxu0 0.0
      %4263 = vmatpush2.xpose.msra.mxu0 0.0
      %4264 = vmatprep.subr.mxu0 0.0
      %4265 = vmatpush2.xpose.msra.mxu0 0.0
      %4266 = vmatprep.subr.mxu0 0.0
      %4267 = vmatpush2.xpose.msra.mxu0 0.0
      %4268 = vmatprep.subr.mxu0 0.0
      %4269 = vmatpush2.xpose.msra.mxu0 0.0
      %4270 = vmatprep.subr.mxu0 0.0
      %4271 = vmatpush2.xpose.msra.mxu0 0.0
      %4272 = vmatprep.subr.mxu0 0.0
      %4273 = vmatpush2.xpose.msra.mxu0 0.0
      %4274 = vmatprep.subr.mxu0 0.0
      %4275 = vmatpush2.xpose.msra.mxu0 0.0
      %4276 = vmatprep.subr.mxu0 0.0
      %4277 = vmatpush2.xpose.msra.mxu0 0.0
      %4278 = vmatprep.subr.mxu0 0.0
      %4279 = vmatpush2.xpose.msra.mxu0 0.0
      %4280 = vmatprep.subr.mxu0 0.0
      %4281 = vmatpush2.xpose.msra.mxu0 0.0
      %4282 = vmatprep.subr.mxu0 0.0
      %4283 = vmatpush2.xpose.msra.mxu0 0.0
      %4284 = vmatprep.subr.mxu0 0.0
      %4285 = vmatpush2.xpose.msra.mxu0 0.0
      %4286 = vmatprep.subr.mxu0 0.0
      %4287 = vmatpush2.xpose.msra.mxu0 0.0
      %4288 = vmatprep.subr.mxu0 0.0
      %4289 = vmatpush2.xpose.msra.mxu0 0.0
      %4290 = vmatprep.subr.mxu0 0.0
      %4291 = vmatpush2.xpose.msra.mxu0 0.0
      %4292 = vmatprep.subr.mxu0 0.0
      %4293 = vmatpush2.xpose.msra.mxu0 0.0
      %4294 = vmatprep.mubr.f32.mxu0 0.0
      %4295 = vmatmul.mubr.f32.gmra.mxu0 %v4225
      %v4296 = vpop.f32.mrf.mxu0
      %v4297 = vadd.f32 0.0, %v4296
      %v4298 = vpop.f32.mrf.mxu0
      %4299 = vdwg.mxu0
      %v4300 = vmul.f32 %v4297, 0.25
      %vm4301 = vcmask 64512
      %v4302 = vsel %vm4301, %v4300, -inf
      %4303 = vmax.xlane.f32.xlu0 %v4302
      %v4304 = vpop.xlane.xlu0 %4303
      %v4305 = vsub.f32 %v4300, %v4304
      %v4306 = vmul.f32 %v4305, 1.442695
      %v4307 = vpow.pop %v4306
      %v4308 = vsel %vm4301, %v4307, 0.0
      %4309 = vadd.xlane.f32.xlu0 %v4308
      %v4310 = vpop.xlane.xlu0 %4309
      %v4311 = vrcp.pop %v4310
      %v4312 = vmul.f32 %v4307, %v4311
      %v4314 = vsel %vm4301, %v4312, 0
      %4316 = vmatprep.subr.mxu0 0.0
      %4317 = vmatpush1.msra.mxu0 0.0
      %4318 = vmatprep.subr.mxu0 0.0
      %4319 = vmatpush1.msra.mxu0 0.0
      %4320 = vmatprep.subr.mxu0 0.0
      %4321 = vmatpush1.msra.mxu0 0.0
      %4322 = vmatprep.subr.mxu0 0.0
      %4323 = vmatpush1.msra.mxu0 0.0
      %4324 = vmatprep.subr.mxu0 0.0
      %4325 = vmatpush1.msra.mxu0 0.0
      %4326 = vmatprep.subr.mxu0 0.0
      %4327 = vmatpush1.msra.mxu0 0.0
      %4328 = vmatprep.subr.mxu0 0.0
      %4329 = vmatpush1.msra.mxu0 0.0
      %4330 = vmatprep.subr.mxu0 0.0
      %4331 = vmatpush1.msra.mxu0 0.0
      %4332 = vmatprep.subr.mxu0 0.0
      %4333 = vmatpush1.msra.mxu0 0.0
      %4334 = vmatprep.subr.mxu0 0.0
      %4335 = vmatpush1.msra.mxu0 0.0
      %4336 = vmatprep.subr.mxu0 0.0
      %4337 = vmatpush1.msra.mxu0 0.0
      %4338 = vmatprep.subr.mxu0 0.0
      %4339 = vmatpush1.msra.mxu0 0.0
      %4340 = vmatprep.subr.mxu0 0.0
      %4341 = vmatpush1.msra.mxu0 0.0
      %4342 = vmatprep.subr.mxu0 0.0
      %4343 = vmatpush1.msra.mxu0 0.0
      %4344 = vmatprep.subr.mxu0 0.0
      %4345 = vmatpush1.msra.mxu0 0.0
      %4346 = vmatprep.subr.mxu0 0.0
      %4347 = vmatpush1.msra.mxu0 %v4220
      %4348 = vmatprep.subr.mxu0 0.0
      %4349 = vmatpush2.msra.mxu0 0.0
      %4350 = vmatprep.subr.mxu0 0.0
      %4351 = vmatpush2.msra.mxu0 0.0
      %4352 = vmatprep.subr.mxu0 0.0
      %4353 = vmatpush2.msra.mxu0 0.0
      %4354 = vmatprep.subr.mxu0 0.0
      %4355 = vmatpush2.msra.mxu0 0.0
      %4356 = vmatprep.subr.mxu0 0.0
      %4357 = vmatpush2.msra.mxu0 0.0
      %4358 = vmatprep.subr.mxu0 0.0
      %4359 = vmatpush2.msra.mxu0 0.0
      %4360 = vmatprep.subr.mxu0 0.0
      %4361 = vmatpush2.msra.mxu0 0.0
      %4362 = vmatprep.subr.mxu0 0.0
      %4363 = vmatpush2.msra.mxu0 0.0
      %4364 = vmatprep.subr.mxu0 0.0
      %4365 = vmatpush2.msra.mxu0 0.0
      %4366 = vmatprep.subr.mxu0 0.0
      %4367 = vmatpush2.msra.mxu0 0.0
      %4368 = vmatprep.subr.mxu0 0.0
      %4369 = vmatpush2.msra.mxu0 0.0
      %4370 = vmatprep.subr.mxu0 0.0
      %4371 = vmatpush2.msra.mxu0 0.0
      %4372 = vmatprep.subr.mxu0 0.0
      %4373 = vmatpush2.msra.mxu0 0.0
      %4374 = vmatprep.subr.mxu0 0.0
      %4375 = vmatpush2.msra.mxu0 0.0
      %4376 = vmatprep.subr.mxu0 0.0
      %4377 = vmatpush2.msra.mxu0 0.0
      %4378 = vmatprep.subr.mxu0 0.0
      %4379 = vmatpush2.msra.mxu0 0.0
      %4380 = vmatprep.mubr.f32.mxu0 0.0
      %4381 = vmatmul.mubr.f32.gmra.mxu0 %v4314
      %v4382 = vpop.f32.mrf.mxu0
      %v4383 = vadd.f32 0.0, %v4382
      %v4384 = vpop.f32.mrf.mxu0
      %4385 = vdwg.mxu0
      %s4386 = smul.u32 %s3931, 16
      %s4387 = scalar_lea.vmem %s51, %s4386
      %v4388 = vld [vmem:[%s4387] sm:$0xff]
      %v4389 = vld [vmem:[%s4387 + $0x8] sm:$0xff]
      %v4391 = vsel %vm4223, %v4383, 0
      %4393 = vmatprep.subr.mxu0 0.0
      %4394 = vmatpush1.msra.mxu0 0.0
      %4395 = vmatprep.subr.mxu0 0.0
      %4396 = vmatpush1.msra.mxu0 0.0
      %4397 = vmatprep.subr.mxu0 0.0
      %4398 = vmatpush1.msra.mxu0 0.0
      %4399 = vmatprep.subr.mxu0 0.0
      %4400 = vmatpush1.msra.mxu0 0.0
      %4401 = vmatprep.subr.mxu0 0.0
      %4402 = vmatpush1.msra.mxu0 0.0
      %4403 = vmatprep.subr.mxu0 0.0
      %4404 = vmatpush1.msra.mxu0 0.0
      %4405 = vmatprep.subr.mxu0 0.0
      %4406 = vmatpush1.msra.mxu0 0.0
      %4407 = vmatprep.subr.mxu0 0.0
      %4408 = vmatpush1.msra.mxu0 0.0
      %4409 = vmatprep.subr.mxu0 0.0
      %4410 = vmatpush1.msra.mxu0 0.0
      %4411 = vmatprep.subr.mxu0 0.0
      %4412 = vmatpush1.msra.mxu0 0.0
      %4413 = vmatprep.subr.mxu0 0.0
      %4414 = vmatpush1.msra.mxu0 0.0
      %4415 = vmatprep.subr.mxu0 0.0
      %4416 = vmatpush1.msra.mxu0 0.0
      %4417 = vmatprep.subr.mxu0 0.0
      %4418 = vmatpush1.msra.mxu0 0.0
      %4419 = vmatprep.subr.mxu0 0.0
      %4420 = vmatpush1.msra.mxu0 0.0
      %4421 = vmatprep.subr.mxu0 0.0
      %4422 = vmatpush1.msra.mxu0 %v4389
      %4423 = vmatprep.subr.mxu0 0.0
      %4424 = vmatpush1.msra.mxu0 %v4388
      %4425 = vmatprep.subr.mxu0 0.0
      %4426 = vmatpush2.msra.mxu0 0.0
      %4427 = vmatprep.subr.mxu0 0.0
      %4428 = vmatpush2.msra.mxu0 0.0
      %4429 = vmatprep.subr.mxu0 0.0
      %4430 = vmatpush2.msra.mxu0 0.0
      %4431 = vmatprep.subr.mxu0 0.0
      %4432 = vmatpush2.msra.mxu0 0.0
      %4433 = vmatprep.subr.mxu0 0.0
      %4434 = vmatpush2.msra.mxu0 0.0
      %4435 = vmatprep.subr.mxu0 0.0
      %4436 = vmatpush2.msra.mxu0 0.0
      %4437 = vmatprep.subr.mxu0 0.0
      %4438 = vmatpush2.msra.mxu0 0.0
      %4439 = vmatprep.subr.mxu0 0.0
      %4440 = vmatpush2.msra.mxu0 0.0
      %4441 = vmatprep.subr.mxu0 0.0
      %4442 = vmatpush2.msra.mxu0 0.0
      %4443 = vmatprep.subr.mxu0 0.0
      %4444 = vmatpush2.msra.mxu0 0.0
      %4445 = vmatprep.subr.mxu0 0.0
      %4446 = vmatpush2.msra.mxu0 0.0
      %4447 = vmatprep.subr.mxu0 0.0
      %4448 = vmatpush2.msra.mxu0 0.0
      %4449 = vmatprep.subr.mxu0 0.0
      %4450 = vmatpush2.msra.mxu0 0.0
      %4451 = vmatprep.subr.mxu0 0.0
      %4452 = vmatpush2.msra.mxu0 0.0
      %4453 = vmatprep.subr.mxu0 0.0
      %4454 = vmatpush2.msra.mxu0 0.0
      %4455 = vmatprep.subr.mxu0 0.0
      %4456 = vmatpush2.msra.mxu0 0.0
      %4457 = vmatprep.mubr.f32.mxu0 0.0
      %4458 = vmatmul.mubr.f32.gmra.mxu0 %v4391
      %v4459 = vpop.f32.mrf.mxu0
      %v4460 = vadd.f32 0.0, %v4459
      %v4461 = vpop.f32.mrf.mxu0
      %4462 = vdwg.mxu0
      %v4463 = vadd.f32 %v3936, %v4460
    $region255: #{transformer_forward.1} parent=1 // loop_footer
      %s3935 = sadd.s32 1, %s3931
    $region256: #{transformer_forward.1} parent=1 // loop_footer_branch
      %3930 = sbr.rel target = $region252
    $region257: #{transformer_forward.1} parent=1 // loop_exit
      _
    %v4464 = vadd.f32 %v3359, %v3936
    %v4465 = vadd.f32 %v4464, %v3900
    %4466 = vadd.xlane.f32.xlu0 %v4465
    %v4467 = vpop.xlane.xlu0 %4466
    %v4468 = vmul.f32 %v4467, %v894
    %v4469 = vsub.f32 %v4465, %v4468
    %v4470 = vmul.f32 %v4469, %v4469
    %4471 = vadd.xlane.f32.xlu0 %v4470
    %v4472 = vpop.xlane.xlu0 %4471
    %v4473 = vmul.f32 %v4472, %v894
    %v4474 = vadd.f32 %v4473, 1e-05
    %v4475 = vrsqrt.pop %v4474
    %v4476 = vmul.f32 %v4469, %v4475
    %v4477 = vmul.f32 %v4476, %v3920
    %v4478 = vadd.f32 %v4477, %v3927
    %v4479 = vld [vmem:[%s59] sm:$0xff]
    %v4480 = vld [vmem:[%s59 + $0x8] sm:$0xff]
    %v4481 = vld [vmem:[%s59 + $0x10] sm:$0xff]
    %v4482 = vld [vmem:[%s59 + $0x18] sm:$0xff]
    %v4483 = vld [vmem:[%s59 + $0x20] sm:$0xff]
    %v4484 = vld [vmem:[%s59 + $0x28] sm:$0xff]
    %v4485 = vld [vmem:[%s59 + $0x30] sm:$0xff]
    %v4486 = vld [vmem:[%s59 + $0x38] sm:$0xff]
    %v4487 = vld [vmem:[%s59 + $0x40] sm:$0xff]
    %v4488 = vld [vmem:[%s59 + $0x48] sm:$0xff]
    %v4489 = vld [vmem:[%s59 + $0x50] sm:$0xff]
    %v4490 = vld [vmem:[%s59 + $0x58] sm:$0xff]
    %v4491 = vld [vmem:[%s59 + $0x60] sm:$0xff]
    %v4492 = vld [vmem:[%s59 + $0x68] sm:$0xff]
    %v4493 = vld [vmem:[%s59 + $0x70] sm:$0xff]
    %v4494 = vld [vmem:[%s59 + $0x78] sm:$0xff]
    %v4495 = vld [vmem:[%s59 + $0x80] sm:$0xff]
    %v4496 = vld [vmem:[%s59 + $0x88] sm:$0xff]
    %v4497 = vld [vmem:[%s59 + $0x90] sm:$0xff]
    %v4498 = vld [vmem:[%s59 + $0x98] sm:$0xff]
    %v4499 = vld [vmem:[%s59 + $0xa0] sm:$0xff]
    %v4500 = vld [vmem:[%s59 + $0xa8] sm:$0xff]
    %v4501 = vld [vmem:[%s59 + $0xb0] sm:$0xff]
    %v4502 = vld [vmem:[%s59 + $0xb8] sm:$0xff]
    %v4503 = vld [vmem:[%s59 + $0xc0] sm:$0xff]
    %v4504 = vld [vmem:[%s59 + $0xc8] sm:$0xff]
    %v4505 = vld [vmem:[%s59 + $0xd0] sm:$0xff]
    %v4506 = vld [vmem:[%s59 + $0xd8] sm:$0xff]
    %v4507 = vld [vmem:[%s59 + $0xe0] sm:$0xff]
    %v4508 = vld [vmem:[%s59 + $0xe8] sm:$0xff]
    %v4509 = vld [vmem:[%s59 + $0xf0] sm:$0xff]
    %v4510 = vld [vmem:[%s59 + $0xf8] sm:$0xff]
    %v4511 = vld [vmem:[%s59 + $0x100] sm:$0xff]
    %v4512 = vld [vmem:[%s59 + $0x108] sm:$0xff]
    %v4513 = vld [vmem:[%s59 + $0x110] sm:$0xff]
    %v4514 = vld [vmem:[%s59 + $0x118] sm:$0xff]
    %v4515 = vld [vmem:[%s59 + $0x120] sm:$0xff]
    %v4516 = vld [vmem:[%s59 + $0x128] sm:$0xff]
    %v4517 = vld [vmem:[%s59 + $0x130] sm:$0xff]
    %v4518 = vld [vmem:[%s59 + $0x138] sm:$0xff]
    %v4519 = vld [vmem:[%s59 + $0x140] sm:$0xff]
    %v4520 = vld [vmem:[%s59 + $0x148] sm:$0xff]
    %v4521 = vld [vmem:[%s59 + $0x150] sm:$0xff]
    %v4522 = vld [vmem:[%s59 + $0x158] sm:$0xff]
    %v4523 = vld [vmem:[%s59 + $0x160] sm:$0xff]
    %v4524 = vld [vmem:[%s59 + $0x168] sm:$0xff]
    %v4525 = vld [vmem:[%s59 + $0x170] sm:$0xff]
    %v4526 = vld [vmem:[%s59 + $0x178] sm:$0xff]
    %v4527 = vld [vmem:[%s59 + $0x180] sm:$0xff]
    %v4528 = vld [vmem:[%s59 + $0x188] sm:$0xff]
    %v4529 = vld [vmem:[%s59 + $0x190] sm:$0xff]
    %v4530 = vld [vmem:[%s59 + $0x198] sm:$0xff]
    %v4531 = vld [vmem:[%s59 + $0x1a0] sm:$0xff]
    %v4532 = vld [vmem:[%s59 + $0x1a8] sm:$0xff]
    %v4533 = vld [vmem:[%s59 + $0x1b0] sm:$0xff]
    %v4534 = vld [vmem:[%s59 + $0x1b8] sm:$0xff]
    %v4535 = vld [vmem:[%s59 + $0x1c0] sm:$0xff]
    %v4536 = vld [vmem:[%s59 + $0x1c8] sm:$0xff]
    %v4537 = vld [vmem:[%s59 + $0x1d0] sm:$0xff]
    %v4538 = vld [vmem:[%s59 + $0x1d8] sm:$0xff]
    %v4539 = vld [vmem:[%s59 + $0x1e0] sm:$0xff]
    %v4540 = vld [vmem:[%s59 + $0x1e8] sm:$0xff]
    %v4541 = vld [vmem:[%s59 + $0x1f0] sm:$0xff]
    %v4542 = vld [vmem:[%s59 + $0x1f8] sm:$0xff]
    %v4543 = vld [vmem:[%s59 + $0x200] sm:$0xff]
    %v4544 = vld [vmem:[%s59 + $0x208] sm:$0xff]
    %v4545 = vld [vmem:[%s59 + $0x210] sm:$0xff]
    %v4546 = vld [vmem:[%s59 + $0x218] sm:$0xff]
    %v4547 = vld [vmem:[%s59 + $0x220] sm:$0xff]
    %v4548 = vld [vmem:[%s59 + $0x228] sm:$0xff]
    %v4549 = vld [vmem:[%s59 + $0x230] sm:$0xff]
    %v4550 = vld [vmem:[%s59 + $0x238] sm:$0xff]
    %v4551 = vld [vmem:[%s59 + $0x240] sm:$0xff]
    %v4552 = vld [vmem:[%s59 + $0x248] sm:$0xff]
    %v4553 = vld [vmem:[%s59 + $0x250] sm:$0xff]
    %v4554 = vld [vmem:[%s59 + $0x258] sm:$0xff]
    %v4555 = vld [vmem:[%s59 + $0x260] sm:$0xff]
    %v4556 = vld [vmem:[%s59 + $0x268] sm:$0xff]
    %v4557 = vld [vmem:[%s59 + $0x270] sm:$0xff]
    %v4558 = vld [vmem:[%s59 + $0x278] sm:$0xff]
    %v4559 = vld [vmem:[%s59 + $0x280] sm:$0xff]
    %v4560 = vld [vmem:[%s59 + $0x288] sm:$0xff]
    %v4561 = vld [vmem:[%s59 + $0x290] sm:$0xff]
    %v4562 = vld [vmem:[%s59 + $0x298] sm:$0xff]
    %v4563 = vld [vmem:[%s59 + $0x2a0] sm:$0xff]
    %v4564 = vld [vmem:[%s59 + $0x2a8] sm:$0xff]
    %v4565 = vld [vmem:[%s59 + $0x2b0] sm:$0xff]
    %v4566 = vld [vmem:[%s59 + $0x2b8] sm:$0xff]
    %v4567 = vld [vmem:[%s59 + $0x2c0] sm:$0xff]
    %v4568 = vld [vmem:[%s59 + $0x2c8] sm:$0xff]
    %v4569 = vld [vmem:[%s59 + $0x2d0] sm:$0xff]
    %v4570 = vld [vmem:[%s59 + $0x2d8] sm:$0xff]
    %v4571 = vld [vmem:[%s59 + $0x2e0] sm:$0xff]
    %v4572 = vld [vmem:[%s59 + $0x2e8] sm:$0xff]
    %v4573 = vld [vmem:[%s59 + $0x2f0] sm:$0xff]
    %v4574 = vld [vmem:[%s59 + $0x2f8] sm:$0xff]
    %v4575 = vld [vmem:[%s59 + $0x300] sm:$0xff]
    %v4576 = vld [vmem:[%s59 + $0x308] sm:$0xff]
    %v4577 = vld [vmem:[%s59 + $0x310] sm:$0xff]
    %v4578 = vld [vmem:[%s59 + $0x318] sm:$0xff]
    %v4579 = vld [vmem:[%s59 + $0x320] sm:$0xff]
    %v4580 = vld [vmem:[%s59 + $0x328] sm:$0xff]
    %v4581 = vld [vmem:[%s59 + $0x330] sm:$0xff]
    %v4582 = vld [vmem:[%s59 + $0x338] sm:$0xff]
    %v4583 = vld [vmem:[%s59 + $0x340] sm:$0xff]
    %v4584 = vld [vmem:[%s59 + $0x348] sm:$0xff]
    %v4585 = vld [vmem:[%s59 + $0x350] sm:$0xff]
    %v4586 = vld [vmem:[%s59 + $0x358] sm:$0xff]
    %v4587 = vld [vmem:[%s59 + $0x360] sm:$0xff]
    %v4588 = vld [vmem:[%s59 + $0x368] sm:$0xff]
    %v4589 = vld [vmem:[%s59 + $0x370] sm:$0xff]
    %v4590 = vld [vmem:[%s59 + $0x378] sm:$0xff]
    %v4591 = vld [vmem:[%s59 + $0x380] sm:$0xff]
    %v4592 = vld [vmem:[%s59 + $0x388] sm:$0xff]
    %v4593 = vld [vmem:[%s59 + $0x390] sm:$0xff]
    %v4594 = vld [vmem:[%s59 + $0x398] sm:$0xff]
    %v4595 = vld [vmem:[%s59 + $0x3a0] sm:$0xff]
    %v4596 = vld [vmem:[%s59 + $0x3a8] sm:$0xff]
    %v4597 = vld [vmem:[%s59 + $0x3b0] sm:$0xff]
    %v4598 = vld [vmem:[%s59 + $0x3b8] sm:$0xff]
    %v4599 = vld [vmem:[%s59 + $0x3c0] sm:$0xff]
    %v4600 = vld [vmem:[%s59 + $0x3c8] sm:$0xff]
    %v4601 = vld [vmem:[%s59 + $0x3d0] sm:$0xff]
    %v4602 = vld [vmem:[%s59 + $0x3d8] sm:$0xff]
    %v4603 = vld [vmem:[%s59 + $0x3e0] sm:$0xff]
    %v4604 = vld [vmem:[%s59 + $0x3e8] sm:$0xff]
    %v4605 = vld [vmem:[%s59 + $0x3f0] sm:$0xff]
    %v4606 = vld [vmem:[%s59 + $0x3f8] sm:$0xff]
    %v4607 = vld [vmem:[%s59 + $0x400] sm:$0xff]
    %v4608 = vld [vmem:[%s59 + $0x408] sm:$0xff]
    %v4609 = vld [vmem:[%s59 + $0x410] sm:$0xff]
    %v4610 = vld [vmem:[%s59 + $0x418] sm:$0xff]
    %v4611 = vld [vmem:[%s59 + $0x420] sm:$0xff]
    %v4612 = vld [vmem:[%s59 + $0x428] sm:$0xff]
    %v4613 = vld [vmem:[%s59 + $0x430] sm:$0xff]
    %v4614 = vld [vmem:[%s59 + $0x438] sm:$0xff]
    %v4615 = vld [vmem:[%s59 + $0x440] sm:$0xff]
    %v4616 = vld [vmem:[%s59 + $0x448] sm:$0xff]
    %v4617 = vld [vmem:[%s59 + $0x450] sm:$0xff]
    %v4618 = vld [vmem:[%s59 + $0x458] sm:$0xff]
    %v4619 = vld [vmem:[%s59 + $0x460] sm:$0xff]
    %v4620 = vld [vmem:[%s59 + $0x468] sm:$0xff]
    %v4621 = vld [vmem:[%s59 + $0x470] sm:$0xff]
    %v4622 = vld [vmem:[%s59 + $0x478] sm:$0xff]
    %v4623 = vld [vmem:[%s59 + $0x480] sm:$0xff]
    %v4624 = vld [vmem:[%s59 + $0x488] sm:$0xff]
    %v4625 = vld [vmem:[%s59 + $0x490] sm:$0xff]
    %v4626 = vld [vmem:[%s59 + $0x498] sm:$0xff]
    %v4627 = vld [vmem:[%s59 + $0x4a0] sm:$0xff]
    %v4628 = vld [vmem:[%s59 + $0x4a8] sm:$0xff]
    %v4629 = vld [vmem:[%s59 + $0x4b0] sm:$0xff]
    %v4630 = vld [vmem:[%s59 + $0x4b8] sm:$0xff]
    %v4631 = vld [vmem:[%s59 + $0x4c0] sm:$0xff]
    %v4632 = vld [vmem:[%s59 + $0x4c8] sm:$0xff]
    %v4633 = vld [vmem:[%s59 + $0x4d0] sm:$0xff]
    %v4634 = vld [vmem:[%s59 + $0x4d8] sm:$0xff]
    %v4635 = vld [vmem:[%s59 + $0x4e0] sm:$0xff]
    %v4636 = vld [vmem:[%s59 + $0x4e8] sm:$0xff]
    %v4637 = vld [vmem:[%s59 + $0x4f0] sm:$0xff]
    %v4638 = vld [vmem:[%s59 + $0x4f8] sm:$0xff]
    %v4639 = vld [vmem:[%s59 + $0x500] sm:$0xff]
    %v4640 = vld [vmem:[%s59 + $0x508] sm:$0xff]
    %v4641 = vld [vmem:[%s59 + $0x510] sm:$0xff]
    %v4642 = vld [vmem:[%s59 + $0x518] sm:$0xff]
    %v4643 = vld [vmem:[%s59 + $0x520] sm:$0xff]
    %v4644 = vld [vmem:[%s59 + $0x528] sm:$0xff]
    %v4645 = vld [vmem:[%s59 + $0x530] sm:$0xff]
    %v4646 = vld [vmem:[%s59 + $0x538] sm:$0xff]
    %v4647 = vld [vmem:[%s59 + $0x540] sm:$0xff]
    %v4648 = vld [vmem:[%s59 + $0x548] sm:$0xff]
    %v4649 = vld [vmem:[%s59 + $0x550] sm:$0xff]
    %v4650 = vld [vmem:[%s59 + $0x558] sm:$0xff]
    %v4651 = vld [vmem:[%s59 + $0x560] sm:$0xff]
    %v4652 = vld [vmem:[%s59 + $0x568] sm:$0xff]
    %v4653 = vld [vmem:[%s59 + $0x570] sm:$0xff]
    %v4654 = vld [vmem:[%s59 + $0x578] sm:$0xff]
    %v4655 = vld [vmem:[%s59 + $0x580] sm:$0xff]
    %v4656 = vld [vmem:[%s59 + $0x588] sm:$0xff]
    %v4657 = vld [vmem:[%s59 + $0x590] sm:$0xff]
    %v4658 = vld [vmem:[%s59 + $0x598] sm:$0xff]
    %v4659 = vld [vmem:[%s59 + $0x5a0] sm:$0xff]
    %v4660 = vld [vmem:[%s59 + $0x5a8] sm:$0xff]
    %v4661 = vld [vmem:[%s59 + $0x5b0] sm:$0xff]
    %v4662 = vld [vmem:[%s59 + $0x5b8] sm:$0xff]
    %v4663 = vld [vmem:[%s59 + $0x5c0] sm:$0xff]
    %v4664 = vld [vmem:[%s59 + $0x5c8] sm:$0xff]
    %v4665 = vld [vmem:[%s59 + $0x5d0] sm:$0xff]
    %v4666 = vld [vmem:[%s59 + $0x5d8] sm:$0xff]
    %v4667 = vld [vmem:[%s59 + $0x5e0] sm:$0xff]
    %v4668 = vld [vmem:[%s59 + $0x5e8] sm:$0xff]
    %v4669 = vld [vmem:[%s59 + $0x5f0] sm:$0xff]
    %v4670 = vld [vmem:[%s59 + $0x5f8] sm:$0xff]
    %v4671 = vld [vmem:[%s59 + $0x600] sm:$0xff]
    %v4672 = vld [vmem:[%s59 + $0x608] sm:$0xff]
    %v4673 = vld [vmem:[%s59 + $0x610] sm:$0xff]
    %v4674 = vld [vmem:[%s59 + $0x618] sm:$0xff]
    %v4675 = vld [vmem:[%s59 + $0x620] sm:$0xff]
    %v4676 = vld [vmem:[%s59 + $0x628] sm:$0xff]
    %v4677 = vld [vmem:[%s59 + $0x630] sm:$0xff]
    %v4678 = vld [vmem:[%s59 + $0x638] sm:$0xff]
    %v4679 = vld [vmem:[%s59 + $0x640] sm:$0xff]
    %v4680 = vld [vmem:[%s59 + $0x648] sm:$0xff]
    %v4681 = vld [vmem:[%s59 + $0x650] sm:$0xff]
    %v4682 = vld [vmem:[%s59 + $0x658] sm:$0xff]
    %v4683 = vld [vmem:[%s59 + $0x660] sm:$0xff]
    %v4684 = vld [vmem:[%s59 + $0x668] sm:$0xff]
    %v4685 = vld [vmem:[%s59 + $0x670] sm:$0xff]
    %v4686 = vld [vmem:[%s59 + $0x678] sm:$0xff]
    %v4687 = vld [vmem:[%s59 + $0x680] sm:$0xff]
    %v4688 = vld [vmem:[%s59 + $0x688] sm:$0xff]
    %v4689 = vld [vmem:[%s59 + $0x690] sm:$0xff]
    %v4690 = vld [vmem:[%s59 + $0x698] sm:$0xff]
    %v4691 = vld [vmem:[%s59 + $0x6a0] sm:$0xff]
    %v4692 = vld [vmem:[%s59 + $0x6a8] sm:$0xff]
    %v4693 = vld [vmem:[%s59 + $0x6b0] sm:$0xff]
    %v4694 = vld [vmem:[%s59 + $0x6b8] sm:$0xff]
    %v4695 = vld [vmem:[%s59 + $0x6c0] sm:$0xff]
    %v4696 = vld [vmem:[%s59 + $0x6c8] sm:$0xff]
    %v4697 = vld [vmem:[%s59 + $0x6d0] sm:$0xff]
    %v4698 = vld [vmem:[%s59 + $0x6d8] sm:$0xff]
    %v4699 = vld [vmem:[%s59 + $0x6e0] sm:$0xff]
    %v4700 = vld [vmem:[%s59 + $0x6e8] sm:$0xff]
    %v4701 = vld [vmem:[%s59 + $0x6f0] sm:$0xff]
    %v4702 = vld [vmem:[%s59 + $0x6f8] sm:$0xff]
    %v4703 = vld [vmem:[%s59 + $0x700] sm:$0xff]
    %v4704 = vld [vmem:[%s59 + $0x708] sm:$0xff]
    %v4705 = vld [vmem:[%s59 + $0x710] sm:$0xff]
    %v4706 = vld [vmem:[%s59 + $0x718] sm:$0xff]
    %v4707 = vld [vmem:[%s59 + $0x720] sm:$0xff]
    %v4708 = vld [vmem:[%s59 + $0x728] sm:$0xff]
    %v4709 = vld [vmem:[%s59 + $0x730] sm:$0xff]
    %v4710 = vld [vmem:[%s59 + $0x738] sm:$0xff]
    %v4711 = vld [vmem:[%s59 + $0x740] sm:$0xff]
    %v4712 = vld [vmem:[%s59 + $0x748] sm:$0xff]
    %v4713 = vld [vmem:[%s59 + $0x750] sm:$0xff]
    %v4714 = vld [vmem:[%s59 + $0x758] sm:$0xff]
    %v4715 = vld [vmem:[%s59 + $0x760] sm:$0xff]
    %v4716 = vld [vmem:[%s59 + $0x768] sm:$0xff]
    %v4717 = vld [vmem:[%s59 + $0x770] sm:$0xff]
    %v4718 = vld [vmem:[%s59 + $0x778] sm:$0xff]
    %v4719 = vld [vmem:[%s59 + $0x780] sm:$0xff]
    %v4720 = vld [vmem:[%s59 + $0x788] sm:$0xff]
    %v4721 = vld [vmem:[%s59 + $0x790] sm:$0xff]
    %v4722 = vld [vmem:[%s59 + $0x798] sm:$0xff]
    %v4723 = vld [vmem:[%s59 + $0x7a0] sm:$0xff]
    %v4724 = vld [vmem:[%s59 + $0x7a8] sm:$0xff]
    %v4725 = vld [vmem:[%s59 + $0x7b0] sm:$0xff]
    %v4726 = vld [vmem:[%s59 + $0x7b8] sm:$0xff]
    %v4727 = vld [vmem:[%s59 + $0x7c0] sm:$0xff]
    %v4728 = vld [vmem:[%s59 + $0x7c8] sm:$0xff]
    %v4729 = vld [vmem:[%s59 + $0x7d0] sm:$0xff]
    %v4730 = vld [vmem:[%s59 + $0x7d8] sm:$0xff]
    %v4731 = vld [vmem:[%s59 + $0x7e0] sm:$0xff]
    %v4732 = vld [vmem:[%s59 + $0x7e8] sm:$0xff]
    %v4733 = vld [vmem:[%s59 + $0x7f0] sm:$0xff]
    %v4734 = vld [vmem:[%s59 + $0x7f8] sm:$0xff]
    %v4735 = vld [vmem:[%s61] sm:$0xff]
    %v4736 = vld [vmem:[%s61 + $0x8] sm:$0xff]
    %v4739 = vlaneseq
    %v4740 = vshrl.u32 %v4739, 7
    %v4741 = vsub.s32 0, %v4740
    %v4742 = vrot.slane %v4735, %v4741
    %v4743 = vlaneseq
    %v4744 = vshrl.u32 %v4743, 7
    %v4745 = vsub.s32 1, %v4744
    %v4746 = vrot.slane %v4735, %v4745
    %v4747 = vlaneseq
    %v4748 = vshrl.u32 %v4747, 7
    %v4749 = vsub.s32 2, %v4748
    %v4750 = vrot.slane %v4735, %v4749
    %v4751 = vlaneseq
    %v4752 = vshrl.u32 %v4751, 7
    %v4753 = vsub.s32 3, %v4752
    %v4754 = vrot.slane %v4735, %v4753
    %v4755 = vlaneseq
    %v4756 = vshrl.u32 %v4755, 7
    %v4757 = vsub.s32 4, %v4756
    %v4758 = vrot.slane %v4735, %v4757
    %v4759 = vlaneseq
    %v4760 = vshrl.u32 %v4759, 7
    %v4761 = vsub.s32 5, %v4760
    %v4762 = vrot.slane %v4735, %v4761
    %v4763 = vlaneseq
    %v4764 = vshrl.u32 %v4763, 7
    %v4765 = vsub.s32 6, %v4764
    %v4766 = vrot.slane %v4735, %v4765
    %v4767 = vlaneseq
    %v4768 = vshrl.u32 %v4767, 7
    %v4769 = vsub.s32 7, %v4768
    %v4770 = vrot.slane %v4735, %v4769
    %v4771 = vlaneseq
    %v4772 = vshrl.u32 %v4771, 7
    %v4773 = vsub.s32 0, %v4772
    %v4774 = vrot.slane %v4736, %v4773
    %v4775 = vlaneseq
    %v4776 = vshrl.u32 %v4775, 7
    %v4777 = vsub.s32 1, %v4776
    %v4778 = vrot.slane %v4736, %v4777
    %v4779 = vlaneseq
    %v4780 = vshrl.u32 %v4779, 7
    %v4781 = vsub.s32 2, %v4780
    %v4782 = vrot.slane %v4736, %v4781
    %v4783 = vlaneseq
    %v4784 = vshrl.u32 %v4783, 7
    %v4785 = vsub.s32 3, %v4784
    %v4786 = vrot.slane %v4736, %v4785
    %v4787 = vlaneseq
    %v4788 = vshrl.u32 %v4787, 7
    %v4789 = vsub.s32 4, %v4788
    %v4790 = vrot.slane %v4736, %v4789
    %v4791 = vlaneseq
    %v4792 = vshrl.u32 %v4791, 7
    %v4793 = vsub.s32 5, %v4792
    %v4794 = vrot.slane %v4736, %v4793
    %v4795 = vlaneseq
    %v4796 = vshrl.u32 %v4795, 7
    %v4797 = vsub.s32 6, %v4796
    %v4798 = vrot.slane %v4736, %v4797
    %v4799 = vlaneseq
    %v4800 = vshrl.u32 %v4799, 7
    %v4801 = vsub.s32 7, %v4800
    %v4802 = vrot.slane %v4736, %v4801
    %4819 = vmatprep.subr.mxu0 %v4720
    %4820 = vmatpush1.msra.mxu0 %v4719
    %4821 = vmatprep.subr.mxu0 %v4704
    %4822 = vmatpush1.msra.mxu0 %v4703
    %4823 = vmatprep.subr.mxu0 %v4688
    %4824 = vmatpush1.msra.mxu0 %v4687
    %4825 = vmatprep.subr.mxu0 %v4672
    %4826 = vmatpush1.msra.mxu0 %v4671
    %4827 = vmatprep.subr.mxu0 %v4656
    %4828 = vmatpush1.msra.mxu0 %v4655
    %4829 = vmatprep.subr.mxu0 %v4640
    %4830 = vmatpush1.msra.mxu0 %v4639
    %4831 = vmatprep.subr.mxu0 %v4624
    %4832 = vmatpush1.msra.mxu0 %v4623
    %4833 = vmatprep.subr.mxu0 %v4608
    %4834 = vmatpush1.msra.mxu0 %v4607
    %4835 = vmatprep.subr.mxu0 %v4592
    %4836 = vmatpush1.msra.mxu0 %v4591
    %4837 = vmatprep.subr.mxu0 %v4576
    %4838 = vmatpush1.msra.mxu0 %v4575
    %4839 = vmatprep.subr.mxu0 %v4560
    %4840 = vmatpush1.msra.mxu0 %v4559
    %4841 = vmatprep.subr.mxu0 %v4544
    %4842 = vmatpush1.msra.mxu0 %v4543
    %4843 = vmatprep.subr.mxu0 %v4528
    %4844 = vmatpush1.msra.mxu0 %v4527
    %4845 = vmatprep.subr.mxu0 %v4512
    %4846 = vmatpush1.msra.mxu0 %v4511
    %4847 = vmatprep.subr.mxu0 %v4496
    %4848 = vmatpush1.msra.mxu0 %v4495
    %4849 = vmatprep.subr.mxu0 %v4480
    %4850 = vmatpush1.msra.mxu0 %v4479
    %4851 = vmatprep.subr.mxu0 0.0
    %4852 = vmatpush2.msra.mxu0 0.0
    %4853 = vmatprep.subr.mxu0 0.0
    %4854 = vmatpush2.msra.mxu0 0.0
    %4855 = vmatprep.subr.mxu0 0.0
    %4856 = vmatpush2.msra.mxu0 0.0
    %4857 = vmatprep.subr.mxu0 0.0
    %4858 = vmatpush2.msra.mxu0 0.0
    %4859 = vmatprep.subr.mxu0 0.0
    %4860 = vmatpush2.msra.mxu0 0.0
    %4861 = vmatprep.subr.mxu0 0.0
    %4862 = vmatpush2.msra.mxu0 0.0
    %4863 = vmatprep.subr.mxu0 0.0
    %4864 = vmatpush2.msra.mxu0 0.0
    %4865 = vmatprep.subr.mxu0 0.0
    %4866 = vmatpush2.msra.mxu0 0.0
    %4867 = vmatprep.subr.mxu0 0.0
    %4868 = vmatpush2.msra.mxu0 0.0
    %4869 = vmatprep.subr.mxu0 0.0
    %4870 = vmatpush2.msra.mxu0 0.0
    %4871 = vmatprep.subr.mxu0 0.0
    %4872 = vmatpush2.msra.mxu0 0.0
    %4873 = vmatprep.subr.mxu0 0.0
    %4874 = vmatpush2.msra.mxu0 0.0
    %4875 = vmatprep.subr.mxu0 0.0
    %4876 = vmatpush2.msra.mxu0 0.0
    %4877 = vmatprep.subr.mxu0 0.0
    %4878 = vmatpush2.msra.mxu0 0.0
    %4879 = vmatprep.subr.mxu0 0.0
    %4880 = vmatpush2.msra.mxu0 0.0
    %4881 = vmatprep.subr.mxu0 0.0
    %4882 = vmatpush2.msra.mxu0 0.0
    %4883 = vmatprep.mubr.f32.mxu0 0.0
    %4884 = vmatmul.mubr.f32.gmra.mxu0 %v3929
    %v4885 = vpop.f32.mrf.mxu0
    %v4886 = vadd.f32 %v4742, %v4885
    %v4887 = vpop.f32.mrf.mxu0
    %v4888 = vadd.f32 %v4746, %v4887
    %4889 = vmatprep.mubr.f32.mxu0 0.0
    %4890 = vmatmul.mubr.f32.gmra.mxu0 %v4478
    %v4891 = vpop.f32.mrf.mxu0
    %v4892 = vadd.f32 %v4742, %v4891
    %v4893 = vpop.f32.mrf.mxu0
    %v4894 = vadd.f32 %v4746, %v4893
    %4895 = vdwg.mxu0
    %4896 = vmatprep.subr.mxu0 %v4722
    %4897 = vmatpush1.msra.mxu0 %v4721
    %4898 = vmatprep.subr.mxu0 %v4706
    %4899 = vmatpush1.msra.mxu0 %v4705
    %4900 = vmatprep.subr.mxu0 %v4690
    %4901 = vmatpush1.msra.mxu0 %v4689
    %4902 = vmatprep.subr.mxu0 %v4674
    %4903 = vmatpush1.msra.mxu0 %v4673
    %4904 = vmatprep.subr.mxu0 %v4658
    %4905 = vmatpush1.msra.mxu0 %v4657
    %4906 = vmatprep.subr.mxu0 %v4642
    %4907 = vmatpush1.msra.mxu0 %v4641
    %4908 = vmatprep.subr.mxu0 %v4626
    %4909 = vmatpush1.msra.mxu0 %v4625
    %4910 = vmatprep.subr.mxu0 %v4610
    %4911 = vmatpush1.msra.mxu0 %v4609
    %4912 = vmatprep.subr.mxu0 %v4594
    %4913 = vmatpush1.msra.mxu0 %v4593
    %4914 = vmatprep.subr.mxu0 %v4578
    %4915 = vmatpush1.msra.mxu0 %v4577
    %4916 = vmatprep.subr.mxu0 %v4562
    %4917 = vmatpush1.msra.mxu0 %v4561
    %4918 = vmatprep.subr.mxu0 %v4546
    %4919 = vmatpush1.msra.mxu0 %v4545
    %4920 = vmatprep.subr.mxu0 %v4530
    %4921 = vmatpush1.msra.mxu0 %v4529
    %4922 = vmatprep.subr.mxu0 %v4514
    %4923 = vmatpush1.msra.mxu0 %v4513
    %4924 = vmatprep.subr.mxu0 %v4498
    %4925 = vmatpush1.msra.mxu0 %v4497
    %4926 = vmatprep.subr.mxu0 %v4482
    %4927 = vmatpush1.msra.mxu0 %v4481
    %4928 = vmatprep.subr.mxu0 0.0
    %4929 = vmatpush2.msra.mxu0 0.0
    %4930 = vmatprep.subr.mxu0 0.0
    %4931 = vmatpush2.msra.mxu0 0.0
    %4932 = vmatprep.subr.mxu0 0.0
    %4933 = vmatpush2.msra.mxu0 0.0
    %4934 = vmatprep.subr.mxu0 0.0
    %4935 = vmatpush2.msra.mxu0 0.0
    %4936 = vmatprep.subr.mxu0 0.0
    %4937 = vmatpush2.msra.mxu0 0.0
    %4938 = vmatprep.subr.mxu0 0.0
    %4939 = vmatpush2.msra.mxu0 0.0
    %4940 = vmatprep.subr.mxu0 0.0
    %4941 = vmatpush2.msra.mxu0 0.0
    %4942 = vmatprep.subr.mxu0 0.0
    %4943 = vmatpush2.msra.mxu0 0.0
    %4944 = vmatprep.subr.mxu0 0.0
    %4945 = vmatpush2.msra.mxu0 0.0
    %4946 = vmatprep.subr.mxu0 0.0
    %4947 = vmatpush2.msra.mxu0 0.0
    %4948 = vmatprep.subr.mxu0 0.0
    %4949 = vmatpush2.msra.mxu0 0.0
    %4950 = vmatprep.subr.mxu0 0.0
    %4951 = vmatpush2.msra.mxu0 0.0
    %4952 = vmatprep.subr.mxu0 0.0
    %4953 = vmatpush2.msra.mxu0 0.0
    %4954 = vmatprep.subr.mxu0 0.0
    %4955 = vmatpush2.msra.mxu0 0.0
    %4956 = vmatprep.subr.mxu0 0.0
    %4957 = vmatpush2.msra.mxu0 0.0
    %4958 = vmatprep.subr.mxu0 0.0
    %4959 = vmatpush2.msra.mxu0 0.0
    %4960 = vmatprep.mubr.f32.mxu0 0.0
    %4961 = vmatmul.mubr.f32.gmra.mxu0 %v3929
    %v4962 = vpop.f32.mrf.mxu0
    %v4963 = vadd.f32 %v4750, %v4962
    %v4964 = vpop.f32.mrf.mxu0
    %v4965 = vadd.f32 %v4754, %v4964
    %4966 = vmatprep.mubr.f32.mxu0 0.0
    %4967 = vmatmul.mubr.f32.gmra.mxu0 %v4478
    %v4968 = vpop.f32.mrf.mxu0
    %v4969 = vadd.f32 %v4750, %v4968
    %v4970 = vpop.f32.mrf.mxu0
    %v4971 = vadd.f32 %v4754, %v4970
    %4972 = vdwg.mxu0
    %4973 = vmatprep.subr.mxu0 %v4724
    %4974 = vmatpush1.msra.mxu0 %v4723
    %4975 = vmatprep.subr.mxu0 %v4708
    %4976 = vmatpush1.msra.mxu0 %v4707
    %4977 = vmatprep.subr.mxu0 %v4692
    %4978 = vmatpush1.msra.mxu0 %v4691
    %4979 = vmatprep.subr.mxu0 %v4676
    %4980 = vmatpush1.msra.mxu0 %v4675
    %4981 = vmatprep.subr.mxu0 %v4660
    %4982 = vmatpush1.msra.mxu0 %v4659
    %4983 = vmatprep.subr.mxu0 %v4644
    %4984 = vmatpush1.msra.mxu0 %v4643
    %4985 = vmatprep.subr.mxu0 %v4628
    %4986 = vmatpush1.msra.mxu0 %v4627
    %4987 = vmatprep.subr.mxu0 %v4612
    %4988 = vmatpush1.msra.mxu0 %v4611
    %4989 = vmatprep.subr.mxu0 %v4596
    %4990 = vmatpush1.msra.mxu0 %v4595
    %4991 = vmatprep.subr.mxu0 %v4580
    %4992 = vmatpush1.msra.mxu0 %v4579
    %4993 = vmatprep.subr.mxu0 %v4564
    %4994 = vmatpush1.msra.mxu0 %v4563
    %4995 = vmatprep.subr.mxu0 %v4548
    %4996 = vmatpush1.msra.mxu0 %v4547
    %4997 = vmatprep.subr.mxu0 %v4532
    %4998 = vmatpush1.msra.mxu0 %v4531
    %4999 = vmatprep.subr.mxu0 %v4516
    %5000 = vmatpush1.msra.mxu0 %v4515
    %5001 = vmatprep.subr.mxu0 %v4500
    %5002 = vmatpush1.msra.mxu0 %v4499
    %5003 = vmatprep.subr.mxu0 %v4484
    %5004 = vmatpush1.msra.mxu0 %v4483
    %5005 = vmatprep.subr.mxu0 0.0
    %5006 = vmatpush2.msra.mxu0 0.0
    %5007 = vmatprep.subr.mxu0 0.0
    %5008 = vmatpush2.msra.mxu0 0.0
    %5009 = vmatprep.subr.mxu0 0.0
    %5010 = vmatpush2.msra.mxu0 0.0
    %5011 = vmatprep.subr.mxu0 0.0
    %5012 = vmatpush2.msra.mxu0 0.0
    %5013 = vmatprep.subr.mxu0 0.0
    %5014 = vmatpush2.msra.mxu0 0.0
    %5015 = vmatprep.subr.mxu0 0.0
    %5016 = vmatpush2.msra.mxu0 0.0
    %5017 = vmatprep.subr.mxu0 0.0
    %5018 = vmatpush2.msra.mxu0 0.0
    %5019 = vmatprep.subr.mxu0 0.0
    %5020 = vmatpush2.msra.mxu0 0.0
    %5021 = vmatprep.subr.mxu0 0.0
    %5022 = vmatpush2.msra.mxu0 0.0
    %5023 = vmatprep.subr.mxu0 0.0
    %5024 = vmatpush2.msra.mxu0 0.0
    %5025 = vmatprep.subr.mxu0 0.0
    %5026 = vmatpush2.msra.mxu0 0.0
    %5027 = vmatprep.subr.mxu0 0.0
    %5028 = vmatpush2.msra.mxu0 0.0
    %5029 = vmatprep.subr.mxu0 0.0
    %5030 = vmatpush2.msra.mxu0 0.0
    %5031 = vmatprep.subr.mxu0 0.0
    %5032 = vmatpush2.msra.mxu0 0.0
    %5033 = vmatprep.subr.mxu0 0.0
    %5034 = vmatpush2.msra.mxu0 0.0
    %5035 = vmatprep.subr.mxu0 0.0
    %5036 = vmatpush2.msra.mxu0 0.0
    %5037 = vmatprep.mubr.f32.mxu0 0.0
    %5038 = vmatmul.mubr.f32.gmra.mxu0 %v3929
    %v5039 = vpop.f32.mrf.mxu0
    %v5040 = vadd.f32 %v4758, %v5039
    %v5041 = vpop.f32.mrf.mxu0
    %v5042 = vadd.f32 %v4762, %v5041
    %5043 = vmatprep.mubr.f32.mxu0 0.0
    %5044 = vmatmul.mubr.f32.gmra.mxu0 %v4478
    %v5045 = vpop.f32.mrf.mxu0
    %v5046 = vadd.f32 %v4758, %v5045
    %v5047 = vpop.f32.mrf.mxu0
    %v5048 = vadd.f32 %v4762, %v5047
    %5049 = vdwg.mxu0
    %5050 = vmatprep.subr.mxu0 %v4726
    %5051 = vmatpush1.msra.mxu0 %v4725
    %5052 = vmatprep.subr.mxu0 %v4710
    %5053 = vmatpush1.msra.mxu0 %v4709
    %5054 = vmatprep.subr.mxu0 %v4694
    %5055 = vmatpush1.msra.mxu0 %v4693
    %5056 = vmatprep.subr.mxu0 %v4678
    %5057 = vmatpush1.msra.mxu0 %v4677
    %5058 = vmatprep.subr.mxu0 %v4662
    %5059 = vmatpush1.msra.mxu0 %v4661
    %5060 = vmatprep.subr.mxu0 %v4646
    %5061 = vmatpush1.msra.mxu0 %v4645
    %5062 = vmatprep.subr.mxu0 %v4630
    %5063 = vmatpush1.msra.mxu0 %v4629
    %5064 = vmatprep.subr.mxu0 %v4614
    %5065 = vmatpush1.msra.mxu0 %v4613
    %5066 = vmatprep.subr.mxu0 %v4598
    %5067 = vmatpush1.msra.mxu0 %v4597
    %5068 = vmatprep.subr.mxu0 %v4582
    %5069 = vmatpush1.msra.mxu0 %v4581
    %5070 = vmatprep.subr.mxu0 %v4566
    %5071 = vmatpush1.msra.mxu0 %v4565
    %5072 = vmatprep.subr.mxu0 %v4550
    %5073 = vmatpush1.msra.mxu0 %v4549
    %5074 = vmatprep.subr.mxu0 %v4534
    %5075 = vmatpush1.msra.mxu0 %v4533
    %5076 = vmatprep.subr.mxu0 %v4518
    %5077 = vmatpush1.msra.mxu0 %v4517
    %5078 = vmatprep.subr.mxu0 %v4502
    %5079 = vmatpush1.msra.mxu0 %v4501
    %5080 = vmatprep.subr.mxu0 %v4486
    %5081 = vmatpush1.msra.mxu0 %v4485
    %5082 = vmatprep.subr.mxu0 0.0
    %5083 = vmatpush2.msra.mxu0 0.0
    %5084 = vmatprep.subr.mxu0 0.0
    %5085 = vmatpush2.msra.mxu0 0.0
    %5086 = vmatprep.subr.mxu0 0.0
    %5087 = vmatpush2.msra.mxu0 0.0
    %5088 = vmatprep.subr.mxu0 0.0
    %5089 = vmatpush2.msra.mxu0 0.0
    %5090 = vmatprep.subr.mxu0 0.0
    %5091 = vmatpush2.msra.mxu0 0.0
    %5092 = vmatprep.subr.mxu0 0.0
    %5093 = vmatpush2.msra.mxu0 0.0
    %5094 = vmatprep.subr.mxu0 0.0
    %5095 = vmatpush2.msra.mxu0 0.0
    %5096 = vmatprep.subr.mxu0 0.0
    %5097 = vmatpush2.msra.mxu0 0.0
    %5098 = vmatprep.subr.mxu0 0.0
    %5099 = vmatpush2.msra.mxu0 0.0
    %5100 = vmatprep.subr.mxu0 0.0
    %5101 = vmatpush2.msra.mxu0 0.0
    %5102 = vmatprep.subr.mxu0 0.0
    %5103 = vmatpush2.msra.mxu0 0.0
    %5104 = vmatprep.subr.mxu0 0.0
    %5105 = vmatpush2.msra.mxu0 0.0
    %5106 = vmatprep.subr.mxu0 0.0
    %5107 = vmatpush2.msra.mxu0 0.0
    %5108 = vmatprep.subr.mxu0 0.0
    %5109 = vmatpush2.msra.mxu0 0.0
    %5110 = vmatprep.subr.mxu0 0.0
    %5111 = vmatpush2.msra.mxu0 0.0
    %5112 = vmatprep.subr.mxu0 0.0
    %5113 = vmatpush2.msra.mxu0 0.0
    %5114 = vmatprep.mubr.f32.mxu0 0.0
    %5115 = vmatmul.mubr.f32.gmra.mxu0 %v3929
    %v5116 = vpop.f32.mrf.mxu0
    %v5117 = vadd.f32 %v4766, %v5116
    %v5118 = vpop.f32.mrf.mxu0
    %v5119 = vadd.f32 %v4770, %v5118
    %5120 = vmatprep.mubr.f32.mxu0 0.0
    %5121 = vmatmul.mubr.f32.gmra.mxu0 %v4478
    %v5122 = vpop.f32.mrf.mxu0
    %v5123 = vadd.f32 %v4766, %v5122
    %v5124 = vpop.f32.mrf.mxu0
    %v5125 = vadd.f32 %v4770, %v5124
    %5126 = vdwg.mxu0
    %5127 = vmatprep.subr.mxu0 %v4728
    %5128 = vmatpush1.msra.mxu0 %v4727
    %5129 = vmatprep.subr.mxu0 %v4712
    %5130 = vmatpush1.msra.mxu0 %v4711
    %5131 = vmatprep.subr.mxu0 %v4696
    %5132 = vmatpush1.msra.mxu0 %v4695
    %5133 = vmatprep.subr.mxu0 %v4680
    %5134 = vmatpush1.msra.mxu0 %v4679
    %5135 = vmatprep.subr.mxu0 %v4664
    %5136 = vmatpush1.msra.mxu0 %v4663
    %5137 = vmatprep.subr.mxu0 %v4648
    %5138 = vmatpush1.msra.mxu0 %v4647
    %5139 = vmatprep.subr.mxu0 %v4632
    %5140 = vmatpush1.msra.mxu0 %v4631
    %5141 = vmatprep.subr.mxu0 %v4616
    %5142 = vmatpush1.msra.mxu0 %v4615
    %5143 = vmatprep.subr.mxu0 %v4600
    %5144 = vmatpush1.msra.mxu0 %v4599
    %5145 = vmatprep.subr.mxu0 %v4584
    %5146 = vmatpush1.msra.mxu0 %v4583
    %5147 = vmatprep.subr.mxu0 %v4568
    %5148 = vmatpush1.msra.mxu0 %v4567
    %5149 = vmatprep.subr.mxu0 %v4552
    %5150 = vmatpush1.msra.mxu0 %v4551
    %5151 = vmatprep.subr.mxu0 %v4536
    %5152 = vmatpush1.msra.mxu0 %v4535
    %5153 = vmatprep.subr.mxu0 %v4520
    %5154 = vmatpush1.msra.mxu0 %v4519
    %5155 = vmatprep.subr.mxu0 %v4504
    %5156 = vmatpush1.msra.mxu0 %v4503
    %5157 = vmatprep.subr.mxu0 %v4488
    %5158 = vmatpush1.msra.mxu0 %v4487
    %5159 = vmatprep.subr.mxu0 0.0
    %5160 = vmatpush2.msra.mxu0 0.0
    %5161 = vmatprep.subr.mxu0 0.0
    %5162 = vmatpush2.msra.mxu0 0.0
    %5163 = vmatprep.subr.mxu0 0.0
    %5164 = vmatpush2.msra.mxu0 0.0
    %5165 = vmatprep.subr.mxu0 0.0
    %5166 = vmatpush2.msra.mxu0 0.0
    %5167 = vmatprep.subr.mxu0 0.0
    %5168 = vmatpush2.msra.mxu0 0.0
    %5169 = vmatprep.subr.mxu0 0.0
    %5170 = vmatpush2.msra.mxu0 0.0
    %5171 = vmatprep.subr.mxu0 0.0
    %5172 = vmatpush2.msra.mxu0 0.0
    %5173 = vmatprep.subr.mxu0 0.0
    %5174 = vmatpush2.msra.mxu0 0.0
    %5175 = vmatprep.subr.mxu0 0.0
    %5176 = vmatpush2.msra.mxu0 0.0
    %5177 = vmatprep.subr.mxu0 0.0
    %5178 = vmatpush2.msra.mxu0 0.0
    %5179 = vmatprep.subr.mxu0 0.0
    %5180 = vmatpush2.msra.mxu0 0.0
    %5181 = vmatprep.subr.mxu0 0.0
    %5182 = vmatpush2.msra.mxu0 0.0
    %5183 = vmatprep.subr.mxu0 0.0
    %5184 = vmatpush2.msra.mxu0 0.0
    %5185 = vmatprep.subr.mxu0 0.0
    %5186 = vmatpush2.msra.mxu0 0.0
    %5187 = vmatprep.subr.mxu0 0.0
    %5188 = vmatpush2.msra.mxu0 0.0
    %5189 = vmatprep.subr.mxu0 0.0
    %5190 = vmatpush2.msra.mxu0 0.0
    %5191 = vmatprep.mubr.f32.mxu0 0.0
    %5192 = vmatmul.mubr.f32.gmra.mxu0 %v3929
    %v5193 = vpop.f32.mrf.mxu0
    %v5194 = vadd.f32 %v4774, %v5193
    %v5195 = vpop.f32.mrf.mxu0
    %v5196 = vadd.f32 %v4778, %v5195
    %5197 = vmatprep.mubr.f32.mxu0 0.0
    %5198 = vmatmul.mubr.f32.gmra.mxu0 %v4478
    %v5199 = vpop.f32.mrf.mxu0
    %v5200 = vadd.f32 %v4774, %v5199
    %v5201 = vpop.f32.mrf.mxu0
    %v5202 = vadd.f32 %v4778, %v5201
    %5203 = vdwg.mxu0
    %5204 = vmatprep.subr.mxu0 %v4730
    %5205 = vmatpush1.msra.mxu0 %v4729
    %5206 = vmatprep.subr.mxu0 %v4714
    %5207 = vmatpush1.msra.mxu0 %v4713
    %5208 = vmatprep.subr.mxu0 %v4698
    %5209 = vmatpush1.msra.mxu0 %v4697
    %5210 = vmatprep.subr.mxu0 %v4682
    %5211 = vmatpush1.msra.mxu0 %v4681
    %5212 = vmatprep.subr.mxu0 %v4666
    %5213 = vmatpush1.msra.mxu0 %v4665
    %5214 = vmatprep.subr.mxu0 %v4650
    %5215 = vmatpush1.msra.mxu0 %v4649
    %5216 = vmatprep.subr.mxu0 %v4634
    %5217 = vmatpush1.msra.mxu0 %v4633
    %5218 = vmatprep.subr.mxu0 %v4618
    %5219 = vmatpush1.msra.mxu0 %v4617
    %5220 = vmatprep.subr.mxu0 %v4602
    %5221 = vmatpush1.msra.mxu0 %v4601
    %5222 = vmatprep.subr.mxu0 %v4586
    %5223 = vmatpush1.msra.mxu0 %v4585
    %5224 = vmatprep.subr.mxu0 %v4570
    %5225 = vmatpush1.msra.mxu0 %v4569
    %5226 = vmatprep.subr.mxu0 %v4554
    %5227 = vmatpush1.msra.mxu0 %v4553
    %5228 = vmatprep.subr.mxu0 %v4538
    %5229 = vmatpush1.msra.mxu0 %v4537
    %5230 = vmatprep.subr.mxu0 %v4522
    %5231 = vmatpush1.msra.mxu0 %v4521
    %5232 = vmatprep.subr.mxu0 %v4506
    %5233 = vmatpush1.msra.mxu0 %v4505
    %5234 = vmatprep.subr.mxu0 %v4490
    %5235 = vmatpush1.msra.mxu0 %v4489
    %5236 = vmatprep.subr.mxu0 0.0
    %5237 = vmatpush2.msra.mxu0 0.0
    %5238 = vmatprep.subr.mxu0 0.0
    %5239 = vmatpush2.msra.mxu0 0.0
    %5240 = vmatprep.subr.mxu0 0.0
    %5241 = vmatpush2.msra.mxu0 0.0
    %5242 = vmatprep.subr.mxu0 0.0
    %5243 = vmatpush2.msra.mxu0 0.0
    %5244 = vmatprep.subr.mxu0 0.0
    %5245 = vmatpush2.msra.mxu0 0.0
    %5246 = vmatprep.subr.mxu0 0.0
    %5247 = vmatpush2.msra.mxu0 0.0
    %5248 = vmatprep.subr.mxu0 0.0
    %5249 = vmatpush2.msra.mxu0 0.0
    %5250 = vmatprep.subr.mxu0 0.0
    %5251 = vmatpush2.msra.mxu0 0.0
    %5252 = vmatprep.subr.mxu0 0.0
    %5253 = vmatpush2.msra.mxu0 0.0
    %5254 = vmatprep.subr.mxu0 0.0
    %5255 = vmatpush2.msra.mxu0 0.0
    %5256 = vmatprep.subr.mxu0 0.0
    %5257 = vmatpush2.msra.mxu0 0.0
    %5258 = vmatprep.subr.mxu0 0.0
    %5259 = vmatpush2.msra.mxu0 0.0
    %5260 = vmatprep.subr.mxu0 0.0
    %5261 = vmatpush2.msra.mxu0 0.0
    %5262 = vmatprep.subr.mxu0 0.0
    %5263 = vmatpush2.msra.mxu0 0.0
    %5264 = vmatprep.subr.mxu0 0.0
    %5265 = vmatpush2.msra.mxu0 0.0
    %5266 = vmatprep.subr.mxu0 0.0
    %5267 = vmatpush2.msra.mxu0 0.0
    %5268 = vmatprep.mubr.f32.mxu0 0.0
    %5269 = vmatmul.mubr.f32.gmra.mxu0 %v3929
    %v5270 = vpop.f32.mrf.mxu0
    %v5271 = vadd.f32 %v4782, %v5270
    %v5272 = vpop.f32.mrf.mxu0
    %v5273 = vadd.f32 %v4786, %v5272
    %5274 = vmatprep.mubr.f32.mxu0 0.0
    %5275 = vmatmul.mubr.f32.gmra.mxu0 %v4478
    %v5276 = vpop.f32.mrf.mxu0
    %v5277 = vadd.f32 %v4782, %v5276
    %v5278 = vpop.f32.mrf.mxu0
    %v5279 = vadd.f32 %v4786, %v5278
    %5280 = vdwg.mxu0
    %5281 = vmatprep.subr.mxu0 %v4732
    %5282 = vmatpush1.msra.mxu0 %v4731
    %5283 = vmatprep.subr.mxu0 %v4716
    %5284 = vmatpush1.msra.mxu0 %v4715
    %5285 = vmatprep.subr.mxu0 %v4700
    %5286 = vmatpush1.msra.mxu0 %v4699
    %5287 = vmatprep.subr.mxu0 %v4684
    %5288 = vmatpush1.msra.mxu0 %v4683
    %5289 = vmatprep.subr.mxu0 %v4668
    %5290 = vmatpush1.msra.mxu0 %v4667
    %5291 = vmatprep.subr.mxu0 %v4652
    %5292 = vmatpush1.msra.mxu0 %v4651
    %5293 = vmatprep.subr.mxu0 %v4636
    %5294 = vmatpush1.msra.mxu0 %v4635
    %5295 = vmatprep.subr.mxu0 %v4620
    %5296 = vmatpush1.msra.mxu0 %v4619
    %5297 = vmatprep.subr.mxu0 %v4604
    %5298 = vmatpush1.msra.mxu0 %v4603
    %5299 = vmatprep.subr.mxu0 %v4588
    %5300 = vmatpush1.msra.mxu0 %v4587
    %5301 = vmatprep.subr.mxu0 %v4572
    %5302 = vmatpush1.msra.mxu0 %v4571
    %5303 = vmatprep.subr.mxu0 %v4556
    %5304 = vmatpush1.msra.mxu0 %v4555
    %5305 = vmatprep.subr.mxu0 %v4540
    %5306 = vmatpush1.msra.mxu0 %v4539
    %5307 = vmatprep.subr.mxu0 %v4524
    %5308 = vmatpush1.msra.mxu0 %v4523
    %5309 = vmatprep.subr.mxu0 %v4508
    %5310 = vmatpush1.msra.mxu0 %v4507
    %5311 = vmatprep.subr.mxu0 %v4492
    %5312 = vmatpush1.msra.mxu0 %v4491
    %5313 = vmatprep.subr.mxu0 0.0
    %5314 = vmatpush2.msra.mxu0 0.0
    %5315 = vmatprep.subr.mxu0 0.0
    %5316 = vmatpush2.msra.mxu0 0.0
    %5317 = vmatprep.subr.mxu0 0.0
    %5318 = vmatpush2.msra.mxu0 0.0
    %5319 = vmatprep.subr.mxu0 0.0
    %5320 = vmatpush2.msra.mxu0 0.0
    %5321 = vmatprep.subr.mxu0 0.0
    %5322 = vmatpush2.msra.mxu0 0.0
    %5323 = vmatprep.subr.mxu0 0.0
    %5324 = vmatpush2.msra.mxu0 0.0
    %5325 = vmatprep.subr.mxu0 0.0
    %5326 = vmatpush2.msra.mxu0 0.0
    %5327 = vmatprep.subr.mxu0 0.0
    %5328 = vmatpush2.msra.mxu0 0.0
    %5329 = vmatprep.subr.mxu0 0.0
    %5330 = vmatpush2.msra.mxu0 0.0
    %5331 = vmatprep.subr.mxu0 0.0
    %5332 = vmatpush2.msra.mxu0 0.0
    %5333 = vmatprep.subr.mxu0 0.0
    %5334 = vmatpush2.msra.mxu0 0.0
    %5335 = vmatprep.subr.mxu0 0.0
    %5336 = vmatpush2.msra.mxu0 0.0
    %5337 = vmatprep.subr.mxu0 0.0
    %5338 = vmatpush2.msra.mxu0 0.0
    %5339 = vmatprep.subr.mxu0 0.0
    %5340 = vmatpush2.msra.mxu0 0.0
    %5341 = vmatprep.subr.mxu0 0.0
    %5342 = vmatpush2.msra.mxu0 0.0
    %5343 = vmatprep.subr.mxu0 0.0
    %5344 = vmatpush2.msra.mxu0 0.0
    %5345 = vmatprep.mubr.f32.mxu0 0.0
    %5346 = vmatmul.mubr.f32.gmra.mxu0 %v3929
    %v5347 = vpop.f32.mrf.mxu0
    %v5348 = vadd.f32 %v4790, %v5347
    %v5349 = vpop.f32.mrf.mxu0
    %v5350 = vadd.f32 %v4794, %v5349
    %5351 = vmatprep.mubr.f32.mxu0 0.0
    %5352 = vmatmul.mubr.f32.gmra.mxu0 %v4478
    %v5353 = vpop.f32.mrf.mxu0
    %v5354 = vadd.f32 %v4790, %v5353
    %v5355 = vpop.f32.mrf.mxu0
    %v5356 = vadd.f32 %v4794, %v5355
    %5357 = vdwg.mxu0
    %5358 = vmatprep.subr.mxu0 %v4734
    %5359 = vmatpush1.msra.mxu0 %v4733
    %5360 = vmatprep.subr.mxu0 %v4718
    %5361 = vmatpush1.msra.mxu0 %v4717
    %5362 = vmatprep.subr.mxu0 %v4702
    %5363 = vmatpush1.msra.mxu0 %v4701
    %5364 = vmatprep.subr.mxu0 %v4686
    %5365 = vmatpush1.msra.mxu0 %v4685
    %5366 = vmatprep.subr.mxu0 %v4670
    %5367 = vmatpush1.msra.mxu0 %v4669
    %5368 = vmatprep.subr.mxu0 %v4654
    %5369 = vmatpush1.msra.mxu0 %v4653
    %5370 = vmatprep.subr.mxu0 %v4638
    %5371 = vmatpush1.msra.mxu0 %v4637
    %5372 = vmatprep.subr.mxu0 %v4622
    %5373 = vmatpush1.msra.mxu0 %v4621
    %5374 = vmatprep.subr.mxu0 %v4606
    %5375 = vmatpush1.msra.mxu0 %v4605
    %5376 = vmatprep.subr.mxu0 %v4590
    %5377 = vmatpush1.msra.mxu0 %v4589
    %5378 = vmatprep.subr.mxu0 %v4574
    %5379 = vmatpush1.msra.mxu0 %v4573
    %5380 = vmatprep.subr.mxu0 %v4558
    %5381 = vmatpush1.msra.mxu0 %v4557
    %5382 = vmatprep.subr.mxu0 %v4542
    %5383 = vmatpush1.msra.mxu0 %v4541
    %5384 = vmatprep.subr.mxu0 %v4526
    %5385 = vmatpush1.msra.mxu0 %v4525
    %5386 = vmatprep.subr.mxu0 %v4510
    %5387 = vmatpush1.msra.mxu0 %v4509
    %5388 = vmatprep.subr.mxu0 %v4494
    %5389 = vmatpush1.msra.mxu0 %v4493
    %5390 = vmatprep.subr.mxu0 0.0
    %5391 = vmatpush2.msra.mxu0 0.0
    %5392 = vmatprep.subr.mxu0 0.0
    %5393 = vmatpush2.msra.mxu0 0.0
    %5394 = vmatprep.subr.mxu0 0.0
    %5395 = vmatpush2.msra.mxu0 0.0
    %5396 = vmatprep.subr.mxu0 0.0
    %5397 = vmatpush2.msra.mxu0 0.0
    %5398 = vmatprep.subr.mxu0 0.0
    %5399 = vmatpush2.msra.mxu0 0.0
    %5400 = vmatprep.subr.mxu0 0.0
    %5401 = vmatpush2.msra.mxu0 0.0
    %5402 = vmatprep.subr.mxu0 0.0
    %5403 = vmatpush2.msra.mxu0 0.0
    %5404 = vmatprep.subr.mxu0 0.0
    %5405 = vmatpush2.msra.mxu0 0.0
    %5406 = vmatprep.subr.mxu0 0.0
    %5407 = vmatpush2.msra.mxu0 0.0
    %5408 = vmatprep.subr.mxu0 0.0
    %5409 = vmatpush2.msra.mxu0 0.0
    %5410 = vmatprep.subr.mxu0 0.0
    %5411 = vmatpush2.msra.mxu0 0.0
    %5412 = vmatprep.subr.mxu0 0.0
    %5413 = vmatpush2.msra.mxu0 0.0
    %5414 = vmatprep.subr.mxu0 0.0
    %5415 = vmatpush2.msra.mxu0 0.0
    %5416 = vmatprep.subr.mxu0 0.0
    %5417 = vmatpush2.msra.mxu0 0.0
    %5418 = vmatprep.subr.mxu0 0.0
    %5419 = vmatpush2.msra.mxu0 0.0
    %5420 = vmatprep.subr.mxu0 0.0
    %5421 = vmatpush2.msra.mxu0 0.0
    %5422 = vmatprep.mubr.f32.mxu0 0.0
    %5423 = vmatmul.mubr.f32.gmra.mxu0 %v3929
    %v5424 = vpop.f32.mrf.mxu0
    %v5425 = vadd.f32 %v4798, %v5424
    %v5426 = vpop.f32.mrf.mxu0
    %v5427 = vadd.f32 %v4802, %v5426
    %5428 = vmatprep.mubr.f32.mxu0 0.0
    %5429 = vmatmul.mubr.f32.gmra.mxu0 %v4478
    %v5430 = vpop.f32.mrf.mxu0
    %v5431 = vadd.f32 %v4798, %v5430
    %v5432 = vpop.f32.mrf.mxu0
    %v5433 = vadd.f32 %v4802, %v5432
    %5434 = vdwg.mxu0
    %v5435 = vmax.f32 %v4886, 0.0
    %v5436 = vmax.f32 %v4888, 0.0
    %v5437 = vmax.f32 %v4963, 0.0
    %v5438 = vmax.f32 %v4965, 0.0
    %v5439 = vmax.f32 %v5040, 0.0
    %v5440 = vmax.f32 %v5042, 0.0
    %v5441 = vmax.f32 %v5117, 0.0
    %v5442 = vmax.f32 %v5119, 0.0
    %v5443 = vmax.f32 %v5194, 0.0
    %v5444 = vmax.f32 %v5196, 0.0
    %v5445 = vmax.f32 %v5271, 0.0
    %v5446 = vmax.f32 %v5273, 0.0
    %v5447 = vmax.f32 %v5348, 0.0
    %v5448 = vmax.f32 %v5350, 0.0
    %v5449 = vmax.f32 %v5425, 0.0
    %v5450 = vmax.f32 %v5427, 0.0
    %v5451 = vmax.f32 %v4892, 0.0
    %v5452 = vmax.f32 %v4894, 0.0
    %v5453 = vmax.f32 %v4969, 0.0
    %v5454 = vmax.f32 %v4971, 0.0
    %v5455 = vmax.f32 %v5046, 0.0
    %v5456 = vmax.f32 %v5048, 0.0
    %v5457 = vmax.f32 %v5123, 0.0
    %v5458 = vmax.f32 %v5125, 0.0
    %v5459 = vmax.f32 %v5200, 0.0
    %v5460 = vmax.f32 %v5202, 0.0
    %v5461 = vmax.f32 %v5277, 0.0
    %v5462 = vmax.f32 %v5279, 0.0
    %v5463 = vmax.f32 %v5354, 0.0
    %v5464 = vmax.f32 %v5356, 0.0
    %v5465 = vmax.f32 %v5431, 0.0
    %v5466 = vmax.f32 %v5433, 0.0
    %v5467 = vld [vmem:[%s63] sm:$0xff]
    %v5468 = vld [vmem:[%s63 + $0x8] sm:$0xff]
    %v5469 = vld [vmem:[%s63 + $0x10] sm:$0xff]
    %v5470 = vld [vmem:[%s63 + $0x18] sm:$0xff]
    %v5471 = vld [vmem:[%s63 + $0x20] sm:$0xff]
    %v5472 = vld [vmem:[%s63 + $0x28] sm:$0xff]
    %v5473 = vld [vmem:[%s63 + $0x30] sm:$0xff]
    %v5474 = vld [vmem:[%s63 + $0x38] sm:$0xff]
    %v5475 = vld [vmem:[%s63 + $0x40] sm:$0xff]
    %v5476 = vld [vmem:[%s63 + $0x48] sm:$0xff]
    %v5477 = vld [vmem:[%s63 + $0x50] sm:$0xff]
    %v5478 = vld [vmem:[%s63 + $0x58] sm:$0xff]
    %v5479 = vld [vmem:[%s63 + $0x60] sm:$0xff]
    %v5480 = vld [vmem:[%s63 + $0x68] sm:$0xff]
    %v5481 = vld [vmem:[%s63 + $0x70] sm:$0xff]
    %v5482 = vld [vmem:[%s63 + $0x78] sm:$0xff]
    %v5483 = vld [vmem:[%s63 + $0x80] sm:$0xff]
    %v5484 = vld [vmem:[%s63 + $0x88] sm:$0xff]
    %v5485 = vld [vmem:[%s63 + $0x90] sm:$0xff]
    %v5486 = vld [vmem:[%s63 + $0x98] sm:$0xff]
    %v5487 = vld [vmem:[%s63 + $0xa0] sm:$0xff]
    %v5488 = vld [vmem:[%s63 + $0xa8] sm:$0xff]
    %v5489 = vld [vmem:[%s63 + $0xb0] sm:$0xff]
    %v5490 = vld [vmem:[%s63 + $0xb8] sm:$0xff]
    %v5491 = vld [vmem:[%s63 + $0xc0] sm:$0xff]
    %v5492 = vld [vmem:[%s63 + $0xc8] sm:$0xff]
    %v5493 = vld [vmem:[%s63 + $0xd0] sm:$0xff]
    %v5494 = vld [vmem:[%s63 + $0xd8] sm:$0xff]
    %v5495 = vld [vmem:[%s63 + $0xe0] sm:$0xff]
    %v5496 = vld [vmem:[%s63 + $0xe8] sm:$0xff]
    %v5497 = vld [vmem:[%s63 + $0xf0] sm:$0xff]
    %v5498 = vld [vmem:[%s63 + $0xf8] sm:$0xff]
    %v5499 = vld [vmem:[%s63 + $0x100] sm:$0xff]
    %v5500 = vld [vmem:[%s63 + $0x108] sm:$0xff]
    %v5501 = vld [vmem:[%s63 + $0x110] sm:$0xff]
    %v5502 = vld [vmem:[%s63 + $0x118] sm:$0xff]
    %v5503 = vld [vmem:[%s63 + $0x120] sm:$0xff]
    %v5504 = vld [vmem:[%s63 + $0x128] sm:$0xff]
    %v5505 = vld [vmem:[%s63 + $0x130] sm:$0xff]
    %v5506 = vld [vmem:[%s63 + $0x138] sm:$0xff]
    %v5507 = vld [vmem:[%s63 + $0x140] sm:$0xff]
    %v5508 = vld [vmem:[%s63 + $0x148] sm:$0xff]
    %v5509 = vld [vmem:[%s63 + $0x150] sm:$0xff]
    %v5510 = vld [vmem:[%s63 + $0x158] sm:$0xff]
    %v5511 = vld [vmem:[%s63 + $0x160] sm:$0xff]
    %v5512 = vld [vmem:[%s63 + $0x168] sm:$0xff]
    %v5513 = vld [vmem:[%s63 + $0x170] sm:$0xff]
    %v5514 = vld [vmem:[%s63 + $0x178] sm:$0xff]
    %v5515 = vld [vmem:[%s63 + $0x180] sm:$0xff]
    %v5516 = vld [vmem:[%s63 + $0x188] sm:$0xff]
    %v5517 = vld [vmem:[%s63 + $0x190] sm:$0xff]
    %v5518 = vld [vmem:[%s63 + $0x198] sm:$0xff]
    %v5519 = vld [vmem:[%s63 + $0x1a0] sm:$0xff]
    %v5520 = vld [vmem:[%s63 + $0x1a8] sm:$0xff]
    %v5521 = vld [vmem:[%s63 + $0x1b0] sm:$0xff]
    %v5522 = vld [vmem:[%s63 + $0x1b8] sm:$0xff]
    %v5523 = vld [vmem:[%s63 + $0x1c0] sm:$0xff]
    %v5524 = vld [vmem:[%s63 + $0x1c8] sm:$0xff]
    %v5525 = vld [vmem:[%s63 + $0x1d0] sm:$0xff]
    %v5526 = vld [vmem:[%s63 + $0x1d8] sm:$0xff]
    %v5527 = vld [vmem:[%s63 + $0x1e0] sm:$0xff]
    %v5528 = vld [vmem:[%s63 + $0x1e8] sm:$0xff]
    %v5529 = vld [vmem:[%s63 + $0x1f0] sm:$0xff]
    %v5530 = vld [vmem:[%s63 + $0x1f8] sm:$0xff]
    %v5531 = vld [vmem:[%s63 + $0x200] sm:$0xff]
    %v5532 = vld [vmem:[%s63 + $0x208] sm:$0xff]
    %v5533 = vld [vmem:[%s63 + $0x210] sm:$0xff]
    %v5534 = vld [vmem:[%s63 + $0x218] sm:$0xff]
    %v5535 = vld [vmem:[%s63 + $0x220] sm:$0xff]
    %v5536 = vld [vmem:[%s63 + $0x228] sm:$0xff]
    %v5537 = vld [vmem:[%s63 + $0x230] sm:$0xff]
    %v5538 = vld [vmem:[%s63 + $0x238] sm:$0xff]
    %v5539 = vld [vmem:[%s63 + $0x240] sm:$0xff]
    %v5540 = vld [vmem:[%s63 + $0x248] sm:$0xff]
    %v5541 = vld [vmem:[%s63 + $0x250] sm:$0xff]
    %v5542 = vld [vmem:[%s63 + $0x258] sm:$0xff]
    %v5543 = vld [vmem:[%s63 + $0x260] sm:$0xff]
    %v5544 = vld [vmem:[%s63 + $0x268] sm:$0xff]
    %v5545 = vld [vmem:[%s63 + $0x270] sm:$0xff]
    %v5546 = vld [vmem:[%s63 + $0x278] sm:$0xff]
    %v5547 = vld [vmem:[%s63 + $0x280] sm:$0xff]
    %v5548 = vld [vmem:[%s63 + $0x288] sm:$0xff]
    %v5549 = vld [vmem:[%s63 + $0x290] sm:$0xff]
    %v5550 = vld [vmem:[%s63 + $0x298] sm:$0xff]
    %v5551 = vld [vmem:[%s63 + $0x2a0] sm:$0xff]
    %v5552 = vld [vmem:[%s63 + $0x2a8] sm:$0xff]
    %v5553 = vld [vmem:[%s63 + $0x2b0] sm:$0xff]
    %v5554 = vld [vmem:[%s63 + $0x2b8] sm:$0xff]
    %v5555 = vld [vmem:[%s63 + $0x2c0] sm:$0xff]
    %v5556 = vld [vmem:[%s63 + $0x2c8] sm:$0xff]
    %v5557 = vld [vmem:[%s63 + $0x2d0] sm:$0xff]
    %v5558 = vld [vmem:[%s63 + $0x2d8] sm:$0xff]
    %v5559 = vld [vmem:[%s63 + $0x2e0] sm:$0xff]
    %v5560 = vld [vmem:[%s63 + $0x2e8] sm:$0xff]
    %v5561 = vld [vmem:[%s63 + $0x2f0] sm:$0xff]
    %v5562 = vld [vmem:[%s63 + $0x2f8] sm:$0xff]
    %v5563 = vld [vmem:[%s63 + $0x300] sm:$0xff]
    %v5564 = vld [vmem:[%s63 + $0x308] sm:$0xff]
    %v5565 = vld [vmem:[%s63 + $0x310] sm:$0xff]
    %v5566 = vld [vmem:[%s63 + $0x318] sm:$0xff]
    %v5567 = vld [vmem:[%s63 + $0x320] sm:$0xff]
    %v5568 = vld [vmem:[%s63 + $0x328] sm:$0xff]
    %v5569 = vld [vmem:[%s63 + $0x330] sm:$0xff]
    %v5570 = vld [vmem:[%s63 + $0x338] sm:$0xff]
    %v5571 = vld [vmem:[%s63 + $0x340] sm:$0xff]
    %v5572 = vld [vmem:[%s63 + $0x348] sm:$0xff]
    %v5573 = vld [vmem:[%s63 + $0x350] sm:$0xff]
    %v5574 = vld [vmem:[%s63 + $0x358] sm:$0xff]
    %v5575 = vld [vmem:[%s63 + $0x360] sm:$0xff]
    %v5576 = vld [vmem:[%s63 + $0x368] sm:$0xff]
    %v5577 = vld [vmem:[%s63 + $0x370] sm:$0xff]
    %v5578 = vld [vmem:[%s63 + $0x378] sm:$0xff]
    %v5579 = vld [vmem:[%s63 + $0x380] sm:$0xff]
    %v5580 = vld [vmem:[%s63 + $0x388] sm:$0xff]
    %v5581 = vld [vmem:[%s63 + $0x390] sm:$0xff]
    %v5582 = vld [vmem:[%s63 + $0x398] sm:$0xff]
    %v5583 = vld [vmem:[%s63 + $0x3a0] sm:$0xff]
    %v5584 = vld [vmem:[%s63 + $0x3a8] sm:$0xff]
    %v5585 = vld [vmem:[%s63 + $0x3b0] sm:$0xff]
    %v5586 = vld [vmem:[%s63 + $0x3b8] sm:$0xff]
    %v5587 = vld [vmem:[%s63 + $0x3c0] sm:$0xff]
    %v5588 = vld [vmem:[%s63 + $0x3c8] sm:$0xff]
    %v5589 = vld [vmem:[%s63 + $0x3d0] sm:$0xff]
    %v5590 = vld [vmem:[%s63 + $0x3d8] sm:$0xff]
    %v5591 = vld [vmem:[%s63 + $0x3e0] sm:$0xff]
    %v5592 = vld [vmem:[%s63 + $0x3e8] sm:$0xff]
    %v5593 = vld [vmem:[%s63 + $0x3f0] sm:$0xff]
    %v5594 = vld [vmem:[%s63 + $0x3f8] sm:$0xff]
    %v5595 = vld [vmem:[%s63 + $0x400] sm:$0xff]
    %v5596 = vld [vmem:[%s63 + $0x408] sm:$0xff]
    %v5597 = vld [vmem:[%s63 + $0x410] sm:$0xff]
    %v5598 = vld [vmem:[%s63 + $0x418] sm:$0xff]
    %v5599 = vld [vmem:[%s63 + $0x420] sm:$0xff]
    %v5600 = vld [vmem:[%s63 + $0x428] sm:$0xff]
    %v5601 = vld [vmem:[%s63 + $0x430] sm:$0xff]
    %v5602 = vld [vmem:[%s63 + $0x438] sm:$0xff]
    %v5603 = vld [vmem:[%s63 + $0x440] sm:$0xff]
    %v5604 = vld [vmem:[%s63 + $0x448] sm:$0xff]
    %v5605 = vld [vmem:[%s63 + $0x450] sm:$0xff]
    %v5606 = vld [vmem:[%s63 + $0x458] sm:$0xff]
    %v5607 = vld [vmem:[%s63 + $0x460] sm:$0xff]
    %v5608 = vld [vmem:[%s63 + $0x468] sm:$0xff]
    %v5609 = vld [vmem:[%s63 + $0x470] sm:$0xff]
    %v5610 = vld [vmem:[%s63 + $0x478] sm:$0xff]
    %v5611 = vld [vmem:[%s63 + $0x480] sm:$0xff]
    %v5612 = vld [vmem:[%s63 + $0x488] sm:$0xff]
    %v5613 = vld [vmem:[%s63 + $0x490] sm:$0xff]
    %v5614 = vld [vmem:[%s63 + $0x498] sm:$0xff]
    %v5615 = vld [vmem:[%s63 + $0x4a0] sm:$0xff]
    %v5616 = vld [vmem:[%s63 + $0x4a8] sm:$0xff]
    %v5617 = vld [vmem:[%s63 + $0x4b0] sm:$0xff]
    %v5618 = vld [vmem:[%s63 + $0x4b8] sm:$0xff]
    %v5619 = vld [vmem:[%s63 + $0x4c0] sm:$0xff]
    %v5620 = vld [vmem:[%s63 + $0x4c8] sm:$0xff]
    %v5621 = vld [vmem:[%s63 + $0x4d0] sm:$0xff]
    %v5622 = vld [vmem:[%s63 + $0x4d8] sm:$0xff]
    %v5623 = vld [vmem:[%s63 + $0x4e0] sm:$0xff]
    %v5624 = vld [vmem:[%s63 + $0x4e8] sm:$0xff]
    %v5625 = vld [vmem:[%s63 + $0x4f0] sm:$0xff]
    %v5626 = vld [vmem:[%s63 + $0x4f8] sm:$0xff]
    %v5627 = vld [vmem:[%s63 + $0x500] sm:$0xff]
    %v5628 = vld [vmem:[%s63 + $0x508] sm:$0xff]
    %v5629 = vld [vmem:[%s63 + $0x510] sm:$0xff]
    %v5630 = vld [vmem:[%s63 + $0x518] sm:$0xff]
    %v5631 = vld [vmem:[%s63 + $0x520] sm:$0xff]
    %v5632 = vld [vmem:[%s63 + $0x528] sm:$0xff]
    %v5633 = vld [vmem:[%s63 + $0x530] sm:$0xff]
    %v5634 = vld [vmem:[%s63 + $0x538] sm:$0xff]
    %v5635 = vld [vmem:[%s63 + $0x540] sm:$0xff]
    %v5636 = vld [vmem:[%s63 + $0x548] sm:$0xff]
    %v5637 = vld [vmem:[%s63 + $0x550] sm:$0xff]
    %v5638 = vld [vmem:[%s63 + $0x558] sm:$0xff]
    %v5639 = vld [vmem:[%s63 + $0x560] sm:$0xff]
    %v5640 = vld [vmem:[%s63 + $0x568] sm:$0xff]
    %v5641 = vld [vmem:[%s63 + $0x570] sm:$0xff]
    %v5642 = vld [vmem:[%s63 + $0x578] sm:$0xff]
    %v5643 = vld [vmem:[%s63 + $0x580] sm:$0xff]
    %v5644 = vld [vmem:[%s63 + $0x588] sm:$0xff]
    %v5645 = vld [vmem:[%s63 + $0x590] sm:$0xff]
    %v5646 = vld [vmem:[%s63 + $0x598] sm:$0xff]
    %v5647 = vld [vmem:[%s63 + $0x5a0] sm:$0xff]
    %v5648 = vld [vmem:[%s63 + $0x5a8] sm:$0xff]
    %v5649 = vld [vmem:[%s63 + $0x5b0] sm:$0xff]
    %v5650 = vld [vmem:[%s63 + $0x5b8] sm:$0xff]
    %v5651 = vld [vmem:[%s63 + $0x5c0] sm:$0xff]
    %v5652 = vld [vmem:[%s63 + $0x5c8] sm:$0xff]
    %v5653 = vld [vmem:[%s63 + $0x5d0] sm:$0xff]
    %v5654 = vld [vmem:[%s63 + $0x5d8] sm:$0xff]
    %v5655 = vld [vmem:[%s63 + $0x5e0] sm:$0xff]
    %v5656 = vld [vmem:[%s63 + $0x5e8] sm:$0xff]
    %v5657 = vld [vmem:[%s63 + $0x5f0] sm:$0xff]
    %v5658 = vld [vmem:[%s63 + $0x5f8] sm:$0xff]
    %v5659 = vld [vmem:[%s63 + $0x600] sm:$0xff]
    %v5660 = vld [vmem:[%s63 + $0x608] sm:$0xff]
    %v5661 = vld [vmem:[%s63 + $0x610] sm:$0xff]
    %v5662 = vld [vmem:[%s63 + $0x618] sm:$0xff]
    %v5663 = vld [vmem:[%s63 + $0x620] sm:$0xff]
    %v5664 = vld [vmem:[%s63 + $0x628] sm:$0xff]
    %v5665 = vld [vmem:[%s63 + $0x630] sm:$0xff]
    %v5666 = vld [vmem:[%s63 + $0x638] sm:$0xff]
    %v5667 = vld [vmem:[%s63 + $0x640] sm:$0xff]
    %v5668 = vld [vmem:[%s63 + $0x648] sm:$0xff]
    %v5669 = vld [vmem:[%s63 + $0x650] sm:$0xff]
    %v5670 = vld [vmem:[%s63 + $0x658] sm:$0xff]
    %v5671 = vld [vmem:[%s63 + $0x660] sm:$0xff]
    %v5672 = vld [vmem:[%s63 + $0x668] sm:$0xff]
    %v5673 = vld [vmem:[%s63 + $0x670] sm:$0xff]
    %v5674 = vld [vmem:[%s63 + $0x678] sm:$0xff]
    %v5675 = vld [vmem:[%s63 + $0x680] sm:$0xff]
    %v5676 = vld [vmem:[%s63 + $0x688] sm:$0xff]
    %v5677 = vld [vmem:[%s63 + $0x690] sm:$0xff]
    %v5678 = vld [vmem:[%s63 + $0x698] sm:$0xff]
    %v5679 = vld [vmem:[%s63 + $0x6a0] sm:$0xff]
    %v5680 = vld [vmem:[%s63 + $0x6a8] sm:$0xff]
    %v5681 = vld [vmem:[%s63 + $0x6b0] sm:$0xff]
    %v5682 = vld [vmem:[%s63 + $0x6b8] sm:$0xff]
    %v5683 = vld [vmem:[%s63 + $0x6c0] sm:$0xff]
    %v5684 = vld [vmem:[%s63 + $0x6c8] sm:$0xff]
    %v5685 = vld [vmem:[%s63 + $0x6d0] sm:$0xff]
    %v5686 = vld [vmem:[%s63 + $0x6d8] sm:$0xff]
    %v5687 = vld [vmem:[%s63 + $0x6e0] sm:$0xff]
    %v5688 = vld [vmem:[%s63 + $0x6e8] sm:$0xff]
    %v5689 = vld [vmem:[%s63 + $0x6f0] sm:$0xff]
    %v5690 = vld [vmem:[%s63 + $0x6f8] sm:$0xff]
    %v5691 = vld [vmem:[%s63 + $0x700] sm:$0xff]
    %v5692 = vld [vmem:[%s63 + $0x708] sm:$0xff]
    %v5693 = vld [vmem:[%s63 + $0x710] sm:$0xff]
    %v5694 = vld [vmem:[%s63 + $0x718] sm:$0xff]
    %v5695 = vld [vmem:[%s63 + $0x720] sm:$0xff]
    %v5696 = vld [vmem:[%s63 + $0x728] sm:$0xff]
    %v5697 = vld [vmem:[%s63 + $0x730] sm:$0xff]
    %v5698 = vld [vmem:[%s63 + $0x738] sm:$0xff]
    %v5699 = vld [vmem:[%s63 + $0x740] sm:$0xff]
    %v5700 = vld [vmem:[%s63 + $0x748] sm:$0xff]
    %v5701 = vld [vmem:[%s63 + $0x750] sm:$0xff]
    %v5702 = vld [vmem:[%s63 + $0x758] sm:$0xff]
    %v5703 = vld [vmem:[%s63 + $0x760] sm:$0xff]
    %v5704 = vld [vmem:[%s63 + $0x768] sm:$0xff]
    %v5705 = vld [vmem:[%s63 + $0x770] sm:$0xff]
    %v5706 = vld [vmem:[%s63 + $0x778] sm:$0xff]
    %v5707 = vld [vmem:[%s63 + $0x780] sm:$0xff]
    %v5708 = vld [vmem:[%s63 + $0x788] sm:$0xff]
    %v5709 = vld [vmem:[%s63 + $0x790] sm:$0xff]
    %v5710 = vld [vmem:[%s63 + $0x798] sm:$0xff]
    %v5711 = vld [vmem:[%s63 + $0x7a0] sm:$0xff]
    %v5712 = vld [vmem:[%s63 + $0x7a8] sm:$0xff]
    %v5713 = vld [vmem:[%s63 + $0x7b0] sm:$0xff]
    %v5714 = vld [vmem:[%s63 + $0x7b8] sm:$0xff]
    %v5715 = vld [vmem:[%s63 + $0x7c0] sm:$0xff]
    %v5716 = vld [vmem:[%s63 + $0x7c8] sm:$0xff]
    %v5717 = vld [vmem:[%s63 + $0x7d0] sm:$0xff]
    %v5718 = vld [vmem:[%s63 + $0x7d8] sm:$0xff]
    %v5719 = vld [vmem:[%s63 + $0x7e0] sm:$0xff]
    %v5720 = vld [vmem:[%s63 + $0x7e8] sm:$0xff]
    %v5721 = vld [vmem:[%s63 + $0x7f0] sm:$0xff]
    %v5722 = vld [vmem:[%s63 + $0x7f8] sm:$0xff]
    %v5723 = vld [vmem:[%s65] sm:$0x1]
    %v5725 = vlaneseq
    %v5726 = vshrl.u32 %v5725, 7
    %v5727 = vsub.s32 0, %v5726
    %v5728 = vrot.slane %v5723, %v5727
    %5730 = vmatprep.subr.mxu0 0.0
    %5731 = vmatpush1.msra.mxu0 %v5482
    %5732 = vmatprep.subr.mxu0 0.0
    %5733 = vmatpush1.msra.mxu0 %v5481
    %5734 = vmatprep.subr.mxu0 0.0
    %5735 = vmatpush1.msra.mxu0 %v5480
    %5736 = vmatprep.subr.mxu0 0.0
    %5737 = vmatpush1.msra.mxu0 %v5479
    %5738 = vmatprep.subr.mxu0 0.0
    %5739 = vmatpush1.msra.mxu0 %v5478
    %5740 = vmatprep.subr.mxu0 0.0
    %5741 = vmatpush1.msra.mxu0 %v5477
    %5742 = vmatprep.subr.mxu0 0.0
    %5743 = vmatpush1.msra.mxu0 %v5476
    %5744 = vmatprep.subr.mxu0 0.0
    %5745 = vmatpush1.msra.mxu0 %v5475
    %5746 = vmatprep.subr.mxu0 0.0
    %5747 = vmatpush1.msra.mxu0 %v5474
    %5748 = vmatprep.subr.mxu0 0.0
    %5749 = vmatpush1.msra.mxu0 %v5473
    %5750 = vmatprep.subr.mxu0 0.0
    %5751 = vmatpush1.msra.mxu0 %v5472
    %5752 = vmatprep.subr.mxu0 0.0
    %5753 = vmatpush1.msra.mxu0 %v5471
    %5754 = vmatprep.subr.mxu0 0.0
    %5755 = vmatpush1.msra.mxu0 %v5470
    %5756 = vmatprep.subr.mxu0 0.0
    %5757 = vmatpush1.msra.mxu0 %v5469
    %5758 = vmatprep.subr.mxu0 0.0
    %5759 = vmatpush1.msra.mxu0 %v5468
    %5760 = vmatprep.subr.mxu0 0.0
    %5761 = vmatpush1.msra.mxu0 %v5467
    %5762 = vmatprep.subr.mxu0 0.0
    %5763 = vmatpush2.msra.mxu0 %v5498
    %5764 = vmatprep.subr.mxu0 0.0
    %5765 = vmatpush2.msra.mxu0 %v5497
    %5766 = vmatprep.subr.mxu0 0.0
    %5767 = vmatpush2.msra.mxu0 %v5496
    %5768 = vmatprep.subr.mxu0 0.0
    %5769 = vmatpush2.msra.mxu0 %v5495
    %5770 = vmatprep.subr.mxu0 0.0
    %5771 = vmatpush2.msra.mxu0 %v5494
    %5772 = vmatprep.subr.mxu0 0.0
    %5773 = vmatpush2.msra.mxu0 %v5493
    %5774 = vmatprep.subr.mxu0 0.0
    %5775 = vmatpush2.msra.mxu0 %v5492
    %5776 = vmatprep.subr.mxu0 0.0
    %5777 = vmatpush2.msra.mxu0 %v5491
    %5778 = vmatprep.subr.mxu0 0.0
    %5779 = vmatpush2.msra.mxu0 %v5490
    %5780 = vmatprep.subr.mxu0 0.0
    %5781 = vmatpush2.msra.mxu0 %v5489
    %5782 = vmatprep.subr.mxu0 0.0
    %5783 = vmatpush2.msra.mxu0 %v5488
    %5784 = vmatprep.subr.mxu0 0.0
    %5785 = vmatpush2.msra.mxu0 %v5487
    %5786 = vmatprep.subr.mxu0 0.0
    %5787 = vmatpush2.msra.mxu0 %v5486
    %5788 = vmatprep.subr.mxu0 0.0
    %5789 = vmatpush2.msra.mxu0 %v5485
    %5790 = vmatprep.subr.mxu0 0.0
    %5791 = vmatpush2.msra.mxu0 %v5484
    %5792 = vmatprep.subr.mxu0 0.0
    %5793 = vmatpush2.msra.mxu0 %v5483
    %5794 = vmatprep.mubr.f32.mxu0 %v5436
    %5795 = vmatmul.mubr.f32.gmra.mxu0 %v5435
    %v5796 = vpop.f32.mrf.mxu0
    %v5797 = vadd.f32 %v5728, %v5796
    %v5798 = vpop.f32.mrf.mxu0
    %5799 = vmatprep.mubr.f32.mxu0 %v5452
    %5800 = vmatmul.mubr.f32.gmra.mxu0 %v5451
    %v5801 = vpop.f32.mrf.mxu0
    %v5802 = vadd.f32 %v5728, %v5801
    %v5803 = vpop.f32.mrf.mxu0
    %5804 = vdwg.mxu0
    %5805 = vmatprep.subr.mxu0 0.0
    %5806 = vmatpush1.msra.mxu0 %v5514
    %5807 = vmatprep.subr.mxu0 0.0
    %5808 = vmatpush1.msra.mxu0 %v5513
    %5809 = vmatprep.subr.mxu0 0.0
    %5810 = vmatpush1.msra.mxu0 %v5512
    %5811 = vmatprep.subr.mxu0 0.0
    %5812 = vmatpush1.msra.mxu0 %v5511
    %5813 = vmatprep.subr.mxu0 0.0
    %5814 = vmatpush1.msra.mxu0 %v5510
    %5815 = vmatprep.subr.mxu0 0.0
    %5816 = vmatpush1.msra.mxu0 %v5509
    %5817 = vmatprep.subr.mxu0 0.0
    %5818 = vmatpush1.msra.mxu0 %v5508
    %5819 = vmatprep.subr.mxu0 0.0
    %5820 = vmatpush1.msra.mxu0 %v5507
    %5821 = vmatprep.subr.mxu0 0.0
    %5822 = vmatpush1.msra.mxu0 %v5506
    %5823 = vmatprep.subr.mxu0 0.0
    %5824 = vmatpush1.msra.mxu0 %v5505
    %5825 = vmatprep.subr.mxu0 0.0
    %5826 = vmatpush1.msra.mxu0 %v5504
    %5827 = vmatprep.subr.mxu0 0.0
    %5828 = vmatpush1.msra.mxu0 %v5503
    %5829 = vmatprep.subr.mxu0 0.0
    %5830 = vmatpush1.msra.mxu0 %v5502
    %5831 = vmatprep.subr.mxu0 0.0
    %5832 = vmatpush1.msra.mxu0 %v5501
    %5833 = vmatprep.subr.mxu0 0.0
    %5834 = vmatpush1.msra.mxu0 %v5500
    %5835 = vmatprep.subr.mxu0 0.0
    %5836 = vmatpush1.msra.mxu0 %v5499
    %5837 = vmatprep.subr.mxu0 0.0
    %5838 = vmatpush2.msra.mxu0 %v5530
    %5839 = vmatprep.subr.mxu0 0.0
    %5840 = vmatpush2.msra.mxu0 %v5529
    %5841 = vmatprep.subr.mxu0 0.0
    %5842 = vmatpush2.msra.mxu0 %v5528
    %5843 = vmatprep.subr.mxu0 0.0
    %5844 = vmatpush2.msra.mxu0 %v5527
    %5845 = vmatprep.subr.mxu0 0.0
    %5846 = vmatpush2.msra.mxu0 %v5526
    %5847 = vmatprep.subr.mxu0 0.0
    %5848 = vmatpush2.msra.mxu0 %v5525
    %5849 = vmatprep.subr.mxu0 0.0
    %5850 = vmatpush2.msra.mxu0 %v5524
    %5851 = vmatprep.subr.mxu0 0.0
    %5852 = vmatpush2.msra.mxu0 %v5523
    %5853 = vmatprep.subr.mxu0 0.0
    %5854 = vmatpush2.msra.mxu0 %v5522
    %5855 = vmatprep.subr.mxu0 0.0
    %5856 = vmatpush2.msra.mxu0 %v5521
    %5857 = vmatprep.subr.mxu0 0.0
    %5858 = vmatpush2.msra.mxu0 %v5520
    %5859 = vmatprep.subr.mxu0 0.0
    %5860 = vmatpush2.msra.mxu0 %v5519
    %5861 = vmatprep.subr.mxu0 0.0
    %5862 = vmatpush2.msra.mxu0 %v5518
    %5863 = vmatprep.subr.mxu0 0.0
    %5864 = vmatpush2.msra.mxu0 %v5517
    %5865 = vmatprep.subr.mxu0 0.0
    %5866 = vmatpush2.msra.mxu0 %v5516
    %5867 = vmatprep.subr.mxu0 0.0
    %5868 = vmatpush2.msra.mxu0 %v5515
    %5869 = vmatprep.mubr.f32.mxu0 %v5438
    %5870 = vmatmul.mubr.f32.gmra.mxu0 %v5437
    %v5871 = vpop.f32.mrf.mxu0
    %v5872 = vadd.f32 %v5797, %v5871
    %v5873 = vpop.f32.mrf.mxu0
    %5874 = vmatprep.mubr.f32.mxu0 %v5454
    %5875 = vmatmul.mubr.f32.gmra.mxu0 %v5453
    %v5876 = vpop.f32.mrf.mxu0
    %v5877 = vadd.f32 %v5802, %v5876
    %v5878 = vpop.f32.mrf.mxu0
    %5879 = vdwg.mxu0
    %5880 = vmatprep.subr.mxu0 0.0
    %5881 = vmatpush1.msra.mxu0 %v5546
    %5882 = vmatprep.subr.mxu0 0.0
    %5883 = vmatpush1.msra.mxu0 %v5545
    %5884 = vmatprep.subr.mxu0 0.0
    %5885 = vmatpush1.msra.mxu0 %v5544
    %5886 = vmatprep.subr.mxu0 0.0
    %5887 = vmatpush1.msra.mxu0 %v5543
    %5888 = vmatprep.subr.mxu0 0.0
    %5889 = vmatpush1.msra.mxu0 %v5542
    %5890 = vmatprep.subr.mxu0 0.0
    %5891 = vmatpush1.msra.mxu0 %v5541
    %5892 = vmatprep.subr.mxu0 0.0
    %5893 = vmatpush1.msra.mxu0 %v5540
    %5894 = vmatprep.subr.mxu0 0.0
    %5895 = vmatpush1.msra.mxu0 %v5539
    %5896 = vmatprep.subr.mxu0 0.0
    %5897 = vmatpush1.msra.mxu0 %v5538
    %5898 = vmatprep.subr.mxu0 0.0
    %5899 = vmatpush1.msra.mxu0 %v5537
    %5900 = vmatprep.subr.mxu0 0.0
    %5901 = vmatpush1.msra.mxu0 %v5536
    %5902 = vmatprep.subr.mxu0 0.0
    %5903 = vmatpush1.msra.mxu0 %v5535
    %5904 = vmatprep.subr.mxu0 0.0
    %5905 = vmatpush1.msra.mxu0 %v5534
    %5906 = vmatprep.subr.mxu0 0.0
    %5907 = vmatpush1.msra.mxu0 %v5533
    %5908 = vmatprep.subr.mxu0 0.0
    %5909 = vmatpush1.msra.mxu0 %v5532
    %5910 = vmatprep.subr.mxu0 0.0
    %5911 = vmatpush1.msra.mxu0 %v5531
    %5912 = vmatprep.subr.mxu0 0.0
    %5913 = vmatpush2.msra.mxu0 %v5562
    %5914 = vmatprep.subr.mxu0 0.0
    %5915 = vmatpush2.msra.mxu0 %v5561
    %5916 = vmatprep.subr.mxu0 0.0
    %5917 = vmatpush2.msra.mxu0 %v5560
    %5918 = vmatprep.subr.mxu0 0.0
    %5919 = vmatpush2.msra.mxu0 %v5559
    %5920 = vmatprep.subr.mxu0 0.0
    %5921 = vmatpush2.msra.mxu0 %v5558
    %5922 = vmatprep.subr.mxu0 0.0
    %5923 = vmatpush2.msra.mxu0 %v5557
    %5924 = vmatprep.subr.mxu0 0.0
    %5925 = vmatpush2.msra.mxu0 %v5556
    %5926 = vmatprep.subr.mxu0 0.0
    %5927 = vmatpush2.msra.mxu0 %v5555
    %5928 = vmatprep.subr.mxu0 0.0
    %5929 = vmatpush2.msra.mxu0 %v5554
    %5930 = vmatprep.subr.mxu0 0.0
    %5931 = vmatpush2.msra.mxu0 %v5553
    %5932 = vmatprep.subr.mxu0 0.0
    %5933 = vmatpush2.msra.mxu0 %v5552
    %5934 = vmatprep.subr.mxu0 0.0
    %5935 = vmatpush2.msra.mxu0 %v5551
    %5936 = vmatprep.subr.mxu0 0.0
    %5937 = vmatpush2.msra.mxu0 %v5550
    %5938 = vmatprep.subr.mxu0 0.0
    %5939 = vmatpush2.msra.mxu0 %v5549
    %5940 = vmatprep.subr.mxu0 0.0
    %5941 = vmatpush2.msra.mxu0 %v5548
    %5942 = vmatprep.subr.mxu0 0.0
    %5943 = vmatpush2.msra.mxu0 %v5547
    %5944 = vmatprep.mubr.f32.mxu0 %v5440
    %5945 = vmatmul.mubr.f32.gmra.mxu0 %v5439
    %v5946 = vpop.f32.mrf.mxu0
    %v5947 = vadd.f32 %v5872, %v5946
    %v5948 = vpop.f32.mrf.mxu0
    %5949 = vmatprep.mubr.f32.mxu0 %v5456
    %5950 = vmatmul.mubr.f32.gmra.mxu0 %v5455
    %v5951 = vpop.f32.mrf.mxu0
    %v5952 = vadd.f32 %v5877, %v5951
    %v5953 = vpop.f32.mrf.mxu0
    %5954 = vdwg.mxu0
    %5955 = vmatprep.subr.mxu0 0.0
    %5956 = vmatpush1.msra.mxu0 %v5578
    %5957 = vmatprep.subr.mxu0 0.0
    %5958 = vmatpush1.msra.mxu0 %v5577
    %5959 = vmatprep.subr.mxu0 0.0
    %5960 = vmatpush1.msra.mxu0 %v5576
    %5961 = vmatprep.subr.mxu0 0.0
    %5962 = vmatpush1.msra.mxu0 %v5575
    %5963 = vmatprep.subr.mxu0 0.0
    %5964 = vmatpush1.msra.mxu0 %v5574
    %5965 = vmatprep.subr.mxu0 0.0
    %5966 = vmatpush1.msra.mxu0 %v5573
    %5967 = vmatprep.subr.mxu0 0.0
    %5968 = vmatpush1.msra.mxu0 %v5572
    %5969 = vmatprep.subr.mxu0 0.0
    %5970 = vmatpush1.msra.mxu0 %v5571
    %5971 = vmatprep.subr.mxu0 0.0
    %5972 = vmatpush1.msra.mxu0 %v5570
    %5973 = vmatprep.subr.mxu0 0.0
    %5974 = vmatpush1.msra.mxu0 %v5569
    %5975 = vmatprep.subr.mxu0 0.0
    %5976 = vmatpush1.msra.mxu0 %v5568
    %5977 = vmatprep.subr.mxu0 0.0
    %5978 = vmatpush1.msra.mxu0 %v5567
    %5979 = vmatprep.subr.mxu0 0.0
    %5980 = vmatpush1.msra.mxu0 %v5566
    %5981 = vmatprep.subr.mxu0 0.0
    %5982 = vmatpush1.msra.mxu0 %v5565
    %5983 = vmatprep.subr.mxu0 0.0
    %5984 = vmatpush1.msra.mxu0 %v5564
    %5985 = vmatprep.subr.mxu0 0.0
    %5986 = vmatpush1.msra.mxu0 %v5563
    %5987 = vmatprep.subr.mxu0 0.0
    %5988 = vmatpush2.msra.mxu0 %v5594
    %5989 = vmatprep.subr.mxu0 0.0
    %5990 = vmatpush2.msra.mxu0 %v5593
    %5991 = vmatprep.subr.mxu0 0.0
    %5992 = vmatpush2.msra.mxu0 %v5592
    %5993 = vmatprep.subr.mxu0 0.0
    %5994 = vmatpush2.msra.mxu0 %v5591
    %5995 = vmatprep.subr.mxu0 0.0
    %5996 = vmatpush2.msra.mxu0 %v5590
    %5997 = vmatprep.subr.mxu0 0.0
    %5998 = vmatpush2.msra.mxu0 %v5589
    %5999 = vmatprep.subr.mxu0 0.0
    %6000 = vmatpush2.msra.mxu0 %v5588
    %6001 = vmatprep.subr.mxu0 0.0
    %6002 = vmatpush2.msra.mxu0 %v5587
    %6003 = vmatprep.subr.mxu0 0.0
    %6004 = vmatpush2.msra.mxu0 %v5586
    %6005 = vmatprep.subr.mxu0 0.0
    %6006 = vmatpush2.msra.mxu0 %v5585
    %6007 = vmatprep.subr.mxu0 0.0
    %6008 = vmatpush2.msra.mxu0 %v5584
    %6009 = vmatprep.subr.mxu0 0.0
    %6010 = vmatpush2.msra.mxu0 %v5583
    %6011 = vmatprep.subr.mxu0 0.0
    %6012 = vmatpush2.msra.mxu0 %v5582
    %6013 = vmatprep.subr.mxu0 0.0
    %6014 = vmatpush2.msra.mxu0 %v5581
    %6015 = vmatprep.subr.mxu0 0.0
    %6016 = vmatpush2.msra.mxu0 %v5580
    %6017 = vmatprep.subr.mxu0 0.0
    %6018 = vmatpush2.msra.mxu0 %v5579
    %6019 = vmatprep.mubr.f32.mxu0 %v5442
    %6020 = vmatmul.mubr.f32.gmra.mxu0 %v5441
    %v6021 = vpop.f32.mrf.mxu0
    %v6022 = vadd.f32 %v5947, %v6021
    %v6023 = vpop.f32.mrf.mxu0
    %6024 = vmatprep.mubr.f32.mxu0 %v5458
    %6025 = vmatmul.mubr.f32.gmra.mxu0 %v5457
    %v6026 = vpop.f32.mrf.mxu0
    %v6027 = vadd.f32 %v5952, %v6026
    %v6028 = vpop.f32.mrf.mxu0
    %6029 = vdwg.mxu0
    %6030 = vmatprep.subr.mxu0 0.0
    %6031 = vmatpush1.msra.mxu0 %v5610
    %6032 = vmatprep.subr.mxu0 0.0
    %6033 = vmatpush1.msra.mxu0 %v5609
    %6034 = vmatprep.subr.mxu0 0.0
    %6035 = vmatpush1.msra.mxu0 %v5608
    %6036 = vmatprep.subr.mxu0 0.0
    %6037 = vmatpush1.msra.mxu0 %v5607
    %6038 = vmatprep.subr.mxu0 0.0
    %6039 = vmatpush1.msra.mxu0 %v5606
    %6040 = vmatprep.subr.mxu0 0.0
    %6041 = vmatpush1.msra.mxu0 %v5605
    %6042 = vmatprep.subr.mxu0 0.0
    %6043 = vmatpush1.msra.mxu0 %v5604
    %6044 = vmatprep.subr.mxu0 0.0
    %6045 = vmatpush1.msra.mxu0 %v5603
    %6046 = vmatprep.subr.mxu0 0.0
    %6047 = vmatpush1.msra.mxu0 %v5602
    %6048 = vmatprep.subr.mxu0 0.0
    %6049 = vmatpush1.msra.mxu0 %v5601
    %6050 = vmatprep.subr.mxu0 0.0
    %6051 = vmatpush1.msra.mxu0 %v5600
    %6052 = vmatprep.subr.mxu0 0.0
    %6053 = vmatpush1.msra.mxu0 %v5599
    %6054 = vmatprep.subr.mxu0 0.0
    %6055 = vmatpush1.msra.mxu0 %v5598
    %6056 = vmatprep.subr.mxu0 0.0
    %6057 = vmatpush1.msra.mxu0 %v5597
    %6058 = vmatprep.subr.mxu0 0.0
    %6059 = vmatpush1.msra.mxu0 %v5596
    %6060 = vmatprep.subr.mxu0 0.0
    %6061 = vmatpush1.msra.mxu0 %v5595
    %6062 = vmatprep.subr.mxu0 0.0
    %6063 = vmatpush2.msra.mxu0 %v5626
    %6064 = vmatprep.subr.mxu0 0.0
    %6065 = vmatpush2.msra.mxu0 %v5625
    %6066 = vmatprep.subr.mxu0 0.0
    %6067 = vmatpush2.msra.mxu0 %v5624
    %6068 = vmatprep.subr.mxu0 0.0
    %6069 = vmatpush2.msra.mxu0 %v5623
    %6070 = vmatprep.subr.mxu0 0.0
    %6071 = vmatpush2.msra.mxu0 %v5622
    %6072 = vmatprep.subr.mxu0 0.0
    %6073 = vmatpush2.msra.mxu0 %v5621
    %6074 = vmatprep.subr.mxu0 0.0
    %6075 = vmatpush2.msra.mxu0 %v5620
    %6076 = vmatprep.subr.mxu0 0.0
    %6077 = vmatpush2.msra.mxu0 %v5619
    %6078 = vmatprep.subr.mxu0 0.0
    %6079 = vmatpush2.msra.mxu0 %v5618
    %6080 = vmatprep.subr.mxu0 0.0
    %6081 = vmatpush2.msra.mxu0 %v5617
    %6082 = vmatprep.subr.mxu0 0.0
    %6083 = vmatpush2.msra.mxu0 %v5616
    %6084 = vmatprep.subr.mxu0 0.0
    %6085 = vmatpush2.msra.mxu0 %v5615
    %6086 = vmatprep.subr.mxu0 0.0
    %6087 = vmatpush2.msra.mxu0 %v5614
    %6088 = vmatprep.subr.mxu0 0.0
    %6089 = vmatpush2.msra.mxu0 %v5613
    %6090 = vmatprep.subr.mxu0 0.0
    %6091 = vmatpush2.msra.mxu0 %v5612
    %6092 = vmatprep.subr.mxu0 0.0
    %6093 = vmatpush2.msra.mxu0 %v5611
    %6094 = vmatprep.mubr.f32.mxu0 %v5444
    %6095 = vmatmul.mubr.f32.gmra.mxu0 %v5443
    %v6096 = vpop.f32.mrf.mxu0
    %v6097 = vadd.f32 %v6022, %v6096
    %v6098 = vpop.f32.mrf.mxu0
    %6099 = vmatprep.mubr.f32.mxu0 %v5460
    %6100 = vmatmul.mubr.f32.gmra.mxu0 %v5459
    %v6101 = vpop.f32.mrf.mxu0
    %v6102 = vadd.f32 %v6027, %v6101
    %v6103 = vpop.f32.mrf.mxu0
    %6104 = vdwg.mxu0
    %6105 = vmatprep.subr.mxu0 0.0
    %6106 = vmatpush1.msra.mxu0 %v5642
    %6107 = vmatprep.subr.mxu0 0.0
    %6108 = vmatpush1.msra.mxu0 %v5641
    %6109 = vmatprep.subr.mxu0 0.0
    %6110 = vmatpush1.msra.mxu0 %v5640
    %6111 = vmatprep.subr.mxu0 0.0
    %6112 = vmatpush1.msra.mxu0 %v5639
    %6113 = vmatprep.subr.mxu0 0.0
    %6114 = vmatpush1.msra.mxu0 %v5638
    %6115 = vmatprep.subr.mxu0 0.0
    %6116 = vmatpush1.msra.mxu0 %v5637
    %6117 = vmatprep.subr.mxu0 0.0
    %6118 = vmatpush1.msra.mxu0 %v5636
    %6119 = vmatprep.subr.mxu0 0.0
    %6120 = vmatpush1.msra.mxu0 %v5635
    %6121 = vmatprep.subr.mxu0 0.0
    %6122 = vmatpush1.msra.mxu0 %v5634
    %6123 = vmatprep.subr.mxu0 0.0
    %6124 = vmatpush1.msra.mxu0 %v5633
    %6125 = vmatprep.subr.mxu0 0.0
    %6126 = vmatpush1.msra.mxu0 %v5632
    %6127 = vmatprep.subr.mxu0 0.0
    %6128 = vmatpush1.msra.mxu0 %v5631
    %6129 = vmatprep.subr.mxu0 0.0
    %6130 = vmatpush1.msra.mxu0 %v5630
    %6131 = vmatprep.subr.mxu0 0.0
    %6132 = vmatpush1.msra.mxu0 %v5629
    %6133 = vmatprep.subr.mxu0 0.0
    %6134 = vmatpush1.msra.mxu0 %v5628
    %6135 = vmatprep.subr.mxu0 0.0
    %6136 = vmatpush1.msra.mxu0 %v5627
    %6137 = vmatprep.subr.mxu0 0.0
    %6138 = vmatpush2.msra.mxu0 %v5658
    %6139 = vmatprep.subr.mxu0 0.0
    %6140 = vmatpush2.msra.mxu0 %v5657
    %6141 = vmatprep.subr.mxu0 0.0
    %6142 = vmatpush2.msra.mxu0 %v5656
    %6143 = vmatprep.subr.mxu0 0.0
    %6144 = vmatpush2.msra.mxu0 %v5655
    %6145 = vmatprep.subr.mxu0 0.0
    %6146 = vmatpush2.msra.mxu0 %v5654
    %6147 = vmatprep.subr.mxu0 0.0
    %6148 = vmatpush2.msra.mxu0 %v5653
    %6149 = vmatprep.subr.mxu0 0.0
    %6150 = vmatpush2.msra.mxu0 %v5652
    %6151 = vmatprep.subr.mxu0 0.0
    %6152 = vmatpush2.msra.mxu0 %v5651
    %6153 = vmatprep.subr.mxu0 0.0
    %6154 = vmatpush2.msra.mxu0 %v5650
    %6155 = vmatprep.subr.mxu0 0.0
    %6156 = vmatpush2.msra.mxu0 %v5649
    %6157 = vmatprep.subr.mxu0 0.0
    %6158 = vmatpush2.msra.mxu0 %v5648
    %6159 = vmatprep.subr.mxu0 0.0
    %6160 = vmatpush2.msra.mxu0 %v5647
    %6161 = vmatprep.subr.mxu0 0.0
    %6162 = vmatpush2.msra.mxu0 %v5646
    %6163 = vmatprep.subr.mxu0 0.0
    %6164 = vmatpush2.msra.mxu0 %v5645
    %6165 = vmatprep.subr.mxu0 0.0
    %6166 = vmatpush2.msra.mxu0 %v5644
    %6167 = vmatprep.subr.mxu0 0.0
    %6168 = vmatpush2.msra.mxu0 %v5643
    %6169 = vmatprep.mubr.f32.mxu0 %v5446
    %6170 = vmatmul.mubr.f32.gmra.mxu0 %v5445
    %v6171 = vpop.f32.mrf.mxu0
    %v6172 = vadd.f32 %v6097, %v6171
    %v6173 = vpop.f32.mrf.mxu0
    %6174 = vmatprep.mubr.f32.mxu0 %v5462
    %6175 = vmatmul.mubr.f32.gmra.mxu0 %v5461
    %v6176 = vpop.f32.mrf.mxu0
    %v6177 = vadd.f32 %v6102, %v6176
    %v6178 = vpop.f32.mrf.mxu0
    %6179 = vdwg.mxu0
    %6180 = vmatprep.subr.mxu0 0.0
    %6181 = vmatpush1.msra.mxu0 %v5674
    %6182 = vmatprep.subr.mxu0 0.0
    %6183 = vmatpush1.msra.mxu0 %v5673
    %6184 = vmatprep.subr.mxu0 0.0
    %6185 = vmatpush1.msra.mxu0 %v5672
    %6186 = vmatprep.subr.mxu0 0.0
    %6187 = vmatpush1.msra.mxu0 %v5671
    %6188 = vmatprep.subr.mxu0 0.0
    %6189 = vmatpush1.msra.mxu0 %v5670
    %6190 = vmatprep.subr.mxu0 0.0
    %6191 = vmatpush1.msra.mxu0 %v5669
    %6192 = vmatprep.subr.mxu0 0.0
    %6193 = vmatpush1.msra.mxu0 %v5668
    %6194 = vmatprep.subr.mxu0 0.0
    %6195 = vmatpush1.msra.mxu0 %v5667
    %6196 = vmatprep.subr.mxu0 0.0
    %6197 = vmatpush1.msra.mxu0 %v5666
    %6198 = vmatprep.subr.mxu0 0.0
    %6199 = vmatpush1.msra.mxu0 %v5665
    %6200 = vmatprep.subr.mxu0 0.0
    %6201 = vmatpush1.msra.mxu0 %v5664
    %6202 = vmatprep.subr.mxu0 0.0
    %6203 = vmatpush1.msra.mxu0 %v5663
    %6204 = vmatprep.subr.mxu0 0.0
    %6205 = vmatpush1.msra.mxu0 %v5662
    %6206 = vmatprep.subr.mxu0 0.0
    %6207 = vmatpush1.msra.mxu0 %v5661
    %6208 = vmatprep.subr.mxu0 0.0
    %6209 = vmatpush1.msra.mxu0 %v5660
    %6210 = vmatprep.subr.mxu0 0.0
    %6211 = vmatpush1.msra.mxu0 %v5659
    %6212 = vmatprep.subr.mxu0 0.0
    %6213 = vmatpush2.msra.mxu0 %v5690
    %6214 = vmatprep.subr.mxu0 0.0
    %6215 = vmatpush2.msra.mxu0 %v5689
    %6216 = vmatprep.subr.mxu0 0.0
    %6217 = vmatpush2.msra.mxu0 %v5688
    %6218 = vmatprep.subr.mxu0 0.0
    %6219 = vmatpush2.msra.mxu0 %v5687
    %6220 = vmatprep.subr.mxu0 0.0
    %6221 = vmatpush2.msra.mxu0 %v5686
    %6222 = vmatprep.subr.mxu0 0.0
    %6223 = vmatpush2.msra.mxu0 %v5685
    %6224 = vmatprep.subr.mxu0 0.0
    %6225 = vmatpush2.msra.mxu0 %v5684
    %6226 = vmatprep.subr.mxu0 0.0
    %6227 = vmatpush2.msra.mxu0 %v5683
    %6228 = vmatprep.subr.mxu0 0.0
    %6229 = vmatpush2.msra.mxu0 %v5682
    %6230 = vmatprep.subr.mxu0 0.0
    %6231 = vmatpush2.msra.mxu0 %v5681
    %6232 = vmatprep.subr.mxu0 0.0
    %6233 = vmatpush2.msra.mxu0 %v5680
    %6234 = vmatprep.subr.mxu0 0.0
    %6235 = vmatpush2.msra.mxu0 %v5679
    %6236 = vmatprep.subr.mxu0 0.0
    %6237 = vmatpush2.msra.mxu0 %v5678
    %6238 = vmatprep.subr.mxu0 0.0
    %6239 = vmatpush2.msra.mxu0 %v5677
    %6240 = vmatprep.subr.mxu0 0.0
    %6241 = vmatpush2.msra.mxu0 %v5676
    %6242 = vmatprep.subr.mxu0 0.0
    %6243 = vmatpush2.msra.mxu0 %v5675
    %6244 = vmatprep.mubr.f32.mxu0 %v5448
    %6245 = vmatmul.mubr.f32.gmra.mxu0 %v5447
    %v6246 = vpop.f32.mrf.mxu0
    %v6247 = vadd.f32 %v6172, %v6246
    %v6248 = vpop.f32.mrf.mxu0
    %6249 = vmatprep.mubr.f32.mxu0 %v5464
    %6250 = vmatmul.mubr.f32.gmra.mxu0 %v5463
    %v6251 = vpop.f32.mrf.mxu0
    %v6252 = vadd.f32 %v6177, %v6251
    %v6253 = vpop.f32.mrf.mxu0
    %6254 = vdwg.mxu0
    %6255 = vmatprep.subr.mxu0 0.0
    %6256 = vmatpush1.msra.mxu0 %v5706
    %6257 = vmatprep.subr.mxu0 0.0
    %6258 = vmatpush1.msra.mxu0 %v5705
    %6259 = vmatprep.subr.mxu0 0.0
    %6260 = vmatpush1.msra.mxu0 %v5704
    %6261 = vmatprep.subr.mxu0 0.0
    %6262 = vmatpush1.msra.mxu0 %v5703
    %6263 = vmatprep.subr.mxu0 0.0
    %6264 = vmatpush1.msra.mxu0 %v5702
    %6265 = vmatprep.subr.mxu0 0.0
    %6266 = vmatpush1.msra.mxu0 %v5701
    %6267 = vmatprep.subr.mxu0 0.0
    %6268 = vmatpush1.msra.mxu0 %v5700
    %6269 = vmatprep.subr.mxu0 0.0
    %6270 = vmatpush1.msra.mxu0 %v5699
    %6271 = vmatprep.subr.mxu0 0.0
    %6272 = vmatpush1.msra.mxu0 %v5698
    %6273 = vmatprep.subr.mxu0 0.0
    %6274 = vmatpush1.msra.mxu0 %v5697
    %6275 = vmatprep.subr.mxu0 0.0
    %6276 = vmatpush1.msra.mxu0 %v5696
    %6277 = vmatprep.subr.mxu0 0.0
    %6278 = vmatpush1.msra.mxu0 %v5695
    %6279 = vmatprep.subr.mxu0 0.0
    %6280 = vmatpush1.msra.mxu0 %v5694
    %6281 = vmatprep.subr.mxu0 0.0
    %6282 = vmatpush1.msra.mxu0 %v5693
    %6283 = vmatprep.subr.mxu0 0.0
    %6284 = vmatpush1.msra.mxu0 %v5692
    %6285 = vmatprep.subr.mxu0 0.0
    %6286 = vmatpush1.msra.mxu0 %v5691
    %6287 = vmatprep.subr.mxu0 0.0
    %6288 = vmatpush2.msra.mxu0 %v5722
    %6289 = vmatprep.subr.mxu0 0.0
    %6290 = vmatpush2.msra.mxu0 %v5721
    %6291 = vmatprep.subr.mxu0 0.0
    %6292 = vmatpush2.msra.mxu0 %v5720
    %6293 = vmatprep.subr.mxu0 0.0
    %6294 = vmatpush2.msra.mxu0 %v5719
    %6295 = vmatprep.subr.mxu0 0.0
    %6296 = vmatpush2.msra.mxu0 %v5718
    %6297 = vmatprep.subr.mxu0 0.0
    %6298 = vmatpush2.msra.mxu0 %v5717
    %6299 = vmatprep.subr.mxu0 0.0
    %6300 = vmatpush2.msra.mxu0 %v5716
    %6301 = vmatprep.subr.mxu0 0.0
    %6302 = vmatpush2.msra.mxu0 %v5715
    %6303 = vmatprep.subr.mxu0 0.0
    %6304 = vmatpush2.msra.mxu0 %v5714
    %6305 = vmatprep.subr.mxu0 0.0
    %6306 = vmatpush2.msra.mxu0 %v5713
    %6307 = vmatprep.subr.mxu0 0.0
    %6308 = vmatpush2.msra.mxu0 %v5712
    %6309 = vmatprep.subr.mxu0 0.0
    %6310 = vmatpush2.msra.mxu0 %v5711
    %6311 = vmatprep.subr.mxu0 0.0
    %6312 = vmatpush2.msra.mxu0 %v5710
    %6313 = vmatprep.subr.mxu0 0.0
    %6314 = vmatpush2.msra.mxu0 %v5709
    %6315 = vmatprep.subr.mxu0 0.0
    %6316 = vmatpush2.msra.mxu0 %v5708
    %6317 = vmatprep.subr.mxu0 0.0
    %6318 = vmatpush2.msra.mxu0 %v5707
    %6319 = vmatprep.mubr.f32.mxu0 %v5450
    %6320 = vmatmul.mubr.f32.gmra.mxu0 %v5449
    %v6321 = vpop.f32.mrf.mxu0
    %v6322 = vadd.f32 %v6247, %v6321
    %v6323 = vpop.f32.mrf.mxu0
    %6324 = vmatprep.mubr.f32.mxu0 %v5466
    %6325 = vmatmul.mubr.f32.gmra.mxu0 %v5465
    %v6326 = vpop.f32.mrf.mxu0
    %v6327 = vadd.f32 %v6252, %v6326
    %v6328 = vpop.f32.mrf.mxu0
    %6329 = vdwg.mxu0
    %v6330 = vadd.f32 %v3929, %v6322
    %v6331 = vadd.f32 %v4478, %v6327
    %v6332 = vld [vmem:[%s67] sm:$0x1]
    %v6333 = vld [vmem:[%s69] sm:$0x1]
    %6334 = vadd.xlane.f32.xlu0 %v6330
    %v6335 = vpop.xlane.xlu0 %6334
    %6336 = vadd.xlane.f32.xlu0 %v6331
    %v6337 = vpop.xlane.xlu0 %6336
    %v6338 = vmul.f32 %v6335, %v894
    %v6339 = vmul.f32 %v6337, %v894
    %v6340 = vsub.f32 %v6330, %v6338
    %v6341 = vsub.f32 %v6331, %v6339
    %v6342 = vmul.f32 %v6340, %v6340
    %v6343 = vmul.f32 %v6341, %v6341
    %6344 = vadd.xlane.f32.xlu0 %v6342
    %v6345 = vpop.xlane.xlu0 %6344
    %6346 = vadd.xlane.f32.xlu0 %v6343
    %v6347 = vpop.xlane.xlu0 %6346
    %v6348 = vmul.f32 %v6345, %v894
    %v6349 = vmul.f32 %v6347, %v894
    %v6350 = vadd.f32 %v6348, 1e-05
    %v6351 = vadd.f32 %v6349, 1e-05
    %v6352 = vrsqrt.pop %v6350
    %v6353 = vrsqrt.pop %v6351
    %v6354 = vmul.f32 %v6340, %v6352
    %v6355 = vmul.f32 %v6341, %v6353
    %v6357 = vlaneseq
    %v6358 = vshrl.u32 %v6357, 7
    %v6359 = vsub.s32 0, %v6358
    %v6360 = vrot.slane %v6332, %v6359
    %v6362 = vmul.f32 %v6354, %v6360
    %v6363 = vmul.f32 %v6355, %v6360
    %v6365 = vlaneseq
    %v6366 = vshrl.u32 %v6365, 7
    %v6367 = vsub.s32 0, %v6366
    %v6368 = vrot.slane %v6333, %v6367
    %v6370 = vadd.f32 %v6362, %v6368
    %v6371 = vadd.f32 %v6363, %v6368
    loop: start=0, step=1, limit=8
    $region258: #{transformer_forward.1} parent=1 // loop_pre_header
      _
    $region259: #{transformer_forward.1} parent=1 // loop_header
      %s6373 = sphi 0, %s6377
      %p6374 = scmp.ge.s32.totalorder %s6373, 8
      %v6378 = vphi 0.0, %v6905
    $region260: #{transformer_forward.1} parent=1 // loop_header_branch
      %6376 = sbr.rel (%p6374) target = $region264
    $region261: #{transformer_forward.1} parent=1 // loop_body
      %s6379 = smul.u32 %s6373, 128
      %s6380 = scalar_lea.vmem %s71, %s6379
      %v6381 = vld [vmem:[%s6380] sm:$0xff]
      %v6382 = vld [vmem:[%s6380 + $0x8] sm:$0xff]
      %v6383 = vld [vmem:[%s6380 + $0x10] sm:$0xff]
      %v6384 = vld [vmem:[%s6380 + $0x18] sm:$0xff]
      %v6385 = vld [vmem:[%s6380 + $0x20] sm:$0xff]
      %v6386 = vld [vmem:[%s6380 + $0x28] sm:$0xff]
      %v6387 = vld [vmem:[%s6380 + $0x30] sm:$0xff]
      %v6388 = vld [vmem:[%s6380 + $0x38] sm:$0xff]
      %v6389 = vld [vmem:[%s6380 + $0x40] sm:$0xff]
      %v6390 = vld [vmem:[%s6380 + $0x48] sm:$0xff]
      %v6391 = vld [vmem:[%s6380 + $0x50] sm:$0xff]
      %v6392 = vld [vmem:[%s6380 + $0x58] sm:$0xff]
      %v6393 = vld [vmem:[%s6380 + $0x60] sm:$0xff]
      %v6394 = vld [vmem:[%s6380 + $0x68] sm:$0xff]
      %v6395 = vld [vmem:[%s6380 + $0x70] sm:$0xff]
      %v6396 = vld [vmem:[%s6380 + $0x78] sm:$0xff]
      %s6397 = scalar_lea.vmem %s73, %s6373
      %v6398 = vld [vmem:[%s6397] sm:$0x1]
      %v6400 = vlaneseq
      %v6401 = vshrl.u32 %v6400, 7
      %v6402 = vsub.s32 0, %v6401
      %v6403 = vrot.slane %v6398, %v6402
      %6405 = vmatprep.subr.mxu0 0.0
      %6406 = vmatpush1.msra.mxu0 %v6396
      %6407 = vmatprep.subr.mxu0 0.0
      %6408 = vmatpush1.msra.mxu0 %v6395
      %6409 = vmatprep.subr.mxu0 0.0
      %6410 = vmatpush1.msra.mxu0 %v6394
      %6411 = vmatprep.subr.mxu0 0.0
      %6412 = vmatpush1.msra.mxu0 %v6393
      %6413 = vmatprep.subr.mxu0 0.0
      %6414 = vmatpush1.msra.mxu0 %v6392
      %6415 = vmatprep.subr.mxu0 0.0
      %6416 = vmatpush1.msra.mxu0 %v6391
      %6417 = vmatprep.subr.mxu0 0.0
      %6418 = vmatpush1.msra.mxu0 %v6390
      %6419 = vmatprep.subr.mxu0 0.0
      %6420 = vmatpush1.msra.mxu0 %v6389
      %6421 = vmatprep.subr.mxu0 0.0
      %6422 = vmatpush1.msra.mxu0 %v6388
      %6423 = vmatprep.subr.mxu0 0.0
      %6424 = vmatpush1.msra.mxu0 %v6387
      %6425 = vmatprep.subr.mxu0 0.0
      %6426 = vmatpush1.msra.mxu0 %v6386
      %6427 = vmatprep.subr.mxu0 0.0
      %6428 = vmatpush1.msra.mxu0 %v6385
      %6429 = vmatprep.subr.mxu0 0.0
      %6430 = vmatpush1.msra.mxu0 %v6384
      %6431 = vmatprep.subr.mxu0 0.0
      %6432 = vmatpush1.msra.mxu0 %v6383
      %6433 = vmatprep.subr.mxu0 0.0
      %6434 = vmatpush1.msra.mxu0 %v6382
      %6435 = vmatprep.subr.mxu0 0.0
      %6436 = vmatpush1.msra.mxu0 %v6381
      %6437 = vmatprep.subr.mxu0 0.0
      %6438 = vmatpush2.msra.mxu0 0.0
      %6439 = vmatprep.subr.mxu0 0.0
      %6440 = vmatpush2.msra.mxu0 0.0
      %6441 = vmatprep.subr.mxu0 0.0
      %6442 = vmatpush2.msra.mxu0 0.0
      %6443 = vmatprep.subr.mxu0 0.0
      %6444 = vmatpush2.msra.mxu0 0.0
      %6445 = vmatprep.subr.mxu0 0.0
      %6446 = vmatpush2.msra.mxu0 0.0
      %6447 = vmatprep.subr.mxu0 0.0
      %6448 = vmatpush2.msra.mxu0 0.0
      %6449 = vmatprep.subr.mxu0 0.0
      %6450 = vmatpush2.msra.mxu0 0.0
      %6451 = vmatprep.subr.mxu0 0.0
      %6452 = vmatpush2.msra.mxu0 0.0
      %6453 = vmatprep.subr.mxu0 0.0
      %6454 = vmatpush2.msra.mxu0 0.0
      %6455 = vmatprep.subr.mxu0 0.0
      %6456 = vmatpush2.msra.mxu0 0.0
      %6457 = vmatprep.subr.mxu0 0.0
      %6458 = vmatpush2.msra.mxu0 0.0
      %6459 = vmatprep.subr.mxu0 0.0
      %6460 = vmatpush2.msra.mxu0 0.0
      %6461 = vmatprep.subr.mxu0 0.0
      %6462 = vmatpush2.msra.mxu0 0.0
      %6463 = vmatprep.subr.mxu0 0.0
      %6464 = vmatpush2.msra.mxu0 0.0
      %6465 = vmatprep.subr.mxu0 0.0
      %6466 = vmatpush2.msra.mxu0 0.0
      %6467 = vmatprep.subr.mxu0 0.0
      %6468 = vmatpush2.msra.mxu0 0.0
      %6469 = vmatprep.mubr.f32.mxu0 0.0
      %6470 = vmatmul.mubr.f32.gmra.mxu0 %v6370
      %v6471 = vpop.f32.mrf.mxu0
      %v6472 = vadd.f32 %v6403, %v6471
      %v6473 = vpop.f32.mrf.mxu0
      %6474 = vdwg.mxu0
      %s6475 = scalar_lea.vmem %s75, %s6379
      %v6476 = vld [vmem:[%s6475] sm:$0xff]
      %v6477 = vld [vmem:[%s6475 + $0x8] sm:$0xff]
      %v6478 = vld [vmem:[%s6475 + $0x10] sm:$0xff]
      %v6479 = vld [vmem:[%s6475 + $0x18] sm:$0xff]
      %v6480 = vld [vmem:[%s6475 + $0x20] sm:$0xff]
      %v6481 = vld [vmem:[%s6475 + $0x28] sm:$0xff]
      %v6482 = vld [vmem:[%s6475 + $0x30] sm:$0xff]
      %v6483 = vld [vmem:[%s6475 + $0x38] sm:$0xff]
      %v6484 = vld [vmem:[%s6475 + $0x40] sm:$0xff]
      %v6485 = vld [vmem:[%s6475 + $0x48] sm:$0xff]
      %v6486 = vld [vmem:[%s6475 + $0x50] sm:$0xff]
      %v6487 = vld [vmem:[%s6475 + $0x58] sm:$0xff]
      %v6488 = vld [vmem:[%s6475 + $0x60] sm:$0xff]
      %v6489 = vld [vmem:[%s6475 + $0x68] sm:$0xff]
      %v6490 = vld [vmem:[%s6475 + $0x70] sm:$0xff]
      %v6491 = vld [vmem:[%s6475 + $0x78] sm:$0xff]
      %s6492 = scalar_lea.vmem %s77, %s6373
      %v6493 = vld [vmem:[%s6492] sm:$0x1]
      %v6495 = vlaneseq
      %v6496 = vshrl.u32 %v6495, 7
      %v6497 = vsub.s32 0, %v6496
      %v6498 = vrot.slane %v6493, %v6497
      %6500 = vmatprep.subr.mxu0 0.0
      %6501 = vmatpush1.msra.mxu0 %v6491
      %6502 = vmatprep.subr.mxu0 0.0
      %6503 = vmatpush1.msra.mxu0 %v6490
      %6504 = vmatprep.subr.mxu0 0.0
      %6505 = vmatpush1.msra.mxu0 %v6489
      %6506 = vmatprep.subr.mxu0 0.0
      %6507 = vmatpush1.msra.mxu0 %v6488
      %6508 = vmatprep.subr.mxu0 0.0
      %6509 = vmatpush1.msra.mxu0 %v6487
      %6510 = vmatprep.subr.mxu0 0.0
      %6511 = vmatpush1.msra.mxu0 %v6486
      %6512 = vmatprep.subr.mxu0 0.0
      %6513 = vmatpush1.msra.mxu0 %v6485
      %6514 = vmatprep.subr.mxu0 0.0
      %6515 = vmatpush1.msra.mxu0 %v6484
      %6516 = vmatprep.subr.mxu0 0.0
      %6517 = vmatpush1.msra.mxu0 %v6483
      %6518 = vmatprep.subr.mxu0 0.0
      %6519 = vmatpush1.msra.mxu0 %v6482
      %6520 = vmatprep.subr.mxu0 0.0
      %6521 = vmatpush1.msra.mxu0 %v6481
      %6522 = vmatprep.subr.mxu0 0.0
      %6523 = vmatpush1.msra.mxu0 %v6480
      %6524 = vmatprep.subr.mxu0 0.0
      %6525 = vmatpush1.msra.mxu0 %v6479
      %6526 = vmatprep.subr.mxu0 0.0
      %6527 = vmatpush1.msra.mxu0 %v6478
      %6528 = vmatprep.subr.mxu0 0.0
      %6529 = vmatpush1.msra.mxu0 %v6477
      %6530 = vmatprep.subr.mxu0 0.0
      %6531 = vmatpush1.msra.mxu0 %v6476
      %6532 = vmatprep.subr.mxu0 0.0
      %6533 = vmatpush2.msra.mxu0 0.0
      %6534 = vmatprep.subr.mxu0 0.0
      %6535 = vmatpush2.msra.mxu0 0.0
      %6536 = vmatprep.subr.mxu0 0.0
      %6537 = vmatpush2.msra.mxu0 0.0
      %6538 = vmatprep.subr.mxu0 0.0
      %6539 = vmatpush2.msra.mxu0 0.0
      %6540 = vmatprep.subr.mxu0 0.0
      %6541 = vmatpush2.msra.mxu0 0.0
      %6542 = vmatprep.subr.mxu0 0.0
      %6543 = vmatpush2.msra.mxu0 0.0
      %6544 = vmatprep.subr.mxu0 0.0
      %6545 = vmatpush2.msra.mxu0 0.0
      %6546 = vmatprep.subr.mxu0 0.0
      %6547 = vmatpush2.msra.mxu0 0.0
      %6548 = vmatprep.subr.mxu0 0.0
      %6549 = vmatpush2.msra.mxu0 0.0
      %6550 = vmatprep.subr.mxu0 0.0
      %6551 = vmatpush2.msra.mxu0 0.0
      %6552 = vmatprep.subr.mxu0 0.0
      %6553 = vmatpush2.msra.mxu0 0.0
      %6554 = vmatprep.subr.mxu0 0.0
      %6555 = vmatpush2.msra.mxu0 0.0
      %6556 = vmatprep.subr.mxu0 0.0
      %6557 = vmatpush2.msra.mxu0 0.0
      %6558 = vmatprep.subr.mxu0 0.0
      %6559 = vmatpush2.msra.mxu0 0.0
      %6560 = vmatprep.subr.mxu0 0.0
      %6561 = vmatpush2.msra.mxu0 0.0
      %6562 = vmatprep.subr.mxu0 0.0
      %6563 = vmatpush2.msra.mxu0 0.0
      %6564 = vmatprep.mubr.f32.mxu0 0.0
      %6565 = vmatmul.mubr.f32.gmra.mxu0 %v6370
      %v6566 = vpop.f32.mrf.mxu0
      %v6567 = vadd.f32 %v6498, %v6566
      %v6568 = vpop.f32.mrf.mxu0
      %6569 = vdwg.mxu0
      %s6570 = scalar_lea.vmem %s79, %s6379
      %v6571 = vld [vmem:[%s6570] sm:$0xff]
      %v6572 = vld [vmem:[%s6570 + $0x8] sm:$0xff]
      %v6573 = vld [vmem:[%s6570 + $0x10] sm:$0xff]
      %v6574 = vld [vmem:[%s6570 + $0x18] sm:$0xff]
      %v6575 = vld [vmem:[%s6570 + $0x20] sm:$0xff]
      %v6576 = vld [vmem:[%s6570 + $0x28] sm:$0xff]
      %v6577 = vld [vmem:[%s6570 + $0x30] sm:$0xff]
      %v6578 = vld [vmem:[%s6570 + $0x38] sm:$0xff]
      %v6579 = vld [vmem:[%s6570 + $0x40] sm:$0xff]
      %v6580 = vld [vmem:[%s6570 + $0x48] sm:$0xff]
      %v6581 = vld [vmem:[%s6570 + $0x50] sm:$0xff]
      %v6582 = vld [vmem:[%s6570 + $0x58] sm:$0xff]
      %v6583 = vld [vmem:[%s6570 + $0x60] sm:$0xff]
      %v6584 = vld [vmem:[%s6570 + $0x68] sm:$0xff]
      %v6585 = vld [vmem:[%s6570 + $0x70] sm:$0xff]
      %v6586 = vld [vmem:[%s6570 + $0x78] sm:$0xff]
      %s6587 = scalar_lea.vmem %s81, %s6373
      %v6588 = vld [vmem:[%s6587] sm:$0x1]
      %v6590 = vlaneseq
      %v6591 = vshrl.u32 %v6590, 7
      %v6592 = vsub.s32 0, %v6591
      %v6593 = vrot.slane %v6588, %v6592
      %6595 = vmatprep.subr.mxu0 0.0
      %6596 = vmatpush1.msra.mxu0 %v6586
      %6597 = vmatprep.subr.mxu0 0.0
      %6598 = vmatpush1.msra.mxu0 %v6585
      %6599 = vmatprep.subr.mxu0 0.0
      %6600 = vmatpush1.msra.mxu0 %v6584
      %6601 = vmatprep.subr.mxu0 0.0
      %6602 = vmatpush1.msra.mxu0 %v6583
      %6603 = vmatprep.subr.mxu0 0.0
      %6604 = vmatpush1.msra.mxu0 %v6582
      %6605 = vmatprep.subr.mxu0 0.0
      %6606 = vmatpush1.msra.mxu0 %v6581
      %6607 = vmatprep.subr.mxu0 0.0
      %6608 = vmatpush1.msra.mxu0 %v6580
      %6609 = vmatprep.subr.mxu0 0.0
      %6610 = vmatpush1.msra.mxu0 %v6579
      %6611 = vmatprep.subr.mxu0 0.0
      %6612 = vmatpush1.msra.mxu0 %v6578
      %6613 = vmatprep.subr.mxu0 0.0
      %6614 = vmatpush1.msra.mxu0 %v6577
      %6615 = vmatprep.subr.mxu0 0.0
      %6616 = vmatpush1.msra.mxu0 %v6576
      %6617 = vmatprep.subr.mxu0 0.0
      %6618 = vmatpush1.msra.mxu0 %v6575
      %6619 = vmatprep.subr.mxu0 0.0
      %6620 = vmatpush1.msra.mxu0 %v6574
      %6621 = vmatprep.subr.mxu0 0.0
      %6622 = vmatpush1.msra.mxu0 %v6573
      %6623 = vmatprep.subr.mxu0 0.0
      %6624 = vmatpush1.msra.mxu0 %v6572
      %6625 = vmatprep.subr.mxu0 0.0
      %6626 = vmatpush1.msra.mxu0 %v6571
      %6627 = vmatprep.subr.mxu0 0.0
      %6628 = vmatpush2.msra.mxu0 0.0
      %6629 = vmatprep.subr.mxu0 0.0
      %6630 = vmatpush2.msra.mxu0 0.0
      %6631 = vmatprep.subr.mxu0 0.0
      %6632 = vmatpush2.msra.mxu0 0.0
      %6633 = vmatprep.subr.mxu0 0.0
      %6634 = vmatpush2.msra.mxu0 0.0
      %6635 = vmatprep.subr.mxu0 0.0
      %6636 = vmatpush2.msra.mxu0 0.0
      %6637 = vmatprep.subr.mxu0 0.0
      %6638 = vmatpush2.msra.mxu0 0.0
      %6639 = vmatprep.subr.mxu0 0.0
      %6640 = vmatpush2.msra.mxu0 0.0
      %6641 = vmatprep.subr.mxu0 0.0
      %6642 = vmatpush2.msra.mxu0 0.0
      %6643 = vmatprep.subr.mxu0 0.0
      %6644 = vmatpush2.msra.mxu0 0.0
      %6645 = vmatprep.subr.mxu0 0.0
      %6646 = vmatpush2.msra.mxu0 0.0
      %6647 = vmatprep.subr.mxu0 0.0
      %6648 = vmatpush2.msra.mxu0 0.0
      %6649 = vmatprep.subr.mxu0 0.0
      %6650 = vmatpush2.msra.mxu0 0.0
      %6651 = vmatprep.subr.mxu0 0.0
      %6652 = vmatpush2.msra.mxu0 0.0
      %6653 = vmatprep.subr.mxu0 0.0
      %6654 = vmatpush2.msra.mxu0 0.0
      %6655 = vmatprep.subr.mxu0 0.0
      %6656 = vmatpush2.msra.mxu0 0.0
      %6657 = vmatprep.subr.mxu0 0.0
      %6658 = vmatpush2.msra.mxu0 0.0
      %6659 = vmatprep.mubr.f32.mxu0 0.0
      %6660 = vmatmul.mubr.f32.gmra.mxu0 %v6370
      %v6661 = vpop.f32.mrf.mxu0
      %v6662 = vadd.f32 %v6593, %v6661
      %v6663 = vpop.f32.mrf.mxu0
      %6664 = vdwg.mxu0
      %vm6665 = vcmask 130048
      %v6667 = vsel %vm6665, %v6472, 0
      %v6670 = vsel %vm6665, %v6567, 0
      %6672 = vmatprep.subr.mxu0 0.0
      %6673 = vmatpush1.xpose.msra.mxu0 0.0
      %6674 = vmatprep.subr.mxu0 0.0
      %6675 = vmatpush1.xpose.msra.mxu0 0.0
      %6676 = vmatprep.subr.mxu0 0.0
      %6677 = vmatpush1.xpose.msra.mxu0 0.0
      %6678 = vmatprep.subr.mxu0 0.0
      %6679 = vmatpush1.xpose.msra.mxu0 0.0
      %6680 = vmatprep.subr.mxu0 0.0
      %6681 = vmatpush1.xpose.msra.mxu0 0.0
      %6682 = vmatprep.subr.mxu0 0.0
      %6683 = vmatpush1.xpose.msra.mxu0 0.0
      %6684 = vmatprep.subr.mxu0 0.0
      %6685 = vmatpush1.xpose.msra.mxu0 0.0
      %6686 = vmatprep.subr.mxu0 0.0
      %6687 = vmatpush1.xpose.msra.mxu0 0.0
      %6688 = vmatprep.subr.mxu0 0.0
      %6689 = vmatpush1.xpose.msra.mxu0 0.0
      %6690 = vmatprep.subr.mxu0 0.0
      %6691 = vmatpush1.xpose.msra.mxu0 0.0
      %6692 = vmatprep.subr.mxu0 0.0
      %6693 = vmatpush1.xpose.msra.mxu0 0.0
      %6694 = vmatprep.subr.mxu0 0.0
      %6695 = vmatpush1.xpose.msra.mxu0 0.0
      %6696 = vmatprep.subr.mxu0 0.0
      %6697 = vmatpush1.xpose.msra.mxu0 0.0
      %6698 = vmatprep.subr.mxu0 0.0
      %6699 = vmatpush1.xpose.msra.mxu0 0.0
      %6700 = vmatprep.subr.mxu0 0.0
      %6701 = vmatpush1.xpose.msra.mxu0 0.0
      %6702 = vmatprep.subr.mxu0 0.0
      %6703 = vmatpush1.xpose.msra.mxu0 %v6670
      %6704 = vmatprep.subr.mxu0 0.0
      %6705 = vmatpush2.xpose.msra.mxu0 0.0
      %6706 = vmatprep.subr.mxu0 0.0
      %6707 = vmatpush2.xpose.msra.mxu0 0.0
      %6708 = vmatprep.subr.mxu0 0.0
      %6709 = vmatpush2.xpose.msra.mxu0 0.0
      %6710 = vmatprep.subr.mxu0 0.0
      %6711 = vmatpush2.xpose.msra.mxu0 0.0
      %6712 = vmatprep.subr.mxu0 0.0
      %6713 = vmatpush2.xpose.msra.mxu0 0.0
      %6714 = vmatprep.subr.mxu0 0.0
      %6715 = vmatpush2.xpose.msra.mxu0 0.0
      %6716 = vmatprep.subr.mxu0 0.0
      %6717 = vmatpush2.xpose.msra.mxu0 0.0
      %6718 = vmatprep.subr.mxu0 0.0
      %6719 = vmatpush2.xpose.msra.mxu0 0.0
      %6720 = vmatprep.subr.mxu0 0.0
      %6721 = vmatpush2.xpose.msra.mxu0 0.0
      %6722 = vmatprep.subr.mxu0 0.0
      %6723 = vmatpush2.xpose.msra.mxu0 0.0
      %6724 = vmatprep.subr.mxu0 0.0
      %6725 = vmatpush2.xpose.msra.mxu0 0.0
      %6726 = vmatprep.subr.mxu0 0.0
      %6727 = vmatpush2.xpose.msra.mxu0 0.0
      %6728 = vmatprep.subr.mxu0 0.0
      %6729 = vmatpush2.xpose.msra.mxu0 0.0
      %6730 = vmatprep.subr.mxu0 0.0
      %6731 = vmatpush2.xpose.msra.mxu0 0.0
      %6732 = vmatprep.subr.mxu0 0.0
      %6733 = vmatpush2.xpose.msra.mxu0 0.0
      %6734 = vmatprep.subr.mxu0 0.0
      %6735 = vmatpush2.xpose.msra.mxu0 0.0
      %6736 = vmatprep.mubr.f32.mxu0 0.0
      %6737 = vmatmul.mubr.f32.gmra.mxu0 %v6667
      %v6738 = vpop.f32.mrf.mxu0
      %v6739 = vadd.f32 0.0, %v6738
      %v6740 = vpop.f32.mrf.mxu0
      %6741 = vdwg.mxu0
      %v6742 = vmul.f32 %v6739, 0.25
      %vm6743 = vcmask 64512
      %v6744 = vsel %vm6743, %v6742, -inf
      %6745 = vmax.xlane.f32.xlu0 %v6744
      %v6746 = vpop.xlane.xlu0 %6745
      %v6747 = vsub.f32 %v6742, %v6746
      %v6748 = vmul.f32 %v6747, 1.442695
      %v6749 = vpow.pop %v6748
      %v6750 = vsel %vm6743, %v6749, 0.0
      %6751 = vadd.xlane.f32.xlu0 %v6750
      %v6752 = vpop.xlane.xlu0 %6751
      %v6753 = vrcp.pop %v6752
      %v6754 = vmul.f32 %v6749, %v6753
      %v6756 = vsel %vm6743, %v6754, 0
      %6758 = vmatprep.subr.mxu0 0.0
      %6759 = vmatpush1.msra.mxu0 0.0
      %6760 = vmatprep.subr.mxu0 0.0
      %6761 = vmatpush1.msra.mxu0 0.0
      %6762 = vmatprep.subr.mxu0 0.0
      %6763 = vmatpush1.msra.mxu0 0.0
      %6764 = vmatprep.subr.mxu0 0.0
      %6765 = vmatpush1.msra.mxu0 0.0
      %6766 = vmatprep.subr.mxu0 0.0
      %6767 = vmatpush1.msra.mxu0 0.0
      %6768 = vmatprep.subr.mxu0 0.0
      %6769 = vmatpush1.msra.mxu0 0.0
      %6770 = vmatprep.subr.mxu0 0.0
      %6771 = vmatpush1.msra.mxu0 0.0
      %6772 = vmatprep.subr.mxu0 0.0
      %6773 = vmatpush1.msra.mxu0 0.0
      %6774 = vmatprep.subr.mxu0 0.0
      %6775 = vmatpush1.msra.mxu0 0.0
      %6776 = vmatprep.subr.mxu0 0.0
      %6777 = vmatpush1.msra.mxu0 0.0
      %6778 = vmatprep.subr.mxu0 0.0
      %6779 = vmatpush1.msra.mxu0 0.0
      %6780 = vmatprep.subr.mxu0 0.0
      %6781 = vmatpush1.msra.mxu0 0.0
      %6782 = vmatprep.subr.mxu0 0.0
      %6783 = vmatpush1.msra.mxu0 0.0
      %6784 = vmatprep.subr.mxu0 0.0
      %6785 = vmatpush1.msra.mxu0 0.0
      %6786 = vmatprep.subr.mxu0 0.0
      %6787 = vmatpush1.msra.mxu0 0.0
      %6788 = vmatprep.subr.mxu0 0.0
      %6789 = vmatpush1.msra.mxu0 %v6662
      %6790 = vmatprep.subr.mxu0 0.0
      %6791 = vmatpush2.msra.mxu0 0.0
      %6792 = vmatprep.subr.mxu0 0.0
      %6793 = vmatpush2.msra.mxu0 0.0
      %6794 = vmatprep.subr.mxu0 0.0
      %6795 = vmatpush2.msra.mxu0 0.0
      %6796 = vmatprep.subr.mxu0 0.0
      %6797 = vmatpush2.msra.mxu0 0.0
      %6798 = vmatprep.subr.mxu0 0.0
      %6799 = vmatpush2.msra.mxu0 0.0
      %6800 = vmatprep.subr.mxu0 0.0
      %6801 = vmatpush2.msra.mxu0 0.0
      %6802 = vmatprep.subr.mxu0 0.0
      %6803 = vmatpush2.msra.mxu0 0.0
      %6804 = vmatprep.subr.mxu0 0.0
      %6805 = vmatpush2.msra.mxu0 0.0
      %6806 = vmatprep.subr.mxu0 0.0
      %6807 = vmatpush2.msra.mxu0 0.0
      %6808 = vmatprep.subr.mxu0 0.0
      %6809 = vmatpush2.msra.mxu0 0.0
      %6810 = vmatprep.subr.mxu0 0.0
      %6811 = vmatpush2.msra.mxu0 0.0
      %6812 = vmatprep.subr.mxu0 0.0
      %6813 = vmatpush2.msra.mxu0 0.0
      %6814 = vmatprep.subr.mxu0 0.0
      %6815 = vmatpush2.msra.mxu0 0.0
      %6816 = vmatprep.subr.mxu0 0.0
      %6817 = vmatpush2.msra.mxu0 0.0
      %6818 = vmatprep.subr.mxu0 0.0
      %6819 = vmatpush2.msra.mxu0 0.0
      %6820 = vmatprep.subr.mxu0 0.0
      %6821 = vmatpush2.msra.mxu0 0.0
      %6822 = vmatprep.mubr.f32.mxu0 0.0
      %6823 = vmatmul.mubr.f32.gmra.mxu0 %v6756
      %v6824 = vpop.f32.mrf.mxu0
      %v6825 = vadd.f32 0.0, %v6824
      %v6826 = vpop.f32.mrf.mxu0
      %6827 = vdwg.mxu0
      %s6828 = smul.u32 %s6373, 16
      %s6829 = scalar_lea.vmem %s83, %s6828
      %v6830 = vld [vmem:[%s6829] sm:$0xff]
      %v6831 = vld [vmem:[%s6829 + $0x8] sm:$0xff]
      %v6833 = vsel %vm6665, %v6825, 0
      %6835 = vmatprep.subr.mxu0 0.0
      %6836 = vmatpush1.msra.mxu0 0.0
      %6837 = vmatprep.subr.mxu0 0.0
      %6838 = vmatpush1.msra.mxu0 0.0
      %6839 = vmatprep.subr.mxu0 0.0
      %6840 = vmatpush1.msra.mxu0 0.0
      %6841 = vmatprep.subr.mxu0 0.0
      %6842 = vmatpush1.msra.mxu0 0.0
      %6843 = vmatprep.subr.mxu0 0.0
      %6844 = vmatpush1.msra.mxu0 0.0
      %6845 = vmatprep.subr.mxu0 0.0
      %6846 = vmatpush1.msra.mxu0 0.0
      %6847 = vmatprep.subr.mxu0 0.0
      %6848 = vmatpush1.msra.mxu0 0.0
      %6849 = vmatprep.subr.mxu0 0.0
      %6850 = vmatpush1.msra.mxu0 0.0
      %6851 = vmatprep.subr.mxu0 0.0
      %6852 = vmatpush1.msra.mxu0 0.0
      %6853 = vmatprep.subr.mxu0 0.0
      %6854 = vmatpush1.msra.mxu0 0.0
      %6855 = vmatprep.subr.mxu0 0.0
      %6856 = vmatpush1.msra.mxu0 0.0
      %6857 = vmatprep.subr.mxu0 0.0
      %6858 = vmatpush1.msra.mxu0 0.0
      %6859 = vmatprep.subr.mxu0 0.0
      %6860 = vmatpush1.msra.mxu0 0.0
      %6861 = vmatprep.subr.mxu0 0.0
      %6862 = vmatpush1.msra.mxu0 0.0
      %6863 = vmatprep.subr.mxu0 0.0
      %6864 = vmatpush1.msra.mxu0 %v6831
      %6865 = vmatprep.subr.mxu0 0.0
      %6866 = vmatpush1.msra.mxu0 %v6830
      %6867 = vmatprep.subr.mxu0 0.0
      %6868 = vmatpush2.msra.mxu0 0.0
      %6869 = vmatprep.subr.mxu0 0.0
      %6870 = vmatpush2.msra.mxu0 0.0
      %6871 = vmatprep.subr.mxu0 0.0
      %6872 = vmatpush2.msra.mxu0 0.0
      %6873 = vmatprep.subr.mxu0 0.0
      %6874 = vmatpush2.msra.mxu0 0.0
      %6875 = vmatprep.subr.mxu0 0.0
      %6876 = vmatpush2.msra.mxu0 0.0
      %6877 = vmatprep.subr.mxu0 0.0
      %6878 = vmatpush2.msra.mxu0 0.0
      %6879 = vmatprep.subr.mxu0 0.0
      %6880 = vmatpush2.msra.mxu0 0.0
      %6881 = vmatprep.subr.mxu0 0.0
      %6882 = vmatpush2.msra.mxu0 0.0
      %6883 = vmatprep.subr.mxu0 0.0
      %6884 = vmatpush2.msra.mxu0 0.0
      %6885 = vmatprep.subr.mxu0 0.0
      %6886 = vmatpush2.msra.mxu0 0.0
      %6887 = vmatprep.subr.mxu0 0.0
      %6888 = vmatpush2.msra.mxu0 0.0
      %6889 = vmatprep.subr.mxu0 0.0
      %6890 = vmatpush2.msra.mxu0 0.0
      %6891 = vmatprep.subr.mxu0 0.0
      %6892 = vmatpush2.msra.mxu0 0.0
      %6893 = vmatprep.subr.mxu0 0.0
      %6894 = vmatpush2.msra.mxu0 0.0
      %6895 = vmatprep.subr.mxu0 0.0
      %6896 = vmatpush2.msra.mxu0 0.0
      %6897 = vmatprep.subr.mxu0 0.0
      %6898 = vmatpush2.msra.mxu0 0.0
      %6899 = vmatprep.mubr.f32.mxu0 0.0
      %6900 = vmatmul.mubr.f32.gmra.mxu0 %v6833
      %v6901 = vpop.f32.mrf.mxu0
      %v6902 = vadd.f32 0.0, %v6901
      %v6903 = vpop.f32.mrf.mxu0
      %6904 = vdwg.mxu0
      %v6905 = vadd.f32 %v6378, %v6902
    $region262: #{transformer_forward.1} parent=1 // loop_footer
      %s6377 = sadd.s32 1, %s6373
    $region263: #{transformer_forward.1} parent=1 // loop_footer_branch
      %6372 = sbr.rel target = $region259
    $region264: #{transformer_forward.1} parent=1 // loop_exit
      _
    %v6906 = vadd.f32 %v6370, %v6378
    %v6907 = vld [vmem:[%s85] sm:$0x1]
    %v6909 = vlaneseq
    %v6910 = vshrl.u32 %v6909, 7
    %v6911 = vsub.s32 0, %v6910
    %v6912 = vrot.slane %v6907, %v6911
    %v6914 = vadd.f32 %v6906, %v6912
    %v6915 = vld [vmem:[%s87] sm:$0x1]
    %v6916 = vld [vmem:[%s89] sm:$0x1]
    %6917 = vadd.xlane.f32.xlu0 %v6914
    %v6918 = vpop.xlane.xlu0 %6917
    %v6919 = vmul.f32 %v6918, %v894
    %v6920 = vsub.f32 %v6914, %v6919
    %v6921 = vmul.f32 %v6920, %v6920
    %6922 = vadd.xlane.f32.xlu0 %v6921
    %v6923 = vpop.xlane.xlu0 %6922
    %v6924 = vmul.f32 %v6923, %v894
    %v6925 = vadd.f32 %v6924, 1e-05
    %v6926 = vrsqrt.pop %v6925
    %v6927 = vmul.f32 %v6920, %v6926
    %v6929 = vlaneseq
    %v6930 = vshrl.u32 %v6929, 7
    %v6931 = vsub.s32 0, %v6930
    %v6932 = vrot.slane %v6915, %v6931
    %v6934 = vmul.f32 %v6927, %v6932
    %v6936 = vlaneseq
    %v6937 = vshrl.u32 %v6936, 7
    %v6938 = vsub.s32 0, %v6937
    %v6939 = vrot.slane %v6916, %v6938
    %v6941 = vadd.f32 %v6934, %v6939
    loop: start=0, step=1, limit=8
    $region265: #{transformer_forward.1} parent=1 // loop_pre_header
      _
    $region266: #{transformer_forward.1} parent=1 // loop_header
      %s6943 = sphi 0, %s6947
      %p6944 = scmp.ge.s32.totalorder %s6943, 8
      %v6948 = vphi 0.0, %v7475
    $region267: #{transformer_forward.1} parent=1 // loop_header_branch
      %6946 = sbr.rel (%p6944) target = $region271
    $region268: #{transformer_forward.1} parent=1 // loop_body
      %s6949 = smul.u32 %s6943, 128
      %s6950 = scalar_lea.vmem %s71, %s6949
      %v6951 = vld [vmem:[%s6950] sm:$0xff]
      %v6952 = vld [vmem:[%s6950 + $0x8] sm:$0xff]
      %v6953 = vld [vmem:[%s6950 + $0x10] sm:$0xff]
      %v6954 = vld [vmem:[%s6950 + $0x18] sm:$0xff]
      %v6955 = vld [vmem:[%s6950 + $0x20] sm:$0xff]
      %v6956 = vld [vmem:[%s6950 + $0x28] sm:$0xff]
      %v6957 = vld [vmem:[%s6950 + $0x30] sm:$0xff]
      %v6958 = vld [vmem:[%s6950 + $0x38] sm:$0xff]
      %v6959 = vld [vmem:[%s6950 + $0x40] sm:$0xff]
      %v6960 = vld [vmem:[%s6950 + $0x48] sm:$0xff]
      %v6961 = vld [vmem:[%s6950 + $0x50] sm:$0xff]
      %v6962 = vld [vmem:[%s6950 + $0x58] sm:$0xff]
      %v6963 = vld [vmem:[%s6950 + $0x60] sm:$0xff]
      %v6964 = vld [vmem:[%s6950 + $0x68] sm:$0xff]
      %v6965 = vld [vmem:[%s6950 + $0x70] sm:$0xff]
      %v6966 = vld [vmem:[%s6950 + $0x78] sm:$0xff]
      %s6967 = scalar_lea.vmem %s73, %s6943
      %v6968 = vld [vmem:[%s6967] sm:$0x1]
      %v6970 = vlaneseq
      %v6971 = vshrl.u32 %v6970, 7
      %v6972 = vsub.s32 0, %v6971
      %v6973 = vrot.slane %v6968, %v6972
      %6975 = vmatprep.subr.mxu0 0.0
      %6976 = vmatpush1.msra.mxu0 %v6966
      %6977 = vmatprep.subr.mxu0 0.0
      %6978 = vmatpush1.msra.mxu0 %v6965
      %6979 = vmatprep.subr.mxu0 0.0
      %6980 = vmatpush1.msra.mxu0 %v6964
      %6981 = vmatprep.subr.mxu0 0.0
      %6982 = vmatpush1.msra.mxu0 %v6963
      %6983 = vmatprep.subr.mxu0 0.0
      %6984 = vmatpush1.msra.mxu0 %v6962
      %6985 = vmatprep.subr.mxu0 0.0
      %6986 = vmatpush1.msra.mxu0 %v6961
      %6987 = vmatprep.subr.mxu0 0.0
      %6988 = vmatpush1.msra.mxu0 %v6960
      %6989 = vmatprep.subr.mxu0 0.0
      %6990 = vmatpush1.msra.mxu0 %v6959
      %6991 = vmatprep.subr.mxu0 0.0
      %6992 = vmatpush1.msra.mxu0 %v6958
      %6993 = vmatprep.subr.mxu0 0.0
      %6994 = vmatpush1.msra.mxu0 %v6957
      %6995 = vmatprep.subr.mxu0 0.0
      %6996 = vmatpush1.msra.mxu0 %v6956
      %6997 = vmatprep.subr.mxu0 0.0
      %6998 = vmatpush1.msra.mxu0 %v6955
      %6999 = vmatprep.subr.mxu0 0.0
      %7000 = vmatpush1.msra.mxu0 %v6954
      %7001 = vmatprep.subr.mxu0 0.0
      %7002 = vmatpush1.msra.mxu0 %v6953
      %7003 = vmatprep.subr.mxu0 0.0
      %7004 = vmatpush1.msra.mxu0 %v6952
      %7005 = vmatprep.subr.mxu0 0.0
      %7006 = vmatpush1.msra.mxu0 %v6951
      %7007 = vmatprep.subr.mxu0 0.0
      %7008 = vmatpush2.msra.mxu0 0.0
      %7009 = vmatprep.subr.mxu0 0.0
      %7010 = vmatpush2.msra.mxu0 0.0
      %7011 = vmatprep.subr.mxu0 0.0
      %7012 = vmatpush2.msra.mxu0 0.0
      %7013 = vmatprep.subr.mxu0 0.0
      %7014 = vmatpush2.msra.mxu0 0.0
      %7015 = vmatprep.subr.mxu0 0.0
      %7016 = vmatpush2.msra.mxu0 0.0
      %7017 = vmatprep.subr.mxu0 0.0
      %7018 = vmatpush2.msra.mxu0 0.0
      %7019 = vmatprep.subr.mxu0 0.0
      %7020 = vmatpush2.msra.mxu0 0.0
      %7021 = vmatprep.subr.mxu0 0.0
      %7022 = vmatpush2.msra.mxu0 0.0
      %7023 = vmatprep.subr.mxu0 0.0
      %7024 = vmatpush2.msra.mxu0 0.0
      %7025 = vmatprep.subr.mxu0 0.0
      %7026 = vmatpush2.msra.mxu0 0.0
      %7027 = vmatprep.subr.mxu0 0.0
      %7028 = vmatpush2.msra.mxu0 0.0
      %7029 = vmatprep.subr.mxu0 0.0
      %7030 = vmatpush2.msra.mxu0 0.0
      %7031 = vmatprep.subr.mxu0 0.0
      %7032 = vmatpush2.msra.mxu0 0.0
      %7033 = vmatprep.subr.mxu0 0.0
      %7034 = vmatpush2.msra.mxu0 0.0
      %7035 = vmatprep.subr.mxu0 0.0
      %7036 = vmatpush2.msra.mxu0 0.0
      %7037 = vmatprep.subr.mxu0 0.0
      %7038 = vmatpush2.msra.mxu0 0.0
      %7039 = vmatprep.mubr.f32.mxu0 0.0
      %7040 = vmatmul.mubr.f32.gmra.mxu0 %v6371
      %v7041 = vpop.f32.mrf.mxu0
      %v7042 = vadd.f32 %v6973, %v7041
      %v7043 = vpop.f32.mrf.mxu0
      %7044 = vdwg.mxu0
      %s7045 = scalar_lea.vmem %s75, %s6949
      %v7046 = vld [vmem:[%s7045] sm:$0xff]
      %v7047 = vld [vmem:[%s7045 + $0x8] sm:$0xff]
      %v7048 = vld [vmem:[%s7045 + $0x10] sm:$0xff]
      %v7049 = vld [vmem:[%s7045 + $0x18] sm:$0xff]
      %v7050 = vld [vmem:[%s7045 + $0x20] sm:$0xff]
      %v7051 = vld [vmem:[%s7045 + $0x28] sm:$0xff]
      %v7052 = vld [vmem:[%s7045 + $0x30] sm:$0xff]
      %v7053 = vld [vmem:[%s7045 + $0x38] sm:$0xff]
      %v7054 = vld [vmem:[%s7045 + $0x40] sm:$0xff]
      %v7055 = vld [vmem:[%s7045 + $0x48] sm:$0xff]
      %v7056 = vld [vmem:[%s7045 + $0x50] sm:$0xff]
      %v7057 = vld [vmem:[%s7045 + $0x58] sm:$0xff]
      %v7058 = vld [vmem:[%s7045 + $0x60] sm:$0xff]
      %v7059 = vld [vmem:[%s7045 + $0x68] sm:$0xff]
      %v7060 = vld [vmem:[%s7045 + $0x70] sm:$0xff]
      %v7061 = vld [vmem:[%s7045 + $0x78] sm:$0xff]
      %s7062 = scalar_lea.vmem %s77, %s6943
      %v7063 = vld [vmem:[%s7062] sm:$0x1]
      %v7065 = vlaneseq
      %v7066 = vshrl.u32 %v7065, 7
      %v7067 = vsub.s32 0, %v7066
      %v7068 = vrot.slane %v7063, %v7067
      %7070 = vmatprep.subr.mxu0 0.0
      %7071 = vmatpush1.msra.mxu0 %v7061
      %7072 = vmatprep.subr.mxu0 0.0
      %7073 = vmatpush1.msra.mxu0 %v7060
      %7074 = vmatprep.subr.mxu0 0.0
      %7075 = vmatpush1.msra.mxu0 %v7059
      %7076 = vmatprep.subr.mxu0 0.0
      %7077 = vmatpush1.msra.mxu0 %v7058
      %7078 = vmatprep.subr.mxu0 0.0
      %7079 = vmatpush1.msra.mxu0 %v7057
      %7080 = vmatprep.subr.mxu0 0.0
      %7081 = vmatpush1.msra.mxu0 %v7056
      %7082 = vmatprep.subr.mxu0 0.0
      %7083 = vmatpush1.msra.mxu0 %v7055
      %7084 = vmatprep.subr.mxu0 0.0
      %7085 = vmatpush1.msra.mxu0 %v7054
      %7086 = vmatprep.subr.mxu0 0.0
      %7087 = vmatpush1.msra.mxu0 %v7053
      %7088 = vmatprep.subr.mxu0 0.0
      %7089 = vmatpush1.msra.mxu0 %v7052
      %7090 = vmatprep.subr.mxu0 0.0
      %7091 = vmatpush1.msra.mxu0 %v7051
      %7092 = vmatprep.subr.mxu0 0.0
      %7093 = vmatpush1.msra.mxu0 %v7050
      %7094 = vmatprep.subr.mxu0 0.0
      %7095 = vmatpush1.msra.mxu0 %v7049
      %7096 = vmatprep.subr.mxu0 0.0
      %7097 = vmatpush1.msra.mxu0 %v7048
      %7098 = vmatprep.subr.mxu0 0.0
      %7099 = vmatpush1.msra.mxu0 %v7047
      %7100 = vmatprep.subr.mxu0 0.0
      %7101 = vmatpush1.msra.mxu0 %v7046
      %7102 = vmatprep.subr.mxu0 0.0
      %7103 = vmatpush2.msra.mxu0 0.0
      %7104 = vmatprep.subr.mxu0 0.0
      %7105 = vmatpush2.msra.mxu0 0.0
      %7106 = vmatprep.subr.mxu0 0.0
      %7107 = vmatpush2.msra.mxu0 0.0
      %7108 = vmatprep.subr.mxu0 0.0
      %7109 = vmatpush2.msra.mxu0 0.0
      %7110 = vmatprep.subr.mxu0 0.0
      %7111 = vmatpush2.msra.mxu0 0.0
      %7112 = vmatprep.subr.mxu0 0.0
      %7113 = vmatpush2.msra.mxu0 0.0
      %7114 = vmatprep.subr.mxu0 0.0
      %7115 = vmatpush2.msra.mxu0 0.0
      %7116 = vmatprep.subr.mxu0 0.0
      %7117 = vmatpush2.msra.mxu0 0.0
      %7118 = vmatprep.subr.mxu0 0.0
      %7119 = vmatpush2.msra.mxu0 0.0
      %7120 = vmatprep.subr.mxu0 0.0
      %7121 = vmatpush2.msra.mxu0 0.0
      %7122 = vmatprep.subr.mxu0 0.0
      %7123 = vmatpush2.msra.mxu0 0.0
      %7124 = vmatprep.subr.mxu0 0.0
      %7125 = vmatpush2.msra.mxu0 0.0
      %7126 = vmatprep.subr.mxu0 0.0
      %7127 = vmatpush2.msra.mxu0 0.0
      %7128 = vmatprep.subr.mxu0 0.0
      %7129 = vmatpush2.msra.mxu0 0.0
      %7130 = vmatprep.subr.mxu0 0.0
      %7131 = vmatpush2.msra.mxu0 0.0
      %7132 = vmatprep.subr.mxu0 0.0
      %7133 = vmatpush2.msra.mxu0 0.0
      %7134 = vmatprep.mubr.f32.mxu0 0.0
      %7135 = vmatmul.mubr.f32.gmra.mxu0 %v6371
      %v7136 = vpop.f32.mrf.mxu0
      %v7137 = vadd.f32 %v7068, %v7136
      %v7138 = vpop.f32.mrf.mxu0
      %7139 = vdwg.mxu0
      %s7140 = scalar_lea.vmem %s79, %s6949
      %v7141 = vld [vmem:[%s7140] sm:$0xff]
      %v7142 = vld [vmem:[%s7140 + $0x8] sm:$0xff]
      %v7143 = vld [vmem:[%s7140 + $0x10] sm:$0xff]
      %v7144 = vld [vmem:[%s7140 + $0x18] sm:$0xff]
      %v7145 = vld [vmem:[%s7140 + $0x20] sm:$0xff]
      %v7146 = vld [vmem:[%s7140 + $0x28] sm:$0xff]
      %v7147 = vld [vmem:[%s7140 + $0x30] sm:$0xff]
      %v7148 = vld [vmem:[%s7140 + $0x38] sm:$0xff]
      %v7149 = vld [vmem:[%s7140 + $0x40] sm:$0xff]
      %v7150 = vld [vmem:[%s7140 + $0x48] sm:$0xff]
      %v7151 = vld [vmem:[%s7140 + $0x50] sm:$0xff]
      %v7152 = vld [vmem:[%s7140 + $0x58] sm:$0xff]
      %v7153 = vld [vmem:[%s7140 + $0x60] sm:$0xff]
      %v7154 = vld [vmem:[%s7140 + $0x68] sm:$0xff]
      %v7155 = vld [vmem:[%s7140 + $0x70] sm:$0xff]
      %v7156 = vld [vmem:[%s7140 + $0x78] sm:$0xff]
      %s7157 = scalar_lea.vmem %s81, %s6943
      %v7158 = vld [vmem:[%s7157] sm:$0x1]
      %v7160 = vlaneseq
      %v7161 = vshrl.u32 %v7160, 7
      %v7162 = vsub.s32 0, %v7161
      %v7163 = vrot.slane %v7158, %v7162
      %7165 = vmatprep.subr.mxu0 0.0
      %7166 = vmatpush1.msra.mxu0 %v7156
      %7167 = vmatprep.subr.mxu0 0.0
      %7168 = vmatpush1.msra.mxu0 %v7155
      %7169 = vmatprep.subr.mxu0 0.0
      %7170 = vmatpush1.msra.mxu0 %v7154
      %7171 = vmatprep.subr.mxu0 0.0
      %7172 = vmatpush1.msra.mxu0 %v7153
      %7173 = vmatprep.subr.mxu0 0.0
      %7174 = vmatpush1.msra.mxu0 %v7152
      %7175 = vmatprep.subr.mxu0 0.0
      %7176 = vmatpush1.msra.mxu0 %v7151
      %7177 = vmatprep.subr.mxu0 0.0
      %7178 = vmatpush1.msra.mxu0 %v7150
      %7179 = vmatprep.subr.mxu0 0.0
      %7180 = vmatpush1.msra.mxu0 %v7149
      %7181 = vmatprep.subr.mxu0 0.0
      %7182 = vmatpush1.msra.mxu0 %v7148
      %7183 = vmatprep.subr.mxu0 0.0
      %7184 = vmatpush1.msra.mxu0 %v7147
      %7185 = vmatprep.subr.mxu0 0.0
      %7186 = vmatpush1.msra.mxu0 %v7146
      %7187 = vmatprep.subr.mxu0 0.0
      %7188 = vmatpush1.msra.mxu0 %v7145
      %7189 = vmatprep.subr.mxu0 0.0
      %7190 = vmatpush1.msra.mxu0 %v7144
      %7191 = vmatprep.subr.mxu0 0.0
      %7192 = vmatpush1.msra.mxu0 %v7143
      %7193 = vmatprep.subr.mxu0 0.0
      %7194 = vmatpush1.msra.mxu0 %v7142
      %7195 = vmatprep.subr.mxu0 0.0
      %7196 = vmatpush1.msra.mxu0 %v7141
      %7197 = vmatprep.subr.mxu0 0.0
      %7198 = vmatpush2.msra.mxu0 0.0
      %7199 = vmatprep.subr.mxu0 0.0
      %7200 = vmatpush2.msra.mxu0 0.0
      %7201 = vmatprep.subr.mxu0 0.0
      %7202 = vmatpush2.msra.mxu0 0.0
      %7203 = vmatprep.subr.mxu0 0.0
      %7204 = vmatpush2.msra.mxu0 0.0
      %7205 = vmatprep.subr.mxu0 0.0
      %7206 = vmatpush2.msra.mxu0 0.0
      %7207 = vmatprep.subr.mxu0 0.0
      %7208 = vmatpush2.msra.mxu0 0.0
      %7209 = vmatprep.subr.mxu0 0.0
      %7210 = vmatpush2.msra.mxu0 0.0
      %7211 = vmatprep.subr.mxu0 0.0
      %7212 = vmatpush2.msra.mxu0 0.0
      %7213 = vmatprep.subr.mxu0 0.0
      %7214 = vmatpush2.msra.mxu0 0.0
      %7215 = vmatprep.subr.mxu0 0.0
      %7216 = vmatpush2.msra.mxu0 0.0
      %7217 = vmatprep.subr.mxu0 0.0
      %7218 = vmatpush2.msra.mxu0 0.0
      %7219 = vmatprep.subr.mxu0 0.0
      %7220 = vmatpush2.msra.mxu0 0.0
      %7221 = vmatprep.subr.mxu0 0.0
      %7222 = vmatpush2.msra.mxu0 0.0
      %7223 = vmatprep.subr.mxu0 0.0
      %7224 = vmatpush2.msra.mxu0 0.0
      %7225 = vmatprep.subr.mxu0 0.0
      %7226 = vmatpush2.msra.mxu0 0.0
      %7227 = vmatprep.subr.mxu0 0.0
      %7228 = vmatpush2.msra.mxu0 0.0
      %7229 = vmatprep.mubr.f32.mxu0 0.0
      %7230 = vmatmul.mubr.f32.gmra.mxu0 %v6371
      %v7231 = vpop.f32.mrf.mxu0
      %v7232 = vadd.f32 %v7163, %v7231
      %v7233 = vpop.f32.mrf.mxu0
      %7234 = vdwg.mxu0
      %vm7235 = vcmask 130048
      %v7237 = vsel %vm7235, %v7042, 0
      %v7240 = vsel %vm7235, %v7137, 0
      %7242 = vmatprep.subr.mxu0 0.0
      %7243 = vmatpush1.xpose.msra.mxu0 0.0
      %7244 = vmatprep.subr.mxu0 0.0
      %7245 = vmatpush1.xpose.msra.mxu0 0.0
      %7246 = vmatprep.subr.mxu0 0.0
      %7247 = vmatpush1.xpose.msra.mxu0 0.0
      %7248 = vmatprep.subr.mxu0 0.0
      %7249 = vmatpush1.xpose.msra.mxu0 0.0
      %7250 = vmatprep.subr.mxu0 0.0
      %7251 = vmatpush1.xpose.msra.mxu0 0.0
      %7252 = vmatprep.subr.mxu0 0.0
      %7253 = vmatpush1.xpose.msra.mxu0 0.0
      %7254 = vmatprep.subr.mxu0 0.0
      %7255 = vmatpush1.xpose.msra.mxu0 0.0
      %7256 = vmatprep.subr.mxu0 0.0
      %7257 = vmatpush1.xpose.msra.mxu0 0.0
      %7258 = vmatprep.subr.mxu0 0.0
      %7259 = vmatpush1.xpose.msra.mxu0 0.0
      %7260 = vmatprep.subr.mxu0 0.0
      %7261 = vmatpush1.xpose.msra.mxu0 0.0
      %7262 = vmatprep.subr.mxu0 0.0
      %7263 = vmatpush1.xpose.msra.mxu0 0.0
      %7264 = vmatprep.subr.mxu0 0.0
      %7265 = vmatpush1.xpose.msra.mxu0 0.0
      %7266 = vmatprep.subr.mxu0 0.0
      %7267 = vmatpush1.xpose.msra.mxu0 0.0
      %7268 = vmatprep.subr.mxu0 0.0
      %7269 = vmatpush1.xpose.msra.mxu0 0.0
      %7270 = vmatprep.subr.mxu0 0.0
      %7271 = vmatpush1.xpose.msra.mxu0 0.0
      %7272 = vmatprep.subr.mxu0 0.0
      %7273 = vmatpush1.xpose.msra.mxu0 %v7240
      %7274 = vmatprep.subr.mxu0 0.0
      %7275 = vmatpush2.xpose.msra.mxu0 0.0
      %7276 = vmatprep.subr.mxu0 0.0
      %7277 = vmatpush2.xpose.msra.mxu0 0.0
      %7278 = vmatprep.subr.mxu0 0.0
      %7279 = vmatpush2.xpose.msra.mxu0 0.0
      %7280 = vmatprep.subr.mxu0 0.0
      %7281 = vmatpush2.xpose.msra.mxu0 0.0
      %7282 = vmatprep.subr.mxu0 0.0
      %7283 = vmatpush2.xpose.msra.mxu0 0.0
      %7284 = vmatprep.subr.mxu0 0.0
      %7285 = vmatpush2.xpose.msra.mxu0 0.0
      %7286 = vmatprep.subr.mxu0 0.0
      %7287 = vmatpush2.xpose.msra.mxu0 0.0
      %7288 = vmatprep.subr.mxu0 0.0
      %7289 = vmatpush2.xpose.msra.mxu0 0.0
      %7290 = vmatprep.subr.mxu0 0.0
      %7291 = vmatpush2.xpose.msra.mxu0 0.0
      %7292 = vmatprep.subr.mxu0 0.0
      %7293 = vmatpush2.xpose.msra.mxu0 0.0
      %7294 = vmatprep.subr.mxu0 0.0
      %7295 = vmatpush2.xpose.msra.mxu0 0.0
      %7296 = vmatprep.subr.mxu0 0.0
      %7297 = vmatpush2.xpose.msra.mxu0 0.0
      %7298 = vmatprep.subr.mxu0 0.0
      %7299 = vmatpush2.xpose.msra.mxu0 0.0
      %7300 = vmatprep.subr.mxu0 0.0
      %7301 = vmatpush2.xpose.msra.mxu0 0.0
      %7302 = vmatprep.subr.mxu0 0.0
      %7303 = vmatpush2.xpose.msra.mxu0 0.0
      %7304 = vmatprep.subr.mxu0 0.0
      %7305 = vmatpush2.xpose.msra.mxu0 0.0
      %7306 = vmatprep.mubr.f32.mxu0 0.0
      %7307 = vmatmul.mubr.f32.gmra.mxu0 %v7237
      %v7308 = vpop.f32.mrf.mxu0
      %v7309 = vadd.f32 0.0, %v7308
      %v7310 = vpop.f32.mrf.mxu0
      %7311 = vdwg.mxu0
      %v7312 = vmul.f32 %v7309, 0.25
      %vm7313 = vcmask 64512
      %v7314 = vsel %vm7313, %v7312, -inf
      %7315 = vmax.xlane.f32.xlu0 %v7314
      %v7316 = vpop.xlane.xlu0 %7315
      %v7317 = vsub.f32 %v7312, %v7316
      %v7318 = vmul.f32 %v7317, 1.442695
      %v7319 = vpow.pop %v7318
      %v7320 = vsel %vm7313, %v7319, 0.0
      %7321 = vadd.xlane.f32.xlu0 %v7320
      %v7322 = vpop.xlane.xlu0 %7321
      %v7323 = vrcp.pop %v7322
      %v7324 = vmul.f32 %v7319, %v7323
      %v7326 = vsel %vm7313, %v7324, 0
      %7328 = vmatprep.subr.mxu0 0.0
      %7329 = vmatpush1.msra.mxu0 0.0
      %7330 = vmatprep.subr.mxu0 0.0
      %7331 = vmatpush1.msra.mxu0 0.0
      %7332 = vmatprep.subr.mxu0 0.0
      %7333 = vmatpush1.msra.mxu0 0.0
      %7334 = vmatprep.subr.mxu0 0.0
      %7335 = vmatpush1.msra.mxu0 0.0
      %7336 = vmatprep.subr.mxu0 0.0
      %7337 = vmatpush1.msra.mxu0 0.0
      %7338 = vmatprep.subr.mxu0 0.0
      %7339 = vmatpush1.msra.mxu0 0.0
      %7340 = vmatprep.subr.mxu0 0.0
      %7341 = vmatpush1.msra.mxu0 0.0
      %7342 = vmatprep.subr.mxu0 0.0
      %7343 = vmatpush1.msra.mxu0 0.0
      %7344 = vmatprep.subr.mxu0 0.0
      %7345 = vmatpush1.msra.mxu0 0.0
      %7346 = vmatprep.subr.mxu0 0.0
      %7347 = vmatpush1.msra.mxu0 0.0
      %7348 = vmatprep.subr.mxu0 0.0
      %7349 = vmatpush1.msra.mxu0 0.0
      %7350 = vmatprep.subr.mxu0 0.0
      %7351 = vmatpush1.msra.mxu0 0.0
      %7352 = vmatprep.subr.mxu0 0.0
      %7353 = vmatpush1.msra.mxu0 0.0
      %7354 = vmatprep.subr.mxu0 0.0
      %7355 = vmatpush1.msra.mxu0 0.0
      %7356 = vmatprep.subr.mxu0 0.0
      %7357 = vmatpush1.msra.mxu0 0.0
      %7358 = vmatprep.subr.mxu0 0.0
      %7359 = vmatpush1.msra.mxu0 %v7232
      %7360 = vmatprep.subr.mxu0 0.0
      %7361 = vmatpush2.msra.mxu0 0.0
      %7362 = vmatprep.subr.mxu0 0.0
      %7363 = vmatpush2.msra.mxu0 0.0
      %7364 = vmatprep.subr.mxu0 0.0
      %7365 = vmatpush2.msra.mxu0 0.0
      %7366 = vmatprep.subr.mxu0 0.0
      %7367 = vmatpush2.msra.mxu0 0.0
      %7368 = vmatprep.subr.mxu0 0.0
      %7369 = vmatpush2.msra.mxu0 0.0
      %7370 = vmatprep.subr.mxu0 0.0
      %7371 = vmatpush2.msra.mxu0 0.0
      %7372 = vmatprep.subr.mxu0 0.0
      %7373 = vmatpush2.msra.mxu0 0.0
      %7374 = vmatprep.subr.mxu0 0.0
      %7375 = vmatpush2.msra.mxu0 0.0
      %7376 = vmatprep.subr.mxu0 0.0
      %7377 = vmatpush2.msra.mxu0 0.0
      %7378 = vmatprep.subr.mxu0 0.0
      %7379 = vmatpush2.msra.mxu0 0.0
      %7380 = vmatprep.subr.mxu0 0.0
      %7381 = vmatpush2.msra.mxu0 0.0
      %7382 = vmatprep.subr.mxu0 0.0
      %7383 = vmatpush2.msra.mxu0 0.0
      %7384 = vmatprep.subr.mxu0 0.0
      %7385 = vmatpush2.msra.mxu0 0.0
      %7386 = vmatprep.subr.mxu0 0.0
      %7387 = vmatpush2.msra.mxu0 0.0
      %7388 = vmatprep.subr.mxu0 0.0
      %7389 = vmatpush2.msra.mxu0 0.0
      %7390 = vmatprep.subr.mxu0 0.0
      %7391 = vmatpush2.msra.mxu0 0.0
      %7392 = vmatprep.mubr.f32.mxu0 0.0
      %7393 = vmatmul.mubr.f32.gmra.mxu0 %v7326
      %v7394 = vpop.f32.mrf.mxu0
      %v7395 = vadd.f32 0.0, %v7394
      %v7396 = vpop.f32.mrf.mxu0
      %7397 = vdwg.mxu0
      %s7398 = smul.u32 %s6943, 16
      %s7399 = scalar_lea.vmem %s83, %s7398
      %v7400 = vld [vmem:[%s7399] sm:$0xff]
      %v7401 = vld [vmem:[%s7399 + $0x8] sm:$0xff]
      %v7403 = vsel %vm7235, %v7395, 0
      %7405 = vmatprep.subr.mxu0 0.0
      %7406 = vmatpush1.msra.mxu0 0.0
      %7407 = vmatprep.subr.mxu0 0.0
      %7408 = vmatpush1.msra.mxu0 0.0
      %7409 = vmatprep.subr.mxu0 0.0
      %7410 = vmatpush1.msra.mxu0 0.0
      %7411 = vmatprep.subr.mxu0 0.0
      %7412 = vmatpush1.msra.mxu0 0.0
      %7413 = vmatprep.subr.mxu0 0.0
      %7414 = vmatpush1.msra.mxu0 0.0
      %7415 = vmatprep.subr.mxu0 0.0
      %7416 = vmatpush1.msra.mxu0 0.0
      %7417 = vmatprep.subr.mxu0 0.0
      %7418 = vmatpush1.msra.mxu0 0.0
      %7419 = vmatprep.subr.mxu0 0.0
      %7420 = vmatpush1.msra.mxu0 0.0
      %7421 = vmatprep.subr.mxu0 0.0
      %7422 = vmatpush1.msra.mxu0 0.0
      %7423 = vmatprep.subr.mxu0 0.0
      %7424 = vmatpush1.msra.mxu0 0.0
      %7425 = vmatprep.subr.mxu0 0.0
      %7426 = vmatpush1.msra.mxu0 0.0
      %7427 = vmatprep.subr.mxu0 0.0
      %7428 = vmatpush1.msra.mxu0 0.0
      %7429 = vmatprep.subr.mxu0 0.0
      %7430 = vmatpush1.msra.mxu0 0.0
      %7431 = vmatprep.subr.mxu0 0.0
      %7432 = vmatpush1.msra.mxu0 0.0
      %7433 = vmatprep.subr.mxu0 0.0
      %7434 = vmatpush1.msra.mxu0 %v7401
      %7435 = vmatprep.subr.mxu0 0.0
      %7436 = vmatpush1.msra.mxu0 %v7400
      %7437 = vmatprep.subr.mxu0 0.0
      %7438 = vmatpush2.msra.mxu0 0.0
      %7439 = vmatprep.subr.mxu0 0.0
      %7440 = vmatpush2.msra.mxu0 0.0
      %7441 = vmatprep.subr.mxu0 0.0
      %7442 = vmatpush2.msra.mxu0 0.0
      %7443 = vmatprep.subr.mxu0 0.0
      %7444 = vmatpush2.msra.mxu0 0.0
      %7445 = vmatprep.subr.mxu0 0.0
      %7446 = vmatpush2.msra.mxu0 0.0
      %7447 = vmatprep.subr.mxu0 0.0
      %7448 = vmatpush2.msra.mxu0 0.0
      %7449 = vmatprep.subr.mxu0 0.0
      %7450 = vmatpush2.msra.mxu0 0.0
      %7451 = vmatprep.subr.mxu0 0.0
      %7452 = vmatpush2.msra.mxu0 0.0
      %7453 = vmatprep.subr.mxu0 0.0
      %7454 = vmatpush2.msra.mxu0 0.0
      %7455 = vmatprep.subr.mxu0 0.0
      %7456 = vmatpush2.msra.mxu0 0.0
      %7457 = vmatprep.subr.mxu0 0.0
      %7458 = vmatpush2.msra.mxu0 0.0
      %7459 = vmatprep.subr.mxu0 0.0
      %7460 = vmatpush2.msra.mxu0 0.0
      %7461 = vmatprep.subr.mxu0 0.0
      %7462 = vmatpush2.msra.mxu0 0.0
      %7463 = vmatprep.subr.mxu0 0.0
      %7464 = vmatpush2.msra.mxu0 0.0
      %7465 = vmatprep.subr.mxu0 0.0
      %7466 = vmatpush2.msra.mxu0 0.0
      %7467 = vmatprep.subr.mxu0 0.0
      %7468 = vmatpush2.msra.mxu0 0.0
      %7469 = vmatprep.mubr.f32.mxu0 0.0
      %7470 = vmatmul.mubr.f32.gmra.mxu0 %v7403
      %v7471 = vpop.f32.mrf.mxu0
      %v7472 = vadd.f32 0.0, %v7471
      %v7473 = vpop.f32.mrf.mxu0
      %7474 = vdwg.mxu0
      %v7475 = vadd.f32 %v6948, %v7472
    $region269: #{transformer_forward.1} parent=1 // loop_footer
      %s6947 = sadd.s32 1, %s6943
    $region270: #{transformer_forward.1} parent=1 // loop_footer_branch
      %6942 = sbr.rel target = $region266
    $region271: #{transformer_forward.1} parent=1 // loop_exit
      _
    %v7476 = vadd.f32 %v6371, %v6948
    %v7477 = vadd.f32 %v7476, %v6912
    %7478 = vadd.xlane.f32.xlu0 %v7477
    %v7479 = vpop.xlane.xlu0 %7478
    %v7480 = vmul.f32 %v7479, %v894
    %v7481 = vsub.f32 %v7477, %v7480
    %v7482 = vmul.f32 %v7481, %v7481
    %7483 = vadd.xlane.f32.xlu0 %v7482
    %v7484 = vpop.xlane.xlu0 %7483
    %v7485 = vmul.f32 %v7484, %v894
    %v7486 = vadd.f32 %v7485, 1e-05
    %v7487 = vrsqrt.pop %v7486
    %v7488 = vmul.f32 %v7481, %v7487
    %v7489 = vmul.f32 %v7488, %v6932
    %v7490 = vadd.f32 %v7489, %v6939
    %v7491 = vld [vmem:[%s91] sm:$0xff]
    %v7492 = vld [vmem:[%s91 + $0x8] sm:$0xff]
    %v7493 = vld [vmem:[%s91 + $0x10] sm:$0xff]
    %v7494 = vld [vmem:[%s91 + $0x18] sm:$0xff]
    %v7495 = vld [vmem:[%s91 + $0x20] sm:$0xff]
    %v7496 = vld [vmem:[%s91 + $0x28] sm:$0xff]
    %v7497 = vld [vmem:[%s91 + $0x30] sm:$0xff]
    %v7498 = vld [vmem:[%s91 + $0x38] sm:$0xff]
    %v7499 = vld [vmem:[%s91 + $0x40] sm:$0xff]
    %v7500 = vld [vmem:[%s91 + $0x48] sm:$0xff]
    %v7501 = vld [vmem:[%s91 + $0x50] sm:$0xff]
    %v7502 = vld [vmem:[%s91 + $0x58] sm:$0xff]
    %v7503 = vld [vmem:[%s91 + $0x60] sm:$0xff]
    %v7504 = vld [vmem:[%s91 + $0x68] sm:$0xff]
    %v7505 = vld [vmem:[%s91 + $0x70] sm:$0xff]
    %v7506 = vld [vmem:[%s91 + $0x78] sm:$0xff]
    %v7507 = vld [vmem:[%s91 + $0x80] sm:$0xff]
    %v7508 = vld [vmem:[%s91 + $0x88] sm:$0xff]
    %v7509 = vld [vmem:[%s91 + $0x90] sm:$0xff]
    %v7510 = vld [vmem:[%s91 + $0x98] sm:$0xff]
    %v7511 = vld [vmem:[%s91 + $0xa0] sm:$0xff]
    %v7512 = vld [vmem:[%s91 + $0xa8] sm:$0xff]
    %v7513 = vld [vmem:[%s91 + $0xb0] sm:$0xff]
    %v7514 = vld [vmem:[%s91 + $0xb8] sm:$0xff]
    %v7515 = vld [vmem:[%s91 + $0xc0] sm:$0xff]
    %v7516 = vld [vmem:[%s91 + $0xc8] sm:$0xff]
    %v7517 = vld [vmem:[%s91 + $0xd0] sm:$0xff]
    %v7518 = vld [vmem:[%s91 + $0xd8] sm:$0xff]
    %v7519 = vld [vmem:[%s91 + $0xe0] sm:$0xff]
    %v7520 = vld [vmem:[%s91 + $0xe8] sm:$0xff]
    %v7521 = vld [vmem:[%s91 + $0xf0] sm:$0xff]
    %v7522 = vld [vmem:[%s91 + $0xf8] sm:$0xff]
    %v7523 = vld [vmem:[%s91 + $0x100] sm:$0xff]
    %v7524 = vld [vmem:[%s91 + $0x108] sm:$0xff]
    %v7525 = vld [vmem:[%s91 + $0x110] sm:$0xff]
    %v7526 = vld [vmem:[%s91 + $0x118] sm:$0xff]
    %v7527 = vld [vmem:[%s91 + $0x120] sm:$0xff]
    %v7528 = vld [vmem:[%s91 + $0x128] sm:$0xff]
    %v7529 = vld [vmem:[%s91 + $0x130] sm:$0xff]
    %v7530 = vld [vmem:[%s91 + $0x138] sm:$0xff]
    %v7531 = vld [vmem:[%s91 + $0x140] sm:$0xff]
    %v7532 = vld [vmem:[%s91 + $0x148] sm:$0xff]
    %v7533 = vld [vmem:[%s91 + $0x150] sm:$0xff]
    %v7534 = vld [vmem:[%s91 + $0x158] sm:$0xff]
    %v7535 = vld [vmem:[%s91 + $0x160] sm:$0xff]
    %v7536 = vld [vmem:[%s91 + $0x168] sm:$0xff]
    %v7537 = vld [vmem:[%s91 + $0x170] sm:$0xff]
    %v7538 = vld [vmem:[%s91 + $0x178] sm:$0xff]
    %v7539 = vld [vmem:[%s91 + $0x180] sm:$0xff]
    %v7540 = vld [vmem:[%s91 + $0x188] sm:$0xff]
    %v7541 = vld [vmem:[%s91 + $0x190] sm:$0xff]
    %v7542 = vld [vmem:[%s91 + $0x198] sm:$0xff]
    %v7543 = vld [vmem:[%s91 + $0x1a0] sm:$0xff]
    %v7544 = vld [vmem:[%s91 + $0x1a8] sm:$0xff]
    %v7545 = vld [vmem:[%s91 + $0x1b0] sm:$0xff]
    %v7546 = vld [vmem:[%s91 + $0x1b8] sm:$0xff]
    %v7547 = vld [vmem:[%s91 + $0x1c0] sm:$0xff]
    %v7548 = vld [vmem:[%s91 + $0x1c8] sm:$0xff]
    %v7549 = vld [vmem:[%s91 + $0x1d0] sm:$0xff]
    %v7550 = vld [vmem:[%s91 + $0x1d8] sm:$0xff]
    %v7551 = vld [vmem:[%s91 + $0x1e0] sm:$0xff]
    %v7552 = vld [vmem:[%s91 + $0x1e8] sm:$0xff]
    %v7553 = vld [vmem:[%s91 + $0x1f0] sm:$0xff]
    %v7554 = vld [vmem:[%s91 + $0x1f8] sm:$0xff]
    %v7555 = vld [vmem:[%s91 + $0x200] sm:$0xff]
    %v7556 = vld [vmem:[%s91 + $0x208] sm:$0xff]
    %v7557 = vld [vmem:[%s91 + $0x210] sm:$0xff]
    %v7558 = vld [vmem:[%s91 + $0x218] sm:$0xff]
    %v7559 = vld [vmem:[%s91 + $0x220] sm:$0xff]
    %v7560 = vld [vmem:[%s91 + $0x228] sm:$0xff]
    %v7561 = vld [vmem:[%s91 + $0x230] sm:$0xff]
    %v7562 = vld [vmem:[%s91 + $0x238] sm:$0xff]
    %v7563 = vld [vmem:[%s91 + $0x240] sm:$0xff]
    %v7564 = vld [vmem:[%s91 + $0x248] sm:$0xff]
    %v7565 = vld [vmem:[%s91 + $0x250] sm:$0xff]
    %v7566 = vld [vmem:[%s91 + $0x258] sm:$0xff]
    %v7567 = vld [vmem:[%s91 + $0x260] sm:$0xff]
    %v7568 = vld [vmem:[%s91 + $0x268] sm:$0xff]
    %v7569 = vld [vmem:[%s91 + $0x270] sm:$0xff]
    %v7570 = vld [vmem:[%s91 + $0x278] sm:$0xff]
    %v7571 = vld [vmem:[%s91 + $0x280] sm:$0xff]
    %v7572 = vld [vmem:[%s91 + $0x288] sm:$0xff]
    %v7573 = vld [vmem:[%s91 + $0x290] sm:$0xff]
    %v7574 = vld [vmem:[%s91 + $0x298] sm:$0xff]
    %v7575 = vld [vmem:[%s91 + $0x2a0] sm:$0xff]
    %v7576 = vld [vmem:[%s91 + $0x2a8] sm:$0xff]
    %v7577 = vld [vmem:[%s91 + $0x2b0] sm:$0xff]
    %v7578 = vld [vmem:[%s91 + $0x2b8] sm:$0xff]
    %v7579 = vld [vmem:[%s91 + $0x2c0] sm:$0xff]
    %v7580 = vld [vmem:[%s91 + $0x2c8] sm:$0xff]
    %v7581 = vld [vmem:[%s91 + $0x2d0] sm:$0xff]
    %v7582 = vld [vmem:[%s91 + $0x2d8] sm:$0xff]
    %v7583 = vld [vmem:[%s91 + $0x2e0] sm:$0xff]
    %v7584 = vld [vmem:[%s91 + $0x2e8] sm:$0xff]
    %v7585 = vld [vmem:[%s91 + $0x2f0] sm:$0xff]
    %v7586 = vld [vmem:[%s91 + $0x2f8] sm:$0xff]
    %v7587 = vld [vmem:[%s91 + $0x300] sm:$0xff]
    %v7588 = vld [vmem:[%s91 + $0x308] sm:$0xff]
    %v7589 = vld [vmem:[%s91 + $0x310] sm:$0xff]
    %v7590 = vld [vmem:[%s91 + $0x318] sm:$0xff]
    %v7591 = vld [vmem:[%s91 + $0x320] sm:$0xff]
    %v7592 = vld [vmem:[%s91 + $0x328] sm:$0xff]
    %v7593 = vld [vmem:[%s91 + $0x330] sm:$0xff]
    %v7594 = vld [vmem:[%s91 + $0x338] sm:$0xff]
    %v7595 = vld [vmem:[%s91 + $0x340] sm:$0xff]
    %v7596 = vld [vmem:[%s91 + $0x348] sm:$0xff]
    %v7597 = vld [vmem:[%s91 + $0x350] sm:$0xff]
    %v7598 = vld [vmem:[%s91 + $0x358] sm:$0xff]
    %v7599 = vld [vmem:[%s91 + $0x360] sm:$0xff]
    %v7600 = vld [vmem:[%s91 + $0x368] sm:$0xff]
    %v7601 = vld [vmem:[%s91 + $0x370] sm:$0xff]
    %v7602 = vld [vmem:[%s91 + $0x378] sm:$0xff]
    %v7603 = vld [vmem:[%s91 + $0x380] sm:$0xff]
    %v7604 = vld [vmem:[%s91 + $0x388] sm:$0xff]
    %v7605 = vld [vmem:[%s91 + $0x390] sm:$0xff]
    %v7606 = vld [vmem:[%s91 + $0x398] sm:$0xff]
    %v7607 = vld [vmem:[%s91 + $0x3a0] sm:$0xff]
    %v7608 = vld [vmem:[%s91 + $0x3a8] sm:$0xff]
    %v7609 = vld [vmem:[%s91 + $0x3b0] sm:$0xff]
    %v7610 = vld [vmem:[%s91 + $0x3b8] sm:$0xff]
    %v7611 = vld [vmem:[%s91 + $0x3c0] sm:$0xff]
    %v7612 = vld [vmem:[%s91 + $0x3c8] sm:$0xff]
    %v7613 = vld [vmem:[%s91 + $0x3d0] sm:$0xff]
    %v7614 = vld [vmem:[%s91 + $0x3d8] sm:$0xff]
    %v7615 = vld [vmem:[%s91 + $0x3e0] sm:$0xff]
    %v7616 = vld [vmem:[%s91 + $0x3e8] sm:$0xff]
    %v7617 = vld [vmem:[%s91 + $0x3f0] sm:$0xff]
    %v7618 = vld [vmem:[%s91 + $0x3f8] sm:$0xff]
    %v7619 = vld [vmem:[%s91 + $0x400] sm:$0xff]
    %v7620 = vld [vmem:[%s91 + $0x408] sm:$0xff]
    %v7621 = vld [vmem:[%s91 + $0x410] sm:$0xff]
    %v7622 = vld [vmem:[%s91 + $0x418] sm:$0xff]
    %v7623 = vld [vmem:[%s91 + $0x420] sm:$0xff]
    %v7624 = vld [vmem:[%s91 + $0x428] sm:$0xff]
    %v7625 = vld [vmem:[%s91 + $0x430] sm:$0xff]
    %v7626 = vld [vmem:[%s91 + $0x438] sm:$0xff]
    %v7627 = vld [vmem:[%s91 + $0x440] sm:$0xff]
    %v7628 = vld [vmem:[%s91 + $0x448] sm:$0xff]
    %v7629 = vld [vmem:[%s91 + $0x450] sm:$0xff]
    %v7630 = vld [vmem:[%s91 + $0x458] sm:$0xff]
    %v7631 = vld [vmem:[%s91 + $0x460] sm:$0xff]
    %v7632 = vld [vmem:[%s91 + $0x468] sm:$0xff]
    %v7633 = vld [vmem:[%s91 + $0x470] sm:$0xff]
    %v7634 = vld [vmem:[%s91 + $0x478] sm:$0xff]
    %v7635 = vld [vmem:[%s91 + $0x480] sm:$0xff]
    %v7636 = vld [vmem:[%s91 + $0x488] sm:$0xff]
    %v7637 = vld [vmem:[%s91 + $0x490] sm:$0xff]
    %v7638 = vld [vmem:[%s91 + $0x498] sm:$0xff]
    %v7639 = vld [vmem:[%s91 + $0x4a0] sm:$0xff]
    %v7640 = vld [vmem:[%s91 + $0x4a8] sm:$0xff]
    %v7641 = vld [vmem:[%s91 + $0x4b0] sm:$0xff]
    %v7642 = vld [vmem:[%s91 + $0x4b8] sm:$0xff]
    %v7643 = vld [vmem:[%s91 + $0x4c0] sm:$0xff]
    %v7644 = vld [vmem:[%s91 + $0x4c8] sm:$0xff]
    %v7645 = vld [vmem:[%s91 + $0x4d0] sm:$0xff]
    %v7646 = vld [vmem:[%s91 + $0x4d8] sm:$0xff]
    %v7647 = vld [vmem:[%s91 + $0x4e0] sm:$0xff]
    %v7648 = vld [vmem:[%s91 + $0x4e8] sm:$0xff]
    %v7649 = vld [vmem:[%s91 + $0x4f0] sm:$0xff]
    %v7650 = vld [vmem:[%s91 + $0x4f8] sm:$0xff]
    %v7651 = vld [vmem:[%s91 + $0x500] sm:$0xff]
    %v7652 = vld [vmem:[%s91 + $0x508] sm:$0xff]
    %v7653 = vld [vmem:[%s91 + $0x510] sm:$0xff]
    %v7654 = vld [vmem:[%s91 + $0x518] sm:$0xff]
    %v7655 = vld [vmem:[%s91 + $0x520] sm:$0xff]
    %v7656 = vld [vmem:[%s91 + $0x528] sm:$0xff]
    %v7657 = vld [vmem:[%s91 + $0x530] sm:$0xff]
    %v7658 = vld [vmem:[%s91 + $0x538] sm:$0xff]
    %v7659 = vld [vmem:[%s91 + $0x540] sm:$0xff]
    %v7660 = vld [vmem:[%s91 + $0x548] sm:$0xff]
    %v7661 = vld [vmem:[%s91 + $0x550] sm:$0xff]
    %v7662 = vld [vmem:[%s91 + $0x558] sm:$0xff]
    %v7663 = vld [vmem:[%s91 + $0x560] sm:$0xff]
    %v7664 = vld [vmem:[%s91 + $0x568] sm:$0xff]
    %v7665 = vld [vmem:[%s91 + $0x570] sm:$0xff]
    %v7666 = vld [vmem:[%s91 + $0x578] sm:$0xff]
    %v7667 = vld [vmem:[%s91 + $0x580] sm:$0xff]
    %v7668 = vld [vmem:[%s91 + $0x588] sm:$0xff]
    %v7669 = vld [vmem:[%s91 + $0x590] sm:$0xff]
    %v7670 = vld [vmem:[%s91 + $0x598] sm:$0xff]
    %v7671 = vld [vmem:[%s91 + $0x5a0] sm:$0xff]
    %v7672 = vld [vmem:[%s91 + $0x5a8] sm:$0xff]
    %v7673 = vld [vmem:[%s91 + $0x5b0] sm:$0xff]
    %v7674 = vld [vmem:[%s91 + $0x5b8] sm:$0xff]
    %v7675 = vld [vmem:[%s91 + $0x5c0] sm:$0xff]
    %v7676 = vld [vmem:[%s91 + $0x5c8] sm:$0xff]
    %v7677 = vld [vmem:[%s91 + $0x5d0] sm:$0xff]
    %v7678 = vld [vmem:[%s91 + $0x5d8] sm:$0xff]
    %v7679 = vld [vmem:[%s91 + $0x5e0] sm:$0xff]
    %v7680 = vld [vmem:[%s91 + $0x5e8] sm:$0xff]
    %v7681 = vld [vmem:[%s91 + $0x5f0] sm:$0xff]
    %v7682 = vld [vmem:[%s91 + $0x5f8] sm:$0xff]
    %v7683 = vld [vmem:[%s91 + $0x600] sm:$0xff]
    %v7684 = vld [vmem:[%s91 + $0x608] sm:$0xff]
    %v7685 = vld [vmem:[%s91 + $0x610] sm:$0xff]
    %v7686 = vld [vmem:[%s91 + $0x618] sm:$0xff]
    %v7687 = vld [vmem:[%s91 + $0x620] sm:$0xff]
    %v7688 = vld [vmem:[%s91 + $0x628] sm:$0xff]
    %v7689 = vld [vmem:[%s91 + $0x630] sm:$0xff]
    %v7690 = vld [vmem:[%s91 + $0x638] sm:$0xff]
    %v7691 = vld [vmem:[%s91 + $0x640] sm:$0xff]
    %v7692 = vld [vmem:[%s91 + $0x648] sm:$0xff]
    %v7693 = vld [vmem:[%s91 + $0x650] sm:$0xff]
    %v7694 = vld [vmem:[%s91 + $0x658] sm:$0xff]
    %v7695 = vld [vmem:[%s91 + $0x660] sm:$0xff]
    %v7696 = vld [vmem:[%s91 + $0x668] sm:$0xff]
    %v7697 = vld [vmem:[%s91 + $0x670] sm:$0xff]
    %v7698 = vld [vmem:[%s91 + $0x678] sm:$0xff]
    %v7699 = vld [vmem:[%s91 + $0x680] sm:$0xff]
    %v7700 = vld [vmem:[%s91 + $0x688] sm:$0xff]
    %v7701 = vld [vmem:[%s91 + $0x690] sm:$0xff]
    %v7702 = vld [vmem:[%s91 + $0x698] sm:$0xff]
    %v7703 = vld [vmem:[%s91 + $0x6a0] sm:$0xff]
    %v7704 = vld [vmem:[%s91 + $0x6a8] sm:$0xff]
    %v7705 = vld [vmem:[%s91 + $0x6b0] sm:$0xff]
    %v7706 = vld [vmem:[%s91 + $0x6b8] sm:$0xff]
    %v7707 = vld [vmem:[%s91 + $0x6c0] sm:$0xff]
    %v7708 = vld [vmem:[%s91 + $0x6c8] sm:$0xff]
    %v7709 = vld [vmem:[%s91 + $0x6d0] sm:$0xff]
    %v7710 = vld [vmem:[%s91 + $0x6d8] sm:$0xff]
    %v7711 = vld [vmem:[%s91 + $0x6e0] sm:$0xff]
    %v7712 = vld [vmem:[%s91 + $0x6e8] sm:$0xff]
    %v7713 = vld [vmem:[%s91 + $0x6f0] sm:$0xff]
    %v7714 = vld [vmem:[%s91 + $0x6f8] sm:$0xff]
    %v7715 = vld [vmem:[%s91 + $0x700] sm:$0xff]
    %v7716 = vld [vmem:[%s91 + $0x708] sm:$0xff]
    %v7717 = vld [vmem:[%s91 + $0x710] sm:$0xff]
    %v7718 = vld [vmem:[%s91 + $0x718] sm:$0xff]
    %v7719 = vld [vmem:[%s91 + $0x720] sm:$0xff]
    %v7720 = vld [vmem:[%s91 + $0x728] sm:$0xff]
    %v7721 = vld [vmem:[%s91 + $0x730] sm:$0xff]
    %v7722 = vld [vmem:[%s91 + $0x738] sm:$0xff]
    %v7723 = vld [vmem:[%s91 + $0x740] sm:$0xff]
    %v7724 = vld [vmem:[%s91 + $0x748] sm:$0xff]
    %v7725 = vld [vmem:[%s91 + $0x750] sm:$0xff]
    %v7726 = vld [vmem:[%s91 + $0x758] sm:$0xff]
    %v7727 = vld [vmem:[%s91 + $0x760] sm:$0xff]
    %v7728 = vld [vmem:[%s91 + $0x768] sm:$0xff]
    %v7729 = vld [vmem:[%s91 + $0x770] sm:$0xff]
    %v7730 = vld [vmem:[%s91 + $0x778] sm:$0xff]
    %v7731 = vld [vmem:[%s91 + $0x780] sm:$0xff]
    %v7732 = vld [vmem:[%s91 + $0x788] sm:$0xff]
    %v7733 = vld [vmem:[%s91 + $0x790] sm:$0xff]
    %v7734 = vld [vmem:[%s91 + $0x798] sm:$0xff]
    %v7735 = vld [vmem:[%s91 + $0x7a0] sm:$0xff]
    %v7736 = vld [vmem:[%s91 + $0x7a8] sm:$0xff]
    %v7737 = vld [vmem:[%s91 + $0x7b0] sm:$0xff]
    %v7738 = vld [vmem:[%s91 + $0x7b8] sm:$0xff]
    %v7739 = vld [vmem:[%s91 + $0x7c0] sm:$0xff]
    %v7740 = vld [vmem:[%s91 + $0x7c8] sm:$0xff]
    %v7741 = vld [vmem:[%s91 + $0x7d0] sm:$0xff]
    %v7742 = vld [vmem:[%s91 + $0x7d8] sm:$0xff]
    %v7743 = vld [vmem:[%s91 + $0x7e0] sm:$0xff]
    %v7744 = vld [vmem:[%s91 + $0x7e8] sm:$0xff]
    %v7745 = vld [vmem:[%s91 + $0x7f0] sm:$0xff]
    %v7746 = vld [vmem:[%s91 + $0x7f8] sm:$0xff]
    %v7747 = vld [vmem:[%s93] sm:$0xff]
    %v7748 = vld [vmem:[%s93 + $0x8] sm:$0xff]
    %v7751 = vlaneseq
    %v7752 = vshrl.u32 %v7751, 7
    %v7753 = vsub.s32 0, %v7752
    %v7754 = vrot.slane %v7747, %v7753
    %v7755 = vlaneseq
    %v7756 = vshrl.u32 %v7755, 7
    %v7757 = vsub.s32 1, %v7756
    %v7758 = vrot.slane %v7747, %v7757
    %v7759 = vlaneseq
    %v7760 = vshrl.u32 %v7759, 7
    %v7761 = vsub.s32 2, %v7760
    %v7762 = vrot.slane %v7747, %v7761
    %v7763 = vlaneseq
    %v7764 = vshrl.u32 %v7763, 7
    %v7765 = vsub.s32 3, %v7764
    %v7766 = vrot.slane %v7747, %v7765
    %v7767 = vlaneseq
    %v7768 = vshrl.u32 %v7767, 7
    %v7769 = vsub.s32 4, %v7768
    %v7770 = vrot.slane %v7747, %v7769
    %v7771 = vlaneseq
    %v7772 = vshrl.u32 %v7771, 7
    %v7773 = vsub.s32 5, %v7772
    %v7774 = vrot.slane %v7747, %v7773
    %v7775 = vlaneseq
    %v7776 = vshrl.u32 %v7775, 7
    %v7777 = vsub.s32 6, %v7776
    %v7778 = vrot.slane %v7747, %v7777
    %v7779 = vlaneseq
    %v7780 = vshrl.u32 %v7779, 7
    %v7781 = vsub.s32 7, %v7780
    %v7782 = vrot.slane %v7747, %v7781
    %v7783 = vlaneseq
    %v7784 = vshrl.u32 %v7783, 7
    %v7785 = vsub.s32 0, %v7784
    %v7786 = vrot.slane %v7748, %v7785
    %v7787 = vlaneseq
    %v7788 = vshrl.u32 %v7787, 7
    %v7789 = vsub.s32 1, %v7788
    %v7790 = vrot.slane %v7748, %v7789
    %v7791 = vlaneseq
    %v7792 = vshrl.u32 %v7791, 7
    %v7793 = vsub.s32 2, %v7792
    %v7794 = vrot.slane %v7748, %v7793
    %v7795 = vlaneseq
    %v7796 = vshrl.u32 %v7795, 7
    %v7797 = vsub.s32 3, %v7796
    %v7798 = vrot.slane %v7748, %v7797
    %v7799 = vlaneseq
    %v7800 = vshrl.u32 %v7799, 7
    %v7801 = vsub.s32 4, %v7800
    %v7802 = vrot.slane %v7748, %v7801
    %v7803 = vlaneseq
    %v7804 = vshrl.u32 %v7803, 7
    %v7805 = vsub.s32 5, %v7804
    %v7806 = vrot.slane %v7748, %v7805
    %v7807 = vlaneseq
    %v7808 = vshrl.u32 %v7807, 7
    %v7809 = vsub.s32 6, %v7808
    %v7810 = vrot.slane %v7748, %v7809
    %v7811 = vlaneseq
    %v7812 = vshrl.u32 %v7811, 7
    %v7813 = vsub.s32 7, %v7812
    %v7814 = vrot.slane %v7748, %v7813
    %7831 = vmatprep.subr.mxu0 %v7732
    %7832 = vmatpush1.msra.mxu0 %v7731
    %7833 = vmatprep.subr.mxu0 %v7716
    %7834 = vmatpush1.msra.mxu0 %v7715
    %7835 = vmatprep.subr.mxu0 %v7700
    %7836 = vmatpush1.msra.mxu0 %v7699
    %7837 = vmatprep.subr.mxu0 %v7684
    %7838 = vmatpush1.msra.mxu0 %v7683
    %7839 = vmatprep.subr.mxu0 %v7668
    %7840 = vmatpush1.msra.mxu0 %v7667
    %7841 = vmatprep.subr.mxu0 %v7652
    %7842 = vmatpush1.msra.mxu0 %v7651
    %7843 = vmatprep.subr.mxu0 %v7636
    %7844 = vmatpush1.msra.mxu0 %v7635
    %7845 = vmatprep.subr.mxu0 %v7620
    %7846 = vmatpush1.msra.mxu0 %v7619
    %7847 = vmatprep.subr.mxu0 %v7604
    %7848 = vmatpush1.msra.mxu0 %v7603
    %7849 = vmatprep.subr.mxu0 %v7588
    %7850 = vmatpush1.msra.mxu0 %v7587
    %7851 = vmatprep.subr.mxu0 %v7572
    %7852 = vmatpush1.msra.mxu0 %v7571
    %7853 = vmatprep.subr.mxu0 %v7556
    %7854 = vmatpush1.msra.mxu0 %v7555
    %7855 = vmatprep.subr.mxu0 %v7540
    %7856 = vmatpush1.msra.mxu0 %v7539
    %7857 = vmatprep.subr.mxu0 %v7524
    %7858 = vmatpush1.msra.mxu0 %v7523
    %7859 = vmatprep.subr.mxu0 %v7508
    %7860 = vmatpush1.msra.mxu0 %v7507
    %7861 = vmatprep.subr.mxu0 %v7492
    %7862 = vmatpush1.msra.mxu0 %v7491
    %7863 = vmatprep.subr.mxu0 0.0
    %7864 = vmatpush2.msra.mxu0 0.0
    %7865 = vmatprep.subr.mxu0 0.0
    %7866 = vmatpush2.msra.mxu0 0.0
    %7867 = vmatprep.subr.mxu0 0.0
    %7868 = vmatpush2.msra.mxu0 0.0
    %7869 = vmatprep.subr.mxu0 0.0
    %7870 = vmatpush2.msra.mxu0 0.0
    %7871 = vmatprep.subr.mxu0 0.0
    %7872 = vmatpush2.msra.mxu0 0.0
    %7873 = vmatprep.subr.mxu0 0.0
    %7874 = vmatpush2.msra.mxu0 0.0
    %7875 = vmatprep.subr.mxu0 0.0
    %7876 = vmatpush2.msra.mxu0 0.0
    %7877 = vmatprep.subr.mxu0 0.0
    %7878 = vmatpush2.msra.mxu0 0.0
    %7879 = vmatprep.subr.mxu0 0.0
    %7880 = vmatpush2.msra.mxu0 0.0
    %7881 = vmatprep.subr.mxu0 0.0
    %7882 = vmatpush2.msra.mxu0 0.0
    %7883 = vmatprep.subr.mxu0 0.0
    %7884 = vmatpush2.msra.mxu0 0.0
    %7885 = vmatprep.subr.mxu0 0.0
    %7886 = vmatpush2.msra.mxu0 0.0
    %7887 = vmatprep.subr.mxu0 0.0
    %7888 = vmatpush2.msra.mxu0 0.0
    %7889 = vmatprep.subr.mxu0 0.0
    %7890 = vmatpush2.msra.mxu0 0.0
    %7891 = vmatprep.subr.mxu0 0.0
    %7892 = vmatpush2.msra.mxu0 0.0
    %7893 = vmatprep.subr.mxu0 0.0
    %7894 = vmatpush2.msra.mxu0 0.0
    %7895 = vmatprep.mubr.f32.mxu0 0.0
    %7896 = vmatmul.mubr.f32.gmra.mxu0 %v6941
    %v7897 = vpop.f32.mrf.mxu0
    %v7898 = vadd.f32 %v7754, %v7897
    %v7899 = vpop.f32.mrf.mxu0
    %v7900 = vadd.f32 %v7758, %v7899
    %7901 = vmatprep.mubr.f32.mxu0 0.0
    %7902 = vmatmul.mubr.f32.gmra.mxu0 %v7490
    %v7903 = vpop.f32.mrf.mxu0
    %v7904 = vadd.f32 %v7754, %v7903
    %v7905 = vpop.f32.mrf.mxu0
    %v7906 = vadd.f32 %v7758, %v7905
    %7907 = vdwg.mxu0
    %7908 = vmatprep.subr.mxu0 %v7734
    %7909 = vmatpush1.msra.mxu0 %v7733
    %7910 = vmatprep.subr.mxu0 %v7718
    %7911 = vmatpush1.msra.mxu0 %v7717
    %7912 = vmatprep.subr.mxu0 %v7702
    %7913 = vmatpush1.msra.mxu0 %v7701
    %7914 = vmatprep.subr.mxu0 %v7686
    %7915 = vmatpush1.msra.mxu0 %v7685
    %7916 = vmatprep.subr.mxu0 %v7670
    %7917 = vmatpush1.msra.mxu0 %v7669
    %7918 = vmatprep.subr.mxu0 %v7654
    %7919 = vmatpush1.msra.mxu0 %v7653
    %7920 = vmatprep.subr.mxu0 %v7638
    %7921 = vmatpush1.msra.mxu0 %v7637
    %7922 = vmatprep.subr.mxu0 %v7622
    %7923 = vmatpush1.msra.mxu0 %v7621
    %7924 = vmatprep.subr.mxu0 %v7606
    %7925 = vmatpush1.msra.mxu0 %v7605
    %7926 = vmatprep.subr.mxu0 %v7590
    %7927 = vmatpush1.msra.mxu0 %v7589
    %7928 = vmatprep.subr.mxu0 %v7574
    %7929 = vmatpush1.msra.mxu0 %v7573
    %7930 = vmatprep.subr.mxu0 %v7558
    %7931 = vmatpush1.msra.mxu0 %v7557
    %7932 = vmatprep.subr.mxu0 %v7542
    %7933 = vmatpush1.msra.mxu0 %v7541
    %7934 = vmatprep.subr.mxu0 %v7526
    %7935 = vmatpush1.msra.mxu0 %v7525
    %7936 = vmatprep.subr.mxu0 %v7510
    %7937 = vmatpush1.msra.mxu0 %v7509
    %7938 = vmatprep.subr.mxu0 %v7494
    %7939 = vmatpush1.msra.mxu0 %v7493
    %7940 = vmatprep.subr.mxu0 0.0
    %7941 = vmatpush2.msra.mxu0 0.0
    %7942 = vmatprep.subr.mxu0 0.0
    %7943 = vmatpush2.msra.mxu0 0.0
    %7944 = vmatprep.subr.mxu0 0.0
    %7945 = vmatpush2.msra.mxu0 0.0
    %7946 = vmatprep.subr.mxu0 0.0
    %7947 = vmatpush2.msra.mxu0 0.0
    %7948 = vmatprep.subr.mxu0 0.0
    %7949 = vmatpush2.msra.mxu0 0.0
    %7950 = vmatprep.subr.mxu0 0.0
    %7951 = vmatpush2.msra.mxu0 0.0
    %7952 = vmatprep.subr.mxu0 0.0
    %7953 = vmatpush2.msra.mxu0 0.0
    %7954 = vmatprep.subr.mxu0 0.0
    %7955 = vmatpush2.msra.mxu0 0.0
    %7956 = vmatprep.subr.mxu0 0.0
    %7957 = vmatpush2.msra.mxu0 0.0
    %7958 = vmatprep.subr.mxu0 0.0
    %7959 = vmatpush2.msra.mxu0 0.0
    %7960 = vmatprep.subr.mxu0 0.0
    %7961 = vmatpush2.msra.mxu0 0.0
    %7962 = vmatprep.subr.mxu0 0.0
    %7963 = vmatpush2.msra.mxu0 0.0
    %7964 = vmatprep.subr.mxu0 0.0
    %7965 = vmatpush2.msra.mxu0 0.0
    %7966 = vmatprep.subr.mxu0 0.0
    %7967 = vmatpush2.msra.mxu0 0.0
    %7968 = vmatprep.subr.mxu0 0.0
    %7969 = vmatpush2.msra.mxu0 0.0
    %7970 = vmatprep.subr.mxu0 0.0
    %7971 = vmatpush2.msra.mxu0 0.0
    %7972 = vmatprep.mubr.f32.mxu0 0.0
    %7973 = vmatmul.mubr.f32.gmra.mxu0 %v6941
    %v7974 = vpop.f32.mrf.mxu0
    %v7975 = vadd.f32 %v7762, %v7974
    %v7976 = vpop.f32.mrf.mxu0
    %v7977 = vadd.f32 %v7766, %v7976
    %7978 = vmatprep.mubr.f32.mxu0 0.0
    %7979 = vmatmul.mubr.f32.gmra.mxu0 %v7490
    %v7980 = vpop.f32.mrf.mxu0
    %v7981 = vadd.f32 %v7762, %v7980
    %v7982 = vpop.f32.mrf.mxu0
    %v7983 = vadd.f32 %v7766, %v7982
    %7984 = vdwg.mxu0
    %7985 = vmatprep.subr.mxu0 %v7736
    %7986 = vmatpush1.msra.mxu0 %v7735
    %7987 = vmatprep.subr.mxu0 %v7720
    %7988 = vmatpush1.msra.mxu0 %v7719
    %7989 = vmatprep.subr.mxu0 %v7704
    %7990 = vmatpush1.msra.mxu0 %v7703
    %7991 = vmatprep.subr.mxu0 %v7688
    %7992 = vmatpush1.msra.mxu0 %v7687
    %7993 = vmatprep.subr.mxu0 %v7672
    %7994 = vmatpush1.msra.mxu0 %v7671
    %7995 = vmatprep.subr.mxu0 %v7656
    %7996 = vmatpush1.msra.mxu0 %v7655
    %7997 = vmatprep.subr.mxu0 %v7640
    %7998 = vmatpush1.msra.mxu0 %v7639
    %7999 = vmatprep.subr.mxu0 %v7624
    %8000 = vmatpush1.msra.mxu0 %v7623
    %8001 = vmatprep.subr.mxu0 %v7608
    %8002 = vmatpush1.msra.mxu0 %v7607
    %8003 = vmatprep.subr.mxu0 %v7592
    %8004 = vmatpush1.msra.mxu0 %v7591
    %8005 = vmatprep.subr.mxu0 %v7576
    %8006 = vmatpush1.msra.mxu0 %v7575
    %8007 = vmatprep.subr.mxu0 %v7560
    %8008 = vmatpush1.msra.mxu0 %v7559
    %8009 = vmatprep.subr.mxu0 %v7544
    %8010 = vmatpush1.msra.mxu0 %v7543
    %8011 = vmatprep.subr.mxu0 %v7528
    %8012 = vmatpush1.msra.mxu0 %v7527
    %8013 = vmatprep.subr.mxu0 %v7512
    %8014 = vmatpush1.msra.mxu0 %v7511
    %8015 = vmatprep.subr.mxu0 %v7496
    %8016 = vmatpush1.msra.mxu0 %v7495
    %8017 = vmatprep.subr.mxu0 0.0
    %8018 = vmatpush2.msra.mxu0 0.0
    %8019 = vmatprep.subr.mxu0 0.0
    %8020 = vmatpush2.msra.mxu0 0.0
    %8021 = vmatprep.subr.mxu0 0.0
    %8022 = vmatpush2.msra.mxu0 0.0
    %8023 = vmatprep.subr.mxu0 0.0
    %8024 = vmatpush2.msra.mxu0 0.0
    %8025 = vmatprep.subr.mxu0 0.0
    %8026 = vmatpush2.msra.mxu0 0.0
    %8027 = vmatprep.subr.mxu0 0.0
    %8028 = vmatpush2.msra.mxu0 0.0
    %8029 = vmatprep.subr.mxu0 0.0
    %8030 = vmatpush2.msra.mxu0 0.0
    %8031 = vmatprep.subr.mxu0 0.0
    %8032 = vmatpush2.msra.mxu0 0.0
    %8033 = vmatprep.subr.mxu0 0.0
    %8034 = vmatpush2.msra.mxu0 0.0
    %8035 = vmatprep.subr.mxu0 0.0
    %8036 = vmatpush2.msra.mxu0 0.0
    %8037 = vmatprep.subr.mxu0 0.0
    %8038 = vmatpush2.msra.mxu0 0.0
    %8039 = vmatprep.subr.mxu0 0.0
    %8040 = vmatpush2.msra.mxu0 0.0
    %8041 = vmatprep.subr.mxu0 0.0
    %8042 = vmatpush2.msra.mxu0 0.0
    %8043 = vmatprep.subr.mxu0 0.0
    %8044 = vmatpush2.msra.mxu0 0.0
    %8045 = vmatprep.subr.mxu0 0.0
    %8046 = vmatpush2.msra.mxu0 0.0
    %8047 = vmatprep.subr.mxu0 0.0
    %8048 = vmatpush2.msra.mxu0 0.0
    %8049 = vmatprep.mubr.f32.mxu0 0.0
    %8050 = vmatmul.mubr.f32.gmra.mxu0 %v6941
    %v8051 = vpop.f32.mrf.mxu0
    %v8052 = vadd.f32 %v7770, %v8051
    %v8053 = vpop.f32.mrf.mxu0
    %v8054 = vadd.f32 %v7774, %v8053
    %8055 = vmatprep.mubr.f32.mxu0 0.0
    %8056 = vmatmul.mubr.f32.gmra.mxu0 %v7490
    %v8057 = vpop.f32.mrf.mxu0
    %v8058 = vadd.f32 %v7770, %v8057
    %v8059 = vpop.f32.mrf.mxu0
    %v8060 = vadd.f32 %v7774, %v8059
    %8061 = vdwg.mxu0
    %8062 = vmatprep.subr.mxu0 %v7738
    %8063 = vmatpush1.msra.mxu0 %v7737
    %8064 = vmatprep.subr.mxu0 %v7722
    %8065 = vmatpush1.msra.mxu0 %v7721
    %8066 = vmatprep.subr.mxu0 %v7706
    %8067 = vmatpush1.msra.mxu0 %v7705
    %8068 = vmatprep.subr.mxu0 %v7690
    %8069 = vmatpush1.msra.mxu0 %v7689
    %8070 = vmatprep.subr.mxu0 %v7674
    %8071 = vmatpush1.msra.mxu0 %v7673
    %8072 = vmatprep.subr.mxu0 %v7658
    %8073 = vmatpush1.msra.mxu0 %v7657
    %8074 = vmatprep.subr.mxu0 %v7642
    %8075 = vmatpush1.msra.mxu0 %v7641
    %8076 = vmatprep.subr.mxu0 %v7626
    %8077 = vmatpush1.msra.mxu0 %v7625
    %8078 = vmatprep.subr.mxu0 %v7610
    %8079 = vmatpush1.msra.mxu0 %v7609
    %8080 = vmatprep.subr.mxu0 %v7594
    %8081 = vmatpush1.msra.mxu0 %v7593
    %8082 = vmatprep.subr.mxu0 %v7578
    %8083 = vmatpush1.msra.mxu0 %v7577
    %8084 = vmatprep.subr.mxu0 %v7562
    %8085 = vmatpush1.msra.mxu0 %v7561
    %8086 = vmatprep.subr.mxu0 %v7546
    %8087 = vmatpush1.msra.mxu0 %v7545
    %8088 = vmatprep.subr.mxu0 %v7530
    %8089 = vmatpush1.msra.mxu0 %v7529
    %8090 = vmatprep.subr.mxu0 %v7514
    %8091 = vmatpush1.msra.mxu0 %v7513
    %8092 = vmatprep.subr.mxu0 %v7498
    %8093 = vmatpush1.msra.mxu0 %v7497
    %8094 = vmatprep.subr.mxu0 0.0
    %8095 = vmatpush2.msra.mxu0 0.0
    %8096 = vmatprep.subr.mxu0 0.0
    %8097 = vmatpush2.msra.mxu0 0.0
    %8098 = vmatprep.subr.mxu0 0.0
    %8099 = vmatpush2.msra.mxu0 0.0
    %8100 = vmatprep.subr.mxu0 0.0
    %8101 = vmatpush2.msra.mxu0 0.0
    %8102 = vmatprep.subr.mxu0 0.0
    %8103 = vmatpush2.msra.mxu0 0.0
    %8104 = vmatprep.subr.mxu0 0.0
    %8105 = vmatpush2.msra.mxu0 0.0
    %8106 = vmatprep.subr.mxu0 0.0
    %8107 = vmatpush2.msra.mxu0 0.0
    %8108 = vmatprep.subr.mxu0 0.0
    %8109 = vmatpush2.msra.mxu0 0.0
    %8110 = vmatprep.subr.mxu0 0.0
    %8111 = vmatpush2.msra.mxu0 0.0
    %8112 = vmatprep.subr.mxu0 0.0
    %8113 = vmatpush2.msra.mxu0 0.0
    %8114 = vmatprep.subr.mxu0 0.0
    %8115 = vmatpush2.msra.mxu0 0.0
    %8116 = vmatprep.subr.mxu0 0.0
    %8117 = vmatpush2.msra.mxu0 0.0
    %8118 = vmatprep.subr.mxu0 0.0
    %8119 = vmatpush2.msra.mxu0 0.0
    %8120 = vmatprep.subr.mxu0 0.0
    %8121 = vmatpush2.msra.mxu0 0.0
    %8122 = vmatprep.subr.mxu0 0.0
    %8123 = vmatpush2.msra.mxu0 0.0
    %8124 = vmatprep.subr.mxu0 0.0
    %8125 = vmatpush2.msra.mxu0 0.0
    %8126 = vmatprep.mubr.f32.mxu0 0.0
    %8127 = vmatmul.mubr.f32.gmra.mxu0 %v6941
    %v8128 = vpop.f32.mrf.mxu0
    %v8129 = vadd.f32 %v7778, %v8128
    %v8130 = vpop.f32.mrf.mxu0
    %v8131 = vadd.f32 %v7782, %v8130
    %8132 = vmatprep.mubr.f32.mxu0 0.0
    %8133 = vmatmul.mubr.f32.gmra.mxu0 %v7490
    %v8134 = vpop.f32.mrf.mxu0
    %v8135 = vadd.f32 %v7778, %v8134
    %v8136 = vpop.f32.mrf.mxu0
    %v8137 = vadd.f32 %v7782, %v8136
    %8138 = vdwg.mxu0
    %8139 = vmatprep.subr.mxu0 %v7740
    %8140 = vmatpush1.msra.mxu0 %v7739
    %8141 = vmatprep.subr.mxu0 %v7724
    %8142 = vmatpush1.msra.mxu0 %v7723
    %8143 = vmatprep.subr.mxu0 %v7708
    %8144 = vmatpush1.msra.mxu0 %v7707
    %8145 = vmatprep.subr.mxu0 %v7692
    %8146 = vmatpush1.msra.mxu0 %v7691
    %8147 = vmatprep.subr.mxu0 %v7676
    %8148 = vmatpush1.msra.mxu0 %v7675
    %8149 = vmatprep.subr.mxu0 %v7660
    %8150 = vmatpush1.msra.mxu0 %v7659
    %8151 = vmatprep.subr.mxu0 %v7644
    %8152 = vmatpush1.msra.mxu0 %v7643
    %8153 = vmatprep.subr.mxu0 %v7628
    %8154 = vmatpush1.msra.mxu0 %v7627
    %8155 = vmatprep.subr.mxu0 %v7612
    %8156 = vmatpush1.msra.mxu0 %v7611
    %8157 = vmatprep.subr.mxu0 %v7596
    %8158 = vmatpush1.msra.mxu0 %v7595
    %8159 = vmatprep.subr.mxu0 %v7580
    %8160 = vmatpush1.msra.mxu0 %v7579
    %8161 = vmatprep.subr.mxu0 %v7564
    %8162 = vmatpush1.msra.mxu0 %v7563
    %8163 = vmatprep.subr.mxu0 %v7548
    %8164 = vmatpush1.msra.mxu0 %v7547
    %8165 = vmatprep.subr.mxu0 %v7532
    %8166 = vmatpush1.msra.mxu0 %v7531
    %8167 = vmatprep.subr.mxu0 %v7516
    %8168 = vmatpush1.msra.mxu0 %v7515
    %8169 = vmatprep.subr.mxu0 %v7500
    %8170 = vmatpush1.msra.mxu0 %v7499
    %8171 = vmatprep.subr.mxu0 0.0
    %8172 = vmatpush2.msra.mxu0 0.0
    %8173 = vmatprep.subr.mxu0 0.0
    %8174 = vmatpush2.msra.mxu0 0.0
    %8175 = vmatprep.subr.mxu0 0.0
    %8176 = vmatpush2.msra.mxu0 0.0
    %8177 = vmatprep.subr.mxu0 0.0
    %8178 = vmatpush2.msra.mxu0 0.0
    %8179 = vmatprep.subr.mxu0 0.0
    %8180 = vmatpush2.msra.mxu0 0.0
    %8181 = vmatprep.subr.mxu0 0.0
    %8182 = vmatpush2.msra.mxu0 0.0
    %8183 = vmatprep.subr.mxu0 0.0
    %8184 = vmatpush2.msra.mxu0 0.0
    %8185 = vmatprep.subr.mxu0 0.0
    %8186 = vmatpush2.msra.mxu0 0.0
    %8187 = vmatprep.subr.mxu0 0.0
    %8188 = vmatpush2.msra.mxu0 0.0
    %8189 = vmatprep.subr.mxu0 0.0
    %8190 = vmatpush2.msra.mxu0 0.0
    %8191 = vmatprep.subr.mxu0 0.0
    %8192 = vmatpush2.msra.mxu0 0.0
    %8193 = vmatprep.subr.mxu0 0.0
    %8194 = vmatpush2.msra.mxu0 0.0
    %8195 = vmatprep.subr.mxu0 0.0
    %8196 = vmatpush2.msra.mxu0 0.0
    %8197 = vmatprep.subr.mxu0 0.0
    %8198 = vmatpush2.msra.mxu0 0.0
    %8199 = vmatprep.subr.mxu0 0.0
    %8200 = vmatpush2.msra.mxu0 0.0
    %8201 = vmatprep.subr.mxu0 0.0
    %8202 = vmatpush2.msra.mxu0 0.0
    %8203 = vmatprep.mubr.f32.mxu0 0.0
    %8204 = vmatmul.mubr.f32.gmra.mxu0 %v6941
    %v8205 = vpop.f32.mrf.mxu0
    %v8206 = vadd.f32 %v7786, %v8205
    %v8207 = vpop.f32.mrf.mxu0
    %v8208 = vadd.f32 %v7790, %v8207
    %8209 = vmatprep.mubr.f32.mxu0 0.0
    %8210 = vmatmul.mubr.f32.gmra.mxu0 %v7490
    %v8211 = vpop.f32.mrf.mxu0
    %v8212 = vadd.f32 %v7786, %v8211
    %v8213 = vpop.f32.mrf.mxu0
    %v8214 = vadd.f32 %v7790, %v8213
    %8215 = vdwg.mxu0
    %8216 = vmatprep.subr.mxu0 %v7742
    %8217 = vmatpush1.msra.mxu0 %v7741
    %8218 = vmatprep.subr.mxu0 %v7726
    %8219 = vmatpush1.msra.mxu0 %v7725
    %8220 = vmatprep.subr.mxu0 %v7710
    %8221 = vmatpush1.msra.mxu0 %v7709
    %8222 = vmatprep.subr.mxu0 %v7694
    %8223 = vmatpush1.msra.mxu0 %v7693
    %8224 = vmatprep.subr.mxu0 %v7678
    %8225 = vmatpush1.msra.mxu0 %v7677
    %8226 = vmatprep.subr.mxu0 %v7662
    %8227 = vmatpush1.msra.mxu0 %v7661
    %8228 = vmatprep.subr.mxu0 %v7646
    %8229 = vmatpush1.msra.mxu0 %v7645
    %8230 = vmatprep.subr.mxu0 %v7630
    %8231 = vmatpush1.msra.mxu0 %v7629
    %8232 = vmatprep.subr.mxu0 %v7614
    %8233 = vmatpush1.msra.mxu0 %v7613
    %8234 = vmatprep.subr.mxu0 %v7598
    %8235 = vmatpush1.msra.mxu0 %v7597
    %8236 = vmatprep.subr.mxu0 %v7582
    %8237 = vmatpush1.msra.mxu0 %v7581
    %8238 = vmatprep.subr.mxu0 %v7566
    %8239 = vmatpush1.msra.mxu0 %v7565
    %8240 = vmatprep.subr.mxu0 %v7550
    %8241 = vmatpush1.msra.mxu0 %v7549
    %8242 = vmatprep.subr.mxu0 %v7534
    %8243 = vmatpush1.msra.mxu0 %v7533
    %8244 = vmatprep.subr.mxu0 %v7518
    %8245 = vmatpush1.msra.mxu0 %v7517
    %8246 = vmatprep.subr.mxu0 %v7502
    %8247 = vmatpush1.msra.mxu0 %v7501
    %8248 = vmatprep.subr.mxu0 0.0
    %8249 = vmatpush2.msra.mxu0 0.0
    %8250 = vmatprep.subr.mxu0 0.0
    %8251 = vmatpush2.msra.mxu0 0.0
    %8252 = vmatprep.subr.mxu0 0.0
    %8253 = vmatpush2.msra.mxu0 0.0
    %8254 = vmatprep.subr.mxu0 0.0
    %8255 = vmatpush2.msra.mxu0 0.0
    %8256 = vmatprep.subr.mxu0 0.0
    %8257 = vmatpush2.msra.mxu0 0.0
    %8258 = vmatprep.subr.mxu0 0.0
    %8259 = vmatpush2.msra.mxu0 0.0
    %8260 = vmatprep.subr.mxu0 0.0
    %8261 = vmatpush2.msra.mxu0 0.0
    %8262 = vmatprep.subr.mxu0 0.0
    %8263 = vmatpush2.msra.mxu0 0.0
    %8264 = vmatprep.subr.mxu0 0.0
    %8265 = vmatpush2.msra.mxu0 0.0
    %8266 = vmatprep.subr.mxu0 0.0
    %8267 = vmatpush2.msra.mxu0 0.0
    %8268 = vmatprep.subr.mxu0 0.0
    %8269 = vmatpush2.msra.mxu0 0.0
    %8270 = vmatprep.subr.mxu0 0.0
    %8271 = vmatpush2.msra.mxu0 0.0
    %8272 = vmatprep.subr.mxu0 0.0
    %8273 = vmatpush2.msra.mxu0 0.0
    %8274 = vmatprep.subr.mxu0 0.0
    %8275 = vmatpush2.msra.mxu0 0.0
    %8276 = vmatprep.subr.mxu0 0.0
    %8277 = vmatpush2.msra.mxu0 0.0
    %8278 = vmatprep.subr.mxu0 0.0
    %8279 = vmatpush2.msra.mxu0 0.0
    %8280 = vmatprep.mubr.f32.mxu0 0.0
    %8281 = vmatmul.mubr.f32.gmra.mxu0 %v6941
    %v8282 = vpop.f32.mrf.mxu0
    %v8283 = vadd.f32 %v7794, %v8282
    %v8284 = vpop.f32.mrf.mxu0
    %v8285 = vadd.f32 %v7798, %v8284
    %8286 = vmatprep.mubr.f32.mxu0 0.0
    %8287 = vmatmul.mubr.f32.gmra.mxu0 %v7490
    %v8288 = vpop.f32.mrf.mxu0
    %v8289 = vadd.f32 %v7794, %v8288
    %v8290 = vpop.f32.mrf.mxu0
    %v8291 = vadd.f32 %v7798, %v8290
    %8292 = vdwg.mxu0
    %8293 = vmatprep.subr.mxu0 %v7744
    %8294 = vmatpush1.msra.mxu0 %v7743
    %8295 = vmatprep.subr.mxu0 %v7728
    %8296 = vmatpush1.msra.mxu0 %v7727
    %8297 = vmatprep.subr.mxu0 %v7712
    %8298 = vmatpush1.msra.mxu0 %v7711
    %8299 = vmatprep.subr.mxu0 %v7696
    %8300 = vmatpush1.msra.mxu0 %v7695
    %8301 = vmatprep.subr.mxu0 %v7680
    %8302 = vmatpush1.msra.mxu0 %v7679
    %8303 = vmatprep.subr.mxu0 %v7664
    %8304 = vmatpush1.msra.mxu0 %v7663
    %8305 = vmatprep.subr.mxu0 %v7648
    %8306 = vmatpush1.msra.mxu0 %v7647
    %8307 = vmatprep.subr.mxu0 %v7632
    %8308 = vmatpush1.msra.mxu0 %v7631
    %8309 = vmatprep.subr.mxu0 %v7616
    %8310 = vmatpush1.msra.mxu0 %v7615
    %8311 = vmatprep.subr.mxu0 %v7600
    %8312 = vmatpush1.msra.mxu0 %v7599
    %8313 = vmatprep.subr.mxu0 %v7584
    %8314 = vmatpush1.msra.mxu0 %v7583
    %8315 = vmatprep.subr.mxu0 %v7568
    %8316 = vmatpush1.msra.mxu0 %v7567
    %8317 = vmatprep.subr.mxu0 %v7552
    %8318 = vmatpush1.msra.mxu0 %v7551
    %8319 = vmatprep.subr.mxu0 %v7536
    %8320 = vmatpush1.msra.mxu0 %v7535
    %8321 = vmatprep.subr.mxu0 %v7520
    %8322 = vmatpush1.msra.mxu0 %v7519
    %8323 = vmatprep.subr.mxu0 %v7504
    %8324 = vmatpush1.msra.mxu0 %v7503
    %8325 = vmatprep.subr.mxu0 0.0
    %8326 = vmatpush2.msra.mxu0 0.0
    %8327 = vmatprep.subr.mxu0 0.0
    %8328 = vmatpush2.msra.mxu0 0.0
    %8329 = vmatprep.subr.mxu0 0.0
    %8330 = vmatpush2.msra.mxu0 0.0
    %8331 = vmatprep.subr.mxu0 0.0
    %8332 = vmatpush2.msra.mxu0 0.0
    %8333 = vmatprep.subr.mxu0 0.0
    %8334 = vmatpush2.msra.mxu0 0.0
    %8335 = vmatprep.subr.mxu0 0.0
    %8336 = vmatpush2.msra.mxu0 0.0
    %8337 = vmatprep.subr.mxu0 0.0
    %8338 = vmatpush2.msra.mxu0 0.0
    %8339 = vmatprep.subr.mxu0 0.0
    %8340 = vmatpush2.msra.mxu0 0.0
    %8341 = vmatprep.subr.mxu0 0.0
    %8342 = vmatpush2.msra.mxu0 0.0
    %8343 = vmatprep.subr.mxu0 0.0
    %8344 = vmatpush2.msra.mxu0 0.0
    %8345 = vmatprep.subr.mxu0 0.0
    %8346 = vmatpush2.msra.mxu0 0.0
    %8347 = vmatprep.subr.mxu0 0.0
    %8348 = vmatpush2.msra.mxu0 0.0
    %8349 = vmatprep.subr.mxu0 0.0
    %8350 = vmatpush2.msra.mxu0 0.0
    %8351 = vmatprep.subr.mxu0 0.0
    %8352 = vmatpush2.msra.mxu0 0.0
    %8353 = vmatprep.subr.mxu0 0.0
    %8354 = vmatpush2.msra.mxu0 0.0
    %8355 = vmatprep.subr.mxu0 0.0
    %8356 = vmatpush2.msra.mxu0 0.0
    %8357 = vmatprep.mubr.f32.mxu0 0.0
    %8358 = vmatmul.mubr.f32.gmra.mxu0 %v6941
    %v8359 = vpop.f32.mrf.mxu0
    %v8360 = vadd.f32 %v7802, %v8359
    %v8361 = vpop.f32.mrf.mxu0
    %v8362 = vadd.f32 %v7806, %v8361
    %8363 = vmatprep.mubr.f32.mxu0 0.0
    %8364 = vmatmul.mubr.f32.gmra.mxu0 %v7490
    %v8365 = vpop.f32.mrf.mxu0
    %v8366 = vadd.f32 %v7802, %v8365
    %v8367 = vpop.f32.mrf.mxu0
    %v8368 = vadd.f32 %v7806, %v8367
    %8369 = vdwg.mxu0
    %8370 = vmatprep.subr.mxu0 %v7746
    %8371 = vmatpush1.msra.mxu0 %v7745
    %8372 = vmatprep.subr.mxu0 %v7730
    %8373 = vmatpush1.msra.mxu0 %v7729
    %8374 = vmatprep.subr.mxu0 %v7714
    %8375 = vmatpush1.msra.mxu0 %v7713
    %8376 = vmatprep.subr.mxu0 %v7698
    %8377 = vmatpush1.msra.mxu0 %v7697
    %8378 = vmatprep.subr.mxu0 %v7682
    %8379 = vmatpush1.msra.mxu0 %v7681
    %8380 = vmatprep.subr.mxu0 %v7666
    %8381 = vmatpush1.msra.mxu0 %v7665
    %8382 = vmatprep.subr.mxu0 %v7650
    %8383 = vmatpush1.msra.mxu0 %v7649
    %8384 = vmatprep.subr.mxu0 %v7634
    %8385 = vmatpush1.msra.mxu0 %v7633
    %8386 = vmatprep.subr.mxu0 %v7618
    %8387 = vmatpush1.msra.mxu0 %v7617
    %8388 = vmatprep.subr.mxu0 %v7602
    %8389 = vmatpush1.msra.mxu0 %v7601
    %8390 = vmatprep.subr.mxu0 %v7586
    %8391 = vmatpush1.msra.mxu0 %v7585
    %8392 = vmatprep.subr.mxu0 %v7570
    %8393 = vmatpush1.msra.mxu0 %v7569
    %8394 = vmatprep.subr.mxu0 %v7554
    %8395 = vmatpush1.msra.mxu0 %v7553
    %8396 = vmatprep.subr.mxu0 %v7538
    %8397 = vmatpush1.msra.mxu0 %v7537
    %8398 = vmatprep.subr.mxu0 %v7522
    %8399 = vmatpush1.msra.mxu0 %v7521
    %8400 = vmatprep.subr.mxu0 %v7506
    %8401 = vmatpush1.msra.mxu0 %v7505
    %8402 = vmatprep.subr.mxu0 0.0
    %8403 = vmatpush2.msra.mxu0 0.0
    %8404 = vmatprep.subr.mxu0 0.0
    %8405 = vmatpush2.msra.mxu0 0.0
    %8406 = vmatprep.subr.mxu0 0.0
    %8407 = vmatpush2.msra.mxu0 0.0
    %8408 = vmatprep.subr.mxu0 0.0
    %8409 = vmatpush2.msra.mxu0 0.0
    %8410 = vmatprep.subr.mxu0 0.0
    %8411 = vmatpush2.msra.mxu0 0.0
    %8412 = vmatprep.subr.mxu0 0.0
    %8413 = vmatpush2.msra.mxu0 0.0
    %8414 = vmatprep.subr.mxu0 0.0
    %8415 = vmatpush2.msra.mxu0 0.0
    %8416 = vmatprep.subr.mxu0 0.0
    %8417 = vmatpush2.msra.mxu0 0.0
    %8418 = vmatprep.subr.mxu0 0.0
    %8419 = vmatpush2.msra.mxu0 0.0
    %8420 = vmatprep.subr.mxu0 0.0
    %8421 = vmatpush2.msra.mxu0 0.0
    %8422 = vmatprep.subr.mxu0 0.0
    %8423 = vmatpush2.msra.mxu0 0.0
    %8424 = vmatprep.subr.mxu0 0.0
    %8425 = vmatpush2.msra.mxu0 0.0
    %8426 = vmatprep.subr.mxu0 0.0
    %8427 = vmatpush2.msra.mxu0 0.0
    %8428 = vmatprep.subr.mxu0 0.0
    %8429 = vmatpush2.msra.mxu0 0.0
    %8430 = vmatprep.subr.mxu0 0.0
    %8431 = vmatpush2.msra.mxu0 0.0
    %8432 = vmatprep.subr.mxu0 0.0
    %8433 = vmatpush2.msra.mxu0 0.0
    %8434 = vmatprep.mubr.f32.mxu0 0.0
    %8435 = vmatmul.mubr.f32.gmra.mxu0 %v6941
    %v8436 = vpop.f32.mrf.mxu0
    %v8437 = vadd.f32 %v7810, %v8436
    %v8438 = vpop.f32.mrf.mxu0
    %v8439 = vadd.f32 %v7814, %v8438
    %8440 = vmatprep.mubr.f32.mxu0 0.0
    %8441 = vmatmul.mubr.f32.gmra.mxu0 %v7490
    %v8442 = vpop.f32.mrf.mxu0
    %v8443 = vadd.f32 %v7810, %v8442
    %v8444 = vpop.f32.mrf.mxu0
    %v8445 = vadd.f32 %v7814, %v8444
    %8446 = vdwg.mxu0
    %v8447 = vmax.f32 %v7898, 0.0
    %v8448 = vmax.f32 %v7900, 0.0
    %v8449 = vmax.f32 %v7975, 0.0
    %v8450 = vmax.f32 %v7977, 0.0
    %v8451 = vmax.f32 %v8052, 0.0
    %v8452 = vmax.f32 %v8054, 0.0
    %v8453 = vmax.f32 %v8129, 0.0
    %v8454 = vmax.f32 %v8131, 0.0
    %v8455 = vmax.f32 %v8206, 0.0
    %v8456 = vmax.f32 %v8208, 0.0
    %v8457 = vmax.f32 %v8283, 0.0
    %v8458 = vmax.f32 %v8285, 0.0
    %v8459 = vmax.f32 %v8360, 0.0
    %v8460 = vmax.f32 %v8362, 0.0
    %v8461 = vmax.f32 %v8437, 0.0
    %v8462 = vmax.f32 %v8439, 0.0
    %v8463 = vmax.f32 %v7904, 0.0
    %v8464 = vmax.f32 %v7906, 0.0
    %v8465 = vmax.f32 %v7981, 0.0
    %v8466 = vmax.f32 %v7983, 0.0
    %v8467 = vmax.f32 %v8058, 0.0
    %v8468 = vmax.f32 %v8060, 0.0
    %v8469 = vmax.f32 %v8135, 0.0
    %v8470 = vmax.f32 %v8137, 0.0
    %v8471 = vmax.f32 %v8212, 0.0
    %v8472 = vmax.f32 %v8214, 0.0
    %v8473 = vmax.f32 %v8289, 0.0
    %v8474 = vmax.f32 %v8291, 0.0
    %v8475 = vmax.f32 %v8366, 0.0
    %v8476 = vmax.f32 %v8368, 0.0
    %v8477 = vmax.f32 %v8443, 0.0
    %v8478 = vmax.f32 %v8445, 0.0
    %v8479 = vld [vmem:[%s95] sm:$0xff]
    %v8480 = vld [vmem:[%s95 + $0x8] sm:$0xff]
    %v8481 = vld [vmem:[%s95 + $0x10] sm:$0xff]
    %v8482 = vld [vmem:[%s95 + $0x18] sm:$0xff]
    %v8483 = vld [vmem:[%s95 + $0x20] sm:$0xff]
    %v8484 = vld [vmem:[%s95 + $0x28] sm:$0xff]
    %v8485 = vld [vmem:[%s95 + $0x30] sm:$0xff]
    %v8486 = vld [vmem:[%s95 + $0x38] sm:$0xff]
    %v8487 = vld [vmem:[%s95 + $0x40] sm:$0xff]
    %v8488 = vld [vmem:[%s95 + $0x48] sm:$0xff]
    %v8489 = vld [vmem:[%s95 + $0x50] sm:$0xff]
    %v8490 = vld [vmem:[%s95 + $0x58] sm:$0xff]
    %v8491 = vld [vmem:[%s95 + $0x60] sm:$0xff]
    %v8492 = vld [vmem:[%s95 + $0x68] sm:$0xff]
    %v8493 = vld [vmem:[%s95 + $0x70] sm:$0xff]
    %v8494 = vld [vmem:[%s95 + $0x78] sm:$0xff]
    %v8495 = vld [vmem:[%s95 + $0x80] sm:$0xff]
    %v8496 = vld [vmem:[%s95 + $0x88] sm:$0xff]
    %v8497 = vld [vmem:[%s95 + $0x90] sm:$0xff]
    %v8498 = vld [vmem:[%s95 + $0x98] sm:$0xff]
    %v8499 = vld [vmem:[%s95 + $0xa0] sm:$0xff]
    %v8500 = vld [vmem:[%s95 + $0xa8] sm:$0xff]
    %v8501 = vld [vmem:[%s95 + $0xb0] sm:$0xff]
    %v8502 = vld [vmem:[%s95 + $0xb8] sm:$0xff]
    %v8503 = vld [vmem:[%s95 + $0xc0] sm:$0xff]
    %v8504 = vld [vmem:[%s95 + $0xc8] sm:$0xff]
    %v8505 = vld [vmem:[%s95 + $0xd0] sm:$0xff]
    %v8506 = vld [vmem:[%s95 + $0xd8] sm:$0xff]
    %v8507 = vld [vmem:[%s95 + $0xe0] sm:$0xff]
    %v8508 = vld [vmem:[%s95 + $0xe8] sm:$0xff]
    %v8509 = vld [vmem:[%s95 + $0xf0] sm:$0xff]
    %v8510 = vld [vmem:[%s95 + $0xf8] sm:$0xff]
    %v8511 = vld [vmem:[%s95 + $0x100] sm:$0xff]
    %v8512 = vld [vmem:[%s95 + $0x108] sm:$0xff]
    %v8513 = vld [vmem:[%s95 + $0x110] sm:$0xff]
    %v8514 = vld [vmem:[%s95 + $0x118] sm:$0xff]
    %v8515 = vld [vmem:[%s95 + $0x120] sm:$0xff]
    %v8516 = vld [vmem:[%s95 + $0x128] sm:$0xff]
    %v8517 = vld [vmem:[%s95 + $0x130] sm:$0xff]
    %v8518 = vld [vmem:[%s95 + $0x138] sm:$0xff]
    %v8519 = vld [vmem:[%s95 + $0x140] sm:$0xff]
    %v8520 = vld [vmem:[%s95 + $0x148] sm:$0xff]
    %v8521 = vld [vmem:[%s95 + $0x150] sm:$0xff]
    %v8522 = vld [vmem:[%s95 + $0x158] sm:$0xff]
    %v8523 = vld [vmem:[%s95 + $0x160] sm:$0xff]
    %v8524 = vld [vmem:[%s95 + $0x168] sm:$0xff]
    %v8525 = vld [vmem:[%s95 + $0x170] sm:$0xff]
    %v8526 = vld [vmem:[%s95 + $0x178] sm:$0xff]
    %v8527 = vld [vmem:[%s95 + $0x180] sm:$0xff]
    %v8528 = vld [vmem:[%s95 + $0x188] sm:$0xff]
    %v8529 = vld [vmem:[%s95 + $0x190] sm:$0xff]
    %v8530 = vld [vmem:[%s95 + $0x198] sm:$0xff]
    %v8531 = vld [vmem:[%s95 + $0x1a0] sm:$0xff]
    %v8532 = vld [vmem:[%s95 + $0x1a8] sm:$0xff]
    %v8533 = vld [vmem:[%s95 + $0x1b0] sm:$0xff]
    %v8534 = vld [vmem:[%s95 + $0x1b8] sm:$0xff]
    %v8535 = vld [vmem:[%s95 + $0x1c0] sm:$0xff]
    %v8536 = vld [vmem:[%s95 + $0x1c8] sm:$0xff]
    %v8537 = vld [vmem:[%s95 + $0x1d0] sm:$0xff]
    %v8538 = vld [vmem:[%s95 + $0x1d8] sm:$0xff]
    %v8539 = vld [vmem:[%s95 + $0x1e0] sm:$0xff]
    %v8540 = vld [vmem:[%s95 + $0x1e8] sm:$0xff]
    %v8541 = vld [vmem:[%s95 + $0x1f0] sm:$0xff]
    %v8542 = vld [vmem:[%s95 + $0x1f8] sm:$0xff]
    %v8543 = vld [vmem:[%s95 + $0x200] sm:$0xff]
    %v8544 = vld [vmem:[%s95 + $0x208] sm:$0xff]
    %v8545 = vld [vmem:[%s95 + $0x210] sm:$0xff]
    %v8546 = vld [vmem:[%s95 + $0x218] sm:$0xff]
    %v8547 = vld [vmem:[%s95 + $0x220] sm:$0xff]
    %v8548 = vld [vmem:[%s95 + $0x228] sm:$0xff]
    %v8549 = vld [vmem:[%s95 + $0x230] sm:$0xff]
    %v8550 = vld [vmem:[%s95 + $0x238] sm:$0xff]
    %v8551 = vld [vmem:[%s95 + $0x240] sm:$0xff]
    %v8552 = vld [vmem:[%s95 + $0x248] sm:$0xff]
    %v8553 = vld [vmem:[%s95 + $0x250] sm:$0xff]
    %v8554 = vld [vmem:[%s95 + $0x258] sm:$0xff]
    %v8555 = vld [vmem:[%s95 + $0x260] sm:$0xff]
    %v8556 = vld [vmem:[%s95 + $0x268] sm:$0xff]
    %v8557 = vld [vmem:[%s95 + $0x270] sm:$0xff]
    %v8558 = vld [vmem:[%s95 + $0x278] sm:$0xff]
    %v8559 = vld [vmem:[%s95 + $0x280] sm:$0xff]
    %v8560 = vld [vmem:[%s95 + $0x288] sm:$0xff]
    %v8561 = vld [vmem:[%s95 + $0x290] sm:$0xff]
    %v8562 = vld [vmem:[%s95 + $0x298] sm:$0xff]
    %v8563 = vld [vmem:[%s95 + $0x2a0] sm:$0xff]
    %v8564 = vld [vmem:[%s95 + $0x2a8] sm:$0xff]
    %v8565 = vld [vmem:[%s95 + $0x2b0] sm:$0xff]
    %v8566 = vld [vmem:[%s95 + $0x2b8] sm:$0xff]
    %v8567 = vld [vmem:[%s95 + $0x2c0] sm:$0xff]
    %v8568 = vld [vmem:[%s95 + $0x2c8] sm:$0xff]
    %v8569 = vld [vmem:[%s95 + $0x2d0] sm:$0xff]
    %v8570 = vld [vmem:[%s95 + $0x2d8] sm:$0xff]
    %v8571 = vld [vmem:[%s95 + $0x2e0] sm:$0xff]
    %v8572 = vld [vmem:[%s95 + $0x2e8] sm:$0xff]
    %v8573 = vld [vmem:[%s95 + $0x2f0] sm:$0xff]
    %v8574 = vld [vmem:[%s95 + $0x2f8] sm:$0xff]
    %v8575 = vld [vmem:[%s95 + $0x300] sm:$0xff]
    %v8576 = vld [vmem:[%s95 + $0x308] sm:$0xff]
    %v8577 = vld [vmem:[%s95 + $0x310] sm:$0xff]
    %v8578 = vld [vmem:[%s95 + $0x318] sm:$0xff]
    %v8579 = vld [vmem:[%s95 + $0x320] sm:$0xff]
    %v8580 = vld [vmem:[%s95 + $0x328] sm:$0xff]
    %v8581 = vld [vmem:[%s95 + $0x330] sm:$0xff]
    %v8582 = vld [vmem:[%s95 + $0x338] sm:$0xff]
    %v8583 = vld [vmem:[%s95 + $0x340] sm:$0xff]
    %v8584 = vld [vmem:[%s95 + $0x348] sm:$0xff]
    %v8585 = vld [vmem:[%s95 + $0x350] sm:$0xff]
    %v8586 = vld [vmem:[%s95 + $0x358] sm:$0xff]
    %v8587 = vld [vmem:[%s95 + $0x360] sm:$0xff]
    %v8588 = vld [vmem:[%s95 + $0x368] sm:$0xff]
    %v8589 = vld [vmem:[%s95 + $0x370] sm:$0xff]
    %v8590 = vld [vmem:[%s95 + $0x378] sm:$0xff]
    %v8591 = vld [vmem:[%s95 + $0x380] sm:$0xff]
    %v8592 = vld [vmem:[%s95 + $0x388] sm:$0xff]
    %v8593 = vld [vmem:[%s95 + $0x390] sm:$0xff]
    %v8594 = vld [vmem:[%s95 + $0x398] sm:$0xff]
    %v8595 = vld [vmem:[%s95 + $0x3a0] sm:$0xff]
    %v8596 = vld [vmem:[%s95 + $0x3a8] sm:$0xff]
    %v8597 = vld [vmem:[%s95 + $0x3b0] sm:$0xff]
    %v8598 = vld [vmem:[%s95 + $0x3b8] sm:$0xff]
    %v8599 = vld [vmem:[%s95 + $0x3c0] sm:$0xff]
    %v8600 = vld [vmem:[%s95 + $0x3c8] sm:$0xff]
    %v8601 = vld [vmem:[%s95 + $0x3d0] sm:$0xff]
    %v8602 = vld [vmem:[%s95 + $0x3d8] sm:$0xff]
    %v8603 = vld [vmem:[%s95 + $0x3e0] sm:$0xff]
    %v8604 = vld [vmem:[%s95 + $0x3e8] sm:$0xff]
    %v8605 = vld [vmem:[%s95 + $0x3f0] sm:$0xff]
    %v8606 = vld [vmem:[%s95 + $0x3f8] sm:$0xff]
    %v8607 = vld [vmem:[%s95 + $0x400] sm:$0xff]
    %v8608 = vld [vmem:[%s95 + $0x408] sm:$0xff]
    %v8609 = vld [vmem:[%s95 + $0x410] sm:$0xff]
    %v8610 = vld [vmem:[%s95 + $0x418] sm:$0xff]
    %v8611 = vld [vmem:[%s95 + $0x420] sm:$0xff]
    %v8612 = vld [vmem:[%s95 + $0x428] sm:$0xff]
    %v8613 = vld [vmem:[%s95 + $0x430] sm:$0xff]
    %v8614 = vld [vmem:[%s95 + $0x438] sm:$0xff]
    %v8615 = vld [vmem:[%s95 + $0x440] sm:$0xff]
    %v8616 = vld [vmem:[%s95 + $0x448] sm:$0xff]
    %v8617 = vld [vmem:[%s95 + $0x450] sm:$0xff]
    %v8618 = vld [vmem:[%s95 + $0x458] sm:$0xff]
    %v8619 = vld [vmem:[%s95 + $0x460] sm:$0xff]
    %v8620 = vld [vmem:[%s95 + $0x468] sm:$0xff]
    %v8621 = vld [vmem:[%s95 + $0x470] sm:$0xff]
    %v8622 = vld [vmem:[%s95 + $0x478] sm:$0xff]
    %v8623 = vld [vmem:[%s95 + $0x480] sm:$0xff]
    %v8624 = vld [vmem:[%s95 + $0x488] sm:$0xff]
    %v8625 = vld [vmem:[%s95 + $0x490] sm:$0xff]
    %v8626 = vld [vmem:[%s95 + $0x498] sm:$0xff]
    %v8627 = vld [vmem:[%s95 + $0x4a0] sm:$0xff]
    %v8628 = vld [vmem:[%s95 + $0x4a8] sm:$0xff]
    %v8629 = vld [vmem:[%s95 + $0x4b0] sm:$0xff]
    %v8630 = vld [vmem:[%s95 + $0x4b8] sm:$0xff]
    %v8631 = vld [vmem:[%s95 + $0x4c0] sm:$0xff]
    %v8632 = vld [vmem:[%s95 + $0x4c8] sm:$0xff]
    %v8633 = vld [vmem:[%s95 + $0x4d0] sm:$0xff]
    %v8634 = vld [vmem:[%s95 + $0x4d8] sm:$0xff]
    %v8635 = vld [vmem:[%s95 + $0x4e0] sm:$0xff]
    %v8636 = vld [vmem:[%s95 + $0x4e8] sm:$0xff]
    %v8637 = vld [vmem:[%s95 + $0x4f0] sm:$0xff]
    %v8638 = vld [vmem:[%s95 + $0x4f8] sm:$0xff]
    %v8639 = vld [vmem:[%s95 + $0x500] sm:$0xff]
    %v8640 = vld [vmem:[%s95 + $0x508] sm:$0xff]
    %v8641 = vld [vmem:[%s95 + $0x510] sm:$0xff]
    %v8642 = vld [vmem:[%s95 + $0x518] sm:$0xff]
    %v8643 = vld [vmem:[%s95 + $0x520] sm:$0xff]
    %v8644 = vld [vmem:[%s95 + $0x528] sm:$0xff]
    %v8645 = vld [vmem:[%s95 + $0x530] sm:$0xff]
    %v8646 = vld [vmem:[%s95 + $0x538] sm:$0xff]
    %v8647 = vld [vmem:[%s95 + $0x540] sm:$0xff]
    %v8648 = vld [vmem:[%s95 + $0x548] sm:$0xff]
    %v8649 = vld [vmem:[%s95 + $0x550] sm:$0xff]
    %v8650 = vld [vmem:[%s95 + $0x558] sm:$0xff]
    %v8651 = vld [vmem:[%s95 + $0x560] sm:$0xff]
    %v8652 = vld [vmem:[%s95 + $0x568] sm:$0xff]
    %v8653 = vld [vmem:[%s95 + $0x570] sm:$0xff]
    %v8654 = vld [vmem:[%s95 + $0x578] sm:$0xff]
    %v8655 = vld [vmem:[%s95 + $0x580] sm:$0xff]
    %v8656 = vld [vmem:[%s95 + $0x588] sm:$0xff]
    %v8657 = vld [vmem:[%s95 + $0x590] sm:$0xff]
    %v8658 = vld [vmem:[%s95 + $0x598] sm:$0xff]
    %v8659 = vld [vmem:[%s95 + $0x5a0] sm:$0xff]
    %v8660 = vld [vmem:[%s95 + $0x5a8] sm:$0xff]
    %v8661 = vld [vmem:[%s95 + $0x5b0] sm:$0xff]
    %v8662 = vld [vmem:[%s95 + $0x5b8] sm:$0xff]
    %v8663 = vld [vmem:[%s95 + $0x5c0] sm:$0xff]
    %v8664 = vld [vmem:[%s95 + $0x5c8] sm:$0xff]
    %v8665 = vld [vmem:[%s95 + $0x5d0] sm:$0xff]
    %v8666 = vld [vmem:[%s95 + $0x5d8] sm:$0xff]
    %v8667 = vld [vmem:[%s95 + $0x5e0] sm:$0xff]
    %v8668 = vld [vmem:[%s95 + $0x5e8] sm:$0xff]
    %v8669 = vld [vmem:[%s95 + $0x5f0] sm:$0xff]
    %v8670 = vld [vmem:[%s95 + $0x5f8] sm:$0xff]
    %v8671 = vld [vmem:[%s95 + $0x600] sm:$0xff]
    %v8672 = vld [vmem:[%s95 + $0x608] sm:$0xff]
    %v8673 = vld [vmem:[%s95 + $0x610] sm:$0xff]
    %v8674 = vld [vmem:[%s95 + $0x618] sm:$0xff]
    %v8675 = vld [vmem:[%s95 + $0x620] sm:$0xff]
    %v8676 = vld [vmem:[%s95 + $0x628] sm:$0xff]
    %v8677 = vld [vmem:[%s95 + $0x630] sm:$0xff]
    %v8678 = vld [vmem:[%s95 + $0x638] sm:$0xff]
    %v8679 = vld [vmem:[%s95 + $0x640] sm:$0xff]
    %v8680 = vld [vmem:[%s95 + $0x648] sm:$0xff]
    %v8681 = vld [vmem:[%s95 + $0x650] sm:$0xff]
    %v8682 = vld [vmem:[%s95 + $0x658] sm:$0xff]
    %v8683 = vld [vmem:[%s95 + $0x660] sm:$0xff]
    %v8684 = vld [vmem:[%s95 + $0x668] sm:$0xff]
    %v8685 = vld [vmem:[%s95 + $0x670] sm:$0xff]
    %v8686 = vld [vmem:[%s95 + $0x678] sm:$0xff]
    %v8687 = vld [vmem:[%s95 + $0x680] sm:$0xff]
    %v8688 = vld [vmem:[%s95 + $0x688] sm:$0xff]
    %v8689 = vld [vmem:[%s95 + $0x690] sm:$0xff]
    %v8690 = vld [vmem:[%s95 + $0x698] sm:$0xff]
    %v8691 = vld [vmem:[%s95 + $0x6a0] sm:$0xff]
    %v8692 = vld [vmem:[%s95 + $0x6a8] sm:$0xff]
    %v8693 = vld [vmem:[%s95 + $0x6b0] sm:$0xff]
    %v8694 = vld [vmem:[%s95 + $0x6b8] sm:$0xff]
    %v8695 = vld [vmem:[%s95 + $0x6c0] sm:$0xff]
    %v8696 = vld [vmem:[%s95 + $0x6c8] sm:$0xff]
    %v8697 = vld [vmem:[%s95 + $0x6d0] sm:$0xff]
    %v8698 = vld [vmem:[%s95 + $0x6d8] sm:$0xff]
    %v8699 = vld [vmem:[%s95 + $0x6e0] sm:$0xff]
    %v8700 = vld [vmem:[%s95 + $0x6e8] sm:$0xff]
    %v8701 = vld [vmem:[%s95 + $0x6f0] sm:$0xff]
    %v8702 = vld [vmem:[%s95 + $0x6f8] sm:$0xff]
    %v8703 = vld [vmem:[%s95 + $0x700] sm:$0xff]
    %v8704 = vld [vmem:[%s95 + $0x708] sm:$0xff]
    %v8705 = vld [vmem:[%s95 + $0x710] sm:$0xff]
    %v8706 = vld [vmem:[%s95 + $0x718] sm:$0xff]
    %v8707 = vld [vmem:[%s95 + $0x720] sm:$0xff]
    %v8708 = vld [vmem:[%s95 + $0x728] sm:$0xff]
    %v8709 = vld [vmem:[%s95 + $0x730] sm:$0xff]
    %v8710 = vld [vmem:[%s95 + $0x738] sm:$0xff]
    %v8711 = vld [vmem:[%s95 + $0x740] sm:$0xff]
    %v8712 = vld [vmem:[%s95 + $0x748] sm:$0xff]
    %v8713 = vld [vmem:[%s95 + $0x750] sm:$0xff]
    %v8714 = vld [vmem:[%s95 + $0x758] sm:$0xff]
    %v8715 = vld [vmem:[%s95 + $0x760] sm:$0xff]
    %v8716 = vld [vmem:[%s95 + $0x768] sm:$0xff]
    %v8717 = vld [vmem:[%s95 + $0x770] sm:$0xff]
    %v8718 = vld [vmem:[%s95 + $0x778] sm:$0xff]
    %v8719 = vld [vmem:[%s95 + $0x780] sm:$0xff]
    %v8720 = vld [vmem:[%s95 + $0x788] sm:$0xff]
    %v8721 = vld [vmem:[%s95 + $0x790] sm:$0xff]
    %v8722 = vld [vmem:[%s95 + $0x798] sm:$0xff]
    %v8723 = vld [vmem:[%s95 + $0x7a0] sm:$0xff]
    %v8724 = vld [vmem:[%s95 + $0x7a8] sm:$0xff]
    %v8725 = vld [vmem:[%s95 + $0x7b0] sm:$0xff]
    %v8726 = vld [vmem:[%s95 + $0x7b8] sm:$0xff]
    %v8727 = vld [vmem:[%s95 + $0x7c0] sm:$0xff]
    %v8728 = vld [vmem:[%s95 + $0x7c8] sm:$0xff]
    %v8729 = vld [vmem:[%s95 + $0x7d0] sm:$0xff]
    %v8730 = vld [vmem:[%s95 + $0x7d8] sm:$0xff]
    %v8731 = vld [vmem:[%s95 + $0x7e0] sm:$0xff]
    %v8732 = vld [vmem:[%s95 + $0x7e8] sm:$0xff]
    %v8733 = vld [vmem:[%s95 + $0x7f0] sm:$0xff]
    %v8734 = vld [vmem:[%s95 + $0x7f8] sm:$0xff]
    %v8735 = vld [vmem:[%s97] sm:$0x1]
    %v8737 = vlaneseq
    %v8738 = vshrl.u32 %v8737, 7
    %v8739 = vsub.s32 0, %v8738
    %v8740 = vrot.slane %v8735, %v8739
    %8742 = vmatprep.subr.mxu0 0.0
    %8743 = vmatpush1.msra.mxu0 %v8494
    %8744 = vmatprep.subr.mxu0 0.0
    %8745 = vmatpush1.msra.mxu0 %v8493
    %8746 = vmatprep.subr.mxu0 0.0
    %8747 = vmatpush1.msra.mxu0 %v8492
    %8748 = vmatprep.subr.mxu0 0.0
    %8749 = vmatpush1.msra.mxu0 %v8491
    %8750 = vmatprep.subr.mxu0 0.0
    %8751 = vmatpush1.msra.mxu0 %v8490
    %8752 = vmatprep.subr.mxu0 0.0
    %8753 = vmatpush1.msra.mxu0 %v8489
    %8754 = vmatprep.subr.mxu0 0.0
    %8755 = vmatpush1.msra.mxu0 %v8488
    %8756 = vmatprep.subr.mxu0 0.0
    %8757 = vmatpush1.msra.mxu0 %v8487
    %8758 = vmatprep.subr.mxu0 0.0
    %8759 = vmatpush1.msra.mxu0 %v8486
    %8760 = vmatprep.subr.mxu0 0.0
    %8761 = vmatpush1.msra.mxu0 %v8485
    %8762 = vmatprep.subr.mxu0 0.0
    %8763 = vmatpush1.msra.mxu0 %v8484
    %8764 = vmatprep.subr.mxu0 0.0
    %8765 = vmatpush1.msra.mxu0 %v8483
    %8766 = vmatprep.subr.mxu0 0.0
    %8767 = vmatpush1.msra.mxu0 %v8482
    %8768 = vmatprep.subr.mxu0 0.0
    %8769 = vmatpush1.msra.mxu0 %v8481
    %8770 = vmatprep.subr.mxu0 0.0
    %8771 = vmatpush1.msra.mxu0 %v8480
    %8772 = vmatprep.subr.mxu0 0.0
    %8773 = vmatpush1.msra.mxu0 %v8479
    %8774 = vmatprep.subr.mxu0 0.0
    %8775 = vmatpush2.msra.mxu0 %v8510
    %8776 = vmatprep.subr.mxu0 0.0
    %8777 = vmatpush2.msra.mxu0 %v8509
    %8778 = vmatprep.subr.mxu0 0.0
    %8779 = vmatpush2.msra.mxu0 %v8508
    %8780 = vmatprep.subr.mxu0 0.0
    %8781 = vmatpush2.msra.mxu0 %v8507
    %8782 = vmatprep.subr.mxu0 0.0
    %8783 = vmatpush2.msra.mxu0 %v8506
    %8784 = vmatprep.subr.mxu0 0.0
    %8785 = vmatpush2.msra.mxu0 %v8505
    %8786 = vmatprep.subr.mxu0 0.0
    %8787 = vmatpush2.msra.mxu0 %v8504
    %8788 = vmatprep.subr.mxu0 0.0
    %8789 = vmatpush2.msra.mxu0 %v8503
    %8790 = vmatprep.subr.mxu0 0.0
    %8791 = vmatpush2.msra.mxu0 %v8502
    %8792 = vmatprep.subr.mxu0 0.0
    %8793 = vmatpush2.msra.mxu0 %v8501
    %8794 = vmatprep.subr.mxu0 0.0
    %8795 = vmatpush2.msra.mxu0 %v8500
    %8796 = vmatprep.subr.mxu0 0.0
    %8797 = vmatpush2.msra.mxu0 %v8499
    %8798 = vmatprep.subr.mxu0 0.0
    %8799 = vmatpush2.msra.mxu0 %v8498
    %8800 = vmatprep.subr.mxu0 0.0
    %8801 = vmatpush2.msra.mxu0 %v8497
    %8802 = vmatprep.subr.mxu0 0.0
    %8803 = vmatpush2.msra.mxu0 %v8496
    %8804 = vmatprep.subr.mxu0 0.0
    %8805 = vmatpush2.msra.mxu0 %v8495
    %8806 = vmatprep.mubr.f32.mxu0 %v8448
    %8807 = vmatmul.mubr.f32.gmra.mxu0 %v8447
    %v8808 = vpop.f32.mrf.mxu0
    %v8809 = vadd.f32 %v8740, %v8808
    %v8810 = vpop.f32.mrf.mxu0
    %8811 = vmatprep.mubr.f32.mxu0 %v8464
    %8812 = vmatmul.mubr.f32.gmra.mxu0 %v8463
    %v8813 = vpop.f32.mrf.mxu0
    %v8814 = vadd.f32 %v8740, %v8813
    %v8815 = vpop.f32.mrf.mxu0
    %8816 = vdwg.mxu0
    %8817 = vmatprep.subr.mxu0 0.0
    %8818 = vmatpush1.msra.mxu0 %v8526
    %8819 = vmatprep.subr.mxu0 0.0
    %8820 = vmatpush1.msra.mxu0 %v8525
    %8821 = vmatprep.subr.mxu0 0.0
    %8822 = vmatpush1.msra.mxu0 %v8524
    %8823 = vmatprep.subr.mxu0 0.0
    %8824 = vmatpush1.msra.mxu0 %v8523
    %8825 = vmatprep.subr.mxu0 0.0
    %8826 = vmatpush1.msra.mxu0 %v8522
    %8827 = vmatprep.subr.mxu0 0.0
    %8828 = vmatpush1.msra.mxu0 %v8521
    %8829 = vmatprep.subr.mxu0 0.0
    %8830 = vmatpush1.msra.mxu0 %v8520
    %8831 = vmatprep.subr.mxu0 0.0
    %8832 = vmatpush1.msra.mxu0 %v8519
    %8833 = vmatprep.subr.mxu0 0.0
    %8834 = vmatpush1.msra.mxu0 %v8518
    %8835 = vmatprep.subr.mxu0 0.0
    %8836 = vmatpush1.msra.mxu0 %v8517
    %8837 = vmatprep.subr.mxu0 0.0
    %8838 = vmatpush1.msra.mxu0 %v8516
    %8839 = vmatprep.subr.mxu0 0.0
    %8840 = vmatpush1.msra.mxu0 %v8515
    %8841 = vmatprep.subr.mxu0 0.0
    %8842 = vmatpush1.msra.mxu0 %v8514
    %8843 = vmatprep.subr.mxu0 0.0
    %8844 = vmatpush1.msra.mxu0 %v8513
    %8845 = vmatprep.subr.mxu0 0.0
    %8846 = vmatpush1.msra.mxu0 %v8512
    %8847 = vmatprep.subr.mxu0 0.0
    %8848 = vmatpush1.msra.mxu0 %v8511
    %8849 = vmatprep.subr.mxu0 0.0
    %8850 = vmatpush2.msra.mxu0 %v8542
    %8851 = vmatprep.subr.mxu0 0.0
    %8852 = vmatpush2.msra.mxu0 %v8541
    %8853 = vmatprep.subr.mxu0 0.0
    %8854 = vmatpush2.msra.mxu0 %v8540
    %8855 = vmatprep.subr.mxu0 0.0
    %8856 = vmatpush2.msra.mxu0 %v8539
    %8857 = vmatprep.subr.mxu0 0.0
    %8858 = vmatpush2.msra.mxu0 %v8538
    %8859 = vmatprep.subr.mxu0 0.0
    %8860 = vmatpush2.msra.mxu0 %v8537
    %8861 = vmatprep.subr.mxu0 0.0
    %8862 = vmatpush2.msra.mxu0 %v8536
    %8863 = vmatprep.subr.mxu0 0.0
    %8864 = vmatpush2.msra.mxu0 %v8535
    %8865 = vmatprep.subr.mxu0 0.0
    %8866 = vmatpush2.msra.mxu0 %v8534
    %8867 = vmatprep.subr.mxu0 0.0
    %8868 = vmatpush2.msra.mxu0 %v8533
    %8869 = vmatprep.subr.mxu0 0.0
    %8870 = vmatpush2.msra.mxu0 %v8532
    %8871 = vmatprep.subr.mxu0 0.0
    %8872 = vmatpush2.msra.mxu0 %v8531
    %8873 = vmatprep.subr.mxu0 0.0
    %8874 = vmatpush2.msra.mxu0 %v8530
    %8875 = vmatprep.subr.mxu0 0.0
    %8876 = vmatpush2.msra.mxu0 %v8529
    %8877 = vmatprep.subr.mxu0 0.0
    %8878 = vmatpush2.msra.mxu0 %v8528
    %8879 = vmatprep.subr.mxu0 0.0
    %8880 = vmatpush2.msra.mxu0 %v8527
    %8881 = vmatprep.mubr.f32.mxu0 %v8450
    %8882 = vmatmul.mubr.f32.gmra.mxu0 %v8449
    %v8883 = vpop.f32.mrf.mxu0
    %v8884 = vadd.f32 %v8809, %v8883
    %v8885 = vpop.f32.mrf.mxu0
    %8886 = vmatprep.mubr.f32.mxu0 %v8466
    %8887 = vmatmul.mubr.f32.gmra.mxu0 %v8465
    %v8888 = vpop.f32.mrf.mxu0
    %v8889 = vadd.f32 %v8814, %v8888
    %v8890 = vpop.f32.mrf.mxu0
    %8891 = vdwg.mxu0
    %8892 = vmatprep.subr.mxu0 0.0
    %8893 = vmatpush1.msra.mxu0 %v8558
    %8894 = vmatprep.subr.mxu0 0.0
    %8895 = vmatpush1.msra.mxu0 %v8557
    %8896 = vmatprep.subr.mxu0 0.0
    %8897 = vmatpush1.msra.mxu0 %v8556
    %8898 = vmatprep.subr.mxu0 0.0
    %8899 = vmatpush1.msra.mxu0 %v8555
    %8900 = vmatprep.subr.mxu0 0.0
    %8901 = vmatpush1.msra.mxu0 %v8554
    %8902 = vmatprep.subr.mxu0 0.0
    %8903 = vmatpush1.msra.mxu0 %v8553
    %8904 = vmatprep.subr.mxu0 0.0
    %8905 = vmatpush1.msra.mxu0 %v8552
    %8906 = vmatprep.subr.mxu0 0.0
    %8907 = vmatpush1.msra.mxu0 %v8551
    %8908 = vmatprep.subr.mxu0 0.0
    %8909 = vmatpush1.msra.mxu0 %v8550
    %8910 = vmatprep.subr.mxu0 0.0
    %8911 = vmatpush1.msra.mxu0 %v8549
    %8912 = vmatprep.subr.mxu0 0.0
    %8913 = vmatpush1.msra.mxu0 %v8548
    %8914 = vmatprep.subr.mxu0 0.0
    %8915 = vmatpush1.msra.mxu0 %v8547
    %8916 = vmatprep.subr.mxu0 0.0
    %8917 = vmatpush1.msra.mxu0 %v8546
    %8918 = vmatprep.subr.mxu0 0.0
    %8919 = vmatpush1.msra.mxu0 %v8545
    %8920 = vmatprep.subr.mxu0 0.0
    %8921 = vmatpush1.msra.mxu0 %v8544
    %8922 = vmatprep.subr.mxu0 0.0
    %8923 = vmatpush1.msra.mxu0 %v8543
    %8924 = vmatprep.subr.mxu0 0.0
    %8925 = vmatpush2.msra.mxu0 %v8574
    %8926 = vmatprep.subr.mxu0 0.0
    %8927 = vmatpush2.msra.mxu0 %v8573
    %8928 = vmatprep.subr.mxu0 0.0
    %8929 = vmatpush2.msra.mxu0 %v8572
    %8930 = vmatprep.subr.mxu0 0.0
    %8931 = vmatpush2.msra.mxu0 %v8571
    %8932 = vmatprep.subr.mxu0 0.0
    %8933 = vmatpush2.msra.mxu0 %v8570
    %8934 = vmatprep.subr.mxu0 0.0
    %8935 = vmatpush2.msra.mxu0 %v8569
    %8936 = vmatprep.subr.mxu0 0.0
    %8937 = vmatpush2.msra.mxu0 %v8568
    %8938 = vmatprep.subr.mxu0 0.0
    %8939 = vmatpush2.msra.mxu0 %v8567
    %8940 = vmatprep.subr.mxu0 0.0
    %8941 = vmatpush2.msra.mxu0 %v8566
    %8942 = vmatprep.subr.mxu0 0.0
    %8943 = vmatpush2.msra.mxu0 %v8565
    %8944 = vmatprep.subr.mxu0 0.0
    %8945 = vmatpush2.msra.mxu0 %v8564
    %8946 = vmatprep.subr.mxu0 0.0
    %8947 = vmatpush2.msra.mxu0 %v8563
    %8948 = vmatprep.subr.mxu0 0.0
    %8949 = vmatpush2.msra.mxu0 %v8562
    %8950 = vmatprep.subr.mxu0 0.0
    %8951 = vmatpush2.msra.mxu0 %v8561
    %8952 = vmatprep.subr.mxu0 0.0
    %8953 = vmatpush2.msra.mxu0 %v8560
    %8954 = vmatprep.subr.mxu0 0.0
    %8955 = vmatpush2.msra.mxu0 %v8559
    %8956 = vmatprep.mubr.f32.mxu0 %v8452
    %8957 = vmatmul.mubr.f32.gmra.mxu0 %v8451
    %v8958 = vpop.f32.mrf.mxu0
    %v8959 = vadd.f32 %v8884, %v8958
    %v8960 = vpop.f32.mrf.mxu0
    %8961 = vmatprep.mubr.f32.mxu0 %v8468
    %8962 = vmatmul.mubr.f32.gmra.mxu0 %v8467
    %v8963 = vpop.f32.mrf.mxu0
    %v8964 = vadd.f32 %v8889, %v8963
    %v8965 = vpop.f32.mrf.mxu0
    %8966 = vdwg.mxu0
    %8967 = vmatprep.subr.mxu0 0.0
    %8968 = vmatpush1.msra.mxu0 %v8590
    %8969 = vmatprep.subr.mxu0 0.0
    %8970 = vmatpush1.msra.mxu0 %v8589
    %8971 = vmatprep.subr.mxu0 0.0
    %8972 = vmatpush1.msra.mxu0 %v8588
    %8973 = vmatprep.subr.mxu0 0.0
    %8974 = vmatpush1.msra.mxu0 %v8587
    %8975 = vmatprep.subr.mxu0 0.0
    %8976 = vmatpush1.msra.mxu0 %v8586
    %8977 = vmatprep.subr.mxu0 0.0
    %8978 = vmatpush1.msra.mxu0 %v8585
    %8979 = vmatprep.subr.mxu0 0.0
    %8980 = vmatpush1.msra.mxu0 %v8584
    %8981 = vmatprep.subr.mxu0 0.0
    %8982 = vmatpush1.msra.mxu0 %v8583
    %8983 = vmatprep.subr.mxu0 0.0
    %8984 = vmatpush1.msra.mxu0 %v8582
    %8985 = vmatprep.subr.mxu0 0.0
    %8986 = vmatpush1.msra.mxu0 %v8581
    %8987 = vmatprep.subr.mxu0 0.0
    %8988 = vmatpush1.msra.mxu0 %v8580
    %8989 = vmatprep.subr.mxu0 0.0
    %8990 = vmatpush1.msra.mxu0 %v8579
    %8991 = vmatprep.subr.mxu0 0.0
    %8992 = vmatpush1.msra.mxu0 %v8578
    %8993 = vmatprep.subr.mxu0 0.0
    %8994 = vmatpush1.msra.mxu0 %v8577
    %8995 = vmatprep.subr.mxu0 0.0
    %8996 = vmatpush1.msra.mxu0 %v8576
    %8997 = vmatprep.subr.mxu0 0.0
    %8998 = vmatpush1.msra.mxu0 %v8575
    %8999 = vmatprep.subr.mxu0 0.0
    %9000 = vmatpush2.msra.mxu0 %v8606
    %9001 = vmatprep.subr.mxu0 0.0
    %9002 = vmatpush2.msra.mxu0 %v8605
    %9003 = vmatprep.subr.mxu0 0.0
    %9004 = vmatpush2.msra.mxu0 %v8604
    %9005 = vmatprep.subr.mxu0 0.0
    %9006 = vmatpush2.msra.mxu0 %v8603
    %9007 = vmatprep.subr.mxu0 0.0
    %9008 = vmatpush2.msra.mxu0 %v8602
    %9009 = vmatprep.subr.mxu0 0.0
    %9010 = vmatpush2.msra.mxu0 %v8601
    %9011 = vmatprep.subr.mxu0 0.0
    %9012 = vmatpush2.msra.mxu0 %v8600
    %9013 = vmatprep.subr.mxu0 0.0
    %9014 = vmatpush2.msra.mxu0 %v8599
    %9015 = vmatprep.subr.mxu0 0.0
    %9016 = vmatpush2.msra.mxu0 %v8598
    %9017 = vmatprep.subr.mxu0 0.0
    %9018 = vmatpush2.msra.mxu0 %v8597
    %9019 = vmatprep.subr.mxu0 0.0
    %9020 = vmatpush2.msra.mxu0 %v8596
    %9021 = vmatprep.subr.mxu0 0.0
    %9022 = vmatpush2.msra.mxu0 %v8595
    %9023 = vmatprep.subr.mxu0 0.0
    %9024 = vmatpush2.msra.mxu0 %v8594
    %9025 = vmatprep.subr.mxu0 0.0
    %9026 = vmatpush2.msra.mxu0 %v8593
    %9027 = vmatprep.subr.mxu0 0.0
    %9028 = vmatpush2.msra.mxu0 %v8592
    %9029 = vmatprep.subr.mxu0 0.0
    %9030 = vmatpush2.msra.mxu0 %v8591
    %9031 = vmatprep.mubr.f32.mxu0 %v8454
    %9032 = vmatmul.mubr.f32.gmra.mxu0 %v8453
    %v9033 = vpop.f32.mrf.mxu0
    %v9034 = vadd.f32 %v8959, %v9033
    %v9035 = vpop.f32.mrf.mxu0
    %9036 = vmatprep.mubr.f32.mxu0 %v8470
    %9037 = vmatmul.mubr.f32.gmra.mxu0 %v8469
    %v9038 = vpop.f32.mrf.mxu0
    %v9039 = vadd.f32 %v8964, %v9038
    %v9040 = vpop.f32.mrf.mxu0
    %9041 = vdwg.mxu0
    %9042 = vmatprep.subr.mxu0 0.0
    %9043 = vmatpush1.msra.mxu0 %v8622
    %9044 = vmatprep.subr.mxu0 0.0
    %9045 = vmatpush1.msra.mxu0 %v8621
    %9046 = vmatprep.subr.mxu0 0.0
    %9047 = vmatpush1.msra.mxu0 %v8620
    %9048 = vmatprep.subr.mxu0 0.0
    %9049 = vmatpush1.msra.mxu0 %v8619
    %9050 = vmatprep.subr.mxu0 0.0
    %9051 = vmatpush1.msra.mxu0 %v8618
    %9052 = vmatprep.subr.mxu0 0.0
    %9053 = vmatpush1.msra.mxu0 %v8617
    %9054 = vmatprep.subr.mxu0 0.0
    %9055 = vmatpush1.msra.mxu0 %v8616
    %9056 = vmatprep.subr.mxu0 0.0
    %9057 = vmatpush1.msra.mxu0 %v8615
    %9058 = vmatprep.subr.mxu0 0.0
    %9059 = vmatpush1.msra.mxu0 %v8614
    %9060 = vmatprep.subr.mxu0 0.0
    %9061 = vmatpush1.msra.mxu0 %v8613
    %9062 = vmatprep.subr.mxu0 0.0
    %9063 = vmatpush1.msra.mxu0 %v8612
    %9064 = vmatprep.subr.mxu0 0.0
    %9065 = vmatpush1.msra.mxu0 %v8611
    %9066 = vmatprep.subr.mxu0 0.0
    %9067 = vmatpush1.msra.mxu0 %v8610
    %9068 = vmatprep.subr.mxu0 0.0
    %9069 = vmatpush1.msra.mxu0 %v8609
    %9070 = vmatprep.subr.mxu0 0.0
    %9071 = vmatpush1.msra.mxu0 %v8608
    %9072 = vmatprep.subr.mxu0 0.0
    %9073 = vmatpush1.msra.mxu0 %v8607
    %9074 = vmatprep.subr.mxu0 0.0
    %9075 = vmatpush2.msra.mxu0 %v8638
    %9076 = vmatprep.subr.mxu0 0.0
    %9077 = vmatpush2.msra.mxu0 %v8637
    %9078 = vmatprep.subr.mxu0 0.0
    %9079 = vmatpush2.msra.mxu0 %v8636
    %9080 = vmatprep.subr.mxu0 0.0
    %9081 = vmatpush2.msra.mxu0 %v8635
    %9082 = vmatprep.subr.mxu0 0.0
    %9083 = vmatpush2.msra.mxu0 %v8634
    %9084 = vmatprep.subr.mxu0 0.0
    %9085 = vmatpush2.msra.mxu0 %v8633
    %9086 = vmatprep.subr.mxu0 0.0
    %9087 = vmatpush2.msra.mxu0 %v8632
    %9088 = vmatprep.subr.mxu0 0.0
    %9089 = vmatpush2.msra.mxu0 %v8631
    %9090 = vmatprep.subr.mxu0 0.0
    %9091 = vmatpush2.msra.mxu0 %v8630
    %9092 = vmatprep.subr.mxu0 0.0
    %9093 = vmatpush2.msra.mxu0 %v8629
    %9094 = vmatprep.subr.mxu0 0.0
    %9095 = vmatpush2.msra.mxu0 %v8628
    %9096 = vmatprep.subr.mxu0 0.0
    %9097 = vmatpush2.msra.mxu0 %v8627
    %9098 = vmatprep.subr.mxu0 0.0
    %9099 = vmatpush2.msra.mxu0 %v8626
    %9100 = vmatprep.subr.mxu0 0.0
    %9101 = vmatpush2.msra.mxu0 %v8625
    %9102 = vmatprep.subr.mxu0 0.0
    %9103 = vmatpush2.msra.mxu0 %v8624
    %9104 = vmatprep.subr.mxu0 0.0
    %9105 = vmatpush2.msra.mxu0 %v8623
    %9106 = vmatprep.mubr.f32.mxu0 %v8456
    %9107 = vmatmul.mubr.f32.gmra.mxu0 %v8455
    %v9108 = vpop.f32.mrf.mxu0
    %v9109 = vadd.f32 %v9034, %v9108
    %v9110 = vpop.f32.mrf.mxu0
    %9111 = vmatprep.mubr.f32.mxu0 %v8472
    %9112 = vmatmul.mubr.f32.gmra.mxu0 %v8471
    %v9113 = vpop.f32.mrf.mxu0
    %v9114 = vadd.f32 %v9039, %v9113
    %v9115 = vpop.f32.mrf.mxu0
    %9116 = vdwg.mxu0
    %9117 = vmatprep.subr.mxu0 0.0
    %9118 = vmatpush1.msra.mxu0 %v8654
    %9119 = vmatprep.subr.mxu0 0.0
    %9120 = vmatpush1.msra.mxu0 %v8653
    %9121 = vmatprep.subr.mxu0 0.0
    %9122 = vmatpush1.msra.mxu0 %v8652
    %9123 = vmatprep.subr.mxu0 0.0
    %9124 = vmatpush1.msra.mxu0 %v8651
    %9125 = vmatprep.subr.mxu0 0.0
    %9126 = vmatpush1.msra.mxu0 %v8650
    %9127 = vmatprep.subr.mxu0 0.0
    %9128 = vmatpush1.msra.mxu0 %v8649
    %9129 = vmatprep.subr.mxu0 0.0
    %9130 = vmatpush1.msra.mxu0 %v8648
    %9131 = vmatprep.subr.mxu0 0.0
    %9132 = vmatpush1.msra.mxu0 %v8647
    %9133 = vmatprep.subr.mxu0 0.0
    %9134 = vmatpush1.msra.mxu0 %v8646
    %9135 = vmatprep.subr.mxu0 0.0
    %9136 = vmatpush1.msra.mxu0 %v8645
    %9137 = vmatprep.subr.mxu0 0.0
    %9138 = vmatpush1.msra.mxu0 %v8644
    %9139 = vmatprep.subr.mxu0 0.0
    %9140 = vmatpush1.msra.mxu0 %v8643
    %9141 = vmatprep.subr.mxu0 0.0
    %9142 = vmatpush1.msra.mxu0 %v8642
    %9143 = vmatprep.subr.mxu0 0.0
    %9144 = vmatpush1.msra.mxu0 %v8641
    %9145 = vmatprep.subr.mxu0 0.0
    %9146 = vmatpush1.msra.mxu0 %v8640
    %9147 = vmatprep.subr.mxu0 0.0
    %9148 = vmatpush1.msra.mxu0 %v8639
    %9149 = vmatprep.subr.mxu0 0.0
    %9150 = vmatpush2.msra.mxu0 %v8670
    %9151 = vmatprep.subr.mxu0 0.0
    %9152 = vmatpush2.msra.mxu0 %v8669
    %9153 = vmatprep.subr.mxu0 0.0
    %9154 = vmatpush2.msra.mxu0 %v8668
    %9155 = vmatprep.subr.mxu0 0.0
    %9156 = vmatpush2.msra.mxu0 %v8667
    %9157 = vmatprep.subr.mxu0 0.0
    %9158 = vmatpush2.msra.mxu0 %v8666
    %9159 = vmatprep.subr.mxu0 0.0
    %9160 = vmatpush2.msra.mxu0 %v8665
    %9161 = vmatprep.subr.mxu0 0.0
    %9162 = vmatpush2.msra.mxu0 %v8664
    %9163 = vmatprep.subr.mxu0 0.0
    %9164 = vmatpush2.msra.mxu0 %v8663
    %9165 = vmatprep.subr.mxu0 0.0
    %9166 = vmatpush2.msra.mxu0 %v8662
    %9167 = vmatprep.subr.mxu0 0.0
    %9168 = vmatpush2.msra.mxu0 %v8661
    %9169 = vmatprep.subr.mxu0 0.0
    %9170 = vmatpush2.msra.mxu0 %v8660
    %9171 = vmatprep.subr.mxu0 0.0
    %9172 = vmatpush2.msra.mxu0 %v8659
    %9173 = vmatprep.subr.mxu0 0.0
    %9174 = vmatpush2.msra.mxu0 %v8658
    %9175 = vmatprep.subr.mxu0 0.0
    %9176 = vmatpush2.msra.mxu0 %v8657
    %9177 = vmatprep.subr.mxu0 0.0
    %9178 = vmatpush2.msra.mxu0 %v8656
    %9179 = vmatprep.subr.mxu0 0.0
    %9180 = vmatpush2.msra.mxu0 %v8655
    %9181 = vmatprep.mubr.f32.mxu0 %v8458
    %9182 = vmatmul.mubr.f32.gmra.mxu0 %v8457
    %v9183 = vpop.f32.mrf.mxu0
    %v9184 = vadd.f32 %v9109, %v9183
    %v9185 = vpop.f32.mrf.mxu0
    %9186 = vmatprep.mubr.f32.mxu0 %v8474
    %9187 = vmatmul.mubr.f32.gmra.mxu0 %v8473
    %v9188 = vpop.f32.mrf.mxu0
    %v9189 = vadd.f32 %v9114, %v9188
    %v9190 = vpop.f32.mrf.mxu0
    %9191 = vdwg.mxu0
    %9192 = vmatprep.subr.mxu0 0.0
    %9193 = vmatpush1.msra.mxu0 %v8686
    %9194 = vmatprep.subr.mxu0 0.0
    %9195 = vmatpush1.msra.mxu0 %v8685
    %9196 = vmatprep.subr.mxu0 0.0
    %9197 = vmatpush1.msra.mxu0 %v8684
    %9198 = vmatprep.subr.mxu0 0.0
    %9199 = vmatpush1.msra.mxu0 %v8683
    %9200 = vmatprep.subr.mxu0 0.0
    %9201 = vmatpush1.msra.mxu0 %v8682
    %9202 = vmatprep.subr.mxu0 0.0
    %9203 = vmatpush1.msra.mxu0 %v8681
    %9204 = vmatprep.subr.mxu0 0.0
    %9205 = vmatpush1.msra.mxu0 %v8680
    %9206 = vmatprep.subr.mxu0 0.0
    %9207 = vmatpush1.msra.mxu0 %v8679
    %9208 = vmatprep.subr.mxu0 0.0
    %9209 = vmatpush1.msra.mxu0 %v8678
    %9210 = vmatprep.subr.mxu0 0.0
    %9211 = vmatpush1.msra.mxu0 %v8677
    %9212 = vmatprep.subr.mxu0 0.0
    %9213 = vmatpush1.msra.mxu0 %v8676
    %9214 = vmatprep.subr.mxu0 0.0
    %9215 = vmatpush1.msra.mxu0 %v8675
    %9216 = vmatprep.subr.mxu0 0.0
    %9217 = vmatpush1.msra.mxu0 %v8674
    %9218 = vmatprep.subr.mxu0 0.0
    %9219 = vmatpush1.msra.mxu0 %v8673
    %9220 = vmatprep.subr.mxu0 0.0
    %9221 = vmatpush1.msra.mxu0 %v8672
    %9222 = vmatprep.subr.mxu0 0.0
    %9223 = vmatpush1.msra.mxu0 %v8671
    %9224 = vmatprep.subr.mxu0 0.0
    %9225 = vmatpush2.msra.mxu0 %v8702
    %9226 = vmatprep.subr.mxu0 0.0
    %9227 = vmatpush2.msra.mxu0 %v8701
    %9228 = vmatprep.subr.mxu0 0.0
    %9229 = vmatpush2.msra.mxu0 %v8700
    %9230 = vmatprep.subr.mxu0 0.0
    %9231 = vmatpush2.msra.mxu0 %v8699
    %9232 = vmatprep.subr.mxu0 0.0
    %9233 = vmatpush2.msra.mxu0 %v8698
    %9234 = vmatprep.subr.mxu0 0.0
    %9235 = vmatpush2.msra.mxu0 %v8697
    %9236 = vmatprep.subr.mxu0 0.0
    %9237 = vmatpush2.msra.mxu0 %v8696
    %9238 = vmatprep.subr.mxu0 0.0
    %9239 = vmatpush2.msra.mxu0 %v8695
    %9240 = vmatprep.subr.mxu0 0.0
    %9241 = vmatpush2.msra.mxu0 %v8694
    %9242 = vmatprep.subr.mxu0 0.0
    %9243 = vmatpush2.msra.mxu0 %v8693
    %9244 = vmatprep.subr.mxu0 0.0
    %9245 = vmatpush2.msra.mxu0 %v8692
    %9246 = vmatprep.subr.mxu0 0.0
    %9247 = vmatpush2.msra.mxu0 %v8691
    %9248 = vmatprep.subr.mxu0 0.0
    %9249 = vmatpush2.msra.mxu0 %v8690
    %9250 = vmatprep.subr.mxu0 0.0
    %9251 = vmatpush2.msra.mxu0 %v8689
    %9252 = vmatprep.subr.mxu0 0.0
    %9253 = vmatpush2.msra.mxu0 %v8688
    %9254 = vmatprep.subr.mxu0 0.0
    %9255 = vmatpush2.msra.mxu0 %v8687
    %9256 = vmatprep.mubr.f32.mxu0 %v8460
    %9257 = vmatmul.mubr.f32.gmra.mxu0 %v8459
    %v9258 = vpop.f32.mrf.mxu0
    %v9259 = vadd.f32 %v9184, %v9258
    %v9260 = vpop.f32.mrf.mxu0
    %9261 = vmatprep.mubr.f32.mxu0 %v8476
    %9262 = vmatmul.mubr.f32.gmra.mxu0 %v8475
    %v9263 = vpop.f32.mrf.mxu0
    %v9264 = vadd.f32 %v9189, %v9263
    %v9265 = vpop.f32.mrf.mxu0
    %9266 = vdwg.mxu0
    %9267 = vmatprep.subr.mxu0 0.0
    %9268 = vmatpush1.msra.mxu0 %v8718
    %9269 = vmatprep.subr.mxu0 0.0
    %9270 = vmatpush1.msra.mxu0 %v8717
    %9271 = vmatprep.subr.mxu0 0.0
    %9272 = vmatpush1.msra.mxu0 %v8716
    %9273 = vmatprep.subr.mxu0 0.0
    %9274 = vmatpush1.msra.mxu0 %v8715
    %9275 = vmatprep.subr.mxu0 0.0
    %9276 = vmatpush1.msra.mxu0 %v8714
    %9277 = vmatprep.subr.mxu0 0.0
    %9278 = vmatpush1.msra.mxu0 %v8713
    %9279 = vmatprep.subr.mxu0 0.0
    %9280 = vmatpush1.msra.mxu0 %v8712
    %9281 = vmatprep.subr.mxu0 0.0
    %9282 = vmatpush1.msra.mxu0 %v8711
    %9283 = vmatprep.subr.mxu0 0.0
    %9284 = vmatpush1.msra.mxu0 %v8710
    %9285 = vmatprep.subr.mxu0 0.0
    %9286 = vmatpush1.msra.mxu0 %v8709
    %9287 = vmatprep.subr.mxu0 0.0
    %9288 = vmatpush1.msra.mxu0 %v8708
    %9289 = vmatprep.subr.mxu0 0.0
    %9290 = vmatpush1.msra.mxu0 %v8707
    %9291 = vmatprep.subr.mxu0 0.0
    %9292 = vmatpush1.msra.mxu0 %v8706
    %9293 = vmatprep.subr.mxu0 0.0
    %9294 = vmatpush1.msra.mxu0 %v8705
    %9295 = vmatprep.subr.mxu0 0.0
    %9296 = vmatpush1.msra.mxu0 %v8704
    %9297 = vmatprep.subr.mxu0 0.0
    %9298 = vmatpush1.msra.mxu0 %v8703
    %9299 = vmatprep.subr.mxu0 0.0
    %9300 = vmatpush2.msra.mxu0 %v8734
    %9301 = vmatprep.subr.mxu0 0.0
    %9302 = vmatpush2.msra.mxu0 %v8733
    %9303 = vmatprep.subr.mxu0 0.0
    %9304 = vmatpush2.msra.mxu0 %v8732
    %9305 = vmatprep.subr.mxu0 0.0
    %9306 = vmatpush2.msra.mxu0 %v8731
    %9307 = vmatprep.subr.mxu0 0.0
    %9308 = vmatpush2.msra.mxu0 %v8730
    %9309 = vmatprep.subr.mxu0 0.0
    %9310 = vmatpush2.msra.mxu0 %v8729
    %9311 = vmatprep.subr.mxu0 0.0
    %9312 = vmatpush2.msra.mxu0 %v8728
    %9313 = vmatprep.subr.mxu0 0.0
    %9314 = vmatpush2.msra.mxu0 %v8727
    %9315 = vmatprep.subr.mxu0 0.0
    %9316 = vmatpush2.msra.mxu0 %v8726
    %9317 = vmatprep.subr.mxu0 0.0
    %9318 = vmatpush2.msra.mxu0 %v8725
    %9319 = vmatprep.subr.mxu0 0.0
    %9320 = vmatpush2.msra.mxu0 %v8724
    %9321 = vmatprep.subr.mxu0 0.0
    %9322 = vmatpush2.msra.mxu0 %v8723
    %9323 = vmatprep.subr.mxu0 0.0
    %9324 = vmatpush2.msra.mxu0 %v8722
    %9325 = vmatprep.subr.mxu0 0.0
    %9326 = vmatpush2.msra.mxu0 %v8721
    %9327 = vmatprep.subr.mxu0 0.0
    %9328 = vmatpush2.msra.mxu0 %v8720
    %9329 = vmatprep.subr.mxu0 0.0
    %9330 = vmatpush2.msra.mxu0 %v8719
    %9331 = vmatprep.mubr.f32.mxu0 %v8462
    %9332 = vmatmul.mubr.f32.gmra.mxu0 %v8461
    %v9333 = vpop.f32.mrf.mxu0
    %v9334 = vadd.f32 %v9259, %v9333
    %v9335 = vpop.f32.mrf.mxu0
    %9336 = vmatprep.mubr.f32.mxu0 %v8478
    %9337 = vmatmul.mubr.f32.gmra.mxu0 %v8477
    %v9338 = vpop.f32.mrf.mxu0
    %v9339 = vadd.f32 %v9264, %v9338
    %v9340 = vpop.f32.mrf.mxu0
    %9341 = vdwg.mxu0
    %v9342 = vadd.f32 %v6941, %v9334
    %v9343 = vadd.f32 %v7490, %v9339
    %v9344 = vld [vmem:[%s99] sm:$0x1]
    %v9345 = vld [vmem:[%s101] sm:$0x1]
    %9346 = vadd.xlane.f32.xlu0 %v9342
    %v9347 = vpop.xlane.xlu0 %9346
    %9348 = vadd.xlane.f32.xlu0 %v9343
    %v9349 = vpop.xlane.xlu0 %9348
    %v9350 = vmul.f32 %v9347, %v894
    %v9351 = vmul.f32 %v9349, %v894
    %v9352 = vsub.f32 %v9342, %v9350
    %v9353 = vsub.f32 %v9343, %v9351
    %v9354 = vmul.f32 %v9352, %v9352
    %v9355 = vmul.f32 %v9353, %v9353
    %9356 = vadd.xlane.f32.xlu0 %v9354
    %v9357 = vpop.xlane.xlu0 %9356
    %9358 = vadd.xlane.f32.xlu0 %v9355
    %v9359 = vpop.xlane.xlu0 %9358
    %v9360 = vmul.f32 %v9357, %v894
    %v9361 = vmul.f32 %v9359, %v894
    %v9362 = vadd.f32 %v9360, 1e-05
    %v9363 = vadd.f32 %v9361, 1e-05
    %v9364 = vrsqrt.pop %v9362
    %v9365 = vrsqrt.pop %v9363
    %v9366 = vmul.f32 %v9352, %v9364
    %v9367 = vmul.f32 %v9353, %v9365
    %v9369 = vlaneseq
    %v9370 = vshrl.u32 %v9369, 7
    %v9371 = vsub.s32 0, %v9370
    %v9372 = vrot.slane %v9344, %v9371
    %v9374 = vmul.f32 %v9366, %v9372
    %v9375 = vmul.f32 %v9367, %v9372
    %v9377 = vlaneseq
    %v9378 = vshrl.u32 %v9377, 7
    %v9379 = vsub.s32 0, %v9378
    %v9380 = vrot.slane %v9345, %v9379
    %v9382 = vadd.f32 %v9374, %v9380
    %v9383 = vadd.f32 %v9375, %v9380
    %v9384 = vrot.slane %v9382, 4
    %v9385 = vadd.f32 %v9382, %v9384
    %v9386 = vrot.slane %v9385, 2
    %v9387 = vadd.f32 %v9385, %v9386
    %v9388 = vrot.slane %v9387, 1
    %v9389 = vadd.f32 %v9387, %v9388
    %v9390 = vrcp.pop 8.0
    %v9391 = vmul.f32 %v9389, %v9390
    %v9392 = vrot.slane %v9383, 4
    %v9393 = vadd.f32 %v9383, %v9392
    %v9394 = vrot.slane %v9393, 2
    %v9395 = vadd.f32 %v9393, %v9394
    %v9396 = vrot.slane %v9395, 1
    %v9397 = vadd.f32 %v9395, %v9396
    %v9398 = vmul.f32 %v9397, %v9390
    %vm9399 = vcmask 1040384
    %v9400 = vsel %vm9399, %v9391, %v9398
    %v9401 = vld [vmem:[%s103] sm:$0xff]
    %v9402 = vld [vmem:[%s103 + $0x8] sm:$0xff]
    %v9403 = vld [vmem:[%s103 + $0x10] sm:$0xff]
    %v9404 = vld [vmem:[%s103 + $0x18] sm:$0xff]
    %v9405 = vld [vmem:[%s103 + $0x20] sm:$0xff]
    %v9406 = vld [vmem:[%s103 + $0x28] sm:$0xff]
    %v9407 = vld [vmem:[%s103 + $0x30] sm:$0xff]
    %v9408 = vld [vmem:[%s103 + $0x38] sm:$0xff]
    %v9409 = vld [vmem:[%s103 + $0x40] sm:$0xff]
    %v9410 = vld [vmem:[%s103 + $0x48] sm:$0xff]
    %v9411 = vld [vmem:[%s103 + $0x50] sm:$0xff]
    %v9412 = vld [vmem:[%s103 + $0x58] sm:$0xff]
    %v9413 = vld [vmem:[%s103 + $0x60] sm:$0xff]
    %v9414 = vld [vmem:[%s103 + $0x68] sm:$0xff]
    %v9415 = vld [vmem:[%s103 + $0x70] sm:$0xff]
    %v9416 = vld [vmem:[%s103 + $0x78] sm:$0xff]
    %v9417 = vld [vmem:[#allocation3] sm:$0x1]
    %v9419 = vlaneseq
    %v9420 = vshrl.u32 %v9419, 7
    %v9421 = vsub.s32 0, %v9420
    %v9422 = vrot.slane %v9417, %v9421
    %9424 = vmatprep.subr.mxu0 0.0
    %9425 = vmatpush1.msra.mxu0 %v9416
    %9426 = vmatprep.subr.mxu0 0.0
    %9427 = vmatpush1.msra.mxu0 %v9415
    %9428 = vmatprep.subr.mxu0 0.0
    %9429 = vmatpush1.msra.mxu0 %v9414
    %9430 = vmatprep.subr.mxu0 0.0
    %9431 = vmatpush1.msra.mxu0 %v9413
    %9432 = vmatprep.subr.mxu0 0.0
    %9433 = vmatpush1.msra.mxu0 %v9412
    %9434 = vmatprep.subr.mxu0 0.0
    %9435 = vmatpush1.msra.mxu0 %v9411
    %9436 = vmatprep.subr.mxu0 0.0
    %9437 = vmatpush1.msra.mxu0 %v9410
    %9438 = vmatprep.subr.mxu0 0.0
    %9439 = vmatpush1.msra.mxu0 %v9409
    %9440 = vmatprep.subr.mxu0 0.0
    %9441 = vmatpush1.msra.mxu0 %v9408
    %9442 = vmatprep.subr.mxu0 0.0
    %9443 = vmatpush1.msra.mxu0 %v9407
    %9444 = vmatprep.subr.mxu0 0.0
    %9445 = vmatpush1.msra.mxu0 %v9406
    %9446 = vmatprep.subr.mxu0 0.0
    %9447 = vmatpush1.msra.mxu0 %v9405
    %9448 = vmatprep.subr.mxu0 0.0
    %9449 = vmatpush1.msra.mxu0 %v9404
    %9450 = vmatprep.subr.mxu0 0.0
    %9451 = vmatpush1.msra.mxu0 %v9403
    %9452 = vmatprep.subr.mxu0 0.0
    %9453 = vmatpush1.msra.mxu0 %v9402
    %9454 = vmatprep.subr.mxu0 0.0
    %9455 = vmatpush1.msra.mxu0 %v9401
    %9456 = vmatprep.subr.mxu0 0.0
    %9457 = vmatpush2.msra.mxu0 0.0
    %9458 = vmatprep.subr.mxu0 0.0
    %9459 = vmatpush2.msra.mxu0 0.0
    %9460 = vmatprep.subr.mxu0 0.0
    %9461 = vmatpush2.msra.mxu0 0.0
    %9462 = vmatprep.subr.mxu0 0.0
    %9463 = vmatpush2.msra.mxu0 0.0
    %9464 = vmatprep.subr.mxu0 0.0
    %9465 = vmatpush2.msra.mxu0 0.0
    %9466 = vmatprep.subr.mxu0 0.0
    %9467 = vmatpush2.msra.mxu0 0.0
    %9468 = vmatprep.subr.mxu0 0.0
    %9469 = vmatpush2.msra.mxu0 0.0
    %9470 = vmatprep.subr.mxu0 0.0
    %9471 = vmatpush2.msra.mxu0 0.0
    %9472 = vmatprep.subr.mxu0 0.0
    %9473 = vmatpush2.msra.mxu0 0.0
    %9474 = vmatprep.subr.mxu0 0.0
    %9475 = vmatpush2.msra.mxu0 0.0
    %9476 = vmatprep.subr.mxu0 0.0
    %9477 = vmatpush2.msra.mxu0 0.0
    %9478 = vmatprep.subr.mxu0 0.0
    %9479 = vmatpush2.msra.mxu0 0.0
    %9480 = vmatprep.subr.mxu0 0.0
    %9481 = vmatpush2.msra.mxu0 0.0
    %9482 = vmatprep.subr.mxu0 0.0
    %9483 = vmatpush2.msra.mxu0 0.0
    %9484 = vmatprep.subr.mxu0 0.0
    %9485 = vmatpush2.msra.mxu0 0.0
    %9486 = vmatprep.subr.mxu0 0.0
    %9487 = vmatpush2.msra.mxu0 0.0
    %9488 = vmatprep.mubr.f32.mxu0 0.0
    %9489 = vmatmul.mubr.f32.gmra.mxu0 %v9400
    %v9490 = vpop.f32.mrf.mxu0
    %v9491 = vadd.f32 %v9422, %v9490
    %v9492 = vpop.f32.mrf.mxu0
    %9493 = vdwg.mxu0
    %v9494 = vmax.f32 %v9491, 0.0
    %v9495 = vld [vmem:[#allocation5] sm:$0x1]
    %v9497 = vlaneseq
    %v9498 = vshrl.u32 %v9497, 7
    %v9499 = vsub.s32 0, %v9498
    %v9500 = vrot.slane %v9495, %v9499
    %v9502 = vmul.f32 %v9494, %v9500
    %vm9503 = vcmask 517120
    %v9504 = vsel %vm9503, %v9502, 0.0
    %9505 = vadd.xlane.f32.xlu0 %v9504
    %v9506 = vpop.xlane.xlu0 %9505
    %v9507 = vld [vmem:[#allocation2] sm:$0x1]
    %v9509 = vlaneseq
    %v9510 = vshrl.u32 %v9509, 7
    %v9511 = vsub.s32 0, %v9510
    %v9512 = vrot.slane %v9507, %v9511
    %v9514 = vadd.f32 %v9506, %v9512
    %v9515 = vsub.f32 0.0, %v9514
    %v9516 = vmul.f32 %v9515, 1.442695
    %v9517 = vpow.pop %v9516
    %v9518 = vadd.f32 %v9517, 1.0
    %v9519 = vrcp.pop %v9518
    %v9520 = vmul.f32 1.0, %v9519
    %vm9521 = vcmask 1024
    %9522 = vst.msk [vmem:[%s111] sm:$0x3] %vm9521, %v9520
    // Predicated region
    $region272: #{transformer_forward.1} parent=1 // pred_check
      _
    $region273: #{transformer_forward.1} parent=1 // pred_check_branch
      %9524 = sbr.rel (0) target = $region275
    $region274: #{transformer_forward.1} parent=1 // pred_region
      _
    $region275: #{transformer_forward.1} parent=1 // pred_fallthru
      _
    // Predicated region
    $region276: #{transformer_forward.1} parent=1 // pred_check
      _
    $region277: #{transformer_forward.1} parent=1 // pred_check_branch
      %9526 = sbr.rel (0) target = $region279
    $region278: #{transformer_forward.1} parent=1 // pred_region
      _
    $region279: #{transformer_forward.1} parent=1 // pred_fallthru
      _
    %9527 = vsyncpa [#allocation4], 1
    %9528 = vsyncpa [#allocation6], 1

</llo_original>
